<compile_context>
chip_gen: v7x
topology: tpu7x:2x2x1
jax: 0.10.0
libtpu: 0.0.40
codegen_flags: <defaults>
</compile_context>

<pallas_src>
import numpy as np
import jax
import jax.numpy as jnp
from jax import lax
from jax.experimental import pallas as pl
from jax.experimental.pallas import tpu as pltpu

KW = 4          # Conv1d kernel width
PAD = 2         # ceil((kw-1)/2)
SLOPE = 0.2     # LeakyReLU negative slope
EPS = 1e-5      # InstanceNorm1d eps (affine=False, no running stats)
LANE = 128      # TPU lane width
SUB = 8         # TPU sublane tile


def make_layer_cfg(input_size=64, ndf=64, n_layers=3):
    """(C_in, C_out, stride, use_instance_norm, use_leaky_relu) per conv."""
    cfg = [(input_size, ndf, 2, False, True)]
    nf = ndf
    for _ in range(1, n_layers):
        nf_prev, nf = nf, min(nf * 2, 512)
        cfg.append((nf_prev, nf, 2, True, True))
    nf_prev, nf = nf, min(nf * 2, 512)
    cfg.append((nf_prev, nf, 1, True, True))
    cfg.append((nf, 1, 1, False, False))
    return cfg


def out_len(length, stride):
    return (length + 2 * PAD - KW) // stride + 1


def _round_up(v, m):
    return ((v + m - 1) // m) * m


def make_kernel(specs, bt):
    """specs[i]: dict(cin, cout, stride, norm, act, lp, lo); cin/cout already padded
    to multiples of 128, lp = per-sample padded input length (multiple of 8)."""
    n_layers = len(specs)

    def kernel(x_ref, *args):
        wb = args[:2 * n_layers]               # (w0, b0, w1, b1, ...)
        out_ref = args[2 * n_layers]
        scrs = args[2 * n_layers + 1:]         # one f32 VMEM scratch per intermediate

        # Re-zero the pad halo of every persistent scratch each grid step.  (Scratch
        # is not zero-initialized, and under core-parallel sharding each TensorCore
        # runs a disjoint subset of steps, so this must NOT be gated on program_id.)
        for li in range(n_layers - 1):
            lo = specs[li]["lo"]
            lp_n = specs[li + 1]["lp"]
            c_n = specs[li]["cout"]
            scrs[li][:, 0:PAD, :] = jnp.zeros((bt, PAD, c_n), jnp.float32)
            scrs[li][:, PAD + lo:lp_n, :] = jnp.zeros(
                (bt, lp_n - PAD - lo, c_n), jnp.float32)

        for li, sp in enumerate(specs):
            lp, lo = sp["lp"], sp["lo"]
            cin, cout = sp["cin"], sp["cout"]
            stride, use_norm, use_act = sp["stride"], sp["norm"], sp["act"]
            w_ref, b_ref = wb[2 * li], wb[2 * li + 1]

            # (bt, lp, cin) activations: lp % 8 == 0 and cin % 128 == 0, so merging
            # (bt, lp) into a single row dimension is a layout-free reshape.
            xin = x_ref[...] if li == 0 else scrs[li - 1][...]
            x2 = xin.reshape(bt * lp, cin)
            # Append an aligned block of zero rows so every tap can read a full
            # (bt*lp)-row window starting at offset k = 0..KW-1.
            x2 = jnp.concatenate([x2, jnp.zeros((SUB, cin), x2.dtype)], axis=0)
            xb = x2.astype(jnp.bfloat16)       # cast once per layer, not per tap

            # Cross-sample packed tap matmuls: one MXU dot per (layer, tap) over the
            # whole batch tile (M = bt*lp rows), f32 accumulation.
            acc = None
            for k in range(KW):
                tap = xb[k:k + bt * lp, :]
                part = jnp.dot(tap, w_ref[k],
                               preferred_element_type=jnp.float32)
                acc = part if acc is None else acc + part
            acc = acc + b_ref[...]                       # bias (1, cout)
            y3 = acc.reshape(bt, lp, cout)               # back to per-sample rows

            if stride == 1:
                y = y3[:, 0:lo, :]                       # valid rows are contiguous
                if use_norm:                             # InstanceNorm1d (biased var)
                    m = jnp.mean(y, axis=1, keepdims=True)
                    v = jnp.mean((y - m) ** 2, axis=1, keepdims=True)
                    y = (y - m) * lax.rsqrt(v + EPS)
                if use_act:                              # LeakyReLU(0.2)
                    y = jnp.where(y > 0, y, SLOPE * y)
                if li == n_layers - 1:
                    out_ref[...] = y[:, :, 0:1]          # only channel 0 is real
                else:
                    scrs[li][:, PAD:PAD + lo, :] = y     # single block store
            else:
                # stride == 2: valid outputs are the even full-resolution rows
                # 0, 2, ..., 2*(lo-1).  InstanceNorm via a row mask on the full-res
                # result, then scatter the selected rows into the next scratch.
                if use_norm:
                    rows = lax.broadcasted_iota(jnp.int32, (1, lp, 1), 1)
                    sel = ((rows % 2) == 0) & (rows <= 2 * (lo - 1))
                    msk = sel.astype(jnp.float32)
                    m = jnp.sum(y3 * msk, axis=1, keepdims=True) / lo
                    d = y3 - m
                    v = jnp.sum(d * d * msk, axis=1, keepdims=True) / lo
                    y3 = d * lax.rsqrt(v + EPS)
                if use_act:
                    y3 = jnp.where(y3 > 0, y3, SLOPE * y3)
                dst = scrs[li]
                for j in range(lo):
                    dst[:, PAD + j:PAD + j + 1, :] = y3[:, 2 * j:2 * j + 1, :]

    return kernel


def temporal_discriminator2_pallas(x, params, cfg, batch_tile=None):
    """x: (B, L, input_size) f32; params: list of (weight (Cout,Cin,KW), bias (Cout,))."""
    B, L, C0 = x.shape
    n_layers = len(cfg)
    assert C0 == cfg[0][0]
    assert cfg[-1][2] == 1                       # final layer is stride 1
    assert all(s in (1, 2) for (_, _, s, _, _) in cfg)

    lengths = [L]
    for (_, _, s, _, _) in cfg:
        lengths.append(out_len(lengths[-1], s))
    l_final = lengths[-1]

    # Per-layer geometry: channels padded to the 128-lane boundary, per-sample padded
    # lengths rounded to the 8-sublane boundary (layout-free (bt,lp,c)<->(bt*lp,c)).
    specs = []
    for li, (cin, cout, stride, use_norm, use_act) in enumerate(cfg):
        specs.append(dict(
            cin=_round_up(cin, LANE), cout=_round_up(cout, LANE),
            stride=stride, norm=use_norm, act=use_act,
            lp=_round_up(lengths[li] + 2 * PAD, SUB), lo=lengths[li + 1]))

    # Batch tile: keep >= 2 grid steps (v7x 2-TensorCore "parallel" sharding) while
    # making bt*lp ~ 128..320 rows to fill the MXU M dimension.
    if batch_tile is None:
        batch_tile = max(1, (B + 1) // 2) if B <= 16 else 8
    bt = batch_tile
    b_pad = _round_up(B, bt)

    lp0, cin0 = specs[0]["lp"], specs[0]["cin"]
    # Pre-pad layer-0 input: batch to a multiple of bt, length with the conv halo,
    # channels to 128 lanes.
    x_p = jnp.pad(x.astype(jnp.float32),
                  ((0, b_pad - B), (PAD, lp0 - PAD - L), (0, cin0 - C0)))

    flat_args = []
    in_specs = [pl.BlockSpec((bt, lp0, cin0), lambda b: (b, 0, 0))]
    for (w, bias), sp in zip(params, specs):
        cout, cin, kw = w.shape
        assert kw == KW
        wk = jnp.transpose(w, (2, 1, 0)).astype(jnp.float32)      # (KW, cin, cout)
        wk = jnp.pad(wk, ((0, 0), (0, sp["cin"] - cin), (0, sp["cout"] - cout)))
        wk = wk.astype(jnp.bfloat16)
        bk = jnp.pad(bias.astype(jnp.float32),
                     (0, sp["cout"] - cout)).reshape(1, sp["cout"])
        flat_args += [wk, bk]
        in_specs.append(pl.BlockSpec(wk.shape, lambda b: (0, 0, 0)))
        in_specs.append(pl.BlockSpec(bk.shape, lambda b: (0, 0)))

    # One f32 scratch per intermediate activation (interior + zero halo).
    scratch_shapes = [
        pltpu.VMEM((bt, specs[li + 1]["lp"], specs[li]["cout"]), jnp.float32)
        for li in range(n_layers - 1)]

    fn = pl.pallas_call(
        make_kernel(specs, bt),
        out_shape=jax.ShapeDtypeStruct((b_pad, l_final, 1), jnp.float32),
        grid_spec=pltpu.PrefetchScalarGridSpec(
            num_scalar_prefetch=0,
            grid=(b_pad // bt,),
            in_specs=in_specs,
            out_specs=pl.BlockSpec((bt, l_final, 1), lambda b: (b, 0, 0)),
            scratch_shapes=scratch_shapes,
        ),
        compiler_params=pltpu.CompilerParams(
            dimension_semantics=("parallel",)),
    )
    out = fn(x_p, *flat_args)
    return out[:B]


def reference_forward(x, params, cfg):
    """Pure-JAX reference matching the PyTorch forward (T == L)."""
    h = jnp.transpose(x, (0, 2, 1))                            # (B, C, L) == NCL
    for (w, b), (_, _, s, use_norm, use_act) in zip(params, cfg):
        h = lax.conv_general_dilated(
            h, w, window_strides=(s,), padding=[(PAD, PAD)],
            dimension_numbers=('NCH', 'OIH', 'NCH'),
            precision=lax.Precision.HIGHEST)
        h = h + b[None, :, None]
        if use_norm:
            m = jnp.mean(h, axis=2, keepdims=True)
            v = jnp.mean((h - m) ** 2, axis=2, keepdims=True)
            h = (h - m) / jnp.sqrt(v + EPS)
        if use_act:
            h = jnp.where(h > 0, h, SLOPE * h)
    return h.reshape(h.shape[0], -1, 1)


if __name__ == "__main__":
    B, L, input_size, ndf, n_layers = 3, 32, 64, 64, 3
    cfg = make_layer_cfg(input_size, ndf, n_layers)

    key = jax.random.PRNGKey(0)
    params = []
    for (cin, cout, _, _, _) in cfg:
        key, kw_key, kb_key = jax.random.split(key, 3)
        w = jax.random.normal(kw_key, (cout, cin, KW), jnp.float32) * 0.05
        b = jax.random.normal(kb_key, (cout,), jnp.float32) * 0.05
        params.append((w, b))

    key, kx = jax.random.split(key)
    x = jax.random.normal(kx, (B, L, input_size), jnp.float32)   # (B, T=L, input_size)

    out = temporal_discriminator2_pallas(x, params, cfg)
    out = jax.block_until_ready(out)

    ref = reference_forward(x, params, cfg)
    assert out.shape == ref.shape == (B, 7, 1), (out.shape, ref.shape)
    max_err = float(np.max(np.abs(np.asarray(out) - np.asarray(ref))))
    assert np.allclose(np.asarray(out), np.asarray(ref), rtol=5e-2, atol=5e-2), max_err

    print("KERNEL_OK")
</pallas_src>

<mosaic_0001>
module attributes {stable_mosaic.version = 11 : i64} {
  func.func @kernel(%arg0: i32, %arg1: memref<2x40x128xf32, #tpu.memory_space<vmem>>, %arg2: memref<4x128x128xbf16, #tpu.memory_space<vmem>>, %arg3: memref<1x128xf32, #tpu.memory_space<vmem>>, %arg4: memref<4x128x128xbf16, #tpu.memory_space<vmem>>, %arg5: memref<1x128xf32, #tpu.memory_space<vmem>>, %arg6: memref<4x128x256xbf16, #tpu.memory_space<vmem>>, %arg7: memref<1x256xf32, #tpu.memory_space<vmem>>, %arg8: memref<4x256x512xbf16, #tpu.memory_space<vmem>>, %arg9: memref<1x512xf32, #tpu.memory_space<vmem>>, %arg10: memref<4x512x128xbf16, #tpu.memory_space<vmem>>, %arg11: memref<1x128xf32, #tpu.memory_space<vmem>>, %arg12: memref<2x7x1xf32, #tpu.memory_space<vmem>>, %arg13: memref<2x24x128xf32, #tpu.memory_space<vmem>>, %arg14: memref<2x16x128xf32, #tpu.memory_space<vmem>>, %arg15: memref<2x16x256xf32, #tpu.memory_space<vmem>>, %arg16: memref<2x16x512xf32, #tpu.memory_space<vmem>>) attributes {dimension_semantics = [#tpu.dimension_semantics<parallel>], iteration_bounds = array<i64: 2>, scalar_prefetch = 0 : i64, scratch_operands = 4 : i64, tpu.core_type = #tpu.core_type<tc>, window_params = [{transform_indices = @transform_0, window_bounds = array<i64: 2, 40, 128>}, {pipeline_mode = #tpu.pipeline_mode<synchronous>, transform_indices = @transform_1, window_bounds = array<i64: 4, 128, 128>}, {pipeline_mode = #tpu.pipeline_mode<synchronous>, transform_indices = @transform_2, window_bounds = array<i64: 1, 128>}, {pipeline_mode = #tpu.pipeline_mode<synchronous>, transform_indices = @transform_3, window_bounds = array<i64: 4, 128, 128>}, {pipeline_mode = #tpu.pipeline_mode<synchronous>, transform_indices = @transform_4, window_bounds = array<i64: 1, 128>}, {pipeline_mode = #tpu.pipeline_mode<synchronous>, transform_indices = @transform_5, window_bounds = array<i64: 4, 128, 256>}, {pipeline_mode = #tpu.pipeline_mode<synchronous>, transform_indices = @transform_6, window_bounds = array<i64: 1, 256>}, {pipeline_mode = #tpu.pipeline_mode<synchronous>, transform_indices = @transform_7, window_bounds = array<i64: 4, 256, 512>}, {pipeline_mode = #tpu.pipeline_mode<synchronous>, transform_indices = @transform_8, window_bounds = array<i64: 1, 512>}, {pipeline_mode = #tpu.pipeline_mode<synchronous>, transform_indices = @transform_9, window_bounds = array<i64: 4, 512, 128>}, {pipeline_mode = #tpu.pipeline_mode<synchronous>, transform_indices = @transform_10, window_bounds = array<i64: 1, 128>}, {transform_indices = @transform_11, window_bounds = array<i64: 2, 7, 1>}]} {
    %cst = arith.constant 0.000000e+00 : f32
    %0 = vector.broadcast %cst : f32 to vector<2x2x128xf32>
    %c0 = arith.constant 0 : index
    %c0_0 = arith.constant 0 : index
    %c0_1 = arith.constant 0 : index
    %1 = vector.load %arg13[%c0, %c0_0, %c0_1] : memref<2x24x128xf32, #tpu.memory_space<vmem>>, vector<2x2x128xf32>
    tpu.vector_store %arg13[%c0, %c0_0, %c0_1], %0 {strides = array<i32>} : memref<2x24x128xf32, #tpu.memory_space<vmem>>, vector<2x2x128xf32>,
    %cst_2 = arith.constant 0.000000e+00 : f32
    %2 = vector.broadcast %cst_2 : f32 to vector<2x5x128xf32>
    %c0_3 = arith.constant 0 : index
    %c19 = arith.constant 19 : index
    %c0_4 = arith.constant 0 : index
    %3 = vector.load %arg13[%c0_3, %c19, %c0_4] : memref<2x24x128xf32, #tpu.memory_space<vmem>>, vector<2x5x128xf32>
    tpu.vector_store %arg13[%c0_3, %c19, %c0_4], %2 {strides = array<i32>} : memref<2x24x128xf32, #tpu.memory_space<vmem>>, vector<2x5x128xf32>,
    %cst_5 = arith.constant 0.000000e+00 : f32
    %4 = vector.broadcast %cst_5 : f32 to vector<2x2x128xf32>
    %c0_6 = arith.constant 0 : index
    %c0_7 = arith.constant 0 : index
    %c0_8 = arith.constant 0 : index
    %5 = vector.load %arg14[%c0_6, %c0_7, %c0_8] : memref<2x16x128xf32, #tpu.memory_space<vmem>>, vector<2x2x128xf32>
    tpu.vector_store %arg14[%c0_6, %c0_7, %c0_8], %4 {strides = array<i32>} : memref<2x16x128xf32, #tpu.memory_space<vmem>>, vector<2x2x128xf32>,
    %cst_9 = arith.constant 0.000000e+00 : f32
    %6 = vector.broadcast %cst_9 : f32 to vector<2x5x128xf32>
    %c0_10 = arith.constant 0 : index
    %c11 = arith.constant 11 : index
    %c0_11 = arith.constant 0 : index
    %7 = vector.load %arg14[%c0_10, %c11, %c0_11] : memref<2x16x128xf32, #tpu.memory_space<vmem>>, vector<2x5x128xf32>
    tpu.vector_store %arg14[%c0_10, %c11, %c0_11], %6 {strides = array<i32>} : memref<2x16x128xf32, #tpu.memory_space<vmem>>, vector<2x5x128xf32>,
    %cst_12 = arith.constant 0.000000e+00 : f32
    %8 = vector.broadcast %cst_12 : f32 to vector<2x2x256xf32>
    %c0_13 = arith.constant 0 : index
    %c0_14 = arith.constant 0 : index
    %c0_15 = arith.constant 0 : index
    %9 = vector.load %arg15[%c0_13, %c0_14, %c0_15] : memref<2x16x256xf32, #tpu.memory_space<vmem>>, vector<2x2x256xf32>
    tpu.vector_store %arg15[%c0_13, %c0_14, %c0_15], %8 {strides = array<i32>} : memref<2x16x256xf32, #tpu.memory_space<vmem>>, vector<2x2x256xf32>,
    %cst_16 = arith.constant 0.000000e+00 : f32
    %10 = vector.broadcast %cst_16 : f32 to vector<2x9x256xf32>
    %c0_17 = arith.constant 0 : index
    %c7 = arith.constant 7 : index
    %c0_18 = arith.constant 0 : index
    %11 = vector.load %arg15[%c0_17, %c7, %c0_18] : memref<2x16x256xf32, #tpu.memory_space<vmem>>, vector<2x9x256xf32>
    tpu.vector_store %arg15[%c0_17, %c7, %c0_18], %10 {strides = array<i32>} : memref<2x16x256xf32, #tpu.memory_space<vmem>>, vector<2x9x256xf32>,
    %cst_19 = arith.constant 0.000000e+00 : f32
    %12 = vector.broadcast %cst_19 : f32 to vector<2x2x512xf32>
    %c0_20 = arith.constant 0 : index
    %c0_21 = arith.constant 0 : index
    %c0_22 = arith.constant 0 : index
    %13 = vector.load %arg16[%c0_20, %c0_21, %c0_22] : memref<2x16x512xf32, #tpu.memory_space<vmem>>, vector<2x2x512xf32>
    tpu.vector_store %arg16[%c0_20, %c0_21, %c0_22], %12 {strides = array<i32>} : memref<2x16x512xf32, #tpu.memory_space<vmem>>, vector<2x2x512xf32>,
    %cst_23 = arith.constant 0.000000e+00 : f32
    %14 = vector.broadcast %cst_23 : f32 to vector<2x8x512xf32>
    %c0_24 = arith.constant 0 : index
    %c8 = arith.constant 8 : index
    %c0_25 = arith.constant 0 : index
    %15 = vector.load %arg16[%c0_24, %c8, %c0_25] : memref<2x16x512xf32, #tpu.memory_space<vmem>>, vector<2x8x512xf32>
    tpu.vector_store %arg16[%c0_24, %c8, %c0_25], %14 {strides = array<i32>} : memref<2x16x512xf32, #tpu.memory_space<vmem>>, vector<2x8x512xf32>,
    %c0_26 = arith.constant 0 : index
    %c0_27 = arith.constant 0 : index
    %c0_28 = arith.constant 0 : index
    %16 = vector.load %arg1[%c0_26, %c0_27, %c0_28] : memref<2x40x128xf32, #tpu.memory_space<vmem>>, vector<2x40x128xf32>
    %17 = vector.shape_cast %16 : vector<2x40x128xf32> to vector<80x128xf32>
    %cst_29 = arith.constant 0.000000e+00 : f32
    %18 = vector.broadcast %cst_29 : f32 to vector<8x128xf32>
    %19 = tpu.concatenate %17, %18 in 0 : vector<80x128xf32>, vector<8x128xf32> -> vector<88x128xf32>
    %20 = arith.truncf %19 : vector<88x128xf32> to vector<88x128xbf16>
    %21 = vector.extract_strided_slice %20 {offsets = [0, 0], sizes = [80, 128], strides = [1, 1]} : vector<88x128xbf16> to vector<80x128xbf16>
    %c0_30 = arith.constant 0 : index
    %c0_31 = arith.constant 0 : index
    %c0_32 = arith.constant 0 : index
    %22 = vector.load %arg2[%c0_30, %c0_31, %c0_32] : memref<4x128x128xbf16, #tpu.memory_space<vmem>>, vector<1x128x128xbf16>
    %23 = vector.shape_cast %22 : vector<1x128x128xbf16> to vector<128x128xbf16>
    %cst_33 = arith.constant dense<0.000000e+00> : vector<80x128xf32>
    %24 = tpu.matmul %21, %23, %cst_33 {dimension_numbers = #tpu.dot_dimension_numbers<[1], [0], [0], [1], [0, 0, 1, 1], [], []>} : vector<80x128xbf16>, vector<128x128xbf16>, vector<80x128xf32> -> vector<80x128xf32>
    %25 = vector.extract_strided_slice %20 {offsets = [1, 0], sizes = [80, 128], strides = [1, 1]} : vector<88x128xbf16> to vector<80x128xbf16>
    %c1 = arith.constant 1 : index
    %c0_34 = arith.constant 0 : index
    %c0_35 = arith.constant 0 : index
    %26 = vector.load %arg2[%c1, %c0_34, %c0_35] : memref<4x128x128xbf16, #tpu.memory_space<vmem>>, vector<1x128x128xbf16>
    %27 = vector.shape_cast %26 : vector<1x128x128xbf16> to vector<128x128xbf16>
    %cst_36 = arith.constant dense<0.000000e+00> : vector<80x128xf32>
    %28 = tpu.matmul %25, %27, %cst_36 {dimension_numbers = #tpu.dot_dimension_numbers<[1], [0], [0], [1], [0, 0, 1, 1], [], []>} : vector<80x128xbf16>, vector<128x128xbf16>, vector<80x128xf32> -> vector<80x128xf32>
    %29 = arith.addf %24, %28 : vector<80x128xf32>
    %30 = vector.extract_strided_slice %20 {offsets = [2, 0], sizes = [80, 128], strides = [1, 1]} : vector<88x128xbf16> to vector<80x128xbf16>
    %c2 = arith.constant 2 : index
    %c0_37 = arith.constant 0 : index
    %c0_38 = arith.constant 0 : index
    %31 = vector.load %arg2[%c2, %c0_37, %c0_38] : memref<4x128x128xbf16, #tpu.memory_space<vmem>>, vector<1x128x128xbf16>
    %32 = vector.shape_cast %31 : vector<1x128x128xbf16> to vector<128x128xbf16>
    %cst_39 = arith.constant dense<0.000000e+00> : vector<80x128xf32>
    %33 = tpu.matmul %30, %32, %cst_39 {dimension_numbers = #tpu.dot_dimension_numbers<[1], [0], [0], [1], [0, 0, 1, 1], [], []>} : vector<80x128xbf16>, vector<128x128xbf16>, vector<80x128xf32> -> vector<80x128xf32>
    %34 = arith.addf %29, %33 : vector<80x128xf32>
    %35 = vector.extract_strided_slice %20 {offsets = [3, 0], sizes = [80, 128], strides = [1, 1]} : vector<88x128xbf16> to vector<80x128xbf16>
    %c3 = arith.constant 3 : index
    %c0_40 = arith.constant 0 : index
    %c0_41 = arith.constant 0 : index
    %36 = vector.load %arg2[%c3, %c0_40, %c0_41] : memref<4x128x128xbf16, #tpu.memory_space<vmem>>, vector<1x128x128xbf16>
    %37 = vector.shape_cast %36 : vector<1x128x128xbf16> to vector<128x128xbf16>
    %cst_42 = arith.constant dense<0.000000e+00> : vector<80x128xf32>
    %38 = tpu.matmul %35, %37, %cst_42 {dimension_numbers = #tpu.dot_dimension_numbers<[1], [0], [0], [1], [0, 0, 1, 1], [], []>} : vector<80x128xbf16>, vector<128x128xbf16>, vector<80x128xf32> -> vector<80x128xf32>
    %39 = arith.addf %34, %38 : vector<80x128xf32>
    %c0_43 = arith.constant 0 : index
    %c0_44 = arith.constant 0 : index
    %40 = vector.load %arg3[%c0_43, %c0_44] : memref<1x128xf32, #tpu.memory_space<vmem>>, vector<1x128xf32>
    %41 = vector.broadcast %40 : vector<1x128xf32> to vector<80x128xf32>
    %42 = arith.addf %39, %41 : vector<80x128xf32>
    %43 = vector.shape_cast %42 : vector<80x128xf32> to vector<2x40x128xf32>
    %cst_45 = arith.constant 0.000000e+00 : f32
    %44 = vector.broadcast %cst_45 : f32 to vector<2x40x128xf32>
    %45 = arith.cmpf ogt, %43, %44 : vector<2x40x128xf32>
    %cst_46 = arith.constant 2.000000e-01 : f32
    %46 = vector.broadcast %cst_46 : f32 to vector<2x40x128xf32>
    %47 = arith.mulf %46, %43 : vector<2x40x128xf32>
    %48 = arith.select %45, %43, %47 : vector<2x40x128xi1>, vector<2x40x128xf32>
    %49 = vector.extract_strided_slice %48 {offsets = [0, 0, 0], sizes = [2, 1, 128], strides = [1, 1, 1]} : vector<2x40x128xf32> to vector<2x1x128xf32>
    %c0_47 = arith.constant 0 : index
    %c2_48 = arith.constant 2 : index
    %c0_49 = arith.constant 0 : index
    %50 = vector.load %arg13[%c0_47, %c2_48, %c0_49] : memref<2x24x128xf32, #tpu.memory_space<vmem>>, vector<2x1x128xf32>
    tpu.vector_store %arg13[%c0_47, %c2_48, %c0_49], %49 {strides = array<i32>} : memref<2x24x128xf32, #tpu.memory_space<vmem>>, vector<2x1x128xf32>,
    %51 = vector.extract_strided_slice %48 {offsets = [0, 2, 0], sizes = [2, 1, 128], strides = [1, 1, 1]} : vector<2x40x128xf32> to vector<2x1x128xf32>
    %c0_50 = arith.constant 0 : index
    %c3_51 = arith.constant 3 : index
    %c0_52 = arith.constant 0 : index
    %52 = vector.load %arg13[%c0_50, %c3_51, %c0_52] : memref<2x24x128xf32, #tpu.memory_space<vmem>>, vector<2x1x128xf32>
    tpu.vector_store %arg13[%c0_50, %c3_51, %c0_52], %51 {strides = array<i32>} : memref<2x24x128xf32, #tpu.memory_space<vmem>>, vector<2x1x128xf32>,
    %53 = vector.extract_strided_slice %48 {offsets = [0, 4, 0], sizes = [2, 1, 128], strides = [1, 1, 1]} : vector<2x40x128xf32> to vector<2x1x128xf32>
    %c0_53 = arith.constant 0 : index
    %c4 = arith.constant 4 : index
    %c0_54 = arith.constant 0 : index
    %54 = vector.load %arg13[%c0_53, %c4, %c0_54] : memref<2x24x128xf32, #tpu.memory_space<vmem>>, vector<2x1x128xf32>
    tpu.vector_store %arg13[%c0_53, %c4, %c0_54], %53 {strides = array<i32>} : memref<2x24x128xf32, #tpu.memory_space<vmem>>, vector<2x1x128xf32>,
    %55 = vector.extract_strided_slice %48 {offsets = [0, 6, 0], sizes = [2, 1, 128], strides = [1, 1, 1]} : vector<2x40x128xf32> to vector<2x1x128xf32>
    %c0_55 = arith.constant 0 : index
    %c5 = arith.constant 5 : index
    %c0_56 = arith.constant 0 : index
    %56 = vector.load %arg13[%c0_55, %c5, %c0_56] : memref<2x24x128xf32, #tpu.memory_space<vmem>>, vector<2x1x128xf32>
    tpu.vector_store %arg13[%c0_55, %c5, %c0_56], %55 {strides = array<i32>} : memref<2x24x128xf32, #tpu.memory_space<vmem>>, vector<2x1x128xf32>,
    %57 = vector.extract_strided_slice %48 {offsets = [0, 8, 0], sizes = [2, 1, 128], strides = [1, 1, 1]} : vector<2x40x128xf32> to vector<2x1x128xf32>
    %c0_57 = arith.constant 0 : index
    %c6 = arith.constant 6 : index
    %c0_58 = arith.constant 0 : index
    %58 = vector.load %arg13[%c0_57, %c6, %c0_58] : memref<2x24x128xf32, #tpu.memory_space<vmem>>, vector<2x1x128xf32>
    tpu.vector_store %arg13[%c0_57, %c6, %c0_58], %57 {strides = array<i32>} : memref<2x24x128xf32, #tpu.memory_space<vmem>>, vector<2x1x128xf32>,
    %59 = vector.extract_strided_slice %48 {offsets = [0, 10, 0], sizes = [2, 1, 128], strides = [1, 1, 1]} : vector<2x40x128xf32> to vector<2x1x128xf32>
    %c0_59 = arith.constant 0 : index
    %c7_60 = arith.constant 7 : index
    %c0_61 = arith.constant 0 : index
    %60 = vector.load %arg13[%c0_59, %c7_60, %c0_61] : memref<2x24x128xf32, #tpu.memory_space<vmem>>, vector<2x1x128xf32>
    tpu.vector_store %arg13[%c0_59, %c7_60, %c0_61], %59 {strides = array<i32>} : memref<2x24x128xf32, #tpu.memory_space<vmem>>, vector<2x1x128xf32>,
    %61 = vector.extract_strided_slice %48 {offsets = [0, 12, 0], sizes = [2, 1, 128], strides = [1, 1, 1]} : vector<2x40x128xf32> to vector<2x1x128xf32>
    %c0_62 = arith.constant 0 : index
    %c8_63 = arith.constant 8 : index
    %c0_64 = arith.constant 0 : index
    %62 = vector.load %arg13[%c0_62, %c8_63, %c0_64] : memref<2x24x128xf32, #tpu.memory_space<vmem>>, vector<2x1x128xf32>
    tpu.vector_store %arg13[%c0_62, %c8_63, %c0_64], %61 {strides = array<i32>} : memref<2x24x128xf32, #tpu.memory_space<vmem>>, vector<2x1x128xf32>,
    %63 = vector.extract_strided_slice %48 {offsets = [0, 14, 0], sizes = [2, 1, 128], strides = [1, 1, 1]} : vector<2x40x128xf32> to vector<2x1x128xf32>
    %c0_65 = arith.constant 0 : index
    %c9 = arith.constant 9 : index
    %c0_66 = arith.constant 0 : index
    %64 = vector.load %arg13[%c0_65, %c9, %c0_66] : memref<2x24x128xf32, #tpu.memory_space<vmem>>, vector<2x1x128xf32>
    tpu.vector_store %arg13[%c0_65, %c9, %c0_66], %63 {strides = array<i32>} : memref<2x24x128xf32, #tpu.memory_space<vmem>>, vector<2x1x128xf32>,
    %65 = vector.extract_strided_slice %48 {offsets = [0, 16, 0], sizes = [2, 1, 128], strides = [1, 1, 1]} : vector<2x40x128xf32> to vector<2x1x128xf32>
    %c0_67 = arith.constant 0 : index
    %c10 = arith.constant 10 : index
    %c0_68 = arith.constant 0 : index
    %66 = vector.load %arg13[%c0_67, %c10, %c0_68] : memref<2x24x128xf32, #tpu.memory_space<vmem>>, vector<2x1x128xf32>
    tpu.vector_store %arg13[%c0_67, %c10, %c0_68], %65 {strides = array<i32>} : memref<2x24x128xf32, #tpu.memory_space<vmem>>, vector<2x1x128xf32>,
    %67 = vector.extract_strided_slice %48 {offsets = [0, 18, 0], sizes = [2, 1, 128], strides = [1, 1, 1]} : vector<2x40x128xf32> to vector<2x1x128xf32>
    %c0_69 = arith.constant 0 : index
    %c11_70 = arith.constant 11 : index
    %c0_71 = arith.constant 0 : index
    %68 = vector.load %arg13[%c0_69, %c11_70, %c0_71] : memref<2x24x128xf32, #tpu.memory_space<vmem>>, vector<2x1x128xf32>
    tpu.vector_store %arg13[%c0_69, %c11_70, %c0_71], %67 {strides = array<i32>} : memref<2x24x128xf32, #tpu.memory_space<vmem>>, vector<2x1x128xf32>,
    %69 = vector.extract_strided_slice %48 {offsets = [0, 20, 0], sizes = [2, 1, 128], strides = [1, 1, 1]} : vector<2x40x128xf32> to vector<2x1x128xf32>
    %c0_72 = arith.constant 0 : index
    %c12 = arith.constant 12 : index
    %c0_73 = arith.constant 0 : index
    %70 = vector.load %arg13[%c0_72, %c12, %c0_73] : memref<2x24x128xf32, #tpu.memory_space<vmem>>, vector<2x1x128xf32>
    tpu.vector_store %arg13[%c0_72, %c12, %c0_73], %69 {strides = array<i32>} : memref<2x24x128xf32, #tpu.memory_space<vmem>>, vector<2x1x128xf32>,
    %71 = vector.extract_strided_slice %48 {offsets = [0, 22, 0], sizes = [2, 1, 128], strides = [1, 1, 1]} : vector<2x40x128xf32> to vector<2x1x128xf32>
    %c0_74 = arith.constant 0 : index
    %c13 = arith.constant 13 : index
    %c0_75 = arith.constant 0 : index
    %72 = vector.load %arg13[%c0_74, %c13, %c0_75] : memref<2x24x128xf32, #tpu.memory_space<vmem>>, vector<2x1x128xf32>
    tpu.vector_store %arg13[%c0_74, %c13, %c0_75], %71 {strides = array<i32>} : memref<2x24x128xf32, #tpu.memory_space<vmem>>, vector<2x1x128xf32>,
    %73 = vector.extract_strided_slice %48 {offsets = [0, 24, 0], sizes = [2, 1, 128], strides = [1, 1, 1]} : vector<2x40x128xf32> to vector<2x1x128xf32>
    %c0_76 = arith.constant 0 : index
    %c14 = arith.constant 14 : index
    %c0_77 = arith.constant 0 : index
    %74 = vector.load %arg13[%c0_76, %c14, %c0_77] : memref<2x24x128xf32, #tpu.memory_space<vmem>>, vector<2x1x128xf32>
    tpu.vector_store %arg13[%c0_76, %c14, %c0_77], %73 {strides = array<i32>} : memref<2x24x128xf32, #tpu.memory_space<vmem>>, vector<2x1x128xf32>,
    %75 = vector.extract_strided_slice %48 {offsets = [0, 26, 0], sizes = [2, 1, 128], strides = [1, 1, 1]} : vector<2x40x128xf32> to vector<2x1x128xf32>
    %c0_78 = arith.constant 0 : index
    %c15 = arith.constant 15 : index
    %c0_79 = arith.constant 0 : index
    %76 = vector.load %arg13[%c0_78, %c15, %c0_79] : memref<2x24x128xf32, #tpu.memory_space<vmem>>, vector<2x1x128xf32>
    tpu.vector_store %arg13[%c0_78, %c15, %c0_79], %75 {strides = array<i32>} : memref<2x24x128xf32, #tpu.memory_space<vmem>>, vector<2x1x128xf32>,
    %77 = vector.extract_strided_slice %48 {offsets = [0, 28, 0], sizes = [2, 1, 128], strides = [1, 1, 1]} : vector<2x40x128xf32> to vector<2x1x128xf32>
    %c0_80 = arith.constant 0 : index
    %c16 = arith.constant 16 : index
    %c0_81 = arith.constant 0 : index
    %78 = vector.load %arg13[%c0_80, %c16, %c0_81] : memref<2x24x128xf32, #tpu.memory_space<vmem>>, vector<2x1x128xf32>
    tpu.vector_store %arg13[%c0_80, %c16, %c0_81], %77 {strides = array<i32>} : memref<2x24x128xf32, #tpu.memory_space<vmem>>, vector<2x1x128xf32>,
    %79 = vector.extract_strided_slice %48 {offsets = [0, 30, 0], sizes = [2, 1, 128], strides = [1, 1, 1]} : vector<2x40x128xf32> to vector<2x1x128xf32>
    %c0_82 = arith.constant 0 : index
    %c17 = arith.constant 17 : index
    %c0_83 = arith.constant 0 : index
    %80 = vector.load %arg13[%c0_82, %c17, %c0_83] : memref<2x24x128xf32, #tpu.memory_space<vmem>>, vector<2x1x128xf32>
    tpu.vector_store %arg13[%c0_82, %c17, %c0_83], %79 {strides = array<i32>} : memref<2x24x128xf32, #tpu.memory_space<vmem>>, vector<2x1x128xf32>,
    %81 = vector.extract_strided_slice %48 {offsets = [0, 32, 0], sizes = [2, 1, 128], strides = [1, 1, 1]} : vector<2x40x128xf32> to vector<2x1x128xf32>
    %c0_84 = arith.constant 0 : index
    %c18 = arith.constant 18 : index
    %c0_85 = arith.constant 0 : index
    %82 = vector.load %arg13[%c0_84, %c18, %c0_85] : memref<2x24x128xf32, #tpu.memory_space<vmem>>, vector<2x1x128xf32>
    tpu.vector_store %arg13[%c0_84, %c18, %c0_85], %81 {strides = array<i32>} : memref<2x24x128xf32, #tpu.memory_space<vmem>>, vector<2x1x128xf32>,
    %c0_86 = arith.constant 0 : index
    %c0_87 = arith.constant 0 : index
    %c0_88 = arith.constant 0 : index
    %83 = vector.load %arg13[%c0_86, %c0_87, %c0_88] : memref<2x24x128xf32, #tpu.memory_space<vmem>>, vector<2x24x128xf32>
    %84 = vector.shape_cast %83 : vector<2x24x128xf32> to vector<48x128xf32>
    %cst_89 = arith.constant 0.000000e+00 : f32
    %85 = vector.broadcast %cst_89 : f32 to vector<8x128xf32>
    %86 = tpu.concatenate %84, %85 in 0 : vector<48x128xf32>, vector<8x128xf32> -> vector<56x128xf32>
    %87 = arith.truncf %86 : vector<56x128xf32> to vector<56x128xbf16>
    %88 = vector.extract_strided_slice %87 {offsets = [0, 0], sizes = [48, 128], strides = [1, 1]} : vector<56x128xbf16> to vector<48x128xbf16>
    %c0_90 = arith.constant 0 : index
    %c0_91 = arith.constant 0 : index
    %c0_92 = arith.constant 0 : index
    %89 = vector.load %arg4[%c0_90, %c0_91, %c0_92] : memref<4x128x128xbf16, #tpu.memory_space<vmem>>, vector<1x128x128xbf16>
    %90 = vector.shape_cast %89 : vector<1x128x128xbf16> to vector<128x128xbf16>
    %cst_93 = arith.constant dense<0.000000e+00> : vector<48x128xf32>
    %91 = tpu.matmul %88, %90, %cst_93 {dimension_numbers = #tpu.dot_dimension_numbers<[1], [0], [0], [1], [0, 0, 1, 1], [], []>} : vector<48x128xbf16>, vector<128x128xbf16>, vector<48x128xf32> -> vector<48x128xf32>
    %92 = vector.extract_strided_slice %87 {offsets = [1, 0], sizes = [48, 128], strides = [1, 1]} : vector<56x128xbf16> to vector<48x128xbf16>
    %c1_94 = arith.constant 1 : index
    %c0_95 = arith.constant 0 : index
    %c0_96 = arith.constant 0 : index
    %93 = vector.load %arg4[%c1_94, %c0_95, %c0_96] : memref<4x128x128xbf16, #tpu.memory_space<vmem>>, vector<1x128x128xbf16>
    %94 = vector.shape_cast %93 : vector<1x128x128xbf16> to vector<128x128xbf16>
    %cst_97 = arith.constant dense<0.000000e+00> : vector<48x128xf32>
    %95 = tpu.matmul %92, %94, %cst_97 {dimension_numbers = #tpu.dot_dimension_numbers<[1], [0], [0], [1], [0, 0, 1, 1], [], []>} : vector<48x128xbf16>, vector<128x128xbf16>, vector<48x128xf32> -> vector<48x128xf32>
    %96 = arith.addf %91, %95 : vector<48x128xf32>
    %97 = vector.extract_strided_slice %87 {offsets = [2, 0], sizes = [48, 128], strides = [1, 1]} : vector<56x128xbf16> to vector<48x128xbf16>
    %c2_98 = arith.constant 2 : index
    %c0_99 = arith.constant 0 : index
    %c0_100 = arith.constant 0 : index
    %98 = vector.load %arg4[%c2_98, %c0_99, %c0_100] : memref<4x128x128xbf16, #tpu.memory_space<vmem>>, vector<1x128x128xbf16>
    %99 = vector.shape_cast %98 : vector<1x128x128xbf16> to vector<128x128xbf16>
    %cst_101 = arith.constant dense<0.000000e+00> : vector<48x128xf32>
    %100 = tpu.matmul %97, %99, %cst_101 {dimension_numbers = #tpu.dot_dimension_numbers<[1], [0], [0], [1], [0, 0, 1, 1], [], []>} : vector<48x128xbf16>, vector<128x128xbf16>, vector<48x128xf32> -> vector<48x128xf32>
    %101 = arith.addf %96, %100 : vector<48x128xf32>
    %102 = vector.extract_strided_slice %87 {offsets = [3, 0], sizes = [48, 128], strides = [1, 1]} : vector<56x128xbf16> to vector<48x128xbf16>
    %c3_102 = arith.constant 3 : index
    %c0_103 = arith.constant 0 : index
    %c0_104 = arith.constant 0 : index
    %103 = vector.load %arg4[%c3_102, %c0_103, %c0_104] : memref<4x128x128xbf16, #tpu.memory_space<vmem>>, vector<1x128x128xbf16>
    %104 = vector.shape_cast %103 : vector<1x128x128xbf16> to vector<128x128xbf16>
    %cst_105 = arith.constant dense<0.000000e+00> : vector<48x128xf32>
    %105 = tpu.matmul %102, %104, %cst_105 {dimension_numbers = #tpu.dot_dimension_numbers<[1], [0], [0], [1], [0, 0, 1, 1], [], []>} : vector<48x128xbf16>, vector<128x128xbf16>, vector<48x128xf32> -> vector<48x128xf32>
    %106 = arith.addf %101, %105 : vector<48x128xf32>
    %c0_106 = arith.constant 0 : index
    %c0_107 = arith.constant 0 : index
    %107 = vector.load %arg5[%c0_106, %c0_107] : memref<1x128xf32, #tpu.memory_space<vmem>>, vector<1x128xf32>
    %108 = vector.broadcast %107 : vector<1x128xf32> to vector<48x128xf32>
    %109 = arith.addf %106, %108 : vector<48x128xf32>
    %110 = vector.shape_cast %109 : vector<48x128xf32> to vector<2x24x128xf32>
    %111 = tpu.iota {dimensions = array<i32: 1>} : vector<1x24x1xi32>
    %c2_i32 = arith.constant 2 : i32
    %c0_i32 = arith.constant 0 : i32
    %112 = arith.cmpi eq, %c2_i32, %c0_i32 : i32
    %c1_i32 = arith.constant 1 : i32
    %113 = arith.select %112, %c1_i32, %c2_i32 : i32
    %114 = vector.broadcast %113 : i32 to vector<1x24x1xi32>
    %115 = arith.remsi %111, %114 : vector<1x24x1xi32>
    %c0_i32_108 = arith.constant 0 : i32
    %116 = vector.broadcast %c0_i32_108 : i32 to vector<1x24x1xi32>
    %117 = arith.cmpi ne, %115, %116 : vector<1x24x1xi32>
    %c0_i32_109 = arith.constant 0 : i32
    %118 = vector.broadcast %c0_i32_109 : i32 to vector<1x24x1xi32>
    %119 = arith.cmpi slt, %115, %118 : vector<1x24x1xi32>
    %c0_i32_110 = arith.constant 0 : i32
    %120 = arith.cmpi slt, %113, %c0_i32_110 : i32
    %121 = vector.broadcast %120 : i1 to vector<1x24x1xi1>
    %122 = vector.broadcast %121 : vector<1x24x1xi1> to vector<1x24x1xi1>
    %123 = arith.xori %119, %122 : vector<1x24x1xi1>
    %124 = arith.andi %123, %117 : vector<1x24x1xi1>
    %125 = vector.broadcast %113 : i32 to vector<1x24x1xi32>
    %126 = arith.addi %115, %125 : vector<1x24x1xi32>
    %127 = arith.select %124, %126, %115 : vector<1x24x1xi1>, vector<1x24x1xi32>
    %c0_i32_111 = arith.constant 0 : i32
    %128 = vector.broadcast %c0_i32_111 : i32 to vector<1x24x1xi32>
    %129 = arith.cmpi eq, %127, %128 : vector<1x24x1xi32>
    %c16_i32 = arith.constant 16 : i32
    %130 = vector.broadcast %c16_i32 : i32 to vector<1x24x1xi32>
    %131 = arith.cmpi sle, %111, %130 : vector<1x24x1xi32>
    %132 = arith.andi %129, %131 : vector<1x24x1xi1>
    %133 = arith.extui %132 : vector<1x24x1xi1> to vector<1x24x1xi32>
    %134 = arith.sitofp %133 : vector<1x24x1xi32> to vector<1x24x1xf32>
    %135 = vector.broadcast %134 : vector<1x24x1xf32> to vector<2x24x128xf32>
    %136 = arith.mulf %110, %135 : vector<2x24x128xf32>
    %cst_112 = arith.constant dense<0.000000e+00> : vector<2x128xf32>
    %137 = vector.multi_reduction <add>, %136, %cst_112 [1] : vector<2x24x128xf32> to vector<2x128xf32>
    %138 = vector.shape_cast %137 : vector<2x128xf32> to vector<2x1x128xf32>
    %cst_113 = arith.constant 9.000000e+00 : f32
    %139 = vector.broadcast %cst_113 : f32 to vector<2x1x128xf32>
    %140 = arith.divf %138, %139 : vector<2x1x128xf32>
    %141 = vector.broadcast %140 : vector<2x1x128xf32> to vector<2x24x128xf32>
    %142 = arith.subf %110, %141 : vector<2x24x128xf32>
    %143 = arith.mulf %142, %142 : vector<2x24x128xf32>
    %144 = vector.broadcast %134 : vector<1x24x1xf32> to vector<2x24x128xf32>
    %145 = arith.mulf %143, %144 : vector<2x24x128xf32>
    %cst_114 = arith.constant dense<0.000000e+00> : vector<2x128xf32>
    %146 = vector.multi_reduction <add>, %145, %cst_114 [1] : vector<2x24x128xf32> to vector<2x128xf32>
    %147 = vector.shape_cast %146 : vector<2x128xf32> to vector<2x1x128xf32>
    %cst_115 = arith.constant 9.000000e+00 : f32
    %148 = vector.broadcast %cst_115 : f32 to vector<2x1x128xf32>
    %149 = arith.divf %147, %148 : vector<2x1x128xf32>
    %cst_116 = arith.constant 9.99999974E-6 : f32
    %150 = vector.broadcast %cst_116 : f32 to vector<2x1x128xf32>
    %151 = arith.addf %149, %150 : vector<2x1x128xf32>
    %152 = math.rsqrt %151 : vector<2x1x128xf32>
    %153 = vector.broadcast %152 : vector<2x1x128xf32> to vector<2x24x128xf32>
    %154 = arith.mulf %142, %153 : vector<2x24x128xf32>
    %cst_117 = arith.constant 0.000000e+00 : f32
    %155 = vector.broadcast %cst_117 : f32 to vector<2x24x128xf32>
    %156 = arith.cmpf ogt, %154, %155 : vector<2x24x128xf32>
    %cst_118 = arith.constant 2.000000e-01 : f32
    %157 = vector.broadcast %cst_118 : f32 to vector<2x24x128xf32>
    %158 = arith.mulf %157, %154 : vector<2x24x128xf32>
    %159 = arith.select %156, %154, %158 : vector<2x24x128xi1>, vector<2x24x128xf32>
    %160 = vector.extract_strided_slice %159 {offsets = [0, 0, 0], sizes = [2, 1, 128], strides = [1, 1, 1]} : vector<2x24x128xf32> to vector<2x1x128xf32>
    %c0_119 = arith.constant 0 : index
    %c2_120 = arith.constant 2 : index
    %c0_121 = arith.constant 0 : index
    %161 = vector.load %arg14[%c0_119, %c2_120, %c0_121] : memref<2x16x128xf32, #tpu.memory_space<vmem>>, vector<2x1x128xf32>
    tpu.vector_store %arg14[%c0_119, %c2_120, %c0_121], %160 {strides = array<i32>} : memref<2x16x128xf32, #tpu.memory_space<vmem>>, vector<2x1x128xf32>,
    %162 = vector.extract_strided_slice %159 {offsets = [0, 2, 0], sizes = [2, 1, 128], strides = [1, 1, 1]} : vector<2x24x128xf32> to vector<2x1x128xf32>
    %c0_122 = arith.constant 0 : index
    %c3_123 = arith.constant 3 : index
    %c0_124 = arith.constant 0 : index
    %163 = vector.load %arg14[%c0_122, %c3_123, %c0_124] : memref<2x16x128xf32, #tpu.memory_space<vmem>>, vector<2x1x128xf32>
    tpu.vector_store %arg14[%c0_122, %c3_123, %c0_124], %162 {strides = array<i32>} : memref<2x16x128xf32, #tpu.memory_space<vmem>>, vector<2x1x128xf32>,
    %164 = vector.extract_strided_slice %159 {offsets = [0, 4, 0], sizes = [2, 1, 128], strides = [1, 1, 1]} : vector<2x24x128xf32> to vector<2x1x128xf32>
    %c0_125 = arith.constant 0 : index
    %c4_126 = arith.constant 4 : index
    %c0_127 = arith.constant 0 : index
    %165 = vector.load %arg14[%c0_125, %c4_126, %c0_127] : memref<2x16x128xf32, #tpu.memory_space<vmem>>, vector<2x1x128xf32>
    tpu.vector_store %arg14[%c0_125, %c4_126, %c0_127], %164 {strides = array<i32>} : memref<2x16x128xf32, #tpu.memory_space<vmem>>, vector<2x1x128xf32>,
    %166 = vector.extract_strided_slice %159 {offsets = [0, 6, 0], sizes = [2, 1, 128], strides = [1, 1, 1]} : vector<2x24x128xf32> to vector<2x1x128xf32>
    %c0_128 = arith.constant 0 : index
    %c5_129 = arith.constant 5 : index
    %c0_130 = arith.constant 0 : index
    %167 = vector.load %arg14[%c0_128, %c5_129, %c0_130] : memref<2x16x128xf32, #tpu.memory_space<vmem>>, vector<2x1x128xf32>
    tpu.vector_store %arg14[%c0_128, %c5_129, %c0_130], %166 {strides = array<i32>} : memref<2x16x128xf32, #tpu.memory_space<vmem>>, vector<2x1x128xf32>,
    %168 = vector.extract_strided_slice %159 {offsets = [0, 8, 0], sizes = [2, 1, 128], strides = [1, 1, 1]} : vector<2x24x128xf32> to vector<2x1x128xf32>
    %c0_131 = arith.constant 0 : index
    %c6_132 = arith.constant 6 : index
    %c0_133 = arith.constant 0 : index
    %169 = vector.load %arg14[%c0_131, %c6_132, %c0_133] : memref<2x16x128xf32, #tpu.memory_space<vmem>>, vector<2x1x128xf32>
    tpu.vector_store %arg14[%c0_131, %c6_132, %c0_133], %168 {strides = array<i32>} : memref<2x16x128xf32, #tpu.memory_space<vmem>>, vector<2x1x128xf32>,
    %170 = vector.extract_strided_slice %159 {offsets = [0, 10, 0], sizes = [2, 1, 128], strides = [1, 1, 1]} : vector<2x24x128xf32> to vector<2x1x128xf32>
    %c0_134 = arith.constant 0 : index
    %c7_135 = arith.constant 7 : index
    %c0_136 = arith.constant 0 : index
    %171 = vector.load %arg14[%c0_134, %c7_135, %c0_136] : memref<2x16x128xf32, #tpu.memory_space<vmem>>, vector<2x1x128xf32>
    tpu.vector_store %arg14[%c0_134, %c7_135, %c0_136], %170 {strides = array<i32>} : memref<2x16x128xf32, #tpu.memory_space<vmem>>, vector<2x1x128xf32>,
    %172 = vector.extract_strided_slice %159 {offsets = [0, 12, 0], sizes = [2, 1, 128], strides = [1, 1, 1]} : vector<2x24x128xf32> to vector<2x1x128xf32>
    %c0_137 = arith.constant 0 : index
    %c8_138 = arith.constant 8 : index
    %c0_139 = arith.constant 0 : index
    %173 = vector.load %arg14[%c0_137, %c8_138, %c0_139] : memref<2x16x128xf32, #tpu.memory_space<vmem>>, vector<2x1x128xf32>
    tpu.vector_store %arg14[%c0_137, %c8_138, %c0_139], %172 {strides = array<i32>} : memref<2x16x128xf32, #tpu.memory_space<vmem>>, vector<2x1x128xf32>,
    %174 = vector.extract_strided_slice %159 {offsets = [0, 14, 0], sizes = [2, 1, 128], strides = [1, 1, 1]} : vector<2x24x128xf32> to vector<2x1x128xf32>
    %c0_140 = arith.constant 0 : index
    %c9_141 = arith.constant 9 : index
    %c0_142 = arith.constant 0 : index
    %175 = vector.load %arg14[%c0_140, %c9_141, %c0_142] : memref<2x16x128xf32, #tpu.memory_space<vmem>>, vector<2x1x128xf32>
    tpu.vector_store %arg14[%c0_140, %c9_141, %c0_142], %174 {strides = array<i32>} : memref<2x16x128xf32, #tpu.memory_space<vmem>>, vector<2x1x128xf32>,
    %176 = vector.extract_strided_slice %159 {offsets = [0, 16, 0], sizes = [2, 1, 128], strides = [1, 1, 1]} : vector<2x24x128xf32> to vector<2x1x128xf32>
    %c0_143 = arith.constant 0 : index
    %c10_144 = arith.constant 10 : index
    %c0_145 = arith.constant 0 : index
    %177 = vector.load %arg14[%c0_143, %c10_144, %c0_145] : memref<2x16x128xf32, #tpu.memory_space<vmem>>, vector<2x1x128xf32>
    tpu.vector_store %arg14[%c0_143, %c10_144, %c0_145], %176 {strides = array<i32>} : memref<2x16x128xf32, #tpu.memory_space<vmem>>, vector<2x1x128xf32>,
    %c0_146 = arith.constant 0 : index
    %c0_147 = arith.constant 0 : index
    %c0_148 = arith.constant 0 : index
    %178 = vector.load %arg14[%c0_146, %c0_147, %c0_148] : memref<2x16x128xf32, #tpu.memory_space<vmem>>, vector<2x16x128xf32>
    %179 = vector.shape_cast %178 : vector<2x16x128xf32> to vector<32x128xf32>
    %cst_149 = arith.constant 0.000000e+00 : f32
    %180 = vector.broadcast %cst_149 : f32 to vector<8x128xf32>
    %181 = tpu.concatenate %179, %180 in 0 : vector<32x128xf32>, vector<8x128xf32> -> vector<40x128xf32>
    %182 = arith.truncf %181 : vector<40x128xf32> to vector<40x128xbf16>
    %183 = vector.extract_strided_slice %182 {offsets = [0, 0], sizes = [32, 128], strides = [1, 1]} : vector<40x128xbf16> to vector<32x128xbf16>
    %c0_150 = arith.constant 0 : index
    %c0_151 = arith.constant 0 : index
    %c0_152 = arith.constant 0 : index
    %184 = vector.load %arg6[%c0_150, %c0_151, %c0_152] : memref<4x128x256xbf16, #tpu.memory_space<vmem>>, vector<1x128x256xbf16>
    %185 = vector.shape_cast %184 : vector<1x128x256xbf16> to vector<128x256xbf16>
    %cst_153 = arith.constant dense<0.000000e+00> : vector<32x256xf32>
    %186 = tpu.matmul %183, %185, %cst_153 {dimension_numbers = #tpu.dot_dimension_numbers<[1], [0], [0], [1], [0, 0, 1, 1], [], []>} : vector<32x128xbf16>, vector<128x256xbf16>, vector<32x256xf32> -> vector<32x256xf32>
    %187 = vector.extract_strided_slice %182 {offsets = [1, 0], sizes = [32, 128], strides = [1, 1]} : vector<40x128xbf16> to vector<32x128xbf16>
    %c1_154 = arith.constant 1 : index
    %c0_155 = arith.constant 0 : index
    %c0_156 = arith.constant 0 : index
    %188 = vector.load %arg6[%c1_154, %c0_155, %c0_156] : memref<4x128x256xbf16, #tpu.memory_space<vmem>>, vector<1x128x256xbf16>
    %189 = vector.shape_cast %188 : vector<1x128x256xbf16> to vector<128x256xbf16>
    %cst_157 = arith.constant dense<0.000000e+00> : vector<32x256xf32>
    %190 = tpu.matmul %187, %189, %cst_157 {dimension_numbers = #tpu.dot_dimension_numbers<[1], [0], [0], [1], [0, 0, 1, 1], [], []>} : vector<32x128xbf16>, vector<128x256xbf16>, vector<32x256xf32> -> vector<32x256xf32>
    %191 = arith.addf %186, %190 : vector<32x256xf32>
    %192 = vector.extract_strided_slice %182 {offsets = [2, 0], sizes = [32, 128], strides = [1, 1]} : vector<40x128xbf16> to vector<32x128xbf16>
    %c2_158 = arith.constant 2 : index
    %c0_159 = arith.constant 0 : index
    %c0_160 = arith.constant 0 : index
    %193 = vector.load %arg6[%c2_158, %c0_159, %c0_160] : memref<4x128x256xbf16, #tpu.memory_space<vmem>>, vector<1x128x256xbf16>
    %194 = vector.shape_cast %193 : vector<1x128x256xbf16> to vector<128x256xbf16>
    %cst_161 = arith.constant dense<0.000000e+00> : vector<32x256xf32>
    %195 = tpu.matmul %192, %194, %cst_161 {dimension_numbers = #tpu.dot_dimension_numbers<[1], [0], [0], [1], [0, 0, 1, 1], [], []>} : vector<32x128xbf16>, vector<128x256xbf16>, vector<32x256xf32> -> vector<32x256xf32>
    %196 = arith.addf %191, %195 : vector<32x256xf32>
    %197 = vector.extract_strided_slice %182 {offsets = [3, 0], sizes = [32, 128], strides = [1, 1]} : vector<40x128xbf16> to vector<32x128xbf16>
    %c3_162 = arith.constant 3 : index
    %c0_163 = arith.constant 0 : index
    %c0_164 = arith.constant 0 : index
    %198 = vector.load %arg6[%c3_162, %c0_163, %c0_164] : memref<4x128x256xbf16, #tpu.memory_space<vmem>>, vector<1x128x256xbf16>
    %199 = vector.shape_cast %198 : vector<1x128x256xbf16> to vector<128x256xbf16>
    %cst_165 = arith.constant dense<0.000000e+00> : vector<32x256xf32>
    %200 = tpu.matmul %197, %199, %cst_165 {dimension_numbers = #tpu.dot_dimension_numbers<[1], [0], [0], [1], [0, 0, 1, 1], [], []>} : vector<32x128xbf16>, vector<128x256xbf16>, vector<32x256xf32> -> vector<32x256xf32>
    %201 = arith.addf %196, %200 : vector<32x256xf32>
    %c0_166 = arith.constant 0 : index
    %c0_167 = arith.constant 0 : index
    %202 = vector.load %arg7[%c0_166, %c0_167] : memref<1x256xf32, #tpu.memory_space<vmem>>, vector<1x256xf32>
    %203 = vector.broadcast %202 : vector<1x256xf32> to vector<32x256xf32>
    %204 = arith.addf %201, %203 : vector<32x256xf32>
    %205 = vector.shape_cast %204 : vector<32x256xf32> to vector<2x16x256xf32>
    %206 = tpu.iota {dimensions = array<i32: 1>} : vector<1x16x1xi32>
    %c2_i32_168 = arith.constant 2 : i32
    %c0_i32_169 = arith.constant 0 : i32
    %207 = arith.cmpi eq, %c2_i32_168, %c0_i32_169 : i32
    %c1_i32_170 = arith.constant 1 : i32
    %208 = arith.select %207, %c1_i32_170, %c2_i32_168 : i32
    %209 = vector.broadcast %208 : i32 to vector<1x16x1xi32>
    %210 = arith.remsi %206, %209 : vector<1x16x1xi32>
    %c0_i32_171 = arith.constant 0 : i32
    %211 = vector.broadcast %c0_i32_171 : i32 to vector<1x16x1xi32>
    %212 = arith.cmpi ne, %210, %211 : vector<1x16x1xi32>
    %c0_i32_172 = arith.constant 0 : i32
    %213 = vector.broadcast %c0_i32_172 : i32 to vector<1x16x1xi32>
    %214 = arith.cmpi slt, %210, %213 : vector<1x16x1xi32>
    %c0_i32_173 = arith.constant 0 : i32
    %215 = arith.cmpi slt, %208, %c0_i32_173 : i32
    %216 = vector.broadcast %215 : i1 to vector<1x16x1xi1>
    %217 = vector.broadcast %216 : vector<1x16x1xi1> to vector<1x16x1xi1>
    %218 = arith.xori %214, %217 : vector<1x16x1xi1>
    %219 = arith.andi %218, %212 : vector<1x16x1xi1>
    %220 = vector.broadcast %208 : i32 to vector<1x16x1xi32>
    %221 = arith.addi %210, %220 : vector<1x16x1xi32>
    %222 = arith.select %219, %221, %210 : vector<1x16x1xi1>, vector<1x16x1xi32>
    %c0_i32_174 = arith.constant 0 : i32
    %223 = vector.broadcast %c0_i32_174 : i32 to vector<1x16x1xi32>
    %224 = arith.cmpi eq, %222, %223 : vector<1x16x1xi32>
    %c8_i32 = arith.constant 8 : i32
    %225 = vector.broadcast %c8_i32 : i32 to vector<1x16x1xi32>
    %226 = arith.cmpi sle, %206, %225 : vector<1x16x1xi32>
    %227 = arith.andi %224, %226 : vector<1x16x1xi1>
    %228 = arith.extui %227 : vector<1x16x1xi1> to vector<1x16x1xi32>
    %229 = arith.sitofp %228 : vector<1x16x1xi32> to vector<1x16x1xf32>
    %230 = vector.broadcast %229 : vector<1x16x1xf32> to vector<2x16x256xf32>
    %231 = arith.mulf %205, %230 : vector<2x16x256xf32>
    %cst_175 = arith.constant dense<0.000000e+00> : vector<2x256xf32>
    %232 = vector.multi_reduction <add>, %231, %cst_175 [1] : vector<2x16x256xf32> to vector<2x256xf32>
    %233 = vector.shape_cast %232 : vector<2x256xf32> to vector<2x1x256xf32>
    %cst_176 = arith.constant 5.000000e+00 : f32
    %234 = vector.broadcast %cst_176 : f32 to vector<2x1x256xf32>
    %235 = arith.divf %233, %234 : vector<2x1x256xf32>
    %236 = vector.broadcast %235 : vector<2x1x256xf32> to vector<2x16x256xf32>
    %237 = arith.subf %205, %236 : vector<2x16x256xf32>
    %238 = arith.mulf %237, %237 : vector<2x16x256xf32>
    %239 = vector.broadcast %229 : vector<1x16x1xf32> to vector<2x16x256xf32>
    %240 = arith.mulf %238, %239 : vector<2x16x256xf32>
    %cst_177 = arith.constant dense<0.000000e+00> : vector<2x256xf32>
    %241 = vector.multi_reduction <add>, %240, %cst_177 [1] : vector<2x16x256xf32> to vector<2x256xf32>
    %242 = vector.shape_cast %241 : vector<2x256xf32> to vector<2x1x256xf32>
    %cst_178 = arith.constant 5.000000e+00 : f32
    %243 = vector.broadcast %cst_178 : f32 to vector<2x1x256xf32>
    %244 = arith.divf %242, %243 : vector<2x1x256xf32>
    %cst_179 = arith.constant 9.99999974E-6 : f32
    %245 = vector.broadcast %cst_179 : f32 to vector<2x1x256xf32>
    %246 = arith.addf %244, %245 : vector<2x1x256xf32>
    %247 = math.rsqrt %246 : vector<2x1x256xf32>
    %248 = vector.broadcast %247 : vector<2x1x256xf32> to vector<2x16x256xf32>
    %249 = arith.mulf %237, %248 : vector<2x16x256xf32>
    %cst_180 = arith.constant 0.000000e+00 : f32
    %250 = vector.broadcast %cst_180 : f32 to vector<2x16x256xf32>
    %251 = arith.cmpf ogt, %249, %250 : vector<2x16x256xf32>
    %cst_181 = arith.constant 2.000000e-01 : f32
    %252 = vector.broadcast %cst_181 : f32 to vector<2x16x256xf32>
    %253 = arith.mulf %252, %249 : vector<2x16x256xf32>
    %254 = arith.select %251, %249, %253 : vector<2x16x256xi1>, vector<2x16x256xf32>
    %255 = vector.extract_strided_slice %254 {offsets = [0, 0, 0], sizes = [2, 1, 256], strides = [1, 1, 1]} : vector<2x16x256xf32> to vector<2x1x256xf32>
    %c0_182 = arith.constant 0 : index
    %c2_183 = arith.constant 2 : index
    %c0_184 = arith.constant 0 : index
    %256 = vector.load %arg15[%c0_182, %c2_183, %c0_184] : memref<2x16x256xf32, #tpu.memory_space<vmem>>, vector<2x1x256xf32>
    tpu.vector_store %arg15[%c0_182, %c2_183, %c0_184], %255 {strides = array<i32>} : memref<2x16x256xf32, #tpu.memory_space<vmem>>, vector<2x1x256xf32>,
    %257 = vector.extract_strided_slice %254 {offsets = [0, 2, 0], sizes = [2, 1, 256], strides = [1, 1, 1]} : vector<2x16x256xf32> to vector<2x1x256xf32>
    %c0_185 = arith.constant 0 : index
    %c3_186 = arith.constant 3 : index
    %c0_187 = arith.constant 0 : index
    %258 = vector.load %arg15[%c0_185, %c3_186, %c0_187] : memref<2x16x256xf32, #tpu.memory_space<vmem>>, vector<2x1x256xf32>
    tpu.vector_store %arg15[%c0_185, %c3_186, %c0_187], %257 {strides = array<i32>} : memref<2x16x256xf32, #tpu.memory_space<vmem>>, vector<2x1x256xf32>,
    %259 = vector.extract_strided_slice %254 {offsets = [0, 4, 0], sizes = [2, 1, 256], strides = [1, 1, 1]} : vector<2x16x256xf32> to vector<2x1x256xf32>
    %c0_188 = arith.constant 0 : index
    %c4_189 = arith.constant 4 : index
    %c0_190 = arith.constant 0 : index
    %260 = vector.load %arg15[%c0_188, %c4_189, %c0_190] : memref<2x16x256xf32, #tpu.memory_space<vmem>>, vector<2x1x256xf32>
    tpu.vector_store %arg15[%c0_188, %c4_189, %c0_190], %259 {strides = array<i32>} : memref<2x16x256xf32, #tpu.memory_space<vmem>>, vector<2x1x256xf32>,
    %261 = vector.extract_strided_slice %254 {offsets = [0, 6, 0], sizes = [2, 1, 256], strides = [1, 1, 1]} : vector<2x16x256xf32> to vector<2x1x256xf32>
    %c0_191 = arith.constant 0 : index
    %c5_192 = arith.constant 5 : index
    %c0_193 = arith.constant 0 : index
    %262 = vector.load %arg15[%c0_191, %c5_192, %c0_193] : memref<2x16x256xf32, #tpu.memory_space<vmem>>, vector<2x1x256xf32>
    tpu.vector_store %arg15[%c0_191, %c5_192, %c0_193], %261 {strides = array<i32>} : memref<2x16x256xf32, #tpu.memory_space<vmem>>, vector<2x1x256xf32>,
    %263 = vector.extract_strided_slice %254 {offsets = [0, 8, 0], sizes = [2, 1, 256], strides = [1, 1, 1]} : vector<2x16x256xf32> to vector<2x1x256xf32>
    %c0_194 = arith.constant 0 : index
    %c6_195 = arith.constant 6 : index
    %c0_196 = arith.constant 0 : index
    %264 = vector.load %arg15[%c0_194, %c6_195, %c0_196] : memref<2x16x256xf32, #tpu.memory_space<vmem>>, vector<2x1x256xf32>
    tpu.vector_store %arg15[%c0_194, %c6_195, %c0_196], %263 {strides = array<i32>} : memref<2x16x256xf32, #tpu.memory_space<vmem>>, vector<2x1x256xf32>,
    %c0_197 = arith.constant 0 : index
    %c0_198 = arith.constant 0 : index
    %c0_199 = arith.constant 0 : index
    %265 = vector.load %arg15[%c0_197, %c0_198, %c0_199] : memref<2x16x256xf32, #tpu.memory_space<vmem>>, vector<2x16x256xf32>
    %266 = vector.shape_cast %265 : vector<2x16x256xf32> to vector<32x256xf32>
    %cst_200 = arith.constant 0.000000e+00 : f32
    %267 = vector.broadcast %cst_200 : f32 to vector<8x256xf32>
    %268 = tpu.concatenate %266, %267 in 0 : vector<32x256xf32>, vector<8x256xf32> -> vector<40x256xf32>
    %269 = arith.truncf %268 : vector<40x256xf32> to vector<40x256xbf16>
    %270 = vector.extract_strided_slice %269 {offsets = [0, 0], sizes = [32, 256], strides = [1, 1]} : vector<40x256xbf16> to vector<32x256xbf16>
    %c0_201 = arith.constant 0 : index
    %c0_202 = arith.constant 0 : index
    %c0_203 = arith.constant 0 : index
    %271 = vector.load %arg8[%c0_201, %c0_202, %c0_203] : memref<4x256x512xbf16, #tpu.memory_space<vmem>>, vector<1x256x512xbf16>
    %272 = vector.shape_cast %271 : vector<1x256x512xbf16> to vector<256x512xbf16>
    %cst_204 = arith.constant dense<0.000000e+00> : vector<32x512xf32>
    %273 = tpu.matmul %270, %272, %cst_204 {dimension_numbers = #tpu.dot_dimension_numbers<[1], [0], [0], [1], [0, 0, 1, 1], [], []>} : vector<32x256xbf16>, vector<256x512xbf16>, vector<32x512xf32> -> vector<32x512xf32>
    %274 = vector.extract_strided_slice %269 {offsets = [1, 0], sizes = [32, 256], strides = [1, 1]} : vector<40x256xbf16> to vector<32x256xbf16>
    %c1_205 = arith.constant 1 : index
    %c0_206 = arith.constant 0 : index
    %c0_207 = arith.constant 0 : index
    %275 = vector.load %arg8[%c1_205, %c0_206, %c0_207] : memref<4x256x512xbf16, #tpu.memory_space<vmem>>, vector<1x256x512xbf16>
    %276 = vector.shape_cast %275 : vector<1x256x512xbf16> to vector<256x512xbf16>
    %cst_208 = arith.constant dense<0.000000e+00> : vector<32x512xf32>
    %277 = tpu.matmul %274, %276, %cst_208 {dimension_numbers = #tpu.dot_dimension_numbers<[1], [0], [0], [1], [0, 0, 1, 1], [], []>} : vector<32x256xbf16>, vector<256x512xbf16>, vector<32x512xf32> -> vector<32x512xf32>
    %278 = arith.addf %273, %277 : vector<32x512xf32>
    %279 = vector.extract_strided_slice %269 {offsets = [2, 0], sizes = [32, 256], strides = [1, 1]} : vector<40x256xbf16> to vector<32x256xbf16>
    %c2_209 = arith.constant 2 : index
    %c0_210 = arith.constant 0 : index
    %c0_211 = arith.constant 0 : index
    %280 = vector.load %arg8[%c2_209, %c0_210, %c0_211] : memref<4x256x512xbf16, #tpu.memory_space<vmem>>, vector<1x256x512xbf16>
    %281 = vector.shape_cast %280 : vector<1x256x512xbf16> to vector<256x512xbf16>
    %cst_212 = arith.constant dense<0.000000e+00> : vector<32x512xf32>
    %282 = tpu.matmul %279, %281, %cst_212 {dimension_numbers = #tpu.dot_dimension_numbers<[1], [0], [0], [1], [0, 0, 1, 1], [], []>} : vector<32x256xbf16>, vector<256x512xbf16>, vector<32x512xf32> -> vector<32x512xf32>
    %283 = arith.addf %278, %282 : vector<32x512xf32>
    %284 = vector.extract_strided_slice %269 {offsets = [3, 0], sizes = [32, 256], strides = [1, 1]} : vector<40x256xbf16> to vector<32x256xbf16>
    %c3_213 = arith.constant 3 : index
    %c0_214 = arith.constant 0 : index
    %c0_215 = arith.constant 0 : index
    %285 = vector.load %arg8[%c3_213, %c0_214, %c0_215] : memref<4x256x512xbf16, #tpu.memory_space<vmem>>, vector<1x256x512xbf16>
    %286 = vector.shape_cast %285 : vector<1x256x512xbf16> to vector<256x512xbf16>
    %cst_216 = arith.constant dense<0.000000e+00> : vector<32x512xf32>
    %287 = tpu.matmul %284, %286, %cst_216 {dimension_numbers = #tpu.dot_dimension_numbers<[1], [0], [0], [1], [0, 0, 1, 1], [], []>} : vector<32x256xbf16>, vector<256x512xbf16>, vector<32x512xf32> -> vector<32x512xf32>
    %288 = arith.addf %283, %287 : vector<32x512xf32>
    %c0_217 = arith.constant 0 : index
    %c0_218 = arith.constant 0 : index
    %289 = vector.load %arg9[%c0_217, %c0_218] : memref<1x512xf32, #tpu.memory_space<vmem>>, vector<1x512xf32>
    %290 = vector.broadcast %289 : vector<1x512xf32> to vector<32x512xf32>
    %291 = arith.addf %288, %290 : vector<32x512xf32>
    %292 = vector.shape_cast %291 : vector<32x512xf32> to vector<2x16x512xf32>
    %293 = vector.extract_strided_slice %292 {offsets = [0, 0, 0], sizes = [2, 6, 512], strides = [1, 1, 1]} : vector<2x16x512xf32> to vector<2x6x512xf32>
    %cst_219 = arith.constant dense<0.000000e+00> : vector<2x512xf32>
    %294 = vector.multi_reduction <add>, %293, %cst_219 [1] : vector<2x6x512xf32> to vector<2x512xf32>
    %295 = vector.shape_cast %294 : vector<2x512xf32> to vector<2x1x512xf32>
    %cst_220 = arith.constant 6.000000e+00 : f32
    %296 = vector.broadcast %cst_220 : f32 to vector<2x1x512xf32>
    %297 = arith.divf %295, %296 : vector<2x1x512xf32>
    %298 = vector.broadcast %297 : vector<2x1x512xf32> to vector<2x6x512xf32>
    %299 = arith.subf %293, %298 : vector<2x6x512xf32>
    %300 = arith.mulf %299, %299 : vector<2x6x512xf32>
    %cst_221 = arith.constant dense<0.000000e+00> : vector<2x512xf32>
    %301 = vector.multi_reduction <add>, %300, %cst_221 [1] : vector<2x6x512xf32> to vector<2x512xf32>
    %302 = vector.shape_cast %301 : vector<2x512xf32> to vector<2x1x512xf32>
    %cst_222 = arith.constant 6.000000e+00 : f32
    %303 = vector.broadcast %cst_222 : f32 to vector<2x1x512xf32>
    %304 = arith.divf %302, %303 : vector<2x1x512xf32>
    %305 = vector.broadcast %297 : vector<2x1x512xf32> to vector<2x6x512xf32>
    %306 = arith.subf %293, %305 : vector<2x6x512xf32>
    %cst_223 = arith.constant 9.99999974E-6 : f32
    %307 = vector.broadcast %cst_223 : f32 to vector<2x1x512xf32>
    %308 = arith.addf %304, %307 : vector<2x1x512xf32>
    %309 = math.rsqrt %308 : vector<2x1x512xf32>
    %310 = vector.broadcast %309 : vector<2x1x512xf32> to vector<2x6x512xf32>
    %311 = arith.mulf %306, %310 : vector<2x6x512xf32>
    %cst_224 = arith.constant 0.000000e+00 : f32
    %312 = vector.broadcast %cst_224 : f32 to vector<2x6x512xf32>
    %313 = arith.cmpf ogt, %311, %312 : vector<2x6x512xf32>
    %cst_225 = arith.constant 2.000000e-01 : f32
    %314 = vector.broadcast %cst_225 : f32 to vector<2x6x512xf32>
    %315 = arith.mulf %314, %311 : vector<2x6x512xf32>
    %316 = arith.select %313, %311, %315 : vector<2x6x512xi1>, vector<2x6x512xf32>
    %c0_226 = arith.constant 0 : index
    %c2_227 = arith.constant 2 : index
    %c0_228 = arith.constant 0 : index
    %317 = vector.load %arg16[%c0_226, %c2_227, %c0_228] : memref<2x16x512xf32, #tpu.memory_space<vmem>>, vector<2x6x512xf32>
    tpu.vector_store %arg16[%c0_226, %c2_227, %c0_228], %316 {strides = array<i32>} : memref<2x16x512xf32, #tpu.memory_space<vmem>>, vector<2x6x512xf32>,
    %c0_229 = arith.constant 0 : index
    %c0_230 = arith.constant 0 : index
    %c0_231 = arith.constant 0 : index
    %318 = vector.load %arg16[%c0_229, %c0_230, %c0_231] : memref<2x16x512xf32, #tpu.memory_space<vmem>>, vector<2x16x512xf32>
    %319 = vector.shape_cast %318 : vector<2x16x512xf32> to vector<32x512xf32>
    %cst_232 = arith.constant 0.000000e+00 : f32
    %320 = vector.broadcast %cst_232 : f32 to vector<8x512xf32>
    %321 = tpu.concatenate %319, %320 in 0 : vector<32x512xf32>, vector<8x512xf32> -> vector<40x512xf32>
    %322 = arith.truncf %321 : vector<40x512xf32> to vector<40x512xbf16>
    %323 = vector.extract_strided_slice %322 {offsets = [0, 0], sizes = [32, 512], strides = [1, 1]} : vector<40x512xbf16> to vector<32x512xbf16>
    %c0_233 = arith.constant 0 : index
    %c0_234 = arith.constant 0 : index
    %c0_235 = arith.constant 0 : index
    %324 = vector.load %arg10[%c0_233, %c0_234, %c0_235] : memref<4x512x128xbf16, #tpu.memory_space<vmem>>, vector<1x512x128xbf16>
    %325 = vector.shape_cast %324 : vector<1x512x128xbf16> to vector<512x128xbf16>
    %cst_236 = arith.constant dense<0.000000e+00> : vector<32x128xf32>
    %326 = tpu.matmul %323, %325, %cst_236 {dimension_numbers = #tpu.dot_dimension_numbers<[1], [0], [0], [1], [0, 0, 1, 1], [], []>} : vector<32x512xbf16>, vector<512x128xbf16>, vector<32x128xf32> -> vector<32x128xf32>
    %327 = vector.extract_strided_slice %322 {offsets = [1, 0], sizes = [32, 512], strides = [1, 1]} : vector<40x512xbf16> to vector<32x512xbf16>
    %c1_237 = arith.constant 1 : index
    %c0_238 = arith.constant 0 : index
    %c0_239 = arith.constant 0 : index
    %328 = vector.load %arg10[%c1_237, %c0_238, %c0_239] : memref<4x512x128xbf16, #tpu.memory_space<vmem>>, vector<1x512x128xbf16>
    %329 = vector.shape_cast %328 : vector<1x512x128xbf16> to vector<512x128xbf16>
    %cst_240 = arith.constant dense<0.000000e+00> : vector<32x128xf32>
    %330 = tpu.matmul %327, %329, %cst_240 {dimension_numbers = #tpu.dot_dimension_numbers<[1], [0], [0], [1], [0, 0, 1, 1], [], []>} : vector<32x512xbf16>, vector<512x128xbf16>, vector<32x128xf32> -> vector<32x128xf32>
    %331 = arith.addf %326, %330 : vector<32x128xf32>
    %332 = vector.extract_strided_slice %322 {offsets = [2, 0], sizes = [32, 512], strides = [1, 1]} : vector<40x512xbf16> to vector<32x512xbf16>
    %c2_241 = arith.constant 2 : index
    %c0_242 = arith.constant 0 : index
    %c0_243 = arith.constant 0 : index
    %333 = vector.load %arg10[%c2_241, %c0_242, %c0_243] : memref<4x512x128xbf16, #tpu.memory_space<vmem>>, vector<1x512x128xbf16>
    %334 = vector.shape_cast %333 : vector<1x512x128xbf16> to vector<512x128xbf16>
    %cst_244 = arith.constant dense<0.000000e+00> : vector<32x128xf32>
    %335 = tpu.matmul %332, %334, %cst_244 {dimension_numbers = #tpu.dot_dimension_numbers<[1], [0], [0], [1], [0, 0, 1, 1], [], []>} : vector<32x512xbf16>, vector<512x128xbf16>, vector<32x128xf32> -> vector<32x128xf32>
    %336 = arith.addf %331, %335 : vector<32x128xf32>
    %337 = vector.extract_strided_slice %322 {offsets = [3, 0], sizes = [32, 512], strides = [1, 1]} : vector<40x512xbf16> to vector<32x512xbf16>
    %c3_245 = arith.constant 3 : index
    %c0_246 = arith.constant 0 : index
    %c0_247 = arith.constant 0 : index
    %338 = vector.load %arg10[%c3_245, %c0_246, %c0_247] : memref<4x512x128xbf16, #tpu.memory_space<vmem>>, vector<1x512x128xbf16>
    %339 = vector.shape_cast %338 : vector<1x512x128xbf16> to vector<512x128xbf16>
    %cst_248 = arith.constant dense<0.000000e+00> : vector<32x128xf32>
    %340 = tpu.matmul %337, %339, %cst_248 {dimension_numbers = #tpu.dot_dimension_numbers<[1], [0], [0], [1], [0, 0, 1, 1], [], []>} : vector<32x512xbf16>, vector<512x128xbf16>, vector<32x128xf32> -> vector<32x128xf32>
    %341 = arith.addf %336, %340 : vector<32x128xf32>
    %c0_249 = arith.constant 0 : index
    %c0_250 = arith.constant 0 : index
    %342 = vector.load %arg11[%c0_249, %c0_250] : memref<1x128xf32, #tpu.memory_space<vmem>>, vector<1x128xf32>
    %343 = vector.broadcast %342 : vector<1x128xf32> to vector<32x128xf32>
    %344 = arith.addf %341, %343 : vector<32x128xf32>
    %345 = vector.shape_cast %344 : vector<32x128xf32> to vector<2x16x128xf32>
    %346 = vector.extract_strided_slice %345 {offsets = [0, 0, 0], sizes = [2, 7, 128], strides = [1, 1, 1]} : vector<2x16x128xf32> to vector<2x7x128xf32>
    %347 = vector.extract_strided_slice %346 {offsets = [0, 0, 0], sizes = [2, 7, 1], strides = [1, 1, 1]} : vector<2x7x128xf32> to vector<2x7x1xf32>
    %c0_251 = arith.constant 0 : index
    %c0_252 = arith.constant 0 : index
    %c0_253 = arith.constant 0 : index
    %348 = vector.load %arg12[%c0_251, %c0_252, %c0_253] : memref<2x7x1xf32, #tpu.memory_space<vmem>>, vector<2x7x1xf32>
    tpu.vector_store %arg12[%c0_251, %c0_252, %c0_253], %347 {strides = array<i32>} : memref<2x7x1xf32, #tpu.memory_space<vmem>>, vector<2x7x1xf32>,
    return
  }
  func.func @transform_0(%arg0: i32) -> (i32, i32, i32) {
    %c0_i32 = arith.constant 0 : i32
    %c0_i32_0 = arith.constant 0 : i32
    %c0_i32_1 = arith.constant 0 : i32
    return %arg0, %c0_i32, %c0_i32_0 : i32, i32, i32
  }
  func.func @transform_1(%arg0: i32) -> (i32, i32, i32) {
    %c0_i32 = arith.constant 0 : i32
    %c0_i32_0 = arith.constant 0 : i32
    %c0_i32_1 = arith.constant 0 : i32
    %c0_i32_2 = arith.constant 0 : i32
    return %c0_i32, %c0_i32_0, %c0_i32_1 : i32, i32, i32
  }
  func.func @transform_2(%arg0: i32) -> (i32, i32) {
    %c0_i32 = arith.constant 0 : i32
    %c0_i32_0 = arith.constant 0 : i32
    %c0_i32_1 = arith.constant 0 : i32
    return %c0_i32, %c0_i32_0 : i32, i32
  }
  func.func @transform_3(%arg0: i32) -> (i32, i32, i32) {
    %c0_i32 = arith.constant 0 : i32
    %c0_i32_0 = arith.constant 0 : i32
    %c0_i32_1 = arith.constant 0 : i32
    %c0_i32_2 = arith.constant 0 : i32
    return %c0_i32, %c0_i32_0, %c0_i32_1 : i32, i32, i32
  }
  func.func @transform_4(%arg0: i32) -> (i32, i32) {
    %c0_i32 = arith.constant 0 : i32
    %c0_i32_0 = arith.constant 0 : i32
    %c0_i32_1 = arith.constant 0 : i32
    return %c0_i32, %c0_i32_0 : i32, i32
  }
  func.func @transform_5(%arg0: i32) -> (i32, i32, i32) {
    %c0_i32 = arith.constant 0 : i32
    %c0_i32_0 = arith.constant 0 : i32
    %c0_i32_1 = arith.constant 0 : i32
    %c0_i32_2 = arith.constant 0 : i32
    return %c0_i32, %c0_i32_0, %c0_i32_1 : i32, i32, i32
  }
  func.func @transform_6(%arg0: i32) -> (i32, i32) {
    %c0_i32 = arith.constant 0 : i32
    %c0_i32_0 = arith.constant 0 : i32
    %c0_i32_1 = arith.constant 0 : i32
    return %c0_i32, %c0_i32_0 : i32, i32
  }
  func.func @transform_7(%arg0: i32) -> (i32, i32, i32) {
    %c0_i32 = arith.constant 0 : i32
    %c0_i32_0 = arith.constant 0 : i32
    %c0_i32_1 = arith.constant 0 : i32
    %c0_i32_2 = arith.constant 0 : i32
    return %c0_i32, %c0_i32_0, %c0_i32_1 : i32, i32, i32
  }
  func.func @transform_8(%arg0: i32) -> (i32, i32) {
    %c0_i32 = arith.constant 0 : i32
    %c0_i32_0 = arith.constant 0 : i32
    %c0_i32_1 = arith.constant 0 : i32
    return %c0_i32, %c0_i32_0 : i32, i32
  }
  func.func @transform_9(%arg0: i32) -> (i32, i32, i32) {
    %c0_i32 = arith.constant 0 : i32
    %c0_i32_0 = arith.constant 0 : i32
    %c0_i32_1 = arith.constant 0 : i32
    %c0_i32_2 = arith.constant 0 : i32
    return %c0_i32, %c0_i32_0, %c0_i32_1 : i32, i32, i32
  }
  func.func @transform_10(%arg0: i32) -> (i32, i32) {
    %c0_i32 = arith.constant 0 : i32
    %c0_i32_0 = arith.constant 0 : i32
    %c0_i32_1 = arith.constant 0 : i32
    return %c0_i32, %c0_i32_0 : i32, i32
  }
  func.func @transform_11(%arg0: i32) -> (i32, i32, i32) {
    %c0_i32 = arith.constant 0 : i32
    %c0_i32_0 = arith.constant 0 : i32
    %c0_i32_1 = arith.constant 0 : i32
    return %arg0, %c0_i32, %c0_i32_0 : i32, i32, i32
  }
}

</mosaic_0001>

<llo_original>
// kernel: tpu_custom_call.1
$region0: #{tpu_custom_call.1}
  #allocation0 [shape = 'u32[]', space=smem, size = 0x4, offset = 0x4, fixed_abs, tag = 'smem constant byte address 0x4 - core index']
  #allocation1 [shape = 'u32[144,128]{1,0:T(1,128)}', space=vmem, size = 0x12000, scoped, tag = 'internal scratch']
  #allocation2 [shape = 'f32[2,24,128]{2,1,0:T(8,128)}', space=vmem, size = 0x6000, scoped, tag = 'scratch operand']
  #allocation3 [shape = 'f32[2,16,128]{2,1,0:T(8,128)}', space=vmem, size = 0x4000, scoped, tag = 'scratch operand']
  #allocation4 [shape = 'f32[2,16,256]{2,1,0:T(8,128)}', space=vmem, size = 0x8000, scoped, tag = 'scratch operand']
  #allocation5 [shape = 'f32[2,16,512]{2,1,0:T(8,128)}', space=vmem, size = 0x10000, scoped, tag = 'scratch operand']
  %s0 = inlined_call_operand.hbm [shape: f32[4,40,128], index: 0, kind: input, shape index: {}]
  %s1 = inlined_call_operand.hbm [shape: bf16[4,128,128], index: 1, kind: input, shape index: {}]
  %s2 = inlined_call_operand.vmem [shape: f32[1,128], index: 2, kind: input, shape index: {}]
  %s3 = inlined_call_operand.hbm [shape: bf16[4,128,128], index: 3, kind: input, shape index: {}]
  %s4 = inlined_call_operand.vmem [shape: f32[1,128], index: 4, kind: input, shape index: {}]
  %s5 = inlined_call_operand.hbm [shape: bf16[4,128,256], index: 5, kind: input, shape index: {}]
  %s6 = inlined_call_operand.vmem [shape: f32[1,256], index: 6, kind: input, shape index: {}]
  %s7 = inlined_call_operand.hbm [shape: bf16[4,256,512], index: 7, kind: input, shape index: {}]
  %s8 = inlined_call_operand.vmem [shape: f32[1,512], index: 8, kind: input, shape index: {}]
  %s9 = inlined_call_operand.hbm [shape: bf16[4,512,128], index: 9, kind: input, shape index: {}]
  %s10 = inlined_call_operand.vmem [shape: f32[1,128], index: 10, kind: input, shape index: {}]
  %s11 = inlined_call_operand.vmem [shape: f32[4,7,1], index: 11, kind: output, shape index: {}]
  %s12 = sld [smem:[#allocation0]]
  $region101: #{tpu_custom_call.1} parent=0
    _
  %s14 = ssub.s32 1, %s12
  %s15 = scalar_select 0, %s14, %s12
  $region1: #{tpu_custom_call.1} parent=0
    #allocation6 [shape = 'u8[81920]{0}', space=vmem, size = 0x14000, scoped, tag = 'input window, operand 0']
    #allocation7 [shape = 's32[2]{0}', space=sflag, size = 0x8, scoped, tag = 'scoped memory for tpu_custom_call.1']
    #allocation8 [shape = 'u8[131072]{0}', space=vmem, size = 0x20000, scoped, tag = 'input window, operand 1, single buffered']
    #allocation9 [shape = 's32[1]{0}', space=sflag, size = 0x4, scoped, tag = 'scoped memory for tpu_custom_call.1']
    #allocation10 [shape = 'u8[131072]{0}', space=vmem, size = 0x20000, scoped, tag = 'input window, operand 3, single buffered']
    #allocation11 [shape = 'u8[262144]{0}', space=vmem, size = 0x40000, scoped, tag = 'input window, operand 5, single buffered']
    #allocation12 [shape = 's32[1]{0}', space=sflag, size = 0x4, scoped, tag = 'scoped memory for tpu_custom_call.1']
    #allocation13 [shape = 'u8[1048576]{0}', space=vmem, size = 0x100000, scoped, tag = 'input window, operand 7, single buffered']
    #allocation14 [shape = 'u8[524288]{0}', space=vmem, size = 0x80000, scoped, tag = 'input window, operand 9, single buffered']
    #allocation15 [shape = 's32[1]{0}', space=sflag, size = 0x4, scoped, tag = 'scoped memory for tpu_custom_call.1']
    %16 = vsyncpa [#allocation7], 0
    %s17 = scalar_lea.sflag [#allocation7], 1
    %18 = vsyncpa %s17, 0
    %19 = vsyncpa [#allocation9], 0
    %20 = vsyncpa [#allocation12], 0
    %21 = vsyncpa [#allocation15], 0
    loop: start=0, step=1, limit=4
    $region2: #{tpu_custom_call.1} parent=1 // loop_pre_header
      _
    $region3: #{tpu_custom_call.1} parent=1 // loop_header
      %s23 = sphi 0, %s27
      %p24 = scmp.ge.s32.totalorder %s23, 4
      %s33 = sphi 0, %s35
      %s36 = sphi 0, %s33
      %s37 = sphi 0, %s36
      %s53 = sphi 0, %s37
      %s57 = sphi 0, %s57
      %s59 = sphi 0, %s57
      %s60 = sphi 0, %s59
      %s74 = sphi 0, %s60
      %s78 = sphi 0, %s78
      %s80 = sphi 0, %s78
      %s81 = sphi 0, %s80
      %s95 = sphi 0, %s81
      %s99 = sphi 0, %s99
      %s101 = sphi 0, %s99
      %s102 = sphi 0, %s101
      %s116 = sphi 0, %s102
      %s120 = sphi 0, %s120
      %s122 = sphi 0, %s120
      %s123 = sphi 0, %s122
      %s137 = sphi 0, %s123
      %s141 = sphi 0, %s141
      %s143 = sphi 0, %s141
      %s144 = sphi 0, %s143
      %s158 = sphi 0, %s144
      %s162 = sphi 0, %s162
      %s164 = sphi 0, %s162
      %s165 = sphi 0, %s164
      %s179 = sphi 0, %s165
      %s183 = sphi 0, %s183
      %s185 = sphi 0, %s183
      %s186 = sphi 0, %s185
      %s200 = sphi 0, %s186
      %s204 = sphi 0, %s204
      %s206 = sphi 0, %s204
      %s207 = sphi 0, %s206
      %s221 = sphi 0, %s207
      %s225 = sphi 0, %s225
      %s227 = sphi 0, %s225
      %s228 = sphi 0, %s227
      %s242 = sphi 0, %s228
      %s246 = sphi 0, %s246
      %s248 = sphi 0, %s246
      %s249 = sphi 0, %s248
      %s263 = sphi 0, %s249
      %s269 = sphi 0, %s271
      %s272 = sphi 0, %s269
      %s273 = sphi 0, %s272
      %s289 = sphi 0, %s273
    $region4: #{tpu_custom_call.1} parent=1 // loop_header_branch
      %26 = sbr.rel (%p24) target = $region8
    $region5: #{tpu_custom_call.1} parent=1 // loop_body
      %s28 = ssub.s32 %s23, 1
      %s29 = ssub.s32 %s23, 2
      %s30 = sadd.s32 %s23, 1
      %s31 = ssub.s32 %s23, %s30
      %p32 = scmp.eq.s32.totalorder %s31, 0
      %s34 = sadd.s32 %s33, 1
      %s35 = scalar_select %p32, %s33, %s34
      %p38 = pneg %p32
      %p39 = scmp.eq.s32.totalorder %s23, 1
      %p40 = por %p38, %p39
      %p41 = scmp.ne.s32.totalorder %s33, %s36
      %p42 = scmp.eq.s32.totalorder %s23, 0
      %p43 = por %p41, %p42
      %p44 = scmp.ne.s32.totalorder %s33, %s36
      %p45 = scmp.eq.s32.totalorder %s28, 1
      %p46 = por %p44, %p45
      %p47 = scmp.ne.s32.totalorder %s36, %s37
      %p48 = scmp.eq.s32.totalorder %s28, 0
      %p49 = por %p47, %p48
      %p50 = scmp.ne.s32.totalorder %s36, %s37
      %p51 = scmp.eq.s32.totalorder %s29, 1
      %p52 = por %p50, %p51
      %p54 = scmp.ne.s32.totalorder %s37, %s53
      %p55 = scmp.eq.s32.totalorder %s29, 0
      %p56 = por %p54, %p55
      %s58 = sadd.s32 %s57, 1
      %p61 = scmp.eq.s32.totalorder %s23, 1
      %p62 = scmp.ne.s32.totalorder %s57, %s59
      %p63 = scmp.eq.s32.totalorder %s23, 0
      %p64 = por %p62, %p63
      %p65 = scmp.ne.s32.totalorder %s57, %s59
      %p66 = scmp.eq.s32.totalorder %s28, 1
      %p67 = por %p65, %p66
      %p68 = scmp.ne.s32.totalorder %s59, %s60
      %p69 = scmp.eq.s32.totalorder %s28, 0
      %p70 = por %p68, %p69
      %p71 = scmp.ne.s32.totalorder %s59, %s60
      %p72 = scmp.eq.s32.totalorder %s29, 1
      %p73 = por %p71, %p72
      %p75 = scmp.ne.s32.totalorder %s60, %s74
      %p76 = scmp.eq.s32.totalorder %s29, 0
      %p77 = por %p75, %p76
      %s79 = sadd.s32 %s78, 1
      %p82 = scmp.eq.s32.totalorder %s23, 1
      %p83 = scmp.ne.s32.totalorder %s78, %s80
      %p84 = scmp.eq.s32.totalorder %s23, 0
      %p85 = por %p83, %p84
      %p86 = scmp.ne.s32.totalorder %s78, %s80
      %p87 = scmp.eq.s32.totalorder %s28, 1
      %p88 = por %p86, %p87
      %p89 = scmp.ne.s32.totalorder %s80, %s81
      %p90 = scmp.eq.s32.totalorder %s28, 0
      %p91 = por %p89, %p90
      %p92 = scmp.ne.s32.totalorder %s80, %s81
      %p93 = scmp.eq.s32.totalorder %s29, 1
      %p94 = por %p92, %p93
      %p96 = scmp.ne.s32.totalorder %s81, %s95
      %p97 = scmp.eq.s32.totalorder %s29, 0
      %p98 = por %p96, %p97
      %s100 = sadd.s32 %s99, 1
      %p103 = scmp.eq.s32.totalorder %s23, 1
      %p104 = scmp.ne.s32.totalorder %s99, %s101
      %p105 = scmp.eq.s32.totalorder %s23, 0
      %p106 = por %p104, %p105
      %p107 = scmp.ne.s32.totalorder %s99, %s101
      %p108 = scmp.eq.s32.totalorder %s28, 1
      %p109 = por %p107, %p108
      %p110 = scmp.ne.s32.totalorder %s101, %s102
      %p111 = scmp.eq.s32.totalorder %s28, 0
      %p112 = por %p110, %p111
      %p113 = scmp.ne.s32.totalorder %s101, %s102
      %p114 = scmp.eq.s32.totalorder %s29, 1
      %p115 = por %p113, %p114
      %p117 = scmp.ne.s32.totalorder %s102, %s116
      %p118 = scmp.eq.s32.totalorder %s29, 0
      %p119 = por %p117, %p118
      %s121 = sadd.s32 %s120, 1
      %p124 = scmp.eq.s32.totalorder %s23, 1
      %p125 = scmp.ne.s32.totalorder %s120, %s122
      %p126 = scmp.eq.s32.totalorder %s23, 0
      %p127 = por %p125, %p126
      %p128 = scmp.ne.s32.totalorder %s120, %s122
      %p129 = scmp.eq.s32.totalorder %s28, 1
      %p130 = por %p128, %p129
      %p131 = scmp.ne.s32.totalorder %s122, %s123
      %p132 = scmp.eq.s32.totalorder %s28, 0
      %p133 = por %p131, %p132
      %p134 = scmp.ne.s32.totalorder %s122, %s123
      %p135 = scmp.eq.s32.totalorder %s29, 1
      %p136 = por %p134, %p135
      %p138 = scmp.ne.s32.totalorder %s123, %s137
      %p139 = scmp.eq.s32.totalorder %s29, 0
      %p140 = por %p138, %p139
      %s142 = sadd.s32 %s141, 1
      %p145 = scmp.eq.s32.totalorder %s23, 1
      %p146 = scmp.ne.s32.totalorder %s141, %s143
      %p147 = scmp.eq.s32.totalorder %s23, 0
      %p148 = por %p146, %p147
      %p149 = scmp.ne.s32.totalorder %s141, %s143
      %p150 = scmp.eq.s32.totalorder %s28, 1
      %p151 = por %p149, %p150
      %p152 = scmp.ne.s32.totalorder %s143, %s144
      %p153 = scmp.eq.s32.totalorder %s28, 0
      %p154 = por %p152, %p153
      %p155 = scmp.ne.s32.totalorder %s143, %s144
      %p156 = scmp.eq.s32.totalorder %s29, 1
      %p157 = por %p155, %p156
      %p159 = scmp.ne.s32.totalorder %s144, %s158
      %p160 = scmp.eq.s32.totalorder %s29, 0
      %p161 = por %p159, %p160
      %s163 = sadd.s32 %s162, 1
      %p166 = scmp.eq.s32.totalorder %s23, 1
      %p167 = scmp.ne.s32.totalorder %s162, %s164
      %p168 = scmp.eq.s32.totalorder %s23, 0
      %p169 = por %p167, %p168
      %p170 = scmp.ne.s32.totalorder %s162, %s164
      %p171 = scmp.eq.s32.totalorder %s28, 1
      %p172 = por %p170, %p171
      %p173 = scmp.ne.s32.totalorder %s164, %s165
      %p174 = scmp.eq.s32.totalorder %s28, 0
      %p175 = por %p173, %p174
      %p176 = scmp.ne.s32.totalorder %s164, %s165
      %p177 = scmp.eq.s32.totalorder %s29, 1
      %p178 = por %p176, %p177
      %p180 = scmp.ne.s32.totalorder %s165, %s179
      %p181 = scmp.eq.s32.totalorder %s29, 0
      %p182 = por %p180, %p181
      %s184 = sadd.s32 %s183, 1
      %p187 = scmp.eq.s32.totalorder %s23, 1
      %p188 = scmp.ne.s32.totalorder %s183, %s185
      %p189 = scmp.eq.s32.totalorder %s23, 0
      %p190 = por %p188, %p189
      %p191 = scmp.ne.s32.totalorder %s183, %s185
      %p192 = scmp.eq.s32.totalorder %s28, 1
      %p193 = por %p191, %p192
      %p194 = scmp.ne.s32.totalorder %s185, %s186
      %p195 = scmp.eq.s32.totalorder %s28, 0
      %p196 = por %p194, %p195
      %p197 = scmp.ne.s32.totalorder %s185, %s186
      %p198 = scmp.eq.s32.totalorder %s29, 1
      %p199 = por %p197, %p198
      %p201 = scmp.ne.s32.totalorder %s186, %s200
      %p202 = scmp.eq.s32.totalorder %s29, 0
      %p203 = por %p201, %p202
      %s205 = sadd.s32 %s204, 1
      %p208 = scmp.eq.s32.totalorder %s23, 1
      %p209 = scmp.ne.s32.totalorder %s204, %s206
      %p210 = scmp.eq.s32.totalorder %s23, 0
      %p211 = por %p209, %p210
      %p212 = scmp.ne.s32.totalorder %s204, %s206
      %p213 = scmp.eq.s32.totalorder %s28, 1
      %p214 = por %p212, %p213
      %p215 = scmp.ne.s32.totalorder %s206, %s207
      %p216 = scmp.eq.s32.totalorder %s28, 0
      %p217 = por %p215, %p216
      %p218 = scmp.ne.s32.totalorder %s206, %s207
      %p219 = scmp.eq.s32.totalorder %s29, 1
      %p220 = por %p218, %p219
      %p222 = scmp.ne.s32.totalorder %s207, %s221
      %p223 = scmp.eq.s32.totalorder %s29, 0
      %p224 = por %p222, %p223
      %s226 = sadd.s32 %s225, 1
      %p229 = scmp.eq.s32.totalorder %s23, 1
      %p230 = scmp.ne.s32.totalorder %s225, %s227
      %p231 = scmp.eq.s32.totalorder %s23, 0
      %p232 = por %p230, %p231
      %p233 = scmp.ne.s32.totalorder %s225, %s227
      %p234 = scmp.eq.s32.totalorder %s28, 1
      %p235 = por %p233, %p234
      %p236 = scmp.ne.s32.totalorder %s227, %s228
      %p237 = scmp.eq.s32.totalorder %s28, 0
      %p238 = por %p236, %p237
      %p239 = scmp.ne.s32.totalorder %s227, %s228
      %p240 = scmp.eq.s32.totalorder %s29, 1
      %p241 = por %p239, %p240
      %p243 = scmp.ne.s32.totalorder %s228, %s242
      %p244 = scmp.eq.s32.totalorder %s29, 0
      %p245 = por %p243, %p244
      %s247 = sadd.s32 %s246, 1
      %p250 = scmp.eq.s32.totalorder %s23, 1
      %p251 = scmp.ne.s32.totalorder %s246, %s248
      %p252 = scmp.eq.s32.totalorder %s23, 0
      %p253 = por %p251, %p252
      %p254 = scmp.ne.s32.totalorder %s246, %s248
      %p255 = scmp.eq.s32.totalorder %s28, 1
      %p256 = por %p254, %p255
      %p257 = scmp.ne.s32.totalorder %s248, %s249
      %p258 = scmp.eq.s32.totalorder %s28, 0
      %p259 = por %p257, %p258
      %p260 = scmp.ne.s32.totalorder %s248, %s249
      %p261 = scmp.eq.s32.totalorder %s29, 1
      %p262 = por %p260, %p261
      %p264 = scmp.ne.s32.totalorder %s249, %s263
      %p265 = scmp.eq.s32.totalorder %s29, 0
      %p266 = por %p264, %p265
      %s267 = ssub.s32 %s23, %s30
      %p268 = scmp.eq.s32.totalorder %s267, 0
      %s270 = sadd.s32 %s269, 1
      %s271 = scalar_select %p268, %s269, %s270
      %p274 = pneg %p268
      %p275 = scmp.eq.s32.totalorder %s23, 1
      %p276 = por %p274, %p275
      %p277 = scmp.ne.s32.totalorder %s269, %s272
      %p278 = scmp.eq.s32.totalorder %s23, 0
      %p279 = por %p277, %p278
      %p280 = scmp.ne.s32.totalorder %s269, %s272
      %p281 = scmp.eq.s32.totalorder %s28, 1
      %p282 = por %p280, %p281
      %p283 = scmp.ne.s32.totalorder %s272, %s273
      %p284 = scmp.eq.s32.totalorder %s28, 0
      %p285 = por %p283, %p284
      %p286 = scmp.ne.s32.totalorder %s272, %s273
      %p287 = scmp.eq.s32.totalorder %s29, 1
      %p288 = por %p286, %p287
      %p290 = scmp.ne.s32.totalorder %s273, %s289
      %p291 = scmp.eq.s32.totalorder %s29, 0
      %p292 = por %p290, %p291
      %p293 = scmp.le.s32.totalorder 1, %s23
      %p294 = scmp.lt.s32.totalorder %s23, 3
      %p295 = pnand %p293, %p294
      %p296 = pneg %p295
      // Predicated region
      $region9: #{tpu_custom_call.1} parent=5 // pred_check
        _
      $region10: #{tpu_custom_call.1} parent=5 // pred_check_branch
        %298 = sbr.rel (%p295) target = $region12
      $region11: #{tpu_custom_call.1} parent=5 // pred_region
        %s299 = ssub.s32 %s23, 1
        // Predicated region
        $region13: #{tpu_custom_call.1} parent=11 // pred_check
          %p300 = pneg %p70
        $region14: #{tpu_custom_call.1} parent=11 // pred_check_branch
          %302 = sbr.rel (%p300) target = $region16
        $region15: #{tpu_custom_call.1} parent=11 // pred_region
          %s304 = ssub.s32 4096, 4096
          %305 = vsyncadd [#allocation9], %s304
          %s306 = sshll.u32 [#allocation8], 4
          %s307 = int_to_ptr.vmem [resolvable:$true] %s306
          %312 = dma.hbm_to_vmem [thread:$0]  %s1, 4096, %s307, [#allocation9], 64, 64, 4
        $region16: #{tpu_custom_call.1} parent=11 // pred_fallthru
          _
        // Predicated region
        $region17: #{tpu_custom_call.1} parent=11 // pred_check
          %p313 = pneg %p91
        $region18: #{tpu_custom_call.1} parent=11 // pred_check_branch
          %315 = sbr.rel (%p313) target = $region20
        $region19: #{tpu_custom_call.1} parent=11 // pred_region
          _
        $region20: #{tpu_custom_call.1} parent=11 // pred_fallthru
          _
        // Predicated region
        $region21: #{tpu_custom_call.1} parent=11 // pred_check
          %p316 = pneg %p112
        $region22: #{tpu_custom_call.1} parent=11 // pred_check_branch
          %318 = sbr.rel (%p316) target = $region24
        $region23: #{tpu_custom_call.1} parent=11 // pred_region
          %s320 = ssub.s32 4096, 4096
          %321 = vsyncadd [#allocation9], %s320
          %s322 = sshll.u32 [#allocation10], 4
          %s323 = int_to_ptr.vmem [resolvable:$true] %s322
          %328 = dma.hbm_to_vmem [thread:$0]  %s3, 4096, %s323, [#allocation9], 64, 64, 4
        $region24: #{tpu_custom_call.1} parent=11 // pred_fallthru
          _
        // Predicated region
        $region25: #{tpu_custom_call.1} parent=11 // pred_check
          %p329 = pneg %p133
        $region26: #{tpu_custom_call.1} parent=11 // pred_check_branch
          %331 = sbr.rel (%p329) target = $region28
        $region27: #{tpu_custom_call.1} parent=11 // pred_region
          _
        $region28: #{tpu_custom_call.1} parent=11 // pred_fallthru
          _
        // Predicated region
        $region29: #{tpu_custom_call.1} parent=11 // pred_check
          %p332 = pneg %p154
        $region30: #{tpu_custom_call.1} parent=11 // pred_check_branch
          %334 = sbr.rel (%p332) target = $region32
        $region31: #{tpu_custom_call.1} parent=11 // pred_region
          %s336 = ssub.s32 8192, 8192
          %337 = vsyncadd [#allocation12], %s336
          %s338 = sshll.u32 [#allocation11], 4
          %s339 = int_to_ptr.vmem [resolvable:$true] %s338
          %344 = dma.hbm_to_vmem [thread:$0]  %s5, 8192, %s339, [#allocation12], 128, 128, 8
        $region32: #{tpu_custom_call.1} parent=11 // pred_fallthru
          _
        // Predicated region
        $region33: #{tpu_custom_call.1} parent=11 // pred_check
          %p345 = pneg %p175
        $region34: #{tpu_custom_call.1} parent=11 // pred_check_branch
          %347 = sbr.rel (%p345) target = $region36
        $region35: #{tpu_custom_call.1} parent=11 // pred_region
          _
        $region36: #{tpu_custom_call.1} parent=11 // pred_fallthru
          _
        // Predicated region
        $region37: #{tpu_custom_call.1} parent=11 // pred_check
          %p348 = pneg %p196
        $region38: #{tpu_custom_call.1} parent=11 // pred_check_branch
          %350 = sbr.rel (%p348) target = $region40
        $region39: #{tpu_custom_call.1} parent=11 // pred_region
          %s352 = ssub.s32 32768, 32768
          %353 = vsyncadd [#allocation12], %s352
          %s354 = sshll.u32 [#allocation13], 4
          %s355 = int_to_ptr.vmem [resolvable:$true] %s354
          %360 = dma.hbm_to_vmem [thread:$0]  %s7, 32768, %s355, [#allocation12], 256, 256, 16
        $region40: #{tpu_custom_call.1} parent=11 // pred_fallthru
          _
        // Predicated region
        $region41: #{tpu_custom_call.1} parent=11 // pred_check
          %p361 = pneg %p217
        $region42: #{tpu_custom_call.1} parent=11 // pred_check_branch
          %363 = sbr.rel (%p361) target = $region44
        $region43: #{tpu_custom_call.1} parent=11 // pred_region
          _
        $region44: #{tpu_custom_call.1} parent=11 // pred_fallthru
          _
        // Predicated region
        $region45: #{tpu_custom_call.1} parent=11 // pred_check
          %p364 = pneg %p238
        $region46: #{tpu_custom_call.1} parent=11 // pred_check_branch
          %366 = sbr.rel (%p364) target = $region48
        $region47: #{tpu_custom_call.1} parent=11 // pred_region
          %s368 = ssub.s32 16384, 16384
          %369 = vsyncadd [#allocation15], %s368
          %s370 = sshll.u32 [#allocation14], 4
          %s371 = int_to_ptr.vmem [resolvable:$true] %s370
          %376 = dma.hbm_to_vmem [thread:$0]  %s9, 16384, %s371, [#allocation15], 64, 64, 4
        $region48: #{tpu_custom_call.1} parent=11 // pred_fallthru
          _
        // Predicated region
        $region49: #{tpu_custom_call.1} parent=11 // pred_check
          %p377 = pneg %p259
        $region50: #{tpu_custom_call.1} parent=11 // pred_check_branch
          %379 = sbr.rel (%p377) target = $region52
        $region51: #{tpu_custom_call.1} parent=11 // pred_region
          _
        $region52: #{tpu_custom_call.1} parent=11 // pred_fallthru
          _
      $region12: #{tpu_custom_call.1} parent=5 // pred_fallthru
        _
      %p380 = scmp.lt.s32.totalorder %s23, 2
      // Predicated region
      $region53: #{tpu_custom_call.1} parent=5 // pred_check
        %p381 = pneg %p380
      $region54: #{tpu_custom_call.1} parent=5 // pred_check_branch
        %383 = sbr.rel (%p381) target = $region56
      $region55: #{tpu_custom_call.1} parent=5 // pred_region
        // Predicated region
        $region57: #{tpu_custom_call.1} parent=55 // pred_check
          %p384 = pneg %p43
        $region58: #{tpu_custom_call.1} parent=55 // pred_check_branch
          %386 = sbr.rel (%p384) target = $region60
        $region59: #{tpu_custom_call.1} parent=55 // pred_region
          %s387 = sand.u32 %s33, 1
          %s388 = scalar_lea.sflag [#allocation7], %s387
          %s389 = sand.u32 %s33, 1
          %s390 = smul.addr %s389, 80
          %s391 = scalar_lea.vmem [#allocation6], %s390
          %s392 = smul.u32 2, %s23
          %s394 = ssub.s32 1280, 1280
          %395 = vsyncadd %s388, %s394
          %s396 = smul.addr %s392, 5
          %s397 = smul.addr %s396, 128
          %s398 = scalar_lea.hbm %s0, %s397
          %s399 = sshll.u32 %s391, 4
          %s400 = int_to_ptr.vmem [resolvable:$true] %s399
          %405 = dma.hbm_to_vmem [thread:$0]  %s398, 1280, %s400, %s388, 128, 128, 8
        $region60: #{tpu_custom_call.1} parent=55 // pred_fallthru
          _
      $region56: #{tpu_custom_call.1} parent=5 // pred_fallthru
        _
      %p406 = scmp.le.s32.totalorder 1, %s23
      %p407 = scmp.lt.s32.totalorder %s23, 3
      %p408 = pnand %p406, %p407
      %p409 = pneg %p408
      // Predicated region
      $region61: #{tpu_custom_call.1} parent=5 // pred_check
        _
      $region62: #{tpu_custom_call.1} parent=5 // pred_check_branch
        %411 = sbr.rel (%p408) target = $region64
      $region63: #{tpu_custom_call.1} parent=5 // pred_region
        %s412 = ssub.s32 %s23, 1
        %s413 = sand.u32 %s36, 1
        %s414 = scalar_lea.sflag [#allocation7], %s413
        %s415 = sand.u32 %s36, 1
        %s416 = smul.addr %s415, 80
        %s417 = scalar_lea.vmem [#allocation6], %s416
        // Predicated region
        $region65: #{tpu_custom_call.1} parent=63 // pred_check
          %p418 = pneg %p49
        $region66: #{tpu_custom_call.1} parent=63 // pred_check_branch
          %420 = sbr.rel (%p418) target = $region68
        $region67: #{tpu_custom_call.1} parent=63 // pred_region
          %421 = dma.done %s414, 1280
        $region68: #{tpu_custom_call.1} parent=63 // pred_fallthru
          _
        // Predicated region
        $region69: #{tpu_custom_call.1} parent=63 // pred_check
          %p422 = pneg %p70
        $region70: #{tpu_custom_call.1} parent=63 // pred_check_branch
          %424 = sbr.rel (%p422) target = $region72
        $region71: #{tpu_custom_call.1} parent=63 // pred_region
          %425 = dma.done [#allocation9], 4096
        $region72: #{tpu_custom_call.1} parent=63 // pred_fallthru
          _
        // Predicated region
        $region73: #{tpu_custom_call.1} parent=63 // pred_check
          %p426 = pneg %p112
        $region74: #{tpu_custom_call.1} parent=63 // pred_check_branch
          %428 = sbr.rel (%p426) target = $region76
        $region75: #{tpu_custom_call.1} parent=63 // pred_region
          %429 = dma.done [#allocation9], 4096
        $region76: #{tpu_custom_call.1} parent=63 // pred_fallthru
          _
        // Predicated region
        $region77: #{tpu_custom_call.1} parent=63 // pred_check
          %p430 = pneg %p154
        $region78: #{tpu_custom_call.1} parent=63 // pred_check_branch
          %432 = sbr.rel (%p430) target = $region80
        $region79: #{tpu_custom_call.1} parent=63 // pred_region
          %433 = dma.done [#allocation12], 8192
        $region80: #{tpu_custom_call.1} parent=63 // pred_fallthru
          _
        // Predicated region
        $region81: #{tpu_custom_call.1} parent=63 // pred_check
          %p434 = pneg %p196
        $region82: #{tpu_custom_call.1} parent=63 // pred_check_branch
          %436 = sbr.rel (%p434) target = $region84
        $region83: #{tpu_custom_call.1} parent=63 // pred_region
          %437 = dma.done [#allocation12], 32768
        $region84: #{tpu_custom_call.1} parent=63 // pred_fallthru
          _
        // Predicated region
        $region85: #{tpu_custom_call.1} parent=63 // pred_check
          %p438 = pneg %p238
        $region86: #{tpu_custom_call.1} parent=63 // pred_check_branch
          %440 = sbr.rel (%p438) target = $region88
        $region87: #{tpu_custom_call.1} parent=63 // pred_region
          %441 = dma.done [#allocation15], 16384
        $region88: #{tpu_custom_call.1} parent=63 // pred_fallthru
          _
        %s442 = sand.u32 %s36, 1
        %s443 = scalar_lea.sflag [#allocation7], %s442
        %s444 = sand.u32 %s36, 1
        %s445 = smul.addr %s444, 80
        %s446 = scalar_lea.vmem [#allocation6], %s445
        %p447 = pneg %p49
        %p448 = pneg %p46
        %p449 = pneg %p70
        %p450 = pneg %p67
        %p451 = pneg %p91
        %p452 = pneg %p88
        %p453 = pneg %p112
        %p454 = pneg %p109
        %p455 = pneg %p133
        %p456 = pneg %p130
        %p457 = pneg %p154
        %p458 = pneg %p151
        %p459 = pneg %p175
        %p460 = pneg %p172
        %p461 = pneg %p196
        %p462 = pneg %p193
        %p463 = pneg %p217
        %p464 = pneg %p214
        %p465 = pneg %p238
        %p466 = pneg %p235
        %p467 = pneg %p259
        %p468 = pneg %p256
        %p469 = pneg %p285
        %p470 = pneg %p282
        %s471 = smul.u32 2, %s28
        %p472 = scmp.lt.s32.totalorder %s471, 3
        %s473 = scalar_select %p472, %s471, 3
        %s474 = smul.addr %s473, 8
        %s475 = scalar_lea.vmem %s11, %s474
        %s476 = smul.u32 2, %s28
        %s477 = smul.u32 2, %s28
        %p478 = scmp.lt.s32.totalorder %s477, 3
        %s479 = scalar_select %p478, %s477, 3
        %s480 = smul.addr %s479, 8
        %s481 = scalar_lea.vmem %s11, %s480
        %s482 = smul.u32 2, %s28
        %484 = vst [vmem:[#allocation2] sm:$0x3] 0.0
        %485 = vst [vmem:[#allocation2 + $0x18] sm:$0x3] 0.0
        %486 = vst [vmem:[#allocation2 + $0x13] sm:$0x1f] 0.0
        %487 = vst [vmem:[#allocation2 + $0x2b] sm:$0x1f] 0.0
        %488 = vst [vmem:[#allocation3] sm:$0x3] 0.0
        %489 = vst [vmem:[#allocation3 + $0x10] sm:$0x3] 0.0
        %490 = vst [vmem:[#allocation3 + $0xb] sm:$0x1f] 0.0
        %491 = vst [vmem:[#allocation3 + $0x1b] sm:$0x1f] 0.0
        %492 = vst [vmem:[#allocation4] sm:$0x3] 0.0
        %493 = vst [vmem:[#allocation4 + $0x8] sm:$0x3] 0.0
        %494 = vst [vmem:[#allocation4 + $0x20] sm:$0x3] 0.0
        %495 = vst [vmem:[#allocation4 + $0x28] sm:$0x3] 0.0
        %496 = vst [vmem:[#allocation4] sm:$0x80] 0.0
        %497 = vst [vmem:[#allocation4 + $0x8] sm:$0x80] 0.0
        %498 = vst [vmem:[#allocation4 + $0x10] sm:$0xff] 0.0
        %499 = vst [vmem:[#allocation4 + $0x18] sm:$0xff] 0.0
        %500 = vst [vmem:[#allocation4 + $0x20] sm:$0x80] 0.0
        %501 = vst [vmem:[#allocation4 + $0x28] sm:$0x80] 0.0
        %502 = vst [vmem:[#allocation4 + $0x30] sm:$0xff] 0.0
        %503 = vst [vmem:[#allocation4 + $0x38] sm:$0xff] 0.0
        %504 = vst [vmem:[#allocation5] sm:$0x3] 0.0
        %505 = vst [vmem:[#allocation5 + $0x8] sm:$0x3] 0.0
        %506 = vst [vmem:[#allocation5 + $0x10] sm:$0x3] 0.0
        %507 = vst [vmem:[#allocation5 + $0x18] sm:$0x3] 0.0
        %508 = vst [vmem:[#allocation5 + $0x40] sm:$0x3] 0.0
        %509 = vst [vmem:[#allocation5 + $0x48] sm:$0x3] 0.0
        %510 = vst [vmem:[#allocation5 + $0x50] sm:$0x3] 0.0
        %511 = vst [vmem:[#allocation5 + $0x58] sm:$0x3] 0.0
        %512 = vst [vmem:[#allocation5 + $0x20] sm:$0xff] 0.0
        %513 = vst [vmem:[#allocation5 + $0x28] sm:$0xff] 0.0
        %514 = vst [vmem:[#allocation5 + $0x30] sm:$0xff] 0.0
        %515 = vst [vmem:[#allocation5 + $0x38] sm:$0xff] 0.0
        %516 = vst [vmem:[#allocation5 + $0x60] sm:$0xff] 0.0
        %517 = vst [vmem:[#allocation5 + $0x68] sm:$0xff] 0.0
        %518 = vst [vmem:[#allocation5 + $0x70] sm:$0xff] 0.0
        %519 = vst [vmem:[#allocation5 + $0x78] sm:$0xff] 0.0
        %v520 = vld [vmem:[%s417] sm:$0xff]
        %v521 = vld [vmem:[%s417 + $0x8] sm:$0xff]
        %v522 = vld [vmem:[%s417 + $0x10] sm:$0xff]
        %v523 = vld [vmem:[%s417 + $0x18] sm:$0xff]
        %v524 = vld [vmem:[%s417 + $0x20] sm:$0xff]
        %v525 = vld [vmem:[%s417 + $0x28] sm:$0xff]
        %v526 = vld [vmem:[%s417 + $0x30] sm:$0xff]
        %v527 = vld [vmem:[%s417 + $0x38] sm:$0xff]
        %v528 = vld [vmem:[%s417 + $0x40] sm:$0xff]
        %v529 = vld [vmem:[%s417 + $0x48] sm:$0xff]
        %v530 = vpack.c.bf16 %v521, %v520
        %v531 = vpack.c.bf16 %v523, %v522
        %v532 = vpack.c.bf16 %v525, %v524
        %v533 = vpack.c.bf16 %v527, %v526
        %v534 = vpack.c.bf16 %v529, %v528
        %v535 = vpack.c.bf16 0.0, 0.0
        %v536 = vld [vmem:[#allocation8] sm:$0xf]
        %v537 = vld [vmem:[#allocation8 + $0x4] sm:$0xf]
        %v538 = vld [vmem:[#allocation8 + $0x8] sm:$0xf]
        %v539 = vld [vmem:[#allocation8 + $0xc] sm:$0xf]
        %v540 = vld [vmem:[#allocation8 + $0x10] sm:$0xf]
        %v541 = vld [vmem:[#allocation8 + $0x14] sm:$0xf]
        %v542 = vld [vmem:[#allocation8 + $0x18] sm:$0xf]
        %v543 = vld [vmem:[#allocation8 + $0x1c] sm:$0xf]
        %v544 = vld [vmem:[#allocation8 + $0x20] sm:$0xf]
        %v545 = vld [vmem:[#allocation8 + $0x24] sm:$0xf]
        %v546 = vld [vmem:[#allocation8 + $0x28] sm:$0xf]
        %v547 = vld [vmem:[#allocation8 + $0x2c] sm:$0xf]
        %v548 = vld [vmem:[#allocation8 + $0x30] sm:$0xf]
        %v549 = vld [vmem:[#allocation8 + $0x34] sm:$0xf]
        %v550 = vld [vmem:[#allocation8 + $0x38] sm:$0xf]
        %v551 = vld [vmem:[#allocation8 + $0x3c] sm:$0xf]
        %s552 = scalar_lea.vmem [#allocation8], 64
        %v553 = vld [vmem:[%s552] sm:$0xf]
        %v554 = vld [vmem:[%s552 + $0x4] sm:$0xf]
        %v555 = vld [vmem:[%s552 + $0x8] sm:$0xf]
        %v556 = vld [vmem:[%s552 + $0xc] sm:$0xf]
        %v557 = vld [vmem:[%s552 + $0x10] sm:$0xf]
        %v558 = vld [vmem:[%s552 + $0x14] sm:$0xf]
        %v559 = vld [vmem:[%s552 + $0x18] sm:$0xf]
        %v560 = vld [vmem:[%s552 + $0x1c] sm:$0xf]
        %v561 = vld [vmem:[%s552 + $0x20] sm:$0xf]
        %v562 = vld [vmem:[%s552 + $0x24] sm:$0xf]
        %v563 = vld [vmem:[%s552 + $0x28] sm:$0xf]
        %v564 = vld [vmem:[%s552 + $0x2c] sm:$0xf]
        %v565 = vld [vmem:[%s552 + $0x30] sm:$0xf]
        %v566 = vld [vmem:[%s552 + $0x34] sm:$0xf]
        %v567 = vld [vmem:[%s552 + $0x38] sm:$0xf]
        %v568 = vld [vmem:[%s552 + $0x3c] sm:$0xf]
        %vm569 = vsmask.f32 7424
        %v571 = vshrl.u32 %v530, 16
        %v573 = vshll.u32 %v530, 16
        %v575 = vrot.slane %v573, 1
        %v576 = vor.u32 %v571, %v575
        %v578 = vshll.u32 %v531, 16
        %v580 = vrot.slane %v578, 1
        %v581 = vsel %vm569, %v576, %v580
        %v582 = vshrl.u32 %v531, 16
        %v584 = vor.u32 %v582, %v580
        %v586 = vshll.u32 %v532, 16
        %v588 = vrot.slane %v586, 1
        %v589 = vsel %vm569, %v584, %v588
        %v590 = vshrl.u32 %v532, 16
        %v592 = vor.u32 %v590, %v588
        %v594 = vshll.u32 %v533, 16
        %v596 = vrot.slane %v594, 1
        %v597 = vsel %vm569, %v592, %v596
        %v598 = vshrl.u32 %v533, 16
        %v600 = vor.u32 %v598, %v596
        %v602 = vshll.u32 %v534, 16
        %v604 = vrot.slane %v602, 1
        %v605 = vsel %vm569, %v600, %v604
        %v606 = vshrl.u32 %v534, 16
        %v608 = vor.u32 %v606, %v604
        %v610 = vshll.u32 %v535, 16
        %v612 = vrot.slane %v610, 1
        %v613 = vsel %vm569, %v608, %v612
        %v635 = vunpack.c.l.b16 %v553
        %v636 = vunpack.c.l.b16 %v554
        %v637 = vunpack.c.l.b16 %v555
        %v638 = vunpack.c.l.b16 %v556
        %v639 = vunpack.c.l.b16 %v557
        %v640 = vunpack.c.l.b16 %v558
        %v641 = vunpack.c.l.b16 %v559
        %v642 = vunpack.c.l.b16 %v560
        %v643 = vunpack.c.l.b16 %v561
        %v644 = vunpack.c.l.b16 %v562
        %v645 = vunpack.c.l.b16 %v563
        %v646 = vunpack.c.l.b16 %v564
        %v647 = vunpack.c.l.b16 %v565
        %v648 = vunpack.c.l.b16 %v566
        %v649 = vunpack.c.l.b16 %v567
        %v650 = vunpack.c.l.b16 %v568
        %v651 = vpack.c.b16 %v636, %v635
        %v652 = vpack.c.b16 %v638, %v637
        %v653 = vpack.c.b16 %v640, %v639
        %v654 = vpack.c.b16 %v642, %v641
        %v655 = vpack.c.b16 %v644, %v643
        %v656 = vpack.c.b16 %v646, %v645
        %v657 = vpack.c.b16 %v648, %v647
        %v658 = vpack.c.b16 %v650, %v649
        %667 = vmatprep.subr.bf16.mxu0 0
        %668 = vmatpush1.bf16.msra.mxu0 %v651
        %669 = vmatprep.subr.bf16.mxu0 0
        %670 = vmatpush1.bf16.msra.mxu0 %v652
        %671 = vmatprep.subr.bf16.mxu0 0
        %672 = vmatpush1.bf16.msra.mxu0 %v653
        %673 = vmatprep.subr.bf16.mxu0 0
        %674 = vmatpush1.bf16.msra.mxu0 %v654
        %675 = vmatprep.subr.bf16.mxu0 0
        %676 = vmatpush1.bf16.msra.mxu0 %v655
        %677 = vmatprep.subr.bf16.mxu0 0
        %678 = vmatpush1.bf16.msra.mxu0 %v656
        %679 = vmatprep.subr.bf16.mxu0 0
        %680 = vmatpush1.bf16.msra.mxu0 %v657
        %681 = vmatprep.subr.bf16.mxu0 0
        %682 = vmatpush1.bf16.msra.mxu0 %v658
        %683 = vmatprep.subr.bf16.mxu0 0
        %684 = vmatpush1.bf16.msra.mxu0 0
        %685 = vmatprep.subr.bf16.mxu0 0
        %686 = vmatpush1.bf16.msra.mxu0 0
        %687 = vmatprep.subr.bf16.mxu0 0
        %688 = vmatpush1.bf16.msra.mxu0 0
        %689 = vmatprep.subr.bf16.mxu0 0
        %690 = vmatpush1.bf16.msra.mxu0 0
        %691 = vmatprep.subr.bf16.mxu0 0
        %692 = vmatpush1.bf16.msra.mxu0 0
        %693 = vmatprep.subr.bf16.mxu0 0
        %694 = vmatpush1.bf16.msra.mxu0 0
        %695 = vmatprep.subr.bf16.mxu0 0
        %696 = vmatpush1.bf16.msra.mxu0 0
        %697 = vmatprep.subr.bf16.mxu0 0
        %698 = vmatpush1.bf16.msra.mxu0 0
        %699 = vmatprep.mubr.bf16.mxu0 0
        %700 = vmatmul.mubr.bf16.gmra.mrb[0].mxu0 %v581
        %v701 = vpop.f32.mrb[0].mxu0
        %v702 = vadd.f32 0.0, %v701
        %v703 = vpop.f32.mrb[0].mxu0
        %v704 = vpop.f32.mrb[0].mxu0
        %v705 = vadd.f32 0.0, %v704
        %v706 = vpop.f32.mrb[0].mxu0
        %707 = vmatprep.mubr.bf16.mxu0 0
        %708 = vmatmul.mubr.bf16.gmra.mrb[0].mxu0 %v589
        %v709 = vpop.f32.mrb[0].mxu0
        %v710 = vadd.f32 0.0, %v709
        %v711 = vpop.f32.mrb[0].mxu0
        %v712 = vpop.f32.mrb[0].mxu0
        %v713 = vadd.f32 0.0, %v712
        %v714 = vpop.f32.mrb[0].mxu0
        %715 = vmatprep.mubr.bf16.mxu0 0
        %716 = vmatmul.mubr.bf16.gmra.mrb[0].mxu0 %v597
        %v717 = vpop.f32.mrb[0].mxu0
        %v718 = vadd.f32 0.0, %v717
        %v719 = vpop.f32.mrb[0].mxu0
        %v720 = vpop.f32.mrb[0].mxu0
        %v721 = vadd.f32 0.0, %v720
        %v722 = vpop.f32.mrb[0].mxu0
        %723 = vmatprep.mubr.bf16.mxu0 0
        %724 = vmatmul.mubr.bf16.gmra.mrb[0].mxu0 %v605
        %v725 = vpop.f32.mrb[0].mxu0
        %v726 = vadd.f32 0.0, %v725
        %v727 = vpop.f32.mrb[0].mxu0
        %v728 = vpop.f32.mrb[0].mxu0
        %v729 = vadd.f32 0.0, %v728
        %v730 = vpop.f32.mrb[0].mxu0
        %731 = vmatprep.mubr.bf16.mxu0 0
        %732 = vmatmul.mubr.bf16.gmra.mrb[0].mxu0 %v613
        %v733 = vpop.f32.mrb[0].mxu0
        %v734 = vadd.f32 0.0, %v733
        %v735 = vpop.f32.mrb[0].mxu0
        %v736 = vpop.f32.mrb[0].mxu0
        %v737 = vadd.f32 0.0, %v736
        %v738 = vpop.f32.mrb[0].mxu0
        %739 = vdwg.mxu0
        %v756 = vunpack.c.l.b16 %v536
        %v757 = vunpack.c.l.b16 %v537
        %v758 = vunpack.c.l.b16 %v538
        %v759 = vunpack.c.l.b16 %v539
        %v760 = vunpack.c.l.b16 %v540
        %v761 = vunpack.c.l.b16 %v541
        %v762 = vunpack.c.l.b16 %v542
        %v763 = vunpack.c.l.b16 %v543
        %v764 = vunpack.c.l.b16 %v544
        %v765 = vunpack.c.l.b16 %v545
        %v766 = vunpack.c.l.b16 %v546
        %v767 = vunpack.c.l.b16 %v547
        %v768 = vunpack.c.l.b16 %v548
        %v769 = vunpack.c.l.b16 %v549
        %v770 = vunpack.c.l.b16 %v550
        %v771 = vunpack.c.l.b16 %v551
        %v772 = vpack.c.b16 %v757, %v756
        %v773 = vpack.c.b16 %v759, %v758
        %v774 = vpack.c.b16 %v761, %v760
        %v775 = vpack.c.b16 %v763, %v762
        %v776 = vpack.c.b16 %v765, %v764
        %v777 = vpack.c.b16 %v767, %v766
        %v778 = vpack.c.b16 %v769, %v768
        %v779 = vpack.c.b16 %v771, %v770
        %788 = vmatprep.subr.bf16.mxu0 0
        %789 = vmatpush1.bf16.msra.mxu0 %v772
        %790 = vmatprep.subr.bf16.mxu0 0
        %791 = vmatpush1.bf16.msra.mxu0 %v773
        %792 = vmatprep.subr.bf16.mxu0 0
        %793 = vmatpush1.bf16.msra.mxu0 %v774
        %794 = vmatprep.subr.bf16.mxu0 0
        %795 = vmatpush1.bf16.msra.mxu0 %v775
        %796 = vmatprep.subr.bf16.mxu0 0
        %797 = vmatpush1.bf16.msra.mxu0 %v776
        %798 = vmatprep.subr.bf16.mxu0 0
        %799 = vmatpush1.bf16.msra.mxu0 %v777
        %800 = vmatprep.subr.bf16.mxu0 0
        %801 = vmatpush1.bf16.msra.mxu0 %v778
        %802 = vmatprep.subr.bf16.mxu0 0
        %803 = vmatpush1.bf16.msra.mxu0 %v779
        %804 = vmatprep.subr.bf16.mxu0 0
        %805 = vmatpush1.bf16.msra.mxu0 0
        %806 = vmatprep.subr.bf16.mxu0 0
        %807 = vmatpush1.bf16.msra.mxu0 0
        %808 = vmatprep.subr.bf16.mxu0 0
        %809 = vmatpush1.bf16.msra.mxu0 0
        %810 = vmatprep.subr.bf16.mxu0 0
        %811 = vmatpush1.bf16.msra.mxu0 0
        %812 = vmatprep.subr.bf16.mxu0 0
        %813 = vmatpush1.bf16.msra.mxu0 0
        %814 = vmatprep.subr.bf16.mxu0 0
        %815 = vmatpush1.bf16.msra.mxu0 0
        %816 = vmatprep.subr.bf16.mxu0 0
        %817 = vmatpush1.bf16.msra.mxu0 0
        %818 = vmatprep.subr.bf16.mxu0 0
        %819 = vmatpush1.bf16.msra.mxu0 0
        %820 = vmatprep.mubr.bf16.mxu0 0
        %821 = vmatmul.mubr.bf16.gmra.mrb[0].mxu0 %v530
        %v822 = vpop.f32.mrb[0].mxu0
        %v823 = vadd.f32 %v702, %v822
        %v824 = vpop.f32.mrb[0].mxu0
        %v825 = vpop.f32.mrb[0].mxu0
        %v826 = vadd.f32 %v705, %v825
        %v827 = vpop.f32.mrb[0].mxu0
        %828 = vmatprep.mubr.bf16.mxu0 0
        %829 = vmatmul.mubr.bf16.gmra.mrb[0].mxu0 %v531
        %v830 = vpop.f32.mrb[0].mxu0
        %v831 = vadd.f32 %v710, %v830
        %v832 = vpop.f32.mrb[0].mxu0
        %v833 = vpop.f32.mrb[0].mxu0
        %v834 = vadd.f32 %v713, %v833
        %v835 = vpop.f32.mrb[0].mxu0
        %836 = vmatprep.mubr.bf16.mxu0 0
        %837 = vmatmul.mubr.bf16.gmra.mrb[0].mxu0 %v532
        %v838 = vpop.f32.mrb[0].mxu0
        %v839 = vadd.f32 %v718, %v838
        %v840 = vpop.f32.mrb[0].mxu0
        %v841 = vpop.f32.mrb[0].mxu0
        %v842 = vadd.f32 %v721, %v841
        %v843 = vpop.f32.mrb[0].mxu0
        %844 = vmatprep.mubr.bf16.mxu0 0
        %845 = vmatmul.mubr.bf16.gmra.mrb[0].mxu0 %v533
        %v846 = vpop.f32.mrb[0].mxu0
        %v847 = vadd.f32 %v726, %v846
        %v848 = vpop.f32.mrb[0].mxu0
        %v849 = vpop.f32.mrb[0].mxu0
        %v850 = vadd.f32 %v729, %v849
        %v851 = vpop.f32.mrb[0].mxu0
        %852 = vmatprep.mubr.bf16.mxu0 0
        %853 = vmatmul.mubr.bf16.gmra.mrb[0].mxu0 %v534
        %v854 = vpop.f32.mrb[0].mxu0
        %v855 = vadd.f32 %v734, %v854
        %v856 = vpop.f32.mrb[0].mxu0
        %v857 = vpop.f32.mrb[0].mxu0
        %v858 = vadd.f32 %v737, %v857
        %v859 = vpop.f32.mrb[0].mxu0
        %860 = vdwg.mxu0
        %s861 = scalar_lea.vmem [#allocation8], 128
        %v862 = vld [vmem:[%s861] sm:$0xf]
        %v863 = vld [vmem:[%s861 + $0x4] sm:$0xf]
        %v864 = vld [vmem:[%s861 + $0x8] sm:$0xf]
        %v865 = vld [vmem:[%s861 + $0xc] sm:$0xf]
        %v866 = vld [vmem:[%s861 + $0x10] sm:$0xf]
        %v867 = vld [vmem:[%s861 + $0x14] sm:$0xf]
        %v868 = vld [vmem:[%s861 + $0x18] sm:$0xf]
        %v869 = vld [vmem:[%s861 + $0x1c] sm:$0xf]
        %v870 = vld [vmem:[%s861 + $0x20] sm:$0xf]
        %v871 = vld [vmem:[%s861 + $0x24] sm:$0xf]
        %v872 = vld [vmem:[%s861 + $0x28] sm:$0xf]
        %v873 = vld [vmem:[%s861 + $0x2c] sm:$0xf]
        %v874 = vld [vmem:[%s861 + $0x30] sm:$0xf]
        %v875 = vld [vmem:[%s861 + $0x34] sm:$0xf]
        %v876 = vld [vmem:[%s861 + $0x38] sm:$0xf]
        %v877 = vld [vmem:[%s861 + $0x3c] sm:$0xf]
        %vm884 = vcmask 1046528
        %v885 = vrot.slane %v530, 1
        %v886 = vrot.slane %v531, 1
        %v887 = vsel %vm884, %v885, %v886
        %v888 = vrot.slane %v532, 1
        %v889 = vsel %vm884, %v886, %v888
        %v890 = vrot.slane %v533, 1
        %v891 = vsel %vm884, %v888, %v890
        %v892 = vrot.slane %v534, 1
        %v893 = vsel %vm884, %v890, %v892
        %v894 = vrot.slane %v535, 1
        %v895 = vsel %vm884, %v892, %v894
        %v917 = vunpack.c.l.b16 %v862
        %v918 = vunpack.c.l.b16 %v863
        %v919 = vunpack.c.l.b16 %v864
        %v920 = vunpack.c.l.b16 %v865
        %v921 = vunpack.c.l.b16 %v866
        %v922 = vunpack.c.l.b16 %v867
        %v923 = vunpack.c.l.b16 %v868
        %v924 = vunpack.c.l.b16 %v869
        %v925 = vunpack.c.l.b16 %v870
        %v926 = vunpack.c.l.b16 %v871
        %v927 = vunpack.c.l.b16 %v872
        %v928 = vunpack.c.l.b16 %v873
        %v929 = vunpack.c.l.b16 %v874
        %v930 = vunpack.c.l.b16 %v875
        %v931 = vunpack.c.l.b16 %v876
        %v932 = vunpack.c.l.b16 %v877
        %v933 = vpack.c.b16 %v918, %v917
        %v934 = vpack.c.b16 %v920, %v919
        %v935 = vpack.c.b16 %v922, %v921
        %v936 = vpack.c.b16 %v924, %v923
        %v937 = vpack.c.b16 %v926, %v925
        %v938 = vpack.c.b16 %v928, %v927
        %v939 = vpack.c.b16 %v930, %v929
        %v940 = vpack.c.b16 %v932, %v931
        %949 = vmatprep.subr.bf16.mxu0 0
        %950 = vmatpush1.bf16.msra.mxu0 %v933
        %951 = vmatprep.subr.bf16.mxu0 0
        %952 = vmatpush1.bf16.msra.mxu0 %v934
        %953 = vmatprep.subr.bf16.mxu0 0
        %954 = vmatpush1.bf16.msra.mxu0 %v935
        %955 = vmatprep.subr.bf16.mxu0 0
        %956 = vmatpush1.bf16.msra.mxu0 %v936
        %957 = vmatprep.subr.bf16.mxu0 0
        %958 = vmatpush1.bf16.msra.mxu0 %v937
        %959 = vmatprep.subr.bf16.mxu0 0
        %960 = vmatpush1.bf16.msra.mxu0 %v938
        %961 = vmatprep.subr.bf16.mxu0 0
        %962 = vmatpush1.bf16.msra.mxu0 %v939
        %963 = vmatprep.subr.bf16.mxu0 0
        %964 = vmatpush1.bf16.msra.mxu0 %v940
        %965 = vmatprep.subr.bf16.mxu0 0
        %966 = vmatpush1.bf16.msra.mxu0 0
        %967 = vmatprep.subr.bf16.mxu0 0
        %968 = vmatpush1.bf16.msra.mxu0 0
        %969 = vmatprep.subr.bf16.mxu0 0
        %970 = vmatpush1.bf16.msra.mxu0 0
        %971 = vmatprep.subr.bf16.mxu0 0
        %972 = vmatpush1.bf16.msra.mxu0 0
        %973 = vmatprep.subr.bf16.mxu0 0
        %974 = vmatpush1.bf16.msra.mxu0 0
        %975 = vmatprep.subr.bf16.mxu0 0
        %976 = vmatpush1.bf16.msra.mxu0 0
        %977 = vmatprep.subr.bf16.mxu0 0
        %978 = vmatpush1.bf16.msra.mxu0 0
        %979 = vmatprep.subr.bf16.mxu0 0
        %980 = vmatpush1.bf16.msra.mxu0 0
        %981 = vmatprep.mubr.bf16.mxu0 0
        %982 = vmatmul.mubr.bf16.gmra.mrb[0].mxu0 %v887
        %v983 = vpop.f32.mrb[0].mxu0
        %v984 = vadd.f32 0.0, %v983
        %v985 = vpop.f32.mrb[0].mxu0
        %v986 = vpop.f32.mrb[0].mxu0
        %v987 = vadd.f32 0.0, %v986
        %v988 = vpop.f32.mrb[0].mxu0
        %989 = vmatprep.mubr.bf16.mxu0 0
        %990 = vmatmul.mubr.bf16.gmra.mrb[0].mxu0 %v889
        %v991 = vpop.f32.mrb[0].mxu0
        %v992 = vadd.f32 0.0, %v991
        %v993 = vpop.f32.mrb[0].mxu0
        %v994 = vpop.f32.mrb[0].mxu0
        %v995 = vadd.f32 0.0, %v994
        %v996 = vpop.f32.mrb[0].mxu0
        %997 = vmatprep.mubr.bf16.mxu0 0
        %998 = vmatmul.mubr.bf16.gmra.mrb[0].mxu0 %v891
        %v999 = vpop.f32.mrb[0].mxu0
        %v1000 = vadd.f32 0.0, %v999
        %v1001 = vpop.f32.mrb[0].mxu0
        %v1002 = vpop.f32.mrb[0].mxu0
        %v1003 = vadd.f32 0.0, %v1002
        %v1004 = vpop.f32.mrb[0].mxu0
        %1005 = vmatprep.mubr.bf16.mxu0 0
        %1006 = vmatmul.mubr.bf16.gmra.mrb[0].mxu0 %v893
        %v1007 = vpop.f32.mrb[0].mxu0
        %v1008 = vadd.f32 0.0, %v1007
        %v1009 = vpop.f32.mrb[0].mxu0
        %v1010 = vpop.f32.mrb[0].mxu0
        %v1011 = vadd.f32 0.0, %v1010
        %v1012 = vpop.f32.mrb[0].mxu0
        %1013 = vmatprep.mubr.bf16.mxu0 0
        %1014 = vmatmul.mubr.bf16.gmra.mrb[0].mxu0 %v895
        %v1015 = vpop.f32.mrb[0].mxu0
        %v1016 = vadd.f32 0.0, %v1015
        %v1017 = vpop.f32.mrb[0].mxu0
        %v1018 = vpop.f32.mrb[0].mxu0
        %v1019 = vadd.f32 0.0, %v1018
        %v1020 = vpop.f32.mrb[0].mxu0
        %1021 = vdwg.mxu0
        %v1022 = vadd.f32 %v823, %v984
        %v1023 = vadd.f32 %v826, %v987
        %v1024 = vadd.f32 %v831, %v992
        %v1025 = vadd.f32 %v834, %v995
        %v1026 = vadd.f32 %v839, %v1000
        %v1027 = vadd.f32 %v842, %v1003
        %v1028 = vadd.f32 %v847, %v1008
        %v1029 = vadd.f32 %v850, %v1011
        %v1030 = vadd.f32 %v855, %v1016
        %v1031 = vadd.f32 %v858, %v1019
        %s1032 = scalar_lea.vmem [#allocation8], 192
        %v1033 = vld [vmem:[%s1032] sm:$0xf]
        %v1034 = vld [vmem:[%s1032 + $0x4] sm:$0xf]
        %v1035 = vld [vmem:[%s1032 + $0x8] sm:$0xf]
        %v1036 = vld [vmem:[%s1032 + $0xc] sm:$0xf]
        %v1037 = vld [vmem:[%s1032 + $0x10] sm:$0xf]
        %v1038 = vld [vmem:[%s1032 + $0x14] sm:$0xf]
        %v1039 = vld [vmem:[%s1032 + $0x18] sm:$0xf]
        %v1040 = vld [vmem:[%s1032 + $0x1c] sm:$0xf]
        %v1041 = vld [vmem:[%s1032 + $0x20] sm:$0xf]
        %v1042 = vld [vmem:[%s1032 + $0x24] sm:$0xf]
        %v1043 = vld [vmem:[%s1032 + $0x28] sm:$0xf]
        %v1044 = vld [vmem:[%s1032 + $0x2c] sm:$0xf]
        %v1045 = vld [vmem:[%s1032 + $0x30] sm:$0xf]
        %v1046 = vld [vmem:[%s1032 + $0x34] sm:$0xf]
        %v1047 = vld [vmem:[%s1032 + $0x38] sm:$0xf]
        %v1048 = vld [vmem:[%s1032 + $0x3c] sm:$0xf]
        %vm1049 = vsmask.f32 6400
        %v1050 = vrot.slane %v571, 1
        %v1051 = vrot.slane %v573, 2
        %v1052 = vor.u32 %v1050, %v1051
        %v1053 = vrot.slane %v582, 1
        %v1054 = vrot.slane %v578, 2
        %v1055 = vor.u32 %v1053, %v1054
        %v1056 = vsel %vm1049, %v1052, %v1055
        %v1057 = vrot.slane %v590, 1
        %v1058 = vrot.slane %v586, 2
        %v1059 = vor.u32 %v1057, %v1058
        %v1060 = vsel %vm1049, %v1055, %v1059
        %v1061 = vrot.slane %v598, 1
        %v1062 = vrot.slane %v594, 2
        %v1063 = vor.u32 %v1061, %v1062
        %v1064 = vsel %vm1049, %v1059, %v1063
        %v1065 = vrot.slane %v606, 1
        %v1066 = vrot.slane %v602, 2
        %v1067 = vor.u32 %v1065, %v1066
        %v1068 = vsel %vm1049, %v1063, %v1067
        %v1069 = vshrl.u32 %v535, 16
        %v1071 = vrot.slane %v1069, 1
        %v1072 = vrot.slane %v610, 2
        %v1073 = vor.u32 %v1071, %v1072
        %v1074 = vsel %vm1049, %v1067, %v1073
        %v1096 = vunpack.c.l.b16 %v1033
        %v1097 = vunpack.c.l.b16 %v1034
        %v1098 = vunpack.c.l.b16 %v1035
        %v1099 = vunpack.c.l.b16 %v1036
        %v1100 = vunpack.c.l.b16 %v1037
        %v1101 = vunpack.c.l.b16 %v1038
        %v1102 = vunpack.c.l.b16 %v1039
        %v1103 = vunpack.c.l.b16 %v1040
        %v1104 = vunpack.c.l.b16 %v1041
        %v1105 = vunpack.c.l.b16 %v1042
        %v1106 = vunpack.c.l.b16 %v1043
        %v1107 = vunpack.c.l.b16 %v1044
        %v1108 = vunpack.c.l.b16 %v1045
        %v1109 = vunpack.c.l.b16 %v1046
        %v1110 = vunpack.c.l.b16 %v1047
        %v1111 = vunpack.c.l.b16 %v1048
        %v1112 = vpack.c.b16 %v1097, %v1096
        %v1113 = vpack.c.b16 %v1099, %v1098
        %v1114 = vpack.c.b16 %v1101, %v1100
        %v1115 = vpack.c.b16 %v1103, %v1102
        %v1116 = vpack.c.b16 %v1105, %v1104
        %v1117 = vpack.c.b16 %v1107, %v1106
        %v1118 = vpack.c.b16 %v1109, %v1108
        %v1119 = vpack.c.b16 %v1111, %v1110
        %1128 = vmatprep.subr.bf16.mxu0 0
        %1129 = vmatpush1.bf16.msra.mxu0 %v1112
        %1130 = vmatprep.subr.bf16.mxu0 0
        %1131 = vmatpush1.bf16.msra.mxu0 %v1113
        %1132 = vmatprep.subr.bf16.mxu0 0
        %1133 = vmatpush1.bf16.msra.mxu0 %v1114
        %1134 = vmatprep.subr.bf16.mxu0 0
        %1135 = vmatpush1.bf16.msra.mxu0 %v1115
        %1136 = vmatprep.subr.bf16.mxu0 0
        %1137 = vmatpush1.bf16.msra.mxu0 %v1116
        %1138 = vmatprep.subr.bf16.mxu0 0
        %1139 = vmatpush1.bf16.msra.mxu0 %v1117
        %1140 = vmatprep.subr.bf16.mxu0 0
        %1141 = vmatpush1.bf16.msra.mxu0 %v1118
        %1142 = vmatprep.subr.bf16.mxu0 0
        %1143 = vmatpush1.bf16.msra.mxu0 %v1119
        %1144 = vmatprep.subr.bf16.mxu0 0
        %1145 = vmatpush1.bf16.msra.mxu0 0
        %1146 = vmatprep.subr.bf16.mxu0 0
        %1147 = vmatpush1.bf16.msra.mxu0 0
        %1148 = vmatprep.subr.bf16.mxu0 0
        %1149 = vmatpush1.bf16.msra.mxu0 0
        %1150 = vmatprep.subr.bf16.mxu0 0
        %1151 = vmatpush1.bf16.msra.mxu0 0
        %1152 = vmatprep.subr.bf16.mxu0 0
        %1153 = vmatpush1.bf16.msra.mxu0 0
        %1154 = vmatprep.subr.bf16.mxu0 0
        %1155 = vmatpush1.bf16.msra.mxu0 0
        %1156 = vmatprep.subr.bf16.mxu0 0
        %1157 = vmatpush1.bf16.msra.mxu0 0
        %1158 = vmatprep.subr.bf16.mxu0 0
        %1159 = vmatpush1.bf16.msra.mxu0 0
        %1160 = vmatprep.mubr.bf16.mxu0 0
        %1161 = vmatmul.mubr.bf16.gmra.mrb[0].mxu0 %v1056
        %v1162 = vpop.f32.mrb[0].mxu0
        %v1163 = vadd.f32 0.0, %v1162
        %v1164 = vpop.f32.mrb[0].mxu0
        %v1165 = vpop.f32.mrb[0].mxu0
        %v1166 = vadd.f32 0.0, %v1165
        %v1167 = vpop.f32.mrb[0].mxu0
        %1168 = vmatprep.mubr.bf16.mxu0 0
        %1169 = vmatmul.mubr.bf16.gmra.mrb[0].mxu0 %v1060
        %v1170 = vpop.f32.mrb[0].mxu0
        %v1171 = vadd.f32 0.0, %v1170
        %v1172 = vpop.f32.mrb[0].mxu0
        %v1173 = vpop.f32.mrb[0].mxu0
        %v1174 = vadd.f32 0.0, %v1173
        %v1175 = vpop.f32.mrb[0].mxu0
        %1176 = vmatprep.mubr.bf16.mxu0 0
        %1177 = vmatmul.mubr.bf16.gmra.mrb[0].mxu0 %v1064
        %v1178 = vpop.f32.mrb[0].mxu0
        %v1179 = vadd.f32 0.0, %v1178
        %v1180 = vpop.f32.mrb[0].mxu0
        %v1181 = vpop.f32.mrb[0].mxu0
        %v1182 = vadd.f32 0.0, %v1181
        %v1183 = vpop.f32.mrb[0].mxu0
        %1184 = vmatprep.mubr.bf16.mxu0 0
        %1185 = vmatmul.mubr.bf16.gmra.mrb[0].mxu0 %v1068
        %v1186 = vpop.f32.mrb[0].mxu0
        %v1187 = vadd.f32 0.0, %v1186
        %v1188 = vpop.f32.mrb[0].mxu0
        %v1189 = vpop.f32.mrb[0].mxu0
        %v1190 = vadd.f32 0.0, %v1189
        %v1191 = vpop.f32.mrb[0].mxu0
        %1192 = vmatprep.mubr.bf16.mxu0 0
        %1193 = vmatmul.mubr.bf16.gmra.mrb[0].mxu0 %v1074
        %v1194 = vpop.f32.mrb[0].mxu0
        %v1195 = vadd.f32 0.0, %v1194
        %v1196 = vpop.f32.mrb[0].mxu0
        %v1197 = vpop.f32.mrb[0].mxu0
        %v1198 = vadd.f32 0.0, %v1197
        %v1199 = vpop.f32.mrb[0].mxu0
        %1200 = vdwg.mxu0
        %v1201 = vadd.f32 %v1022, %v1163
        %v1202 = vadd.f32 %v1023, %v1166
        %v1203 = vadd.f32 %v1024, %v1171
        %v1204 = vadd.f32 %v1025, %v1174
        %v1205 = vadd.f32 %v1026, %v1179
        %v1206 = vadd.f32 %v1027, %v1182
        %v1207 = vadd.f32 %v1028, %v1187
        %v1208 = vadd.f32 %v1029, %v1190
        %v1209 = vadd.f32 %v1030, %v1195
        %v1210 = vadd.f32 %v1031, %v1198
        %v1211 = vld [vmem:[%s2] sm:$0x1]
        %v1213 = vlaneseq
        %v1214 = vshrl.u32 %v1213, 7
        %v1215 = vsub.s32 0, %v1214
        %v1216 = vrot.slane %v1211, %v1215
        %v1218 = vadd.f32 %v1201, %v1216
        %v1219 = vadd.f32 %v1202, %v1216
        %v1220 = vadd.f32 %v1203, %v1216
        %v1221 = vadd.f32 %v1204, %v1216
        %v1222 = vadd.f32 %v1205, %v1216
        %v1223 = vadd.f32 %v1206, %v1216
        %v1224 = vadd.f32 %v1207, %v1216
        %v1225 = vadd.f32 %v1208, %v1216
        %v1226 = vadd.f32 %v1209, %v1216
        %v1227 = vadd.f32 %v1210, %v1216
        %vm1228 = vcmp.gt.f32.partialorder %v1218, 0.0
        %vm1229 = vcmp.gt.f32.partialorder %v1219, 0.0
        %vm1230 = vcmp.gt.f32.partialorder %v1220, 0.0
        %vm1231 = vcmp.gt.f32.partialorder %v1221, 0.0
        %vm1232 = vcmp.gt.f32.partialorder %v1222, 0.0
        %vm1233 = vcmp.gt.f32.partialorder %v1223, 0.0
        %vm1234 = vcmp.gt.f32.partialorder %v1224, 0.0
        %vm1235 = vcmp.gt.f32.partialorder %v1225, 0.0
        %vm1236 = vcmp.gt.f32.partialorder %v1226, 0.0
        %vm1237 = vcmp.gt.f32.partialorder %v1227, 0.0
        %v1238 = vmul.f32 %v1218, 0.2
        %v1239 = vmul.f32 %v1219, 0.2
        %v1240 = vmul.f32 %v1220, 0.2
        %v1241 = vmul.f32 %v1221, 0.2
        %v1242 = vmul.f32 %v1222, 0.2
        %v1243 = vmul.f32 %v1223, 0.2
        %v1244 = vmul.f32 %v1224, 0.2
        %v1245 = vmul.f32 %v1225, 0.2
        %v1246 = vmul.f32 %v1226, 0.2
        %v1247 = vmul.f32 %v1227, 0.2
        %v1248 = vsel %vm1228, %v1218, %v1238
        %v1249 = vsel %vm1229, %v1219, %v1239
        %v1250 = vsel %vm1230, %v1220, %v1240
        %v1251 = vsel %vm1231, %v1221, %v1241
        %v1252 = vsel %vm1232, %v1222, %v1242
        %v1253 = vsel %vm1233, %v1223, %v1243
        %v1254 = vsel %vm1234, %v1224, %v1244
        %v1255 = vsel %vm1235, %v1225, %v1245
        %v1256 = vsel %vm1236, %v1226, %v1246
        %v1257 = vsel %vm1237, %v1227, %v1247
        %1258 = vst [vmem:[#allocation2 + $0x2] sm:$0x1] %v1248
        %1259 = vst [vmem:[#allocation2 + $0x1a] sm:$0x1] %v1253
        %1260 = vst [vmem:[#allocation2 + $0x1] sm:$0x4] %v1248
        %1261 = vst [vmem:[#allocation2 + $0x19] sm:$0x4] %v1253
        %1262 = vst [vmem:[#allocation2] sm:$0x10] %v1248
        %1263 = vst [vmem:[#allocation2 + $0x18] sm:$0x10] %v1253
        %1264 = vst [vmem:[#allocation2 - $0x1] sm:$0x40] %v1248
        %1265 = vst [vmem:[#allocation2 + $0x17] sm:$0x40] %v1253
        %1266 = vst [vmem:[#allocation2 + $0x6] sm:$0x1] %v1249
        %1267 = vst [vmem:[#allocation2 + $0x1e] sm:$0x1] %v1254
        %1268 = vst [vmem:[#allocation2 + $0x5] sm:$0x4] %v1249
        %1269 = vst [vmem:[#allocation2 + $0x1d] sm:$0x4] %v1254
        %1270 = vst [vmem:[#allocation2 + $0x4] sm:$0x10] %v1249
        %1271 = vst [vmem:[#allocation2 + $0x1c] sm:$0x10] %v1254
        %1272 = vst [vmem:[#allocation2 + $0x3] sm:$0x40] %v1249
        %1273 = vst [vmem:[#allocation2 + $0x1b] sm:$0x40] %v1254
        %1274 = vst [vmem:[#allocation2 + $0xa] sm:$0x1] %v1250
        %1275 = vst [vmem:[#allocation2 + $0x22] sm:$0x1] %v1255
        %1276 = vst [vmem:[#allocation2 + $0x9] sm:$0x4] %v1250
        %1277 = vst [vmem:[#allocation2 + $0x21] sm:$0x4] %v1255
        %1278 = vst [vmem:[#allocation2 + $0x8] sm:$0x10] %v1250
        %1279 = vst [vmem:[#allocation2 + $0x20] sm:$0x10] %v1255
        %1280 = vst [vmem:[#allocation2 + $0x7] sm:$0x40] %v1250
        %1281 = vst [vmem:[#allocation2 + $0x1f] sm:$0x40] %v1255
        %1282 = vst [vmem:[#allocation2 + $0xe] sm:$0x1] %v1251
        %1283 = vst [vmem:[#allocation2 + $0x26] sm:$0x1] %v1256
        %1284 = vst [vmem:[#allocation2 + $0xd] sm:$0x4] %v1251
        %1285 = vst [vmem:[#allocation2 + $0x25] sm:$0x4] %v1256
        %1286 = vst [vmem:[#allocation2 + $0xc] sm:$0x10] %v1251
        %1287 = vst [vmem:[#allocation2 + $0x24] sm:$0x10] %v1256
        %1288 = vst [vmem:[#allocation2 + $0xb] sm:$0x40] %v1251
        %1289 = vst [vmem:[#allocation2 + $0x23] sm:$0x40] %v1256
        %1290 = vst [vmem:[#allocation2 + $0x12] sm:$0x1] %v1252
        %1291 = vst [vmem:[#allocation2 + $0x2a] sm:$0x1] %v1257
        %v1292 = vld [vmem:[#allocation2] sm:$0xff]
        %v1293 = vld [vmem:[#allocation2 + $0x8] sm:$0xff]
        %v1294 = vld [vmem:[#allocation2 + $0x10] sm:$0xff]
        %v1295 = vld [vmem:[#allocation2 + $0x18] sm:$0xff]
        %v1296 = vld [vmem:[#allocation2 + $0x20] sm:$0xff]
        %v1297 = vld [vmem:[#allocation2 + $0x28] sm:$0xff]
        %v1298 = vpack.c.bf16 %v1293, %v1292
        %v1299 = vpack.c.bf16 %v1295, %v1294
        %v1300 = vpack.c.bf16 %v1297, %v1296
        %v1301 = vld [vmem:[#allocation10] sm:$0xf]
        %v1302 = vld [vmem:[#allocation10 + $0x4] sm:$0xf]
        %v1303 = vld [vmem:[#allocation10 + $0x8] sm:$0xf]
        %v1304 = vld [vmem:[#allocation10 + $0xc] sm:$0xf]
        %v1305 = vld [vmem:[#allocation10 + $0x10] sm:$0xf]
        %v1306 = vld [vmem:[#allocation10 + $0x14] sm:$0xf]
        %v1307 = vld [vmem:[#allocation10 + $0x18] sm:$0xf]
        %v1308 = vld [vmem:[#allocation10 + $0x1c] sm:$0xf]
        %v1309 = vld [vmem:[#allocation10 + $0x20] sm:$0xf]
        %v1310 = vld [vmem:[#allocation10 + $0x24] sm:$0xf]
        %v1311 = vld [vmem:[#allocation10 + $0x28] sm:$0xf]
        %v1312 = vld [vmem:[#allocation10 + $0x2c] sm:$0xf]
        %v1313 = vld [vmem:[#allocation10 + $0x30] sm:$0xf]
        %v1314 = vld [vmem:[#allocation10 + $0x34] sm:$0xf]
        %v1315 = vld [vmem:[#allocation10 + $0x38] sm:$0xf]
        %v1316 = vld [vmem:[#allocation10 + $0x3c] sm:$0xf]
        %s1317 = scalar_lea.vmem [#allocation10], 64
        %v1318 = vld [vmem:[%s1317] sm:$0xf]
        %v1319 = vld [vmem:[%s1317 + $0x4] sm:$0xf]
        %v1320 = vld [vmem:[%s1317 + $0x8] sm:$0xf]
        %v1321 = vld [vmem:[%s1317 + $0xc] sm:$0xf]
        %v1322 = vld [vmem:[%s1317 + $0x10] sm:$0xf]
        %v1323 = vld [vmem:[%s1317 + $0x14] sm:$0xf]
        %v1324 = vld [vmem:[%s1317 + $0x18] sm:$0xf]
        %v1325 = vld [vmem:[%s1317 + $0x1c] sm:$0xf]
        %v1326 = vld [vmem:[%s1317 + $0x20] sm:$0xf]
        %v1327 = vld [vmem:[%s1317 + $0x24] sm:$0xf]
        %v1328 = vld [vmem:[%s1317 + $0x28] sm:$0xf]
        %v1329 = vld [vmem:[%s1317 + $0x2c] sm:$0xf]
        %v1330 = vld [vmem:[%s1317 + $0x30] sm:$0xf]
        %v1331 = vld [vmem:[%s1317 + $0x34] sm:$0xf]
        %v1332 = vld [vmem:[%s1317 + $0x38] sm:$0xf]
        %v1333 = vld [vmem:[%s1317 + $0x3c] sm:$0xf]
        %v1335 = vshrl.u32 %v1298, 16
        %v1337 = vshll.u32 %v1298, 16
        %v1339 = vrot.slane %v1337, 1
        %v1340 = vor.u32 %v1335, %v1339
        %v1342 = vshll.u32 %v1299, 16
        %v1344 = vrot.slane %v1342, 1
        %v1345 = vsel %vm569, %v1340, %v1344
        %v1346 = vshrl.u32 %v1299, 16
        %v1348 = vor.u32 %v1346, %v1344
        %v1350 = vshll.u32 %v1300, 16
        %v1352 = vrot.slane %v1350, 1
        %v1353 = vsel %vm569, %v1348, %v1352
        %v1354 = vshrl.u32 %v1300, 16
        %v1356 = vor.u32 %v1354, %v1352
        %v1357 = vsel %vm569, %v1356, %v612
        %v1377 = vunpack.c.l.b16 %v1318
        %v1378 = vunpack.c.l.b16 %v1319
        %v1379 = vunpack.c.l.b16 %v1320
        %v1380 = vunpack.c.l.b16 %v1321
        %v1381 = vunpack.c.l.b16 %v1322
        %v1382 = vunpack.c.l.b16 %v1323
        %v1383 = vunpack.c.l.b16 %v1324
        %v1384 = vunpack.c.l.b16 %v1325
        %v1385 = vunpack.c.l.b16 %v1326
        %v1386 = vunpack.c.l.b16 %v1327
        %v1387 = vunpack.c.l.b16 %v1328
        %v1388 = vunpack.c.l.b16 %v1329
        %v1389 = vunpack.c.l.b16 %v1330
        %v1390 = vunpack.c.l.b16 %v1331
        %v1391 = vunpack.c.l.b16 %v1332
        %v1392 = vunpack.c.l.b16 %v1333
        %v1393 = vpack.c.b16 %v1378, %v1377
        %v1394 = vpack.c.b16 %v1380, %v1379
        %v1395 = vpack.c.b16 %v1382, %v1381
        %v1396 = vpack.c.b16 %v1384, %v1383
        %v1397 = vpack.c.b16 %v1386, %v1385
        %v1398 = vpack.c.b16 %v1388, %v1387
        %v1399 = vpack.c.b16 %v1390, %v1389
        %v1400 = vpack.c.b16 %v1392, %v1391
        %1409 = vmatprep.subr.bf16.mxu0 0
        %1410 = vmatpush1.bf16.msra.mxu0 %v1393
        %1411 = vmatprep.subr.bf16.mxu0 0
        %1412 = vmatpush1.bf16.msra.mxu0 %v1394
        %1413 = vmatprep.subr.bf16.mxu0 0
        %1414 = vmatpush1.bf16.msra.mxu0 %v1395
        %1415 = vmatprep.subr.bf16.mxu0 0
        %1416 = vmatpush1.bf16.msra.mxu0 %v1396
        %1417 = vmatprep.subr.bf16.mxu0 0
        %1418 = vmatpush1.bf16.msra.mxu0 %v1397
        %1419 = vmatprep.subr.bf16.mxu0 0
        %1420 = vmatpush1.bf16.msra.mxu0 %v1398
        %1421 = vmatprep.subr.bf16.mxu0 0
        %1422 = vmatpush1.bf16.msra.mxu0 %v1399
        %1423 = vmatprep.subr.bf16.mxu0 0
        %1424 = vmatpush1.bf16.msra.mxu0 %v1400
        %1425 = vmatprep.subr.bf16.mxu0 0
        %1426 = vmatpush1.bf16.msra.mxu0 0
        %1427 = vmatprep.subr.bf16.mxu0 0
        %1428 = vmatpush1.bf16.msra.mxu0 0
        %1429 = vmatprep.subr.bf16.mxu0 0
        %1430 = vmatpush1.bf16.msra.mxu0 0
        %1431 = vmatprep.subr.bf16.mxu0 0
        %1432 = vmatpush1.bf16.msra.mxu0 0
        %1433 = vmatprep.subr.bf16.mxu0 0
        %1434 = vmatpush1.bf16.msra.mxu0 0
        %1435 = vmatprep.subr.bf16.mxu0 0
        %1436 = vmatpush1.bf16.msra.mxu0 0
        %1437 = vmatprep.subr.bf16.mxu0 0
        %1438 = vmatpush1.bf16.msra.mxu0 0
        %1439 = vmatprep.subr.bf16.mxu0 0
        %1440 = vmatpush1.bf16.msra.mxu0 0
        %1441 = vmatprep.mubr.bf16.mxu0 0
        %1442 = vmatmul.mubr.bf16.gmra.mrb[0].mxu0 %v1345
        %v1443 = vpop.f32.mrb[0].mxu0
        %v1444 = vadd.f32 0.0, %v1443
        %v1445 = vpop.f32.mrb[0].mxu0
        %v1446 = vpop.f32.mrb[0].mxu0
        %v1447 = vadd.f32 0.0, %v1446
        %v1448 = vpop.f32.mrb[0].mxu0
        %1449 = vmatprep.mubr.bf16.mxu0 0
        %1450 = vmatmul.mubr.bf16.gmra.mrb[0].mxu0 %v1353
        %v1451 = vpop.f32.mrb[0].mxu0
        %v1452 = vadd.f32 0.0, %v1451
        %v1453 = vpop.f32.mrb[0].mxu0
        %v1454 = vpop.f32.mrb[0].mxu0
        %v1455 = vadd.f32 0.0, %v1454
        %v1456 = vpop.f32.mrb[0].mxu0
        %1457 = vmatprep.mubr.bf16.mxu0 0
        %1458 = vmatmul.mubr.bf16.gmra.mrb[0].mxu0 %v1357
        %v1459 = vpop.f32.mrb[0].mxu0
        %v1460 = vadd.f32 0.0, %v1459
        %v1461 = vpop.f32.mrb[0].mxu0
        %v1462 = vpop.f32.mrb[0].mxu0
        %v1463 = vadd.f32 0.0, %v1462
        %v1464 = vpop.f32.mrb[0].mxu0
        %1465 = vdwg.mxu0
        %v1482 = vunpack.c.l.b16 %v1301
        %v1483 = vunpack.c.l.b16 %v1302
        %v1484 = vunpack.c.l.b16 %v1303
        %v1485 = vunpack.c.l.b16 %v1304
        %v1486 = vunpack.c.l.b16 %v1305
        %v1487 = vunpack.c.l.b16 %v1306
        %v1488 = vunpack.c.l.b16 %v1307
        %v1489 = vunpack.c.l.b16 %v1308
        %v1490 = vunpack.c.l.b16 %v1309
        %v1491 = vunpack.c.l.b16 %v1310
        %v1492 = vunpack.c.l.b16 %v1311
        %v1493 = vunpack.c.l.b16 %v1312
        %v1494 = vunpack.c.l.b16 %v1313
        %v1495 = vunpack.c.l.b16 %v1314
        %v1496 = vunpack.c.l.b16 %v1315
        %v1497 = vunpack.c.l.b16 %v1316
        %v1498 = vpack.c.b16 %v1483, %v1482
        %v1499 = vpack.c.b16 %v1485, %v1484
        %v1500 = vpack.c.b16 %v1487, %v1486
        %v1501 = vpack.c.b16 %v1489, %v1488
        %v1502 = vpack.c.b16 %v1491, %v1490
        %v1503 = vpack.c.b16 %v1493, %v1492
        %v1504 = vpack.c.b16 %v1495, %v1494
        %v1505 = vpack.c.b16 %v1497, %v1496
        %1514 = vmatprep.subr.bf16.mxu0 0
        %1515 = vmatpush1.bf16.msra.mxu0 %v1498
        %1516 = vmatprep.subr.bf16.mxu0 0
        %1517 = vmatpush1.bf16.msra.mxu0 %v1499
        %1518 = vmatprep.subr.bf16.mxu0 0
        %1519 = vmatpush1.bf16.msra.mxu0 %v1500
        %1520 = vmatprep.subr.bf16.mxu0 0
        %1521 = vmatpush1.bf16.msra.mxu0 %v1501
        %1522 = vmatprep.subr.bf16.mxu0 0
        %1523 = vmatpush1.bf16.msra.mxu0 %v1502
        %1524 = vmatprep.subr.bf16.mxu0 0
        %1525 = vmatpush1.bf16.msra.mxu0 %v1503
        %1526 = vmatprep.subr.bf16.mxu0 0
        %1527 = vmatpush1.bf16.msra.mxu0 %v1504
        %1528 = vmatprep.subr.bf16.mxu0 0
        %1529 = vmatpush1.bf16.msra.mxu0 %v1505
        %1530 = vmatprep.subr.bf16.mxu0 0
        %1531 = vmatpush1.bf16.msra.mxu0 0
        %1532 = vmatprep.subr.bf16.mxu0 0
        %1533 = vmatpush1.bf16.msra.mxu0 0
        %1534 = vmatprep.subr.bf16.mxu0 0
        %1535 = vmatpush1.bf16.msra.mxu0 0
        %1536 = vmatprep.subr.bf16.mxu0 0
        %1537 = vmatpush1.bf16.msra.mxu0 0
        %1538 = vmatprep.subr.bf16.mxu0 0
        %1539 = vmatpush1.bf16.msra.mxu0 0
        %1540 = vmatprep.subr.bf16.mxu0 0
        %1541 = vmatpush1.bf16.msra.mxu0 0
        %1542 = vmatprep.subr.bf16.mxu0 0
        %1543 = vmatpush1.bf16.msra.mxu0 0
        %1544 = vmatprep.subr.bf16.mxu0 0
        %1545 = vmatpush1.bf16.msra.mxu0 0
        %1546 = vmatprep.mubr.bf16.mxu0 0
        %1547 = vmatmul.mubr.bf16.gmra.mrb[0].mxu0 %v1298
        %v1548 = vpop.f32.mrb[0].mxu0
        %v1549 = vadd.f32 %v1444, %v1548
        %v1550 = vpop.f32.mrb[0].mxu0
        %v1551 = vpop.f32.mrb[0].mxu0
        %v1552 = vadd.f32 %v1447, %v1551
        %v1553 = vpop.f32.mrb[0].mxu0
        %1554 = vmatprep.mubr.bf16.mxu0 0
        %1555 = vmatmul.mubr.bf16.gmra.mrb[0].mxu0 %v1299
        %v1556 = vpop.f32.mrb[0].mxu0
        %v1557 = vadd.f32 %v1452, %v1556
        %v1558 = vpop.f32.mrb[0].mxu0
        %v1559 = vpop.f32.mrb[0].mxu0
        %v1560 = vadd.f32 %v1455, %v1559
        %v1561 = vpop.f32.mrb[0].mxu0
        %1562 = vmatprep.mubr.bf16.mxu0 0
        %1563 = vmatmul.mubr.bf16.gmra.mrb[0].mxu0 %v1300
        %v1564 = vpop.f32.mrb[0].mxu0
        %v1565 = vadd.f32 %v1460, %v1564
        %v1566 = vpop.f32.mrb[0].mxu0
        %v1567 = vpop.f32.mrb[0].mxu0
        %v1568 = vadd.f32 %v1463, %v1567
        %v1569 = vpop.f32.mrb[0].mxu0
        %1570 = vdwg.mxu0
        %s1571 = scalar_lea.vmem [#allocation10], 128
        %v1572 = vld [vmem:[%s1571] sm:$0xf]
        %v1573 = vld [vmem:[%s1571 + $0x4] sm:$0xf]
        %v1574 = vld [vmem:[%s1571 + $0x8] sm:$0xf]
        %v1575 = vld [vmem:[%s1571 + $0xc] sm:$0xf]
        %v1576 = vld [vmem:[%s1571 + $0x10] sm:$0xf]
        %v1577 = vld [vmem:[%s1571 + $0x14] sm:$0xf]
        %v1578 = vld [vmem:[%s1571 + $0x18] sm:$0xf]
        %v1579 = vld [vmem:[%s1571 + $0x1c] sm:$0xf]
        %v1580 = vld [vmem:[%s1571 + $0x20] sm:$0xf]
        %v1581 = vld [vmem:[%s1571 + $0x24] sm:$0xf]
        %v1582 = vld [vmem:[%s1571 + $0x28] sm:$0xf]
        %v1583 = vld [vmem:[%s1571 + $0x2c] sm:$0xf]
        %v1584 = vld [vmem:[%s1571 + $0x30] sm:$0xf]
        %v1585 = vld [vmem:[%s1571 + $0x34] sm:$0xf]
        %v1586 = vld [vmem:[%s1571 + $0x38] sm:$0xf]
        %v1587 = vld [vmem:[%s1571 + $0x3c] sm:$0xf]
        %v1591 = vrot.slane %v1298, 1
        %v1592 = vrot.slane %v1299, 1
        %v1593 = vsel %vm884, %v1591, %v1592
        %v1594 = vrot.slane %v1300, 1
        %v1595 = vsel %vm884, %v1592, %v1594
        %v1596 = vsel %vm884, %v1594, %v894
        %v1616 = vunpack.c.l.b16 %v1572
        %v1617 = vunpack.c.l.b16 %v1573
        %v1618 = vunpack.c.l.b16 %v1574
        %v1619 = vunpack.c.l.b16 %v1575
        %v1620 = vunpack.c.l.b16 %v1576
        %v1621 = vunpack.c.l.b16 %v1577
        %v1622 = vunpack.c.l.b16 %v1578
        %v1623 = vunpack.c.l.b16 %v1579
        %v1624 = vunpack.c.l.b16 %v1580
        %v1625 = vunpack.c.l.b16 %v1581
        %v1626 = vunpack.c.l.b16 %v1582
        %v1627 = vunpack.c.l.b16 %v1583
        %v1628 = vunpack.c.l.b16 %v1584
        %v1629 = vunpack.c.l.b16 %v1585
        %v1630 = vunpack.c.l.b16 %v1586
        %v1631 = vunpack.c.l.b16 %v1587
        %v1632 = vpack.c.b16 %v1617, %v1616
        %v1633 = vpack.c.b16 %v1619, %v1618
        %v1634 = vpack.c.b16 %v1621, %v1620
        %v1635 = vpack.c.b16 %v1623, %v1622
        %v1636 = vpack.c.b16 %v1625, %v1624
        %v1637 = vpack.c.b16 %v1627, %v1626
        %v1638 = vpack.c.b16 %v1629, %v1628
        %v1639 = vpack.c.b16 %v1631, %v1630
        %1648 = vmatprep.subr.bf16.mxu0 0
        %1649 = vmatpush1.bf16.msra.mxu0 %v1632
        %1650 = vmatprep.subr.bf16.mxu0 0
        %1651 = vmatpush1.bf16.msra.mxu0 %v1633
        %1652 = vmatprep.subr.bf16.mxu0 0
        %1653 = vmatpush1.bf16.msra.mxu0 %v1634
        %1654 = vmatprep.subr.bf16.mxu0 0
        %1655 = vmatpush1.bf16.msra.mxu0 %v1635
        %1656 = vmatprep.subr.bf16.mxu0 0
        %1657 = vmatpush1.bf16.msra.mxu0 %v1636
        %1658 = vmatprep.subr.bf16.mxu0 0
        %1659 = vmatpush1.bf16.msra.mxu0 %v1637
        %1660 = vmatprep.subr.bf16.mxu0 0
        %1661 = vmatpush1.bf16.msra.mxu0 %v1638
        %1662 = vmatprep.subr.bf16.mxu0 0
        %1663 = vmatpush1.bf16.msra.mxu0 %v1639
        %1664 = vmatprep.subr.bf16.mxu0 0
        %1665 = vmatpush1.bf16.msra.mxu0 0
        %1666 = vmatprep.subr.bf16.mxu0 0
        %1667 = vmatpush1.bf16.msra.mxu0 0
        %1668 = vmatprep.subr.bf16.mxu0 0
        %1669 = vmatpush1.bf16.msra.mxu0 0
        %1670 = vmatprep.subr.bf16.mxu0 0
        %1671 = vmatpush1.bf16.msra.mxu0 0
        %1672 = vmatprep.subr.bf16.mxu0 0
        %1673 = vmatpush1.bf16.msra.mxu0 0
        %1674 = vmatprep.subr.bf16.mxu0 0
        %1675 = vmatpush1.bf16.msra.mxu0 0
        %1676 = vmatprep.subr.bf16.mxu0 0
        %1677 = vmatpush1.bf16.msra.mxu0 0
        %1678 = vmatprep.subr.bf16.mxu0 0
        %1679 = vmatpush1.bf16.msra.mxu0 0
        %1680 = vmatprep.mubr.bf16.mxu0 0
        %1681 = vmatmul.mubr.bf16.gmra.mrb[0].mxu0 %v1593
        %v1682 = vpop.f32.mrb[0].mxu0
        %v1683 = vadd.f32 0.0, %v1682
        %v1684 = vpop.f32.mrb[0].mxu0
        %v1685 = vpop.f32.mrb[0].mxu0
        %v1686 = vadd.f32 0.0, %v1685
        %v1687 = vpop.f32.mrb[0].mxu0
        %1688 = vmatprep.mubr.bf16.mxu0 0
        %1689 = vmatmul.mubr.bf16.gmra.mrb[0].mxu0 %v1595
        %v1690 = vpop.f32.mrb[0].mxu0
        %v1691 = vadd.f32 0.0, %v1690
        %v1692 = vpop.f32.mrb[0].mxu0
        %v1693 = vpop.f32.mrb[0].mxu0
        %v1694 = vadd.f32 0.0, %v1693
        %v1695 = vpop.f32.mrb[0].mxu0
        %1696 = vmatprep.mubr.bf16.mxu0 0
        %1697 = vmatmul.mubr.bf16.gmra.mrb[0].mxu0 %v1596
        %v1698 = vpop.f32.mrb[0].mxu0
        %v1699 = vadd.f32 0.0, %v1698
        %v1700 = vpop.f32.mrb[0].mxu0
        %v1701 = vpop.f32.mrb[0].mxu0
        %v1702 = vadd.f32 0.0, %v1701
        %v1703 = vpop.f32.mrb[0].mxu0
        %1704 = vdwg.mxu0
        %v1705 = vadd.f32 %v1549, %v1683
        %v1706 = vadd.f32 %v1552, %v1686
        %v1707 = vadd.f32 %v1557, %v1691
        %v1708 = vadd.f32 %v1560, %v1694
        %v1709 = vadd.f32 %v1565, %v1699
        %v1710 = vadd.f32 %v1568, %v1702
        %s1711 = scalar_lea.vmem [#allocation10], 192
        %v1712 = vld [vmem:[%s1711] sm:$0xf]
        %v1713 = vld [vmem:[%s1711 + $0x4] sm:$0xf]
        %v1714 = vld [vmem:[%s1711 + $0x8] sm:$0xf]
        %v1715 = vld [vmem:[%s1711 + $0xc] sm:$0xf]
        %v1716 = vld [vmem:[%s1711 + $0x10] sm:$0xf]
        %v1717 = vld [vmem:[%s1711 + $0x14] sm:$0xf]
        %v1718 = vld [vmem:[%s1711 + $0x18] sm:$0xf]
        %v1719 = vld [vmem:[%s1711 + $0x1c] sm:$0xf]
        %v1720 = vld [vmem:[%s1711 + $0x20] sm:$0xf]
        %v1721 = vld [vmem:[%s1711 + $0x24] sm:$0xf]
        %v1722 = vld [vmem:[%s1711 + $0x28] sm:$0xf]
        %v1723 = vld [vmem:[%s1711 + $0x2c] sm:$0xf]
        %v1724 = vld [vmem:[%s1711 + $0x30] sm:$0xf]
        %v1725 = vld [vmem:[%s1711 + $0x34] sm:$0xf]
        %v1726 = vld [vmem:[%s1711 + $0x38] sm:$0xf]
        %v1727 = vld [vmem:[%s1711 + $0x3c] sm:$0xf]
        %v1728 = vrot.slane %v1335, 1
        %v1729 = vrot.slane %v1337, 2
        %v1730 = vor.u32 %v1728, %v1729
        %v1731 = vrot.slane %v1346, 1
        %v1732 = vrot.slane %v1342, 2
        %v1733 = vor.u32 %v1731, %v1732
        %v1734 = vsel %vm1049, %v1730, %v1733
        %v1735 = vrot.slane %v1354, 1
        %v1736 = vrot.slane %v1350, 2
        %v1737 = vor.u32 %v1735, %v1736
        %v1738 = vsel %vm1049, %v1733, %v1737
        %v1739 = vsel %vm1049, %v1737, %v1073
        %v1759 = vunpack.c.l.b16 %v1712
        %v1760 = vunpack.c.l.b16 %v1713
        %v1761 = vunpack.c.l.b16 %v1714
        %v1762 = vunpack.c.l.b16 %v1715
        %v1763 = vunpack.c.l.b16 %v1716
        %v1764 = vunpack.c.l.b16 %v1717
        %v1765 = vunpack.c.l.b16 %v1718
        %v1766 = vunpack.c.l.b16 %v1719
        %v1767 = vunpack.c.l.b16 %v1720
        %v1768 = vunpack.c.l.b16 %v1721
        %v1769 = vunpack.c.l.b16 %v1722
        %v1770 = vunpack.c.l.b16 %v1723
        %v1771 = vunpack.c.l.b16 %v1724
        %v1772 = vunpack.c.l.b16 %v1725
        %v1773 = vunpack.c.l.b16 %v1726
        %v1774 = vunpack.c.l.b16 %v1727
        %v1775 = vpack.c.b16 %v1760, %v1759
        %v1776 = vpack.c.b16 %v1762, %v1761
        %v1777 = vpack.c.b16 %v1764, %v1763
        %v1778 = vpack.c.b16 %v1766, %v1765
        %v1779 = vpack.c.b16 %v1768, %v1767
        %v1780 = vpack.c.b16 %v1770, %v1769
        %v1781 = vpack.c.b16 %v1772, %v1771
        %v1782 = vpack.c.b16 %v1774, %v1773
        %1791 = vmatprep.subr.bf16.mxu0 0
        %1792 = vmatpush1.bf16.msra.mxu0 %v1775
        %1793 = vmatprep.subr.bf16.mxu0 0
        %1794 = vmatpush1.bf16.msra.mxu0 %v1776
        %1795 = vmatprep.subr.bf16.mxu0 0
        %1796 = vmatpush1.bf16.msra.mxu0 %v1777
        %1797 = vmatprep.subr.bf16.mxu0 0
        %1798 = vmatpush1.bf16.msra.mxu0 %v1778
        %1799 = vmatprep.subr.bf16.mxu0 0
        %1800 = vmatpush1.bf16.msra.mxu0 %v1779
        %1801 = vmatprep.subr.bf16.mxu0 0
        %1802 = vmatpush1.bf16.msra.mxu0 %v1780
        %1803 = vmatprep.subr.bf16.mxu0 0
        %1804 = vmatpush1.bf16.msra.mxu0 %v1781
        %1805 = vmatprep.subr.bf16.mxu0 0
        %1806 = vmatpush1.bf16.msra.mxu0 %v1782
        %1807 = vmatprep.subr.bf16.mxu0 0
        %1808 = vmatpush1.bf16.msra.mxu0 0
        %1809 = vmatprep.subr.bf16.mxu0 0
        %1810 = vmatpush1.bf16.msra.mxu0 0
        %1811 = vmatprep.subr.bf16.mxu0 0
        %1812 = vmatpush1.bf16.msra.mxu0 0
        %1813 = vmatprep.subr.bf16.mxu0 0
        %1814 = vmatpush1.bf16.msra.mxu0 0
        %1815 = vmatprep.subr.bf16.mxu0 0
        %1816 = vmatpush1.bf16.msra.mxu0 0
        %1817 = vmatprep.subr.bf16.mxu0 0
        %1818 = vmatpush1.bf16.msra.mxu0 0
        %1819 = vmatprep.subr.bf16.mxu0 0
        %1820 = vmatpush1.bf16.msra.mxu0 0
        %1821 = vmatprep.subr.bf16.mxu0 0
        %1822 = vmatpush1.bf16.msra.mxu0 0
        %1823 = vmatprep.mubr.bf16.mxu0 0
        %1824 = vmatmul.mubr.bf16.gmra.mrb[0].mxu0 %v1734
        %v1825 = vpop.f32.mrb[0].mxu0
        %v1826 = vadd.f32 0.0, %v1825
        %v1827 = vpop.f32.mrb[0].mxu0
        %v1828 = vpop.f32.mrb[0].mxu0
        %v1829 = vadd.f32 0.0, %v1828
        %v1830 = vpop.f32.mrb[0].mxu0
        %1831 = vmatprep.mubr.bf16.mxu0 0
        %1832 = vmatmul.mubr.bf16.gmra.mrb[0].mxu0 %v1738
        %v1833 = vpop.f32.mrb[0].mxu0
        %v1834 = vadd.f32 0.0, %v1833
        %v1835 = vpop.f32.mrb[0].mxu0
        %v1836 = vpop.f32.mrb[0].mxu0
        %v1837 = vadd.f32 0.0, %v1836
        %v1838 = vpop.f32.mrb[0].mxu0
        %1839 = vmatprep.mubr.bf16.mxu0 0
        %1840 = vmatmul.mubr.bf16.gmra.mrb[0].mxu0 %v1739
        %v1841 = vpop.f32.mrb[0].mxu0
        %v1842 = vadd.f32 0.0, %v1841
        %v1843 = vpop.f32.mrb[0].mxu0
        %v1844 = vpop.f32.mrb[0].mxu0
        %v1845 = vadd.f32 0.0, %v1844
        %v1846 = vpop.f32.mrb[0].mxu0
        %1847 = vdwg.mxu0
        %v1848 = vadd.f32 %v1705, %v1826
        %v1849 = vadd.f32 %v1706, %v1829
        %v1850 = vadd.f32 %v1707, %v1834
        %v1851 = vadd.f32 %v1708, %v1837
        %v1852 = vadd.f32 %v1709, %v1842
        %v1853 = vadd.f32 %v1710, %v1845
        %v1854 = vld [vmem:[%s4] sm:$0x1]
        %v1856 = vlaneseq
        %v1857 = vshrl.u32 %v1856, 7
        %v1858 = vsub.s32 0, %v1857
        %v1859 = vrot.slane %v1854, %v1858
        %v1861 = vadd.f32 %v1848, %v1859
        %v1862 = vadd.f32 %v1849, %v1859
        %v1863 = vadd.f32 %v1850, %v1859
        %v1864 = vadd.f32 %v1851, %v1859
        %v1865 = vadd.f32 %v1852, %v1859
        %v1866 = vadd.f32 %v1853, %v1859
        %v1867 = vlaneseq
        %v1868 = vshrl.u32 %v1867, 7
        %v1869 = vadd.s32 %v1868, 8
        %v1870 = vadd.s32 %v1868, 16
        %vm1871 = vcmp.lt.s32.totalorder %v1868, 0
        %v1872 = vsub.s32 0, %v1868
        %v1873 = vsel %vm1871, %v1872, %v1868
        %v1874 = vshrl.u32 %v1873, 1
        %v1875 = vand.u32 %v1873, 1
        %v1876 = vsub.s32 0, %v1875
        %v1877 = vsel %vm1871, %v1876, %v1875
        %vm1878 = vcmp.lt.s32.totalorder %v1869, 0
        %v1879 = vsub.s32 0, %v1869
        %v1880 = vsel %vm1878, %v1879, %v1869
        %v1881 = vshrl.u32 %v1880, 1
        %v1882 = vand.u32 %v1880, 1
        %v1883 = vsub.s32 0, %v1882
        %v1884 = vsel %vm1878, %v1883, %v1882
        %vm1885 = vcmp.lt.s32.totalorder %v1870, 0
        %v1886 = vsub.s32 0, %v1870
        %v1887 = vsel %vm1885, %v1886, %v1870
        %v1888 = vshrl.u32 %v1887, 1
        %v1889 = vand.u32 %v1887, 1
        %v1890 = vsub.s32 0, %v1889
        %v1891 = vsel %vm1885, %v1890, %v1889
        %vm1892 = vcmp.ne.s32.totalorder %v1877, 0
        %vm1893 = vcmp.ne.s32.totalorder %v1884, 0
        %vm1894 = vcmp.ne.s32.totalorder %v1891, 0
        %vm1895 = vcmp.lt.s32.totalorder %v1877, 0
        %vm1896 = vcmp.lt.s32.totalorder %v1884, 0
        %vm1897 = vcmp.lt.s32.totalorder %v1891, 0
        %vm1898 = vmand %vm1895, %vm1892
        %vm1899 = vmand %vm1896, %vm1893
        %vm1900 = vmand %vm1897, %vm1894
        %v1901 = vadd.s32 %v1877, 2
        %v1902 = vadd.s32 %v1884, 2
        %v1903 = vadd.s32 %v1891, 2
        %v1904 = vsel %vm1898, %v1901, %v1877
        %v1905 = vsel %vm1899, %v1902, %v1884
        %v1906 = vsel %vm1900, %v1903, %v1891
        %vm1907 = vcmp.eq.s32.totalorder %v1904, 0
        %vm1908 = vcmp.eq.s32.totalorder %v1905, 0
        %vm1909 = vcmp.eq.s32.totalorder %v1906, 0
        %vm1910 = vcmp.le.s32.totalorder %v1868, 16
        %vm1911 = vcmp.le.s32.totalorder %v1869, 16
        %vm1912 = vcmp.le.s32.totalorder %v1870, 16
        %vm1913 = vmand %vm1907, %vm1910
        %vm1914 = vmand %vm1908, %vm1911
        %vm1915 = vmand %vm1909, %vm1912
        %v1916 = vsel %vm1913, 1, 0
        %v1917 = vsel %vm1914, 1, 0
        %v1918 = vsel %vm1915, 1, 0
        %v1919 = vcvt.s32.f32 %v1916
        %v1920 = vcvt.s32.f32 %v1917
        %v1921 = vcvt.s32.f32 %v1918
        %v1922 = vmul.f32 %v1861, %v1919
        %v1923 = vmul.f32 %v1862, %v1920
        %v1924 = vmul.f32 %v1863, %v1921
        %v1925 = vmul.f32 %v1864, %v1919
        %v1926 = vmul.f32 %v1865, %v1920
        %v1927 = vmul.f32 %v1866, %v1921
        %v1928 = vadd.f32 %v1922, %v1923
        %v1929 = vadd.f32 %v1928, %v1924
        %v1930 = vrot.slane %v1929, 4
        %v1931 = vadd.f32 %v1929, %v1930
        %v1932 = vrot.slane %v1931, 2
        %v1933 = vadd.f32 %v1931, %v1932
        %v1934 = vrot.slane %v1933, 1
        %v1935 = vadd.f32 %v1933, %v1934
        %v1936 = vadd.f32 %v1925, %v1926
        %v1937 = vadd.f32 %v1936, %v1927
        %v1938 = vrot.slane %v1937, 4
        %v1939 = vadd.f32 %v1937, %v1938
        %v1940 = vrot.slane %v1939, 2
        %v1941 = vadd.f32 %v1939, %v1940
        %v1942 = vrot.slane %v1941, 1
        %v1943 = vadd.f32 %v1941, %v1942
        %v1944 = vrcp.pop 9.0
        %v1945 = vmul.f32 %v1935, %v1944
        %v1946 = vmul.f32 %v1943, %v1944
        %v1947 = vsub.f32 %v1861, %v1945
        %v1948 = vsub.f32 %v1862, %v1945
        %v1949 = vsub.f32 %v1863, %v1945
        %v1950 = vsub.f32 %v1864, %v1946
        %v1951 = vsub.f32 %v1865, %v1946
        %v1952 = vsub.f32 %v1866, %v1946
        %v1953 = vmul.f32 %v1947, %v1947
        %v1954 = vmul.f32 %v1948, %v1948
        %v1955 = vmul.f32 %v1949, %v1949
        %v1956 = vmul.f32 %v1950, %v1950
        %v1957 = vmul.f32 %v1951, %v1951
        %v1958 = vmul.f32 %v1952, %v1952
        %v1959 = vmul.f32 %v1953, %v1919
        %v1960 = vmul.f32 %v1954, %v1920
        %v1961 = vmul.f32 %v1955, %v1921
        %v1962 = vmul.f32 %v1956, %v1919
        %v1963 = vmul.f32 %v1957, %v1920
        %v1964 = vmul.f32 %v1958, %v1921
        %v1965 = vadd.f32 %v1959, %v1960
        %v1966 = vadd.f32 %v1965, %v1961
        %v1967 = vrot.slane %v1966, 4
        %v1968 = vadd.f32 %v1966, %v1967
        %v1969 = vrot.slane %v1968, 2
        %v1970 = vadd.f32 %v1968, %v1969
        %v1971 = vrot.slane %v1970, 1
        %v1972 = vadd.f32 %v1970, %v1971
        %v1973 = vadd.f32 %v1962, %v1963
        %v1974 = vadd.f32 %v1973, %v1964
        %v1975 = vrot.slane %v1974, 4
        %v1976 = vadd.f32 %v1974, %v1975
        %v1977 = vrot.slane %v1976, 2
        %v1978 = vadd.f32 %v1976, %v1977
        %v1979 = vrot.slane %v1978, 1
        %v1980 = vadd.f32 %v1978, %v1979
        %v1981 = vmul.f32 %v1972, %v1944
        %v1982 = vmul.f32 %v1980, %v1944
        %v1983 = vadd.f32 %v1981, 1e-05
        %v1984 = vadd.f32 %v1982, 1e-05
        %v1985 = vrsqrt.pop %v1983
        %v1986 = vrsqrt.pop %v1984
        %v1987 = vmul.f32 %v1947, %v1985
        %v1988 = vmul.f32 %v1948, %v1985
        %v1989 = vmul.f32 %v1949, %v1985
        %v1990 = vmul.f32 %v1950, %v1986
        %v1991 = vmul.f32 %v1951, %v1986
        %v1992 = vmul.f32 %v1952, %v1986
        %vm1993 = vcmp.gt.f32.partialorder %v1987, 0.0
        %vm1994 = vcmp.gt.f32.partialorder %v1988, 0.0
        %vm1995 = vcmp.gt.f32.partialorder %v1989, 0.0
        %vm1996 = vcmp.gt.f32.partialorder %v1990, 0.0
        %vm1997 = vcmp.gt.f32.partialorder %v1991, 0.0
        %vm1998 = vcmp.gt.f32.partialorder %v1992, 0.0
        %v1999 = vmul.f32 %v1987, 0.2
        %v2000 = vmul.f32 %v1988, 0.2
        %v2001 = vmul.f32 %v1989, 0.2
        %v2002 = vmul.f32 %v1990, 0.2
        %v2003 = vmul.f32 %v1991, 0.2
        %v2004 = vmul.f32 %v1992, 0.2
        %v2005 = vsel %vm1993, %v1987, %v1999
        %v2006 = vsel %vm1994, %v1988, %v2000
        %v2007 = vsel %vm1995, %v1989, %v2001
        %v2008 = vsel %vm1996, %v1990, %v2002
        %v2009 = vsel %vm1997, %v1991, %v2003
        %v2010 = vsel %vm1998, %v1992, %v2004
        %2011 = vst [vmem:[#allocation3 + $0x2] sm:$0x1] %v2005
        %2012 = vst [vmem:[#allocation3 + $0x12] sm:$0x1] %v2008
        %2013 = vst [vmem:[#allocation3 + $0x1] sm:$0x4] %v2005
        %2014 = vst [vmem:[#allocation3 + $0x11] sm:$0x4] %v2008
        %2015 = vst [vmem:[#allocation3] sm:$0x10] %v2005
        %2016 = vst [vmem:[#allocation3 + $0x10] sm:$0x10] %v2008
        %2017 = vst [vmem:[#allocation3 - $0x1] sm:$0x40] %v2005
        %2018 = vst [vmem:[#allocation3 + $0xf] sm:$0x40] %v2008
        %2019 = vst [vmem:[#allocation3 + $0x6] sm:$0x1] %v2006
        %2020 = vst [vmem:[#allocation3 + $0x16] sm:$0x1] %v2009
        %2021 = vst [vmem:[#allocation3 + $0x5] sm:$0x4] %v2006
        %2022 = vst [vmem:[#allocation3 + $0x15] sm:$0x4] %v2009
        %2023 = vst [vmem:[#allocation3 + $0x4] sm:$0x10] %v2006
        %2024 = vst [vmem:[#allocation3 + $0x14] sm:$0x10] %v2009
        %2025 = vst [vmem:[#allocation3 + $0x3] sm:$0x40] %v2006
        %2026 = vst [vmem:[#allocation3 + $0x13] sm:$0x40] %v2009
        %2027 = vst [vmem:[#allocation3 + $0xa] sm:$0x1] %v2007
        %2028 = vst [vmem:[#allocation3 + $0x1a] sm:$0x1] %v2010
        %v2029 = vld [vmem:[#allocation3] sm:$0xff]
        %v2030 = vld [vmem:[#allocation3 + $0x8] sm:$0xff]
        %v2031 = vld [vmem:[#allocation3 + $0x10] sm:$0xff]
        %v2032 = vld [vmem:[#allocation3 + $0x18] sm:$0xff]
        %v2033 = vpack.c.bf16 %v2030, %v2029
        %v2034 = vpack.c.bf16 %v2032, %v2031
        %v2035 = vld [vmem:[#allocation11] sm:$0xff]
        %v2036 = vld [vmem:[#allocation11 + $0x8] sm:$0xff]
        %v2037 = vld [vmem:[#allocation11 + $0x10] sm:$0xff]
        %v2038 = vld [vmem:[#allocation11 + $0x18] sm:$0xff]
        %v2039 = vld [vmem:[#allocation11 + $0x20] sm:$0xff]
        %v2040 = vld [vmem:[#allocation11 + $0x28] sm:$0xff]
        %v2041 = vld [vmem:[#allocation11 + $0x30] sm:$0xff]
        %v2042 = vld [vmem:[#allocation11 + $0x38] sm:$0xff]
        %v2043 = vld [vmem:[#allocation11 + $0x40] sm:$0xff]
        %v2044 = vld [vmem:[#allocation11 + $0x48] sm:$0xff]
        %v2045 = vld [vmem:[#allocation11 + $0x50] sm:$0xff]
        %v2046 = vld [vmem:[#allocation11 + $0x58] sm:$0xff]
        %v2047 = vld [vmem:[#allocation11 + $0x60] sm:$0xff]
        %v2048 = vld [vmem:[#allocation11 + $0x68] sm:$0xff]
        %v2049 = vld [vmem:[#allocation11 + $0x70] sm:$0xff]
        %v2050 = vld [vmem:[#allocation11 + $0x78] sm:$0xff]
        %s2051 = scalar_lea.vmem [#allocation11], 128
        %v2052 = vld [vmem:[%s2051] sm:$0xff]
        %v2053 = vld [vmem:[%s2051 + $0x8] sm:$0xff]
        %v2054 = vld [vmem:[%s2051 + $0x10] sm:$0xff]
        %v2055 = vld [vmem:[%s2051 + $0x18] sm:$0xff]
        %v2056 = vld [vmem:[%s2051 + $0x20] sm:$0xff]
        %v2057 = vld [vmem:[%s2051 + $0x28] sm:$0xff]
        %v2058 = vld [vmem:[%s2051 + $0x30] sm:$0xff]
        %v2059 = vld [vmem:[%s2051 + $0x38] sm:$0xff]
        %v2060 = vld [vmem:[%s2051 + $0x40] sm:$0xff]
        %v2061 = vld [vmem:[%s2051 + $0x48] sm:$0xff]
        %v2062 = vld [vmem:[%s2051 + $0x50] sm:$0xff]
        %v2063 = vld [vmem:[%s2051 + $0x58] sm:$0xff]
        %v2064 = vld [vmem:[%s2051 + $0x60] sm:$0xff]
        %v2065 = vld [vmem:[%s2051 + $0x68] sm:$0xff]
        %v2066 = vld [vmem:[%s2051 + $0x70] sm:$0xff]
        %v2067 = vld [vmem:[%s2051 + $0x78] sm:$0xff]
        %v2069 = vshrl.u32 %v2033, 16
        %v2071 = vshll.u32 %v2033, 16
        %v2073 = vrot.slane %v2071, 1
        %v2074 = vor.u32 %v2069, %v2073
        %v2076 = vshll.u32 %v2034, 16
        %v2078 = vrot.slane %v2076, 1
        %v2079 = vsel %vm569, %v2074, %v2078
        %v2080 = vshrl.u32 %v2034, 16
        %v2082 = vor.u32 %v2080, %v2078
        %v2083 = vsel %vm569, %v2082, %v612
        %v2102 = vunpack.c.l.b16 %v2052
        %v2103 = vunpack.c.h.b16 %v2052
        %v2104 = vunpack.c.l.b16 %v2053
        %v2105 = vunpack.c.h.b16 %v2053
        %v2106 = vunpack.c.l.b16 %v2054
        %v2107 = vunpack.c.h.b16 %v2054
        %v2108 = vunpack.c.l.b16 %v2055
        %v2109 = vunpack.c.h.b16 %v2055
        %v2110 = vunpack.c.l.b16 %v2056
        %v2111 = vunpack.c.h.b16 %v2056
        %v2112 = vunpack.c.l.b16 %v2057
        %v2113 = vunpack.c.h.b16 %v2057
        %v2114 = vunpack.c.l.b16 %v2058
        %v2115 = vunpack.c.h.b16 %v2058
        %v2116 = vunpack.c.l.b16 %v2059
        %v2117 = vunpack.c.h.b16 %v2059
        %v2118 = vunpack.c.l.b16 %v2060
        %v2119 = vunpack.c.h.b16 %v2060
        %v2120 = vunpack.c.l.b16 %v2061
        %v2121 = vunpack.c.h.b16 %v2061
        %v2122 = vunpack.c.l.b16 %v2062
        %v2123 = vunpack.c.h.b16 %v2062
        %v2124 = vunpack.c.l.b16 %v2063
        %v2125 = vunpack.c.h.b16 %v2063
        %v2126 = vunpack.c.l.b16 %v2064
        %v2127 = vunpack.c.h.b16 %v2064
        %v2128 = vunpack.c.l.b16 %v2065
        %v2129 = vunpack.c.h.b16 %v2065
        %v2130 = vunpack.c.l.b16 %v2066
        %v2131 = vunpack.c.h.b16 %v2066
        %v2132 = vunpack.c.l.b16 %v2067
        %v2133 = vunpack.c.h.b16 %v2067
        %v2134 = vpack.c.b16 %v2104, %v2102
        %v2135 = vpack.c.b16 %v2105, %v2103
        %v2136 = vpack.c.b16 %v2108, %v2106
        %v2137 = vpack.c.b16 %v2109, %v2107
        %v2138 = vpack.c.b16 %v2112, %v2110
        %v2139 = vpack.c.b16 %v2113, %v2111
        %v2140 = vpack.c.b16 %v2116, %v2114
        %v2141 = vpack.c.b16 %v2117, %v2115
        %v2142 = vpack.c.b16 %v2120, %v2118
        %v2143 = vpack.c.b16 %v2121, %v2119
        %v2144 = vpack.c.b16 %v2124, %v2122
        %v2145 = vpack.c.b16 %v2125, %v2123
        %v2146 = vpack.c.b16 %v2128, %v2126
        %v2147 = vpack.c.b16 %v2129, %v2127
        %v2148 = vpack.c.b16 %v2132, %v2130
        %v2149 = vpack.c.b16 %v2133, %v2131
        %2166 = vmatprep.subr.bf16.mxu0 %v2135
        %2167 = vmatpush1.bf16.msra.mxu0 %v2134
        %2168 = vmatprep.subr.bf16.mxu0 %v2137
        %2169 = vmatpush1.bf16.msra.mxu0 %v2136
        %2170 = vmatprep.subr.bf16.mxu0 %v2139
        %2171 = vmatpush1.bf16.msra.mxu0 %v2138
        %2172 = vmatprep.subr.bf16.mxu0 %v2141
        %2173 = vmatpush1.bf16.msra.mxu0 %v2140
        %2174 = vmatprep.subr.bf16.mxu0 %v2143
        %2175 = vmatpush1.bf16.msra.mxu0 %v2142
        %2176 = vmatprep.subr.bf16.mxu0 %v2145
        %2177 = vmatpush1.bf16.msra.mxu0 %v2144
        %2178 = vmatprep.subr.bf16.mxu0 %v2147
        %2179 = vmatpush1.bf16.msra.mxu0 %v2146
        %2180 = vmatprep.subr.bf16.mxu0 %v2149
        %2181 = vmatpush1.bf16.msra.mxu0 %v2148
        %2182 = vmatprep.subr.bf16.mxu0 0
        %2183 = vmatpush1.bf16.msra.mxu0 0
        %2184 = vmatprep.subr.bf16.mxu0 0
        %2185 = vmatpush1.bf16.msra.mxu0 0
        %2186 = vmatprep.subr.bf16.mxu0 0
        %2187 = vmatpush1.bf16.msra.mxu0 0
        %2188 = vmatprep.subr.bf16.mxu0 0
        %2189 = vmatpush1.bf16.msra.mxu0 0
        %2190 = vmatprep.subr.bf16.mxu0 0
        %2191 = vmatpush1.bf16.msra.mxu0 0
        %2192 = vmatprep.subr.bf16.mxu0 0
        %2193 = vmatpush1.bf16.msra.mxu0 0
        %2194 = vmatprep.subr.bf16.mxu0 0
        %2195 = vmatpush1.bf16.msra.mxu0 0
        %2196 = vmatprep.subr.bf16.mxu0 0
        %2197 = vmatpush1.bf16.msra.mxu0 0
        %2198 = vmatprep.mubr.bf16.mxu0 0
        %2199 = vmatmul.mubr.bf16.gmra.mrb[0].mxu0 %v2079
        %v2200 = vpop.f32.mrb[0].mxu0
        %v2201 = vadd.f32 0.0, %v2200
        %v2202 = vpop.f32.mrb[0].mxu0
        %v2203 = vadd.f32 0.0, %v2202
        %v2204 = vpop.f32.mrb[0].mxu0
        %v2205 = vadd.f32 0.0, %v2204
        %v2206 = vpop.f32.mrb[0].mxu0
        %v2207 = vadd.f32 0.0, %v2206
        %2208 = vmatprep.mubr.bf16.mxu0 0
        %2209 = vmatmul.mubr.bf16.gmra.mrb[0].mxu0 %v2083
        %v2210 = vpop.f32.mrb[0].mxu0
        %v2211 = vadd.f32 0.0, %v2210
        %v2212 = vpop.f32.mrb[0].mxu0
        %v2213 = vadd.f32 0.0, %v2212
        %v2214 = vpop.f32.mrb[0].mxu0
        %v2215 = vadd.f32 0.0, %v2214
        %v2216 = vpop.f32.mrb[0].mxu0
        %v2217 = vadd.f32 0.0, %v2216
        %2218 = vdwg.mxu0
        %v2235 = vunpack.c.l.b16 %v2035
        %v2236 = vunpack.c.h.b16 %v2035
        %v2237 = vunpack.c.l.b16 %v2036
        %v2238 = vunpack.c.h.b16 %v2036
        %v2239 = vunpack.c.l.b16 %v2037
        %v2240 = vunpack.c.h.b16 %v2037
        %v2241 = vunpack.c.l.b16 %v2038
        %v2242 = vunpack.c.h.b16 %v2038
        %v2243 = vunpack.c.l.b16 %v2039
        %v2244 = vunpack.c.h.b16 %v2039
        %v2245 = vunpack.c.l.b16 %v2040
        %v2246 = vunpack.c.h.b16 %v2040
        %v2247 = vunpack.c.l.b16 %v2041
        %v2248 = vunpack.c.h.b16 %v2041
        %v2249 = vunpack.c.l.b16 %v2042
        %v2250 = vunpack.c.h.b16 %v2042
        %v2251 = vunpack.c.l.b16 %v2043
        %v2252 = vunpack.c.h.b16 %v2043
        %v2253 = vunpack.c.l.b16 %v2044
        %v2254 = vunpack.c.h.b16 %v2044
        %v2255 = vunpack.c.l.b16 %v2045
        %v2256 = vunpack.c.h.b16 %v2045
        %v2257 = vunpack.c.l.b16 %v2046
        %v2258 = vunpack.c.h.b16 %v2046
        %v2259 = vunpack.c.l.b16 %v2047
        %v2260 = vunpack.c.h.b16 %v2047
        %v2261 = vunpack.c.l.b16 %v2048
        %v2262 = vunpack.c.h.b16 %v2048
        %v2263 = vunpack.c.l.b16 %v2049
        %v2264 = vunpack.c.h.b16 %v2049
        %v2265 = vunpack.c.l.b16 %v2050
        %v2266 = vunpack.c.h.b16 %v2050
        %v2267 = vpack.c.b16 %v2237, %v2235
        %v2268 = vpack.c.b16 %v2238, %v2236
        %v2269 = vpack.c.b16 %v2241, %v2239
        %v2270 = vpack.c.b16 %v2242, %v2240
        %v2271 = vpack.c.b16 %v2245, %v2243
        %v2272 = vpack.c.b16 %v2246, %v2244
        %v2273 = vpack.c.b16 %v2249, %v2247
        %v2274 = vpack.c.b16 %v2250, %v2248
        %v2275 = vpack.c.b16 %v2253, %v2251
        %v2276 = vpack.c.b16 %v2254, %v2252
        %v2277 = vpack.c.b16 %v2257, %v2255
        %v2278 = vpack.c.b16 %v2258, %v2256
        %v2279 = vpack.c.b16 %v2261, %v2259
        %v2280 = vpack.c.b16 %v2262, %v2260
        %v2281 = vpack.c.b16 %v2265, %v2263
        %v2282 = vpack.c.b16 %v2266, %v2264
        %2299 = vmatprep.subr.bf16.mxu0 %v2268
        %2300 = vmatpush1.bf16.msra.mxu0 %v2267
        %2301 = vmatprep.subr.bf16.mxu0 %v2270
        %2302 = vmatpush1.bf16.msra.mxu0 %v2269
        %2303 = vmatprep.subr.bf16.mxu0 %v2272
        %2304 = vmatpush1.bf16.msra.mxu0 %v2271
        %2305 = vmatprep.subr.bf16.mxu0 %v2274
        %2306 = vmatpush1.bf16.msra.mxu0 %v2273
        %2307 = vmatprep.subr.bf16.mxu0 %v2276
        %2308 = vmatpush1.bf16.msra.mxu0 %v2275
        %2309 = vmatprep.subr.bf16.mxu0 %v2278
        %2310 = vmatpush1.bf16.msra.mxu0 %v2277
        %2311 = vmatprep.subr.bf16.mxu0 %v2280
        %2312 = vmatpush1.bf16.msra.mxu0 %v2279
        %2313 = vmatprep.subr.bf16.mxu0 %v2282
        %2314 = vmatpush1.bf16.msra.mxu0 %v2281
        %2315 = vmatprep.subr.bf16.mxu0 0
        %2316 = vmatpush1.bf16.msra.mxu0 0
        %2317 = vmatprep.subr.bf16.mxu0 0
        %2318 = vmatpush1.bf16.msra.mxu0 0
        %2319 = vmatprep.subr.bf16.mxu0 0
        %2320 = vmatpush1.bf16.msra.mxu0 0
        %2321 = vmatprep.subr.bf16.mxu0 0
        %2322 = vmatpush1.bf16.msra.mxu0 0
        %2323 = vmatprep.subr.bf16.mxu0 0
        %2324 = vmatpush1.bf16.msra.mxu0 0
        %2325 = vmatprep.subr.bf16.mxu0 0
        %2326 = vmatpush1.bf16.msra.mxu0 0
        %2327 = vmatprep.subr.bf16.mxu0 0
        %2328 = vmatpush1.bf16.msra.mxu0 0
        %2329 = vmatprep.subr.bf16.mxu0 0
        %2330 = vmatpush1.bf16.msra.mxu0 0
        %2331 = vmatprep.mubr.bf16.mxu0 0
        %2332 = vmatmul.mubr.bf16.gmra.mrb[0].mxu0 %v2033
        %v2333 = vpop.f32.mrb[0].mxu0
        %v2334 = vadd.f32 %v2201, %v2333
        %v2335 = vpop.f32.mrb[0].mxu0
        %v2336 = vadd.f32 %v2203, %v2335
        %v2337 = vpop.f32.mrb[0].mxu0
        %v2338 = vadd.f32 %v2205, %v2337
        %v2339 = vpop.f32.mrb[0].mxu0
        %v2340 = vadd.f32 %v2207, %v2339
        %2341 = vmatprep.mubr.bf16.mxu0 0
        %2342 = vmatmul.mubr.bf16.gmra.mrb[0].mxu0 %v2034
        %v2343 = vpop.f32.mrb[0].mxu0
        %v2344 = vadd.f32 %v2211, %v2343
        %v2345 = vpop.f32.mrb[0].mxu0
        %v2346 = vadd.f32 %v2213, %v2345
        %v2347 = vpop.f32.mrb[0].mxu0
        %v2348 = vadd.f32 %v2215, %v2347
        %v2349 = vpop.f32.mrb[0].mxu0
        %v2350 = vadd.f32 %v2217, %v2349
        %2351 = vdwg.mxu0
        %s2352 = scalar_lea.vmem [#allocation11], 256
        %v2353 = vld [vmem:[%s2352] sm:$0xff]
        %v2354 = vld [vmem:[%s2352 + $0x8] sm:$0xff]
        %v2355 = vld [vmem:[%s2352 + $0x10] sm:$0xff]
        %v2356 = vld [vmem:[%s2352 + $0x18] sm:$0xff]
        %v2357 = vld [vmem:[%s2352 + $0x20] sm:$0xff]
        %v2358 = vld [vmem:[%s2352 + $0x28] sm:$0xff]
        %v2359 = vld [vmem:[%s2352 + $0x30] sm:$0xff]
        %v2360 = vld [vmem:[%s2352 + $0x38] sm:$0xff]
        %v2361 = vld [vmem:[%s2352 + $0x40] sm:$0xff]
        %v2362 = vld [vmem:[%s2352 + $0x48] sm:$0xff]
        %v2363 = vld [vmem:[%s2352 + $0x50] sm:$0xff]
        %v2364 = vld [vmem:[%s2352 + $0x58] sm:$0xff]
        %v2365 = vld [vmem:[%s2352 + $0x60] sm:$0xff]
        %v2366 = vld [vmem:[%s2352 + $0x68] sm:$0xff]
        %v2367 = vld [vmem:[%s2352 + $0x70] sm:$0xff]
        %v2368 = vld [vmem:[%s2352 + $0x78] sm:$0xff]
        %v2371 = vrot.slane %v2033, 1
        %v2372 = vrot.slane %v2034, 1
        %v2373 = vsel %vm884, %v2371, %v2372
        %v2374 = vsel %vm884, %v2372, %v894
        %v2393 = vunpack.c.l.b16 %v2353
        %v2394 = vunpack.c.h.b16 %v2353
        %v2395 = vunpack.c.l.b16 %v2354
        %v2396 = vunpack.c.h.b16 %v2354
        %v2397 = vunpack.c.l.b16 %v2355
        %v2398 = vunpack.c.h.b16 %v2355
        %v2399 = vunpack.c.l.b16 %v2356
        %v2400 = vunpack.c.h.b16 %v2356
        %v2401 = vunpack.c.l.b16 %v2357
        %v2402 = vunpack.c.h.b16 %v2357
        %v2403 = vunpack.c.l.b16 %v2358
        %v2404 = vunpack.c.h.b16 %v2358
        %v2405 = vunpack.c.l.b16 %v2359
        %v2406 = vunpack.c.h.b16 %v2359
        %v2407 = vunpack.c.l.b16 %v2360
        %v2408 = vunpack.c.h.b16 %v2360
        %v2409 = vunpack.c.l.b16 %v2361
        %v2410 = vunpack.c.h.b16 %v2361
        %v2411 = vunpack.c.l.b16 %v2362
        %v2412 = vunpack.c.h.b16 %v2362
        %v2413 = vunpack.c.l.b16 %v2363
        %v2414 = vunpack.c.h.b16 %v2363
        %v2415 = vunpack.c.l.b16 %v2364
        %v2416 = vunpack.c.h.b16 %v2364
        %v2417 = vunpack.c.l.b16 %v2365
        %v2418 = vunpack.c.h.b16 %v2365
        %v2419 = vunpack.c.l.b16 %v2366
        %v2420 = vunpack.c.h.b16 %v2366
        %v2421 = vunpack.c.l.b16 %v2367
        %v2422 = vunpack.c.h.b16 %v2367
        %v2423 = vunpack.c.l.b16 %v2368
        %v2424 = vunpack.c.h.b16 %v2368
        %v2425 = vpack.c.b16 %v2395, %v2393
        %v2426 = vpack.c.b16 %v2396, %v2394
        %v2427 = vpack.c.b16 %v2399, %v2397
        %v2428 = vpack.c.b16 %v2400, %v2398
        %v2429 = vpack.c.b16 %v2403, %v2401
        %v2430 = vpack.c.b16 %v2404, %v2402
        %v2431 = vpack.c.b16 %v2407, %v2405
        %v2432 = vpack.c.b16 %v2408, %v2406
        %v2433 = vpack.c.b16 %v2411, %v2409
        %v2434 = vpack.c.b16 %v2412, %v2410
        %v2435 = vpack.c.b16 %v2415, %v2413
        %v2436 = vpack.c.b16 %v2416, %v2414
        %v2437 = vpack.c.b16 %v2419, %v2417
        %v2438 = vpack.c.b16 %v2420, %v2418
        %v2439 = vpack.c.b16 %v2423, %v2421
        %v2440 = vpack.c.b16 %v2424, %v2422
        %2457 = vmatprep.subr.bf16.mxu0 %v2426
        %2458 = vmatpush1.bf16.msra.mxu0 %v2425
        %2459 = vmatprep.subr.bf16.mxu0 %v2428
        %2460 = vmatpush1.bf16.msra.mxu0 %v2427
        %2461 = vmatprep.subr.bf16.mxu0 %v2430
        %2462 = vmatpush1.bf16.msra.mxu0 %v2429
        %2463 = vmatprep.subr.bf16.mxu0 %v2432
        %2464 = vmatpush1.bf16.msra.mxu0 %v2431
        %2465 = vmatprep.subr.bf16.mxu0 %v2434
        %2466 = vmatpush1.bf16.msra.mxu0 %v2433
        %2467 = vmatprep.subr.bf16.mxu0 %v2436
        %2468 = vmatpush1.bf16.msra.mxu0 %v2435
        %2469 = vmatprep.subr.bf16.mxu0 %v2438
        %2470 = vmatpush1.bf16.msra.mxu0 %v2437
        %2471 = vmatprep.subr.bf16.mxu0 %v2440
        %2472 = vmatpush1.bf16.msra.mxu0 %v2439
        %2473 = vmatprep.subr.bf16.mxu0 0
        %2474 = vmatpush1.bf16.msra.mxu0 0
        %2475 = vmatprep.subr.bf16.mxu0 0
        %2476 = vmatpush1.bf16.msra.mxu0 0
        %2477 = vmatprep.subr.bf16.mxu0 0
        %2478 = vmatpush1.bf16.msra.mxu0 0
        %2479 = vmatprep.subr.bf16.mxu0 0
        %2480 = vmatpush1.bf16.msra.mxu0 0
        %2481 = vmatprep.subr.bf16.mxu0 0
        %2482 = vmatpush1.bf16.msra.mxu0 0
        %2483 = vmatprep.subr.bf16.mxu0 0
        %2484 = vmatpush1.bf16.msra.mxu0 0
        %2485 = vmatprep.subr.bf16.mxu0 0
        %2486 = vmatpush1.bf16.msra.mxu0 0
        %2487 = vmatprep.subr.bf16.mxu0 0
        %2488 = vmatpush1.bf16.msra.mxu0 0
        %2489 = vmatprep.mubr.bf16.mxu0 0
        %2490 = vmatmul.mubr.bf16.gmra.mrb[0].mxu0 %v2373
        %v2491 = vpop.f32.mrb[0].mxu0
        %v2492 = vadd.f32 0.0, %v2491
        %v2493 = vpop.f32.mrb[0].mxu0
        %v2494 = vadd.f32 0.0, %v2493
        %v2495 = vpop.f32.mrb[0].mxu0
        %v2496 = vadd.f32 0.0, %v2495
        %v2497 = vpop.f32.mrb[0].mxu0
        %v2498 = vadd.f32 0.0, %v2497
        %2499 = vmatprep.mubr.bf16.mxu0 0
        %2500 = vmatmul.mubr.bf16.gmra.mrb[0].mxu0 %v2374
        %v2501 = vpop.f32.mrb[0].mxu0
        %v2502 = vadd.f32 0.0, %v2501
        %v2503 = vpop.f32.mrb[0].mxu0
        %v2504 = vadd.f32 0.0, %v2503
        %v2505 = vpop.f32.mrb[0].mxu0
        %v2506 = vadd.f32 0.0, %v2505
        %v2507 = vpop.f32.mrb[0].mxu0
        %v2508 = vadd.f32 0.0, %v2507
        %2509 = vdwg.mxu0
        %v2510 = vadd.f32 %v2334, %v2492
        %v2511 = vadd.f32 %v2336, %v2494
        %v2512 = vadd.f32 %v2338, %v2496
        %v2513 = vadd.f32 %v2340, %v2498
        %v2514 = vadd.f32 %v2344, %v2502
        %v2515 = vadd.f32 %v2346, %v2504
        %v2516 = vadd.f32 %v2348, %v2506
        %v2517 = vadd.f32 %v2350, %v2508
        %s2518 = scalar_lea.vmem [#allocation11], 384
        %v2519 = vld [vmem:[%s2518] sm:$0xff]
        %v2520 = vld [vmem:[%s2518 + $0x8] sm:$0xff]
        %v2521 = vld [vmem:[%s2518 + $0x10] sm:$0xff]
        %v2522 = vld [vmem:[%s2518 + $0x18] sm:$0xff]
        %v2523 = vld [vmem:[%s2518 + $0x20] sm:$0xff]
        %v2524 = vld [vmem:[%s2518 + $0x28] sm:$0xff]
        %v2525 = vld [vmem:[%s2518 + $0x30] sm:$0xff]
        %v2526 = vld [vmem:[%s2518 + $0x38] sm:$0xff]
        %v2527 = vld [vmem:[%s2518 + $0x40] sm:$0xff]
        %v2528 = vld [vmem:[%s2518 + $0x48] sm:$0xff]
        %v2529 = vld [vmem:[%s2518 + $0x50] sm:$0xff]
        %v2530 = vld [vmem:[%s2518 + $0x58] sm:$0xff]
        %v2531 = vld [vmem:[%s2518 + $0x60] sm:$0xff]
        %v2532 = vld [vmem:[%s2518 + $0x68] sm:$0xff]
        %v2533 = vld [vmem:[%s2518 + $0x70] sm:$0xff]
        %v2534 = vld [vmem:[%s2518 + $0x78] sm:$0xff]
        %v2535 = vrot.slane %v2069, 1
        %v2536 = vrot.slane %v2071, 2
        %v2537 = vor.u32 %v2535, %v2536
        %v2538 = vrot.slane %v2080, 1
        %v2539 = vrot.slane %v2076, 2
        %v2540 = vor.u32 %v2538, %v2539
        %v2541 = vsel %vm1049, %v2537, %v2540
        %v2542 = vsel %vm1049, %v2540, %v1073
        %v2561 = vunpack.c.l.b16 %v2519
        %v2562 = vunpack.c.h.b16 %v2519
        %v2563 = vunpack.c.l.b16 %v2520
        %v2564 = vunpack.c.h.b16 %v2520
        %v2565 = vunpack.c.l.b16 %v2521
        %v2566 = vunpack.c.h.b16 %v2521
        %v2567 = vunpack.c.l.b16 %v2522
        %v2568 = vunpack.c.h.b16 %v2522
        %v2569 = vunpack.c.l.b16 %v2523
        %v2570 = vunpack.c.h.b16 %v2523
        %v2571 = vunpack.c.l.b16 %v2524
        %v2572 = vunpack.c.h.b16 %v2524
        %v2573 = vunpack.c.l.b16 %v2525
        %v2574 = vunpack.c.h.b16 %v2525
        %v2575 = vunpack.c.l.b16 %v2526
        %v2576 = vunpack.c.h.b16 %v2526
        %v2577 = vunpack.c.l.b16 %v2527
        %v2578 = vunpack.c.h.b16 %v2527
        %v2579 = vunpack.c.l.b16 %v2528
        %v2580 = vunpack.c.h.b16 %v2528
        %v2581 = vunpack.c.l.b16 %v2529
        %v2582 = vunpack.c.h.b16 %v2529
        %v2583 = vunpack.c.l.b16 %v2530
        %v2584 = vunpack.c.h.b16 %v2530
        %v2585 = vunpack.c.l.b16 %v2531
        %v2586 = vunpack.c.h.b16 %v2531
        %v2587 = vunpack.c.l.b16 %v2532
        %v2588 = vunpack.c.h.b16 %v2532
        %v2589 = vunpack.c.l.b16 %v2533
        %v2590 = vunpack.c.h.b16 %v2533
        %v2591 = vunpack.c.l.b16 %v2534
        %v2592 = vunpack.c.h.b16 %v2534
        %v2593 = vpack.c.b16 %v2563, %v2561
        %v2594 = vpack.c.b16 %v2564, %v2562
        %v2595 = vpack.c.b16 %v2567, %v2565
        %v2596 = vpack.c.b16 %v2568, %v2566
        %v2597 = vpack.c.b16 %v2571, %v2569
        %v2598 = vpack.c.b16 %v2572, %v2570
        %v2599 = vpack.c.b16 %v2575, %v2573
        %v2600 = vpack.c.b16 %v2576, %v2574
        %v2601 = vpack.c.b16 %v2579, %v2577
        %v2602 = vpack.c.b16 %v2580, %v2578
        %v2603 = vpack.c.b16 %v2583, %v2581
        %v2604 = vpack.c.b16 %v2584, %v2582
        %v2605 = vpack.c.b16 %v2587, %v2585
        %v2606 = vpack.c.b16 %v2588, %v2586
        %v2607 = vpack.c.b16 %v2591, %v2589
        %v2608 = vpack.c.b16 %v2592, %v2590
        %2625 = vmatprep.subr.bf16.mxu0 %v2594
        %2626 = vmatpush1.bf16.msra.mxu0 %v2593
        %2627 = vmatprep.subr.bf16.mxu0 %v2596
        %2628 = vmatpush1.bf16.msra.mxu0 %v2595
        %2629 = vmatprep.subr.bf16.mxu0 %v2598
        %2630 = vmatpush1.bf16.msra.mxu0 %v2597
        %2631 = vmatprep.subr.bf16.mxu0 %v2600
        %2632 = vmatpush1.bf16.msra.mxu0 %v2599
        %2633 = vmatprep.subr.bf16.mxu0 %v2602
        %2634 = vmatpush1.bf16.msra.mxu0 %v2601
        %2635 = vmatprep.subr.bf16.mxu0 %v2604
        %2636 = vmatpush1.bf16.msra.mxu0 %v2603
        %2637 = vmatprep.subr.bf16.mxu0 %v2606
        %2638 = vmatpush1.bf16.msra.mxu0 %v2605
        %2639 = vmatprep.subr.bf16.mxu0 %v2608
        %2640 = vmatpush1.bf16.msra.mxu0 %v2607
        %2641 = vmatprep.subr.bf16.mxu0 0
        %2642 = vmatpush1.bf16.msra.mxu0 0
        %2643 = vmatprep.subr.bf16.mxu0 0
        %2644 = vmatpush1.bf16.msra.mxu0 0
        %2645 = vmatprep.subr.bf16.mxu0 0
        %2646 = vmatpush1.bf16.msra.mxu0 0
        %2647 = vmatprep.subr.bf16.mxu0 0
        %2648 = vmatpush1.bf16.msra.mxu0 0
        %2649 = vmatprep.subr.bf16.mxu0 0
        %2650 = vmatpush1.bf16.msra.mxu0 0
        %2651 = vmatprep.subr.bf16.mxu0 0
        %2652 = vmatpush1.bf16.msra.mxu0 0
        %2653 = vmatprep.subr.bf16.mxu0 0
        %2654 = vmatpush1.bf16.msra.mxu0 0
        %2655 = vmatprep.subr.bf16.mxu0 0
        %2656 = vmatpush1.bf16.msra.mxu0 0
        %2657 = vmatprep.mubr.bf16.mxu0 0
        %2658 = vmatmul.mubr.bf16.gmra.mrb[0].mxu0 %v2541
        %v2659 = vpop.f32.mrb[0].mxu0
        %v2660 = vadd.f32 0.0, %v2659
        %v2661 = vpop.f32.mrb[0].mxu0
        %v2662 = vadd.f32 0.0, %v2661
        %v2663 = vpop.f32.mrb[0].mxu0
        %v2664 = vadd.f32 0.0, %v2663
        %v2665 = vpop.f32.mrb[0].mxu0
        %v2666 = vadd.f32 0.0, %v2665
        %2667 = vmatprep.mubr.bf16.mxu0 0
        %2668 = vmatmul.mubr.bf16.gmra.mrb[0].mxu0 %v2542
        %v2669 = vpop.f32.mrb[0].mxu0
        %v2670 = vadd.f32 0.0, %v2669
        %v2671 = vpop.f32.mrb[0].mxu0
        %v2672 = vadd.f32 0.0, %v2671
        %v2673 = vpop.f32.mrb[0].mxu0
        %v2674 = vadd.f32 0.0, %v2673
        %v2675 = vpop.f32.mrb[0].mxu0
        %v2676 = vadd.f32 0.0, %v2675
        %2677 = vdwg.mxu0
        %v2678 = vadd.f32 %v2510, %v2660
        %v2679 = vadd.f32 %v2511, %v2662
        %v2680 = vadd.f32 %v2512, %v2664
        %v2681 = vadd.f32 %v2513, %v2666
        %v2682 = vadd.f32 %v2514, %v2670
        %v2683 = vadd.f32 %v2515, %v2672
        %v2684 = vadd.f32 %v2516, %v2674
        %v2685 = vadd.f32 %v2517, %v2676
        %v2686 = vld [vmem:[%s6] sm:$0x3]
        %v2688 = vlaneseq
        %v2689 = vshrl.u32 %v2688, 7
        %v2690 = vsub.s32 0, %v2689
        %v2691 = vrot.slane %v2686, %v2690
        %v2692 = vlaneseq
        %v2693 = vshrl.u32 %v2692, 7
        %v2694 = vsub.s32 1, %v2693
        %v2695 = vrot.slane %v2686, %v2694
        %v2698 = vadd.f32 %v2678, %v2691
        %v2699 = vadd.f32 %v2679, %v2695
        %v2700 = vadd.f32 %v2680, %v2691
        %v2701 = vadd.f32 %v2681, %v2695
        %v2702 = vadd.f32 %v2682, %v2691
        %v2703 = vadd.f32 %v2683, %v2695
        %v2704 = vadd.f32 %v2684, %v2691
        %v2705 = vadd.f32 %v2685, %v2695
        %vm2706 = vcmp.le.s32.totalorder %v1868, 8
        %vm2707 = vcmp.le.s32.totalorder %v1869, 8
        %vm2708 = vmand %vm1907, %vm2706
        %vm2709 = vmand %vm1908, %vm2707
        %v2710 = vsel %vm2708, 1, 0
        %v2711 = vsel %vm2709, 1, 0
        %v2712 = vcvt.s32.f32 %v2710
        %v2713 = vcvt.s32.f32 %v2711
        %v2714 = vmul.f32 %v2698, %v2712
        %v2715 = vmul.f32 %v2699, %v2712
        %v2716 = vmul.f32 %v2700, %v2713
        %v2717 = vmul.f32 %v2701, %v2713
        %v2718 = vmul.f32 %v2702, %v2712
        %v2719 = vmul.f32 %v2703, %v2712
        %v2720 = vmul.f32 %v2704, %v2713
        %v2721 = vmul.f32 %v2705, %v2713
        %v2722 = vadd.f32 %v2714, %v2716
        %v2723 = vrot.slane %v2722, 4
        %v2724 = vadd.f32 %v2722, %v2723
        %v2725 = vrot.slane %v2724, 2
        %v2726 = vadd.f32 %v2724, %v2725
        %v2727 = vrot.slane %v2726, 1
        %v2728 = vadd.f32 %v2726, %v2727
        %v2729 = vadd.f32 %v2715, %v2717
        %v2730 = vrot.slane %v2729, 4
        %v2731 = vadd.f32 %v2729, %v2730
        %v2732 = vrot.slane %v2731, 2
        %v2733 = vadd.f32 %v2731, %v2732
        %v2734 = vrot.slane %v2733, 1
        %v2735 = vadd.f32 %v2733, %v2734
        %v2736 = vadd.f32 %v2718, %v2720
        %v2737 = vrot.slane %v2736, 4
        %v2738 = vadd.f32 %v2736, %v2737
        %v2739 = vrot.slane %v2738, 2
        %v2740 = vadd.f32 %v2738, %v2739
        %v2741 = vrot.slane %v2740, 1
        %v2742 = vadd.f32 %v2740, %v2741
        %v2743 = vadd.f32 %v2719, %v2721
        %v2744 = vrot.slane %v2743, 4
        %v2745 = vadd.f32 %v2743, %v2744
        %v2746 = vrot.slane %v2745, 2
        %v2747 = vadd.f32 %v2745, %v2746
        %v2748 = vrot.slane %v2747, 1
        %v2749 = vadd.f32 %v2747, %v2748
        %v2750 = vrcp.pop 5.0
        %v2751 = vmul.f32 %v2728, %v2750
        %v2752 = vmul.f32 %v2735, %v2750
        %v2753 = vmul.f32 %v2742, %v2750
        %v2754 = vmul.f32 %v2749, %v2750
        %v2755 = vsub.f32 %v2698, %v2751
        %v2756 = vsub.f32 %v2699, %v2752
        %v2757 = vsub.f32 %v2700, %v2751
        %v2758 = vsub.f32 %v2701, %v2752
        %v2759 = vsub.f32 %v2702, %v2753
        %v2760 = vsub.f32 %v2703, %v2754
        %v2761 = vsub.f32 %v2704, %v2753
        %v2762 = vsub.f32 %v2705, %v2754
        %v2763 = vmul.f32 %v2755, %v2755
        %v2764 = vmul.f32 %v2756, %v2756
        %v2765 = vmul.f32 %v2757, %v2757
        %v2766 = vmul.f32 %v2758, %v2758
        %v2767 = vmul.f32 %v2759, %v2759
        %v2768 = vmul.f32 %v2760, %v2760
        %v2769 = vmul.f32 %v2761, %v2761
        %v2770 = vmul.f32 %v2762, %v2762
        %v2771 = vmul.f32 %v2763, %v2712
        %v2772 = vmul.f32 %v2764, %v2712
        %v2773 = vmul.f32 %v2765, %v2713
        %v2774 = vmul.f32 %v2766, %v2713
        %v2775 = vmul.f32 %v2767, %v2712
        %v2776 = vmul.f32 %v2768, %v2712
        %v2777 = vmul.f32 %v2769, %v2713
        %v2778 = vmul.f32 %v2770, %v2713
        %v2779 = vadd.f32 %v2771, %v2773
        %v2780 = vrot.slane %v2779, 4
        %v2781 = vadd.f32 %v2779, %v2780
        %v2782 = vrot.slane %v2781, 2
        %v2783 = vadd.f32 %v2781, %v2782
        %v2784 = vrot.slane %v2783, 1
        %v2785 = vadd.f32 %v2783, %v2784
        %v2786 = vadd.f32 %v2772, %v2774
        %v2787 = vrot.slane %v2786, 4
        %v2788 = vadd.f32 %v2786, %v2787
        %v2789 = vrot.slane %v2788, 2
        %v2790 = vadd.f32 %v2788, %v2789
        %v2791 = vrot.slane %v2790, 1
        %v2792 = vadd.f32 %v2790, %v2791
        %v2793 = vadd.f32 %v2775, %v2777
        %v2794 = vrot.slane %v2793, 4
        %v2795 = vadd.f32 %v2793, %v2794
        %v2796 = vrot.slane %v2795, 2
        %v2797 = vadd.f32 %v2795, %v2796
        %v2798 = vrot.slane %v2797, 1
        %v2799 = vadd.f32 %v2797, %v2798
        %v2800 = vadd.f32 %v2776, %v2778
        %v2801 = vrot.slane %v2800, 4
        %v2802 = vadd.f32 %v2800, %v2801
        %v2803 = vrot.slane %v2802, 2
        %v2804 = vadd.f32 %v2802, %v2803
        %v2805 = vrot.slane %v2804, 1
        %v2806 = vadd.f32 %v2804, %v2805
        %v2807 = vmul.f32 %v2785, %v2750
        %v2808 = vmul.f32 %v2792, %v2750
        %v2809 = vmul.f32 %v2799, %v2750
        %v2810 = vmul.f32 %v2806, %v2750
        %v2811 = vadd.f32 %v2807, 1e-05
        %v2812 = vadd.f32 %v2808, 1e-05
        %v2813 = vadd.f32 %v2809, 1e-05
        %v2814 = vadd.f32 %v2810, 1e-05
        %v2815 = vrsqrt.pop %v2811
        %v2816 = vrsqrt.pop %v2812
        %v2817 = vrsqrt.pop %v2813
        %v2818 = vrsqrt.pop %v2814
        %v2819 = vmul.f32 %v2755, %v2815
        %v2820 = vmul.f32 %v2756, %v2816
        %v2821 = vmul.f32 %v2757, %v2815
        %v2822 = vmul.f32 %v2758, %v2816
        %v2823 = vmul.f32 %v2759, %v2817
        %v2824 = vmul.f32 %v2760, %v2818
        %v2825 = vmul.f32 %v2761, %v2817
        %v2826 = vmul.f32 %v2762, %v2818
        %vm2827 = vcmp.gt.f32.partialorder %v2819, 0.0
        %vm2828 = vcmp.gt.f32.partialorder %v2820, 0.0
        %vm2829 = vcmp.gt.f32.partialorder %v2821, 0.0
        %vm2830 = vcmp.gt.f32.partialorder %v2822, 0.0
        %vm2831 = vcmp.gt.f32.partialorder %v2823, 0.0
        %vm2832 = vcmp.gt.f32.partialorder %v2824, 0.0
        %vm2833 = vcmp.gt.f32.partialorder %v2825, 0.0
        %vm2834 = vcmp.gt.f32.partialorder %v2826, 0.0
        %v2835 = vmul.f32 %v2819, 0.2
        %v2836 = vmul.f32 %v2820, 0.2
        %v2837 = vmul.f32 %v2821, 0.2
        %v2838 = vmul.f32 %v2822, 0.2
        %v2839 = vmul.f32 %v2823, 0.2
        %v2840 = vmul.f32 %v2824, 0.2
        %v2841 = vmul.f32 %v2825, 0.2
        %v2842 = vmul.f32 %v2826, 0.2
        %v2843 = vsel %vm2827, %v2819, %v2835
        %v2844 = vsel %vm2828, %v2820, %v2836
        %v2845 = vsel %vm2829, %v2821, %v2837
        %v2846 = vsel %vm2830, %v2822, %v2838
        %v2847 = vsel %vm2831, %v2823, %v2839
        %v2848 = vsel %vm2832, %v2824, %v2840
        %v2849 = vsel %vm2833, %v2825, %v2841
        %v2850 = vsel %vm2834, %v2826, %v2842
        %v2855 = vcombine.low %v2843, %v2844
        %v2857 = vunpack.c.l.s4 1966171168
        %v2858 = vunpack.c.0.s8 %v2857
        %v2859 = vlaneseq
        %v2860 = vshrl.u32 %v2859, 7
        %v2861 = vsub.s32 %v2858, %v2860
        %v2862 = vrot.slane %v2855, %v2861
        %v2864 = vunpack.c.l.s4 1966171168
        %v2865 = vunpack.c.0.s8 %v2864
        %v2866 = vlaneseq
        %v2867 = vshrl.u32 %v2866, 7
        %v2868 = vsub.s32 %v2865, %v2867
        %v2869 = vrot.slane %v2862, %v2868
        %v2870 = vcombine.low %v2847, %v2848
        %v2872 = vunpack.c.l.s4 1966171168
        %v2873 = vunpack.c.0.s8 %v2872
        %v2874 = vlaneseq
        %v2875 = vshrl.u32 %v2874, 7
        %v2876 = vsub.s32 %v2873, %v2875
        %v2877 = vrot.slane %v2870, %v2876
        %v2879 = vunpack.c.l.s4 1966171168
        %v2880 = vunpack.c.0.s8 %v2879
        %v2881 = vlaneseq
        %v2882 = vshrl.u32 %v2881, 7
        %v2883 = vsub.s32 %v2880, %v2882
        %v2884 = vrot.slane %v2877, %v2883
        %v2887 = vlaneseq
        %vm2888 = vcmp.ge.s32.totalorder %v2887, 0
        %vm2889 = vcmp.lt.s32.totalorder %v2887, 256
        %vm2890 = vmand %vm2888, %vm2889
        %s2891 = scalar_lea.vmem [#allocation4], 2
        %2892 = vst.msk [vmem:[%s2891] ss:$8 sm:$0x3] %vm2890, %v2869
        %2893 = vst.msk [vmem:[%s2891] ss:$8 sm:$0x0] %vm2890, %v2869
        %s2894 = scalar_lea.vmem [#allocation4], 34
        %2895 = vst.msk [vmem:[%s2894] ss:$8 sm:$0x3] %vm2890, %v2884
        %2896 = vst.msk [vmem:[%s2894] ss:$8 sm:$0x0] %vm2890, %v2884
        %v2897 = vcombine.high %v2869, %v2869
        %v2898 = vcombine.high %v2884, %v2884
        %s2901 = scalar_lea.vmem [#allocation4], 3
        %2902 = vst.msk [vmem:[%s2901] ss:$8 sm:$0x3] %vm2890, %v2897
        %2903 = vst.msk [vmem:[%s2901] ss:$8 sm:$0x0] %vm2890, %v2897
        %s2904 = scalar_lea.vmem [#allocation4], 35
        %2905 = vst.msk [vmem:[%s2904] ss:$8 sm:$0x3] %vm2890, %v2898
        %2906 = vst.msk [vmem:[%s2904] ss:$8 sm:$0x0] %vm2890, %v2898
        %v2907 = vcombine.high %v2843, %v2844
        %v2909 = vunpack.c.l.s4 1966171168
        %v2910 = vunpack.c.0.s8 %v2909
        %v2911 = vlaneseq
        %v2912 = vshrl.u32 %v2911, 7
        %v2913 = vsub.s32 %v2910, %v2912
        %v2914 = vrot.slane %v2907, %v2913
        %v2916 = vunpack.c.l.s4 1966171168
        %v2917 = vunpack.c.0.s8 %v2916
        %v2918 = vlaneseq
        %v2919 = vshrl.u32 %v2918, 7
        %v2920 = vsub.s32 %v2917, %v2919
        %v2921 = vrot.slane %v2914, %v2920
        %v2922 = vcombine.high %v2847, %v2848
        %v2924 = vunpack.c.l.s4 1966171168
        %v2925 = vunpack.c.0.s8 %v2924
        %v2926 = vlaneseq
        %v2927 = vshrl.u32 %v2926, 7
        %v2928 = vsub.s32 %v2925, %v2927
        %v2929 = vrot.slane %v2922, %v2928
        %v2931 = vunpack.c.l.s4 1966171168
        %v2932 = vunpack.c.0.s8 %v2931
        %v2933 = vlaneseq
        %v2934 = vshrl.u32 %v2933, 7
        %v2935 = vsub.s32 %v2932, %v2934
        %v2936 = vrot.slane %v2929, %v2935
        %s2939 = scalar_lea.vmem [#allocation4], 4
        %2940 = vst.msk [vmem:[%s2939] ss:$8 sm:$0x3] %vm2890, %v2921
        %2941 = vst.msk [vmem:[%s2939] ss:$8 sm:$0x0] %vm2890, %v2921
        %s2942 = scalar_lea.vmem [#allocation4], 36
        %2943 = vst.msk [vmem:[%s2942] ss:$8 sm:$0x3] %vm2890, %v2936
        %2944 = vst.msk [vmem:[%s2942] ss:$8 sm:$0x0] %vm2890, %v2936
        %v2945 = vcombine.high %v2921, %v2921
        %v2946 = vcombine.high %v2936, %v2936
        %s2949 = scalar_lea.vmem [#allocation4], 5
        %2950 = vst.msk [vmem:[%s2949] ss:$8 sm:$0x3] %vm2890, %v2945
        %2951 = vst.msk [vmem:[%s2949] ss:$8 sm:$0x0] %vm2890, %v2945
        %s2952 = scalar_lea.vmem [#allocation4], 37
        %2953 = vst.msk [vmem:[%s2952] ss:$8 sm:$0x3] %vm2890, %v2946
        %2954 = vst.msk [vmem:[%s2952] ss:$8 sm:$0x0] %vm2890, %v2946
        %v2959 = vcombine.low %v2845, %v2846
        %v2961 = vunpack.c.l.s4 1966171168
        %v2962 = vunpack.c.0.s8 %v2961
        %v2963 = vlaneseq
        %v2964 = vshrl.u32 %v2963, 7
        %v2965 = vsub.s32 %v2962, %v2964
        %v2966 = vrot.slane %v2959, %v2965
        %v2968 = vunpack.c.l.s4 1966171168
        %v2969 = vunpack.c.0.s8 %v2968
        %v2970 = vlaneseq
        %v2971 = vshrl.u32 %v2970, 7
        %v2972 = vsub.s32 %v2969, %v2971
        %v2973 = vrot.slane %v2966, %v2972
        %v2974 = vcombine.low %v2849, %v2850
        %v2976 = vunpack.c.l.s4 1966171168
        %v2977 = vunpack.c.0.s8 %v2976
        %v2978 = vlaneseq
        %v2979 = vshrl.u32 %v2978, 7
        %v2980 = vsub.s32 %v2977, %v2979
        %v2981 = vrot.slane %v2974, %v2980
        %v2983 = vunpack.c.l.s4 1966171168
        %v2984 = vunpack.c.0.s8 %v2983
        %v2985 = vlaneseq
        %v2986 = vshrl.u32 %v2985, 7
        %v2987 = vsub.s32 %v2984, %v2986
        %v2988 = vrot.slane %v2981, %v2987
        %s2991 = scalar_lea.vmem [#allocation4], 6
        %2992 = vst.msk [vmem:[%s2991] ss:$8 sm:$0x3] %vm2890, %v2973
        %2993 = vst.msk [vmem:[%s2991] ss:$8 sm:$0x0] %vm2890, %v2973
        %s2994 = scalar_lea.vmem [#allocation4], 38
        %2995 = vst.msk [vmem:[%s2994] ss:$8 sm:$0x3] %vm2890, %v2988
        %2996 = vst.msk [vmem:[%s2994] ss:$8 sm:$0x0] %vm2890, %v2988
        %v2997 = vld [vmem:[#allocation4] sm:$0xff]
        %v2998 = vld [vmem:[#allocation4 + $0x8] sm:$0xff]
        %v2999 = vld [vmem:[#allocation4 + $0x10] sm:$0xff]
        %v3000 = vld [vmem:[#allocation4 + $0x18] sm:$0xff]
        %v3001 = vld [vmem:[#allocation4 + $0x20] sm:$0xff]
        %v3002 = vld [vmem:[#allocation4 + $0x28] sm:$0xff]
        %v3003 = vld [vmem:[#allocation4 + $0x30] sm:$0xff]
        %v3004 = vld [vmem:[#allocation4 + $0x38] sm:$0xff]
        %v3005 = vpack.c.bf16 %v2999, %v2997
        %v3006 = vpack.c.bf16 %v3000, %v2998
        %v3007 = vpack.c.bf16 %v3003, %v3001
        %v3008 = vpack.c.bf16 %v3004, %v3002
        %v3009 = vld [vmem:[#allocation13] sm:$0xff]
        %v3010 = vld [vmem:[#allocation13 + $0x8] sm:$0xff]
        %v3011 = vld [vmem:[#allocation13 + $0x10] sm:$0xff]
        %v3012 = vld [vmem:[#allocation13 + $0x18] sm:$0xff]
        %v3013 = vld [vmem:[#allocation13 + $0x20] sm:$0xff]
        %v3014 = vld [vmem:[#allocation13 + $0x28] sm:$0xff]
        %v3015 = vld [vmem:[#allocation13 + $0x30] sm:$0xff]
        %v3016 = vld [vmem:[#allocation13 + $0x38] sm:$0xff]
        %v3017 = vld [vmem:[#allocation13 + $0x40] sm:$0xff]
        %v3018 = vld [vmem:[#allocation13 + $0x48] sm:$0xff]
        %v3019 = vld [vmem:[#allocation13 + $0x50] sm:$0xff]
        %v3020 = vld [vmem:[#allocation13 + $0x58] sm:$0xff]
        %v3021 = vld [vmem:[#allocation13 + $0x60] sm:$0xff]
        %v3022 = vld [vmem:[#allocation13 + $0x68] sm:$0xff]
        %v3023 = vld [vmem:[#allocation13 + $0x70] sm:$0xff]
        %v3024 = vld [vmem:[#allocation13 + $0x78] sm:$0xff]
        %v3025 = vld [vmem:[#allocation13 + $0x80] sm:$0xff]
        %v3026 = vld [vmem:[#allocation13 + $0x88] sm:$0xff]
        %v3027 = vld [vmem:[#allocation13 + $0x90] sm:$0xff]
        %v3028 = vld [vmem:[#allocation13 + $0x98] sm:$0xff]
        %v3029 = vld [vmem:[#allocation13 + $0xa0] sm:$0xff]
        %v3030 = vld [vmem:[#allocation13 + $0xa8] sm:$0xff]
        %v3031 = vld [vmem:[#allocation13 + $0xb0] sm:$0xff]
        %v3032 = vld [vmem:[#allocation13 + $0xb8] sm:$0xff]
        %v3033 = vld [vmem:[#allocation13 + $0xc0] sm:$0xff]
        %v3034 = vld [vmem:[#allocation13 + $0xc8] sm:$0xff]
        %v3035 = vld [vmem:[#allocation13 + $0xd0] sm:$0xff]
        %v3036 = vld [vmem:[#allocation13 + $0xd8] sm:$0xff]
        %v3037 = vld [vmem:[#allocation13 + $0xe0] sm:$0xff]
        %v3038 = vld [vmem:[#allocation13 + $0xe8] sm:$0xff]
        %v3039 = vld [vmem:[#allocation13 + $0xf0] sm:$0xff]
        %v3040 = vld [vmem:[#allocation13 + $0xf8] sm:$0xff]
        %v3041 = vld [vmem:[#allocation13 + $0x100] sm:$0xff]
        %v3042 = vld [vmem:[#allocation13 + $0x108] sm:$0xff]
        %v3043 = vld [vmem:[#allocation13 + $0x110] sm:$0xff]
        %v3044 = vld [vmem:[#allocation13 + $0x118] sm:$0xff]
        %v3045 = vld [vmem:[#allocation13 + $0x120] sm:$0xff]
        %v3046 = vld [vmem:[#allocation13 + $0x128] sm:$0xff]
        %v3047 = vld [vmem:[#allocation13 + $0x130] sm:$0xff]
        %v3048 = vld [vmem:[#allocation13 + $0x138] sm:$0xff]
        %v3049 = vld [vmem:[#allocation13 + $0x140] sm:$0xff]
        %v3050 = vld [vmem:[#allocation13 + $0x148] sm:$0xff]
        %v3051 = vld [vmem:[#allocation13 + $0x150] sm:$0xff]
        %v3052 = vld [vmem:[#allocation13 + $0x158] sm:$0xff]
        %v3053 = vld [vmem:[#allocation13 + $0x160] sm:$0xff]
        %v3054 = vld [vmem:[#allocation13 + $0x168] sm:$0xff]
        %v3055 = vld [vmem:[#allocation13 + $0x170] sm:$0xff]
        %v3056 = vld [vmem:[#allocation13 + $0x178] sm:$0xff]
        %v3057 = vld [vmem:[#allocation13 + $0x180] sm:$0xff]
        %v3058 = vld [vmem:[#allocation13 + $0x188] sm:$0xff]
        %v3059 = vld [vmem:[#allocation13 + $0x190] sm:$0xff]
        %v3060 = vld [vmem:[#allocation13 + $0x198] sm:$0xff]
        %v3061 = vld [vmem:[#allocation13 + $0x1a0] sm:$0xff]
        %v3062 = vld [vmem:[#allocation13 + $0x1a8] sm:$0xff]
        %v3063 = vld [vmem:[#allocation13 + $0x1b0] sm:$0xff]
        %v3064 = vld [vmem:[#allocation13 + $0x1b8] sm:$0xff]
        %v3065 = vld [vmem:[#allocation13 + $0x1c0] sm:$0xff]
        %v3066 = vld [vmem:[#allocation13 + $0x1c8] sm:$0xff]
        %v3067 = vld [vmem:[#allocation13 + $0x1d0] sm:$0xff]
        %v3068 = vld [vmem:[#allocation13 + $0x1d8] sm:$0xff]
        %v3069 = vld [vmem:[#allocation13 + $0x1e0] sm:$0xff]
        %v3070 = vld [vmem:[#allocation13 + $0x1e8] sm:$0xff]
        %v3071 = vld [vmem:[#allocation13 + $0x1f0] sm:$0xff]
        %v3072 = vld [vmem:[#allocation13 + $0x1f8] sm:$0xff]
        %s3073 = scalar_lea.vmem [#allocation13], 512
        %v3074 = vld [vmem:[%s3073] sm:$0xff]
        %v3075 = vld [vmem:[%s3073 + $0x8] sm:$0xff]
        %v3076 = vld [vmem:[%s3073 + $0x10] sm:$0xff]
        %v3077 = vld [vmem:[%s3073 + $0x18] sm:$0xff]
        %v3078 = vld [vmem:[%s3073 + $0x20] sm:$0xff]
        %v3079 = vld [vmem:[%s3073 + $0x28] sm:$0xff]
        %v3080 = vld [vmem:[%s3073 + $0x30] sm:$0xff]
        %v3081 = vld [vmem:[%s3073 + $0x38] sm:$0xff]
        %v3082 = vld [vmem:[%s3073 + $0x40] sm:$0xff]
        %v3083 = vld [vmem:[%s3073 + $0x48] sm:$0xff]
        %v3084 = vld [vmem:[%s3073 + $0x50] sm:$0xff]
        %v3085 = vld [vmem:[%s3073 + $0x58] sm:$0xff]
        %v3086 = vld [vmem:[%s3073 + $0x60] sm:$0xff]
        %v3087 = vld [vmem:[%s3073 + $0x68] sm:$0xff]
        %v3088 = vld [vmem:[%s3073 + $0x70] sm:$0xff]
        %v3089 = vld [vmem:[%s3073 + $0x78] sm:$0xff]
        %v3090 = vld [vmem:[%s3073 + $0x80] sm:$0xff]
        %v3091 = vld [vmem:[%s3073 + $0x88] sm:$0xff]
        %v3092 = vld [vmem:[%s3073 + $0x90] sm:$0xff]
        %v3093 = vld [vmem:[%s3073 + $0x98] sm:$0xff]
        %v3094 = vld [vmem:[%s3073 + $0xa0] sm:$0xff]
        %v3095 = vld [vmem:[%s3073 + $0xa8] sm:$0xff]
        %v3096 = vld [vmem:[%s3073 + $0xb0] sm:$0xff]
        %v3097 = vld [vmem:[%s3073 + $0xb8] sm:$0xff]
        %v3098 = vld [vmem:[%s3073 + $0xc0] sm:$0xff]
        %v3099 = vld [vmem:[%s3073 + $0xc8] sm:$0xff]
        %v3100 = vld [vmem:[%s3073 + $0xd0] sm:$0xff]
        %v3101 = vld [vmem:[%s3073 + $0xd8] sm:$0xff]
        %v3102 = vld [vmem:[%s3073 + $0xe0] sm:$0xff]
        %v3103 = vld [vmem:[%s3073 + $0xe8] sm:$0xff]
        %v3104 = vld [vmem:[%s3073 + $0xf0] sm:$0xff]
        %v3105 = vld [vmem:[%s3073 + $0xf8] sm:$0xff]
        %v3106 = vld [vmem:[%s3073 + $0x100] sm:$0xff]
        %v3107 = vld [vmem:[%s3073 + $0x108] sm:$0xff]
        %v3108 = vld [vmem:[%s3073 + $0x110] sm:$0xff]
        %v3109 = vld [vmem:[%s3073 + $0x118] sm:$0xff]
        %v3110 = vld [vmem:[%s3073 + $0x120] sm:$0xff]
        %v3111 = vld [vmem:[%s3073 + $0x128] sm:$0xff]
        %v3112 = vld [vmem:[%s3073 + $0x130] sm:$0xff]
        %v3113 = vld [vmem:[%s3073 + $0x138] sm:$0xff]
        %v3114 = vld [vmem:[%s3073 + $0x140] sm:$0xff]
        %v3115 = vld [vmem:[%s3073 + $0x148] sm:$0xff]
        %v3116 = vld [vmem:[%s3073 + $0x150] sm:$0xff]
        %v3117 = vld [vmem:[%s3073 + $0x158] sm:$0xff]
        %v3118 = vld [vmem:[%s3073 + $0x160] sm:$0xff]
        %v3119 = vld [vmem:[%s3073 + $0x168] sm:$0xff]
        %v3120 = vld [vmem:[%s3073 + $0x170] sm:$0xff]
        %v3121 = vld [vmem:[%s3073 + $0x178] sm:$0xff]
        %v3122 = vld [vmem:[%s3073 + $0x180] sm:$0xff]
        %v3123 = vld [vmem:[%s3073 + $0x188] sm:$0xff]
        %v3124 = vld [vmem:[%s3073 + $0x190] sm:$0xff]
        %v3125 = vld [vmem:[%s3073 + $0x198] sm:$0xff]
        %v3126 = vld [vmem:[%s3073 + $0x1a0] sm:$0xff]
        %v3127 = vld [vmem:[%s3073 + $0x1a8] sm:$0xff]
        %v3128 = vld [vmem:[%s3073 + $0x1b0] sm:$0xff]
        %v3129 = vld [vmem:[%s3073 + $0x1b8] sm:$0xff]
        %v3130 = vld [vmem:[%s3073 + $0x1c0] sm:$0xff]
        %v3131 = vld [vmem:[%s3073 + $0x1c8] sm:$0xff]
        %v3132 = vld [vmem:[%s3073 + $0x1d0] sm:$0xff]
        %v3133 = vld [vmem:[%s3073 + $0x1d8] sm:$0xff]
        %v3134 = vld [vmem:[%s3073 + $0x1e0] sm:$0xff]
        %v3135 = vld [vmem:[%s3073 + $0x1e8] sm:$0xff]
        %v3136 = vld [vmem:[%s3073 + $0x1f0] sm:$0xff]
        %v3137 = vld [vmem:[%s3073 + $0x1f8] sm:$0xff]
        %v3139 = vshrl.u32 %v3005, 16
        %v3141 = vshll.u32 %v3005, 16
        %v3143 = vrot.slane %v3141, 1
        %v3144 = vor.u32 %v3139, %v3143
        %v3146 = vshll.u32 %v3007, 16
        %v3148 = vrot.slane %v3146, 1
        %v3149 = vsel %vm569, %v3144, %v3148
        %v3151 = vshrl.u32 %v3006, 16
        %v3153 = vshll.u32 %v3006, 16
        %v3155 = vrot.slane %v3153, 1
        %v3156 = vor.u32 %v3151, %v3155
        %v3158 = vshll.u32 %v3008, 16
        %v3160 = vrot.slane %v3158, 1
        %v3161 = vsel %vm569, %v3156, %v3160
        %v3162 = vshrl.u32 %v3007, 16
        %v3164 = vor.u32 %v3162, %v3148
        %v3165 = vsel %vm569, %v3164, %v612
        %v3166 = vshrl.u32 %v3008, 16
        %v3168 = vor.u32 %v3166, %v3160
        %v3169 = vsel %vm569, %v3168, %v612
        %v3238 = vunpack.c.l.b16 %v3074
        %v3239 = vunpack.c.h.b16 %v3074
        %v3240 = vunpack.c.l.b16 %v3075
        %v3241 = vunpack.c.h.b16 %v3075
        %v3242 = vunpack.c.l.b16 %v3076
        %v3243 = vunpack.c.h.b16 %v3076
        %v3244 = vunpack.c.l.b16 %v3077
        %v3245 = vunpack.c.h.b16 %v3077
        %v3246 = vunpack.c.l.b16 %v3078
        %v3247 = vunpack.c.h.b16 %v3078
        %v3248 = vunpack.c.l.b16 %v3079
        %v3249 = vunpack.c.h.b16 %v3079
        %v3250 = vunpack.c.l.b16 %v3080
        %v3251 = vunpack.c.h.b16 %v3080
        %v3252 = vunpack.c.l.b16 %v3081
        %v3253 = vunpack.c.h.b16 %v3081
        %v3254 = vunpack.c.l.b16 %v3082
        %v3255 = vunpack.c.h.b16 %v3082
        %v3256 = vunpack.c.l.b16 %v3083
        %v3257 = vunpack.c.h.b16 %v3083
        %v3258 = vunpack.c.l.b16 %v3084
        %v3259 = vunpack.c.h.b16 %v3084
        %v3260 = vunpack.c.l.b16 %v3085
        %v3261 = vunpack.c.h.b16 %v3085
        %v3262 = vunpack.c.l.b16 %v3086
        %v3263 = vunpack.c.h.b16 %v3086
        %v3264 = vunpack.c.l.b16 %v3087
        %v3265 = vunpack.c.h.b16 %v3087
        %v3266 = vunpack.c.l.b16 %v3088
        %v3267 = vunpack.c.h.b16 %v3088
        %v3268 = vunpack.c.l.b16 %v3089
        %v3269 = vunpack.c.h.b16 %v3089
        %v3270 = vunpack.c.l.b16 %v3090
        %v3271 = vunpack.c.h.b16 %v3090
        %v3272 = vunpack.c.l.b16 %v3091
        %v3273 = vunpack.c.h.b16 %v3091
        %v3274 = vunpack.c.l.b16 %v3092
        %v3275 = vunpack.c.h.b16 %v3092
        %v3276 = vunpack.c.l.b16 %v3093
        %v3277 = vunpack.c.h.b16 %v3093
        %v3278 = vunpack.c.l.b16 %v3094
        %v3279 = vunpack.c.h.b16 %v3094
        %v3280 = vunpack.c.l.b16 %v3095
        %v3281 = vunpack.c.h.b16 %v3095
        %v3282 = vunpack.c.l.b16 %v3096
        %v3283 = vunpack.c.h.b16 %v3096
        %v3284 = vunpack.c.l.b16 %v3097
        %v3285 = vunpack.c.h.b16 %v3097
        %v3286 = vunpack.c.l.b16 %v3098
        %v3287 = vunpack.c.h.b16 %v3098
        %v3288 = vunpack.c.l.b16 %v3099
        %v3289 = vunpack.c.h.b16 %v3099
        %v3290 = vunpack.c.l.b16 %v3100
        %v3291 = vunpack.c.h.b16 %v3100
        %v3292 = vunpack.c.l.b16 %v3101
        %v3293 = vunpack.c.h.b16 %v3101
        %v3294 = vunpack.c.l.b16 %v3102
        %v3295 = vunpack.c.h.b16 %v3102
        %v3296 = vunpack.c.l.b16 %v3103
        %v3297 = vunpack.c.h.b16 %v3103
        %v3298 = vunpack.c.l.b16 %v3104
        %v3299 = vunpack.c.h.b16 %v3104
        %v3300 = vunpack.c.l.b16 %v3105
        %v3301 = vunpack.c.h.b16 %v3105
        %v3302 = vunpack.c.l.b16 %v3106
        %v3303 = vunpack.c.h.b16 %v3106
        %v3304 = vunpack.c.l.b16 %v3107
        %v3305 = vunpack.c.h.b16 %v3107
        %v3306 = vunpack.c.l.b16 %v3108
        %v3307 = vunpack.c.h.b16 %v3108
        %v3308 = vunpack.c.l.b16 %v3109
        %v3309 = vunpack.c.h.b16 %v3109
        %v3310 = vunpack.c.l.b16 %v3110
        %v3311 = vunpack.c.h.b16 %v3110
        %v3312 = vunpack.c.l.b16 %v3111
        %v3313 = vunpack.c.h.b16 %v3111
        %v3314 = vunpack.c.l.b16 %v3112
        %v3315 = vunpack.c.h.b16 %v3112
        %v3316 = vunpack.c.l.b16 %v3113
        %v3317 = vunpack.c.h.b16 %v3113
        %v3318 = vunpack.c.l.b16 %v3114
        %v3319 = vunpack.c.h.b16 %v3114
        %v3320 = vunpack.c.l.b16 %v3115
        %v3321 = vunpack.c.h.b16 %v3115
        %v3322 = vunpack.c.l.b16 %v3116
        %v3323 = vunpack.c.h.b16 %v3116
        %v3324 = vunpack.c.l.b16 %v3117
        %v3325 = vunpack.c.h.b16 %v3117
        %v3326 = vunpack.c.l.b16 %v3118
        %v3327 = vunpack.c.h.b16 %v3118
        %v3328 = vunpack.c.l.b16 %v3119
        %v3329 = vunpack.c.h.b16 %v3119
        %v3330 = vunpack.c.l.b16 %v3120
        %v3331 = vunpack.c.h.b16 %v3120
        %v3332 = vunpack.c.l.b16 %v3121
        %v3333 = vunpack.c.h.b16 %v3121
        %v3334 = vunpack.c.l.b16 %v3122
        %v3335 = vunpack.c.h.b16 %v3122
        %v3336 = vunpack.c.l.b16 %v3123
        %v3337 = vunpack.c.h.b16 %v3123
        %v3338 = vunpack.c.l.b16 %v3124
        %v3339 = vunpack.c.h.b16 %v3124
        %v3340 = vunpack.c.l.b16 %v3125
        %v3341 = vunpack.c.h.b16 %v3125
        %v3342 = vunpack.c.l.b16 %v3126
        %v3343 = vunpack.c.h.b16 %v3126
        %v3344 = vunpack.c.l.b16 %v3127
        %v3345 = vunpack.c.h.b16 %v3127
        %v3346 = vunpack.c.l.b16 %v3128
        %v3347 = vunpack.c.h.b16 %v3128
        %v3348 = vunpack.c.l.b16 %v3129
        %v3349 = vunpack.c.h.b16 %v3129
        %v3350 = vunpack.c.l.b16 %v3130
        %v3351 = vunpack.c.h.b16 %v3130
        %v3352 = vunpack.c.l.b16 %v3131
        %v3353 = vunpack.c.h.b16 %v3131
        %v3354 = vunpack.c.l.b16 %v3132
        %v3355 = vunpack.c.h.b16 %v3132
        %v3356 = vunpack.c.l.b16 %v3133
        %v3357 = vunpack.c.h.b16 %v3133
        %v3358 = vunpack.c.l.b16 %v3134
        %v3359 = vunpack.c.h.b16 %v3134
        %v3360 = vunpack.c.l.b16 %v3135
        %v3361 = vunpack.c.h.b16 %v3135
        %v3362 = vunpack.c.l.b16 %v3136
        %v3363 = vunpack.c.h.b16 %v3136
        %v3364 = vunpack.c.l.b16 %v3137
        %v3365 = vunpack.c.h.b16 %v3137
        %v3366 = vpack.c.b16 %v3242, %v3238
        %v3367 = vpack.c.b16 %v3243, %v3239
        %v3368 = vpack.c.b16 %v3244, %v3240
        %v3369 = vpack.c.b16 %v3245, %v3241
        %v3370 = vpack.c.b16 %v3250, %v3246
        %v3371 = vpack.c.b16 %v3251, %v3247
        %v3372 = vpack.c.b16 %v3252, %v3248
        %v3373 = vpack.c.b16 %v3253, %v3249
        %v3374 = vpack.c.b16 %v3258, %v3254
        %v3375 = vpack.c.b16 %v3259, %v3255
        %v3376 = vpack.c.b16 %v3260, %v3256
        %v3377 = vpack.c.b16 %v3261, %v3257
        %v3378 = vpack.c.b16 %v3266, %v3262
        %v3379 = vpack.c.b16 %v3267, %v3263
        %v3380 = vpack.c.b16 %v3268, %v3264
        %v3381 = vpack.c.b16 %v3269, %v3265
        %v3382 = vpack.c.b16 %v3274, %v3270
        %v3383 = vpack.c.b16 %v3275, %v3271
        %v3384 = vpack.c.b16 %v3276, %v3272
        %v3385 = vpack.c.b16 %v3277, %v3273
        %v3386 = vpack.c.b16 %v3282, %v3278
        %v3387 = vpack.c.b16 %v3283, %v3279
        %v3388 = vpack.c.b16 %v3284, %v3280
        %v3389 = vpack.c.b16 %v3285, %v3281
        %v3390 = vpack.c.b16 %v3290, %v3286
        %v3391 = vpack.c.b16 %v3291, %v3287
        %v3392 = vpack.c.b16 %v3292, %v3288
        %v3393 = vpack.c.b16 %v3293, %v3289
        %v3394 = vpack.c.b16 %v3298, %v3294
        %v3395 = vpack.c.b16 %v3299, %v3295
        %v3396 = vpack.c.b16 %v3300, %v3296
        %v3397 = vpack.c.b16 %v3301, %v3297
        %v3398 = vpack.c.b16 %v3306, %v3302
        %v3399 = vpack.c.b16 %v3307, %v3303
        %v3400 = vpack.c.b16 %v3308, %v3304
        %v3401 = vpack.c.b16 %v3309, %v3305
        %v3402 = vpack.c.b16 %v3314, %v3310
        %v3403 = vpack.c.b16 %v3315, %v3311
        %v3404 = vpack.c.b16 %v3316, %v3312
        %v3405 = vpack.c.b16 %v3317, %v3313
        %v3406 = vpack.c.b16 %v3322, %v3318
        %v3407 = vpack.c.b16 %v3323, %v3319
        %v3408 = vpack.c.b16 %v3324, %v3320
        %v3409 = vpack.c.b16 %v3325, %v3321
        %v3410 = vpack.c.b16 %v3330, %v3326
        %v3411 = vpack.c.b16 %v3331, %v3327
        %v3412 = vpack.c.b16 %v3332, %v3328
        %v3413 = vpack.c.b16 %v3333, %v3329
        %v3414 = vpack.c.b16 %v3338, %v3334
        %v3415 = vpack.c.b16 %v3339, %v3335
        %v3416 = vpack.c.b16 %v3340, %v3336
        %v3417 = vpack.c.b16 %v3341, %v3337
        %v3418 = vpack.c.b16 %v3346, %v3342
        %v3419 = vpack.c.b16 %v3347, %v3343
        %v3420 = vpack.c.b16 %v3348, %v3344
        %v3421 = vpack.c.b16 %v3349, %v3345
        %v3422 = vpack.c.b16 %v3354, %v3350
        %v3423 = vpack.c.b16 %v3355, %v3351
        %v3424 = vpack.c.b16 %v3356, %v3352
        %v3425 = vpack.c.b16 %v3357, %v3353
        %v3426 = vpack.c.b16 %v3362, %v3358
        %v3427 = vpack.c.b16 %v3363, %v3359
        %v3428 = vpack.c.b16 %v3364, %v3360
        %v3429 = vpack.c.b16 %v3365, %v3361
        %3494 = vmatprep.subr.bf16.mxu0 %v3367
        %3495 = vmatpush1.bf16.msra.mxu0 %v3366
        %3496 = vmatprep.subr.bf16.mxu0 %v3371
        %3497 = vmatpush1.bf16.msra.mxu0 %v3370
        %3498 = vmatprep.subr.bf16.mxu0 %v3375
        %3499 = vmatpush1.bf16.msra.mxu0 %v3374
        %3500 = vmatprep.subr.bf16.mxu0 %v3379
        %3501 = vmatpush1.bf16.msra.mxu0 %v3378
        %3502 = vmatprep.subr.bf16.mxu0 %v3383
        %3503 = vmatpush1.bf16.msra.mxu0 %v3382
        %3504 = vmatprep.subr.bf16.mxu0 %v3387
        %3505 = vmatpush1.bf16.msra.mxu0 %v3386
        %3506 = vmatprep.subr.bf16.mxu0 %v3391
        %3507 = vmatpush1.bf16.msra.mxu0 %v3390
        %3508 = vmatprep.subr.bf16.mxu0 %v3395
        %3509 = vmatpush1.bf16.msra.mxu0 %v3394
        %3510 = vmatprep.subr.bf16.mxu0 %v3399
        %3511 = vmatpush1.bf16.msra.mxu0 %v3398
        %3512 = vmatprep.subr.bf16.mxu0 %v3403
        %3513 = vmatpush1.bf16.msra.mxu0 %v3402
        %3514 = vmatprep.subr.bf16.mxu0 %v3407
        %3515 = vmatpush1.bf16.msra.mxu0 %v3406
        %3516 = vmatprep.subr.bf16.mxu0 %v3411
        %3517 = vmatpush1.bf16.msra.mxu0 %v3410
        %3518 = vmatprep.subr.bf16.mxu0 %v3415
        %3519 = vmatpush1.bf16.msra.mxu0 %v3414
        %3520 = vmatprep.subr.bf16.mxu0 %v3419
        %3521 = vmatpush1.bf16.msra.mxu0 %v3418
        %3522 = vmatprep.subr.bf16.mxu0 %v3423
        %3523 = vmatpush1.bf16.msra.mxu0 %v3422
        %3524 = vmatprep.subr.bf16.mxu0 %v3427
        %3525 = vmatpush1.bf16.msra.mxu0 %v3426
        %3526 = vmatprep.mubr.bf16.mxu0 %v3161
        %3527 = vmatmul.mubr.bf16.gmra.mrb[0].mxu0 %v3149
        %v3528 = vpop.f32.mrb[0].mxu0
        %v3529 = vadd.f32 0.0, %v3528
        %v3530 = vpop.f32.mrb[0].mxu0
        %v3531 = vadd.f32 0.0, %v3530
        %v3532 = vpop.f32.mrb[0].mxu0
        %v3533 = vpop.f32.mrb[0].mxu0
        %3534 = vmatprep.mubr.bf16.mxu0 %v3169
        %3535 = vmatmul.mubr.bf16.gmra.mrb[0].mxu0 %v3165
        %v3536 = vpop.f32.mrb[0].mxu0
        %v3537 = vadd.f32 0.0, %v3536
        %v3538 = vpop.f32.mrb[0].mxu0
        %v3539 = vadd.f32 0.0, %v3538
        %v3540 = vpop.f32.mrb[0].mxu0
        %v3541 = vpop.f32.mrb[0].mxu0
        %3542 = vdwg.mxu0
        %3543 = vmatprep.subr.bf16.mxu0 %v3369
        %3544 = vmatpush1.bf16.msra.mxu0 %v3368
        %3545 = vmatprep.subr.bf16.mxu0 %v3373
        %3546 = vmatpush1.bf16.msra.mxu0 %v3372
        %3547 = vmatprep.subr.bf16.mxu0 %v3377
        %3548 = vmatpush1.bf16.msra.mxu0 %v3376
        %3549 = vmatprep.subr.bf16.mxu0 %v3381
        %3550 = vmatpush1.bf16.msra.mxu0 %v3380
        %3551 = vmatprep.subr.bf16.mxu0 %v3385
        %3552 = vmatpush1.bf16.msra.mxu0 %v3384
        %3553 = vmatprep.subr.bf16.mxu0 %v3389
        %3554 = vmatpush1.bf16.msra.mxu0 %v3388
        %3555 = vmatprep.subr.bf16.mxu0 %v3393
        %3556 = vmatpush1.bf16.msra.mxu0 %v3392
        %3557 = vmatprep.subr.bf16.mxu0 %v3397
        %3558 = vmatpush1.bf16.msra.mxu0 %v3396
        %3559 = vmatprep.subr.bf16.mxu0 %v3401
        %3560 = vmatpush1.bf16.msra.mxu0 %v3400
        %3561 = vmatprep.subr.bf16.mxu0 %v3405
        %3562 = vmatpush1.bf16.msra.mxu0 %v3404
        %3563 = vmatprep.subr.bf16.mxu0 %v3409
        %3564 = vmatpush1.bf16.msra.mxu0 %v3408
        %3565 = vmatprep.subr.bf16.mxu0 %v3413
        %3566 = vmatpush1.bf16.msra.mxu0 %v3412
        %3567 = vmatprep.subr.bf16.mxu0 %v3417
        %3568 = vmatpush1.bf16.msra.mxu0 %v3416
        %3569 = vmatprep.subr.bf16.mxu0 %v3421
        %3570 = vmatpush1.bf16.msra.mxu0 %v3420
        %3571 = vmatprep.subr.bf16.mxu0 %v3425
        %3572 = vmatpush1.bf16.msra.mxu0 %v3424
        %3573 = vmatprep.subr.bf16.mxu0 %v3429
        %3574 = vmatpush1.bf16.msra.mxu0 %v3428
        %3575 = vmatprep.mubr.bf16.mxu0 %v3161
        %3576 = vmatmul.mubr.bf16.gmra.mrb[0].mxu0 %v3149
        %v3577 = vpop.f32.mrb[0].mxu0
        %v3578 = vadd.f32 0.0, %v3577
        %v3579 = vpop.f32.mrb[0].mxu0
        %v3580 = vadd.f32 0.0, %v3579
        %v3581 = vpop.f32.mrb[0].mxu0
        %v3582 = vpop.f32.mrb[0].mxu0
        %3583 = vmatprep.mubr.bf16.mxu0 %v3169
        %3584 = vmatmul.mubr.bf16.gmra.mrb[0].mxu0 %v3165
        %v3585 = vpop.f32.mrb[0].mxu0
        %v3586 = vadd.f32 0.0, %v3585
        %v3587 = vpop.f32.mrb[0].mxu0
        %v3588 = vadd.f32 0.0, %v3587
        %v3589 = vpop.f32.mrb[0].mxu0
        %v3590 = vpop.f32.mrb[0].mxu0
        %3591 = vdwg.mxu0
        %v3656 = vunpack.c.l.b16 %v3009
        %v3657 = vunpack.c.h.b16 %v3009
        %v3658 = vunpack.c.l.b16 %v3010
        %v3659 = vunpack.c.h.b16 %v3010
        %v3660 = vunpack.c.l.b16 %v3011
        %v3661 = vunpack.c.h.b16 %v3011
        %v3662 = vunpack.c.l.b16 %v3012
        %v3663 = vunpack.c.h.b16 %v3012
        %v3664 = vunpack.c.l.b16 %v3013
        %v3665 = vunpack.c.h.b16 %v3013
        %v3666 = vunpack.c.l.b16 %v3014
        %v3667 = vunpack.c.h.b16 %v3014
        %v3668 = vunpack.c.l.b16 %v3015
        %v3669 = vunpack.c.h.b16 %v3015
        %v3670 = vunpack.c.l.b16 %v3016
        %v3671 = vunpack.c.h.b16 %v3016
        %v3672 = vunpack.c.l.b16 %v3017
        %v3673 = vunpack.c.h.b16 %v3017
        %v3674 = vunpack.c.l.b16 %v3018
        %v3675 = vunpack.c.h.b16 %v3018
        %v3676 = vunpack.c.l.b16 %v3019
        %v3677 = vunpack.c.h.b16 %v3019
        %v3678 = vunpack.c.l.b16 %v3020
        %v3679 = vunpack.c.h.b16 %v3020
        %v3680 = vunpack.c.l.b16 %v3021
        %v3681 = vunpack.c.h.b16 %v3021
        %v3682 = vunpack.c.l.b16 %v3022
        %v3683 = vunpack.c.h.b16 %v3022
        %v3684 = vunpack.c.l.b16 %v3023
        %v3685 = vunpack.c.h.b16 %v3023
        %v3686 = vunpack.c.l.b16 %v3024
        %v3687 = vunpack.c.h.b16 %v3024
        %v3688 = vunpack.c.l.b16 %v3025
        %v3689 = vunpack.c.h.b16 %v3025
        %v3690 = vunpack.c.l.b16 %v3026
        %v3691 = vunpack.c.h.b16 %v3026
        %v3692 = vunpack.c.l.b16 %v3027
        %v3693 = vunpack.c.h.b16 %v3027
        %v3694 = vunpack.c.l.b16 %v3028
        %v3695 = vunpack.c.h.b16 %v3028
        %v3696 = vunpack.c.l.b16 %v3029
        %v3697 = vunpack.c.h.b16 %v3029
        %v3698 = vunpack.c.l.b16 %v3030
        %v3699 = vunpack.c.h.b16 %v3030
        %v3700 = vunpack.c.l.b16 %v3031
        %v3701 = vunpack.c.h.b16 %v3031
        %v3702 = vunpack.c.l.b16 %v3032
        %v3703 = vunpack.c.h.b16 %v3032
        %v3704 = vunpack.c.l.b16 %v3033
        %v3705 = vunpack.c.h.b16 %v3033
        %v3706 = vunpack.c.l.b16 %v3034
        %v3707 = vunpack.c.h.b16 %v3034
        %v3708 = vunpack.c.l.b16 %v3035
        %v3709 = vunpack.c.h.b16 %v3035
        %v3710 = vunpack.c.l.b16 %v3036
        %v3711 = vunpack.c.h.b16 %v3036
        %v3712 = vunpack.c.l.b16 %v3037
        %v3713 = vunpack.c.h.b16 %v3037
        %v3714 = vunpack.c.l.b16 %v3038
        %v3715 = vunpack.c.h.b16 %v3038
        %v3716 = vunpack.c.l.b16 %v3039
        %v3717 = vunpack.c.h.b16 %v3039
        %v3718 = vunpack.c.l.b16 %v3040
        %v3719 = vunpack.c.h.b16 %v3040
        %v3720 = vunpack.c.l.b16 %v3041
        %v3721 = vunpack.c.h.b16 %v3041
        %v3722 = vunpack.c.l.b16 %v3042
        %v3723 = vunpack.c.h.b16 %v3042
        %v3724 = vunpack.c.l.b16 %v3043
        %v3725 = vunpack.c.h.b16 %v3043
        %v3726 = vunpack.c.l.b16 %v3044
        %v3727 = vunpack.c.h.b16 %v3044
        %v3728 = vunpack.c.l.b16 %v3045
        %v3729 = vunpack.c.h.b16 %v3045
        %v3730 = vunpack.c.l.b16 %v3046
        %v3731 = vunpack.c.h.b16 %v3046
        %v3732 = vunpack.c.l.b16 %v3047
        %v3733 = vunpack.c.h.b16 %v3047
        %v3734 = vunpack.c.l.b16 %v3048
        %v3735 = vunpack.c.h.b16 %v3048
        %v3736 = vunpack.c.l.b16 %v3049
        %v3737 = vunpack.c.h.b16 %v3049
        %v3738 = vunpack.c.l.b16 %v3050
        %v3739 = vunpack.c.h.b16 %v3050
        %v3740 = vunpack.c.l.b16 %v3051
        %v3741 = vunpack.c.h.b16 %v3051
        %v3742 = vunpack.c.l.b16 %v3052
        %v3743 = vunpack.c.h.b16 %v3052
        %v3744 = vunpack.c.l.b16 %v3053
        %v3745 = vunpack.c.h.b16 %v3053
        %v3746 = vunpack.c.l.b16 %v3054
        %v3747 = vunpack.c.h.b16 %v3054
        %v3748 = vunpack.c.l.b16 %v3055
        %v3749 = vunpack.c.h.b16 %v3055
        %v3750 = vunpack.c.l.b16 %v3056
        %v3751 = vunpack.c.h.b16 %v3056
        %v3752 = vunpack.c.l.b16 %v3057
        %v3753 = vunpack.c.h.b16 %v3057
        %v3754 = vunpack.c.l.b16 %v3058
        %v3755 = vunpack.c.h.b16 %v3058
        %v3756 = vunpack.c.l.b16 %v3059
        %v3757 = vunpack.c.h.b16 %v3059
        %v3758 = vunpack.c.l.b16 %v3060
        %v3759 = vunpack.c.h.b16 %v3060
        %v3760 = vunpack.c.l.b16 %v3061
        %v3761 = vunpack.c.h.b16 %v3061
        %v3762 = vunpack.c.l.b16 %v3062
        %v3763 = vunpack.c.h.b16 %v3062
        %v3764 = vunpack.c.l.b16 %v3063
        %v3765 = vunpack.c.h.b16 %v3063
        %v3766 = vunpack.c.l.b16 %v3064
        %v3767 = vunpack.c.h.b16 %v3064
        %v3768 = vunpack.c.l.b16 %v3065
        %v3769 = vunpack.c.h.b16 %v3065
        %v3770 = vunpack.c.l.b16 %v3066
        %v3771 = vunpack.c.h.b16 %v3066
        %v3772 = vunpack.c.l.b16 %v3067
        %v3773 = vunpack.c.h.b16 %v3067
        %v3774 = vunpack.c.l.b16 %v3068
        %v3775 = vunpack.c.h.b16 %v3068
        %v3776 = vunpack.c.l.b16 %v3069
        %v3777 = vunpack.c.h.b16 %v3069
        %v3778 = vunpack.c.l.b16 %v3070
        %v3779 = vunpack.c.h.b16 %v3070
        %v3780 = vunpack.c.l.b16 %v3071
        %v3781 = vunpack.c.h.b16 %v3071
        %v3782 = vunpack.c.l.b16 %v3072
        %v3783 = vunpack.c.h.b16 %v3072
        %v3784 = vpack.c.b16 %v3660, %v3656
        %v3785 = vpack.c.b16 %v3661, %v3657
        %v3786 = vpack.c.b16 %v3662, %v3658
        %v3787 = vpack.c.b16 %v3663, %v3659
        %v3788 = vpack.c.b16 %v3668, %v3664
        %v3789 = vpack.c.b16 %v3669, %v3665
        %v3790 = vpack.c.b16 %v3670, %v3666
        %v3791 = vpack.c.b16 %v3671, %v3667
        %v3792 = vpack.c.b16 %v3676, %v3672
        %v3793 = vpack.c.b16 %v3677, %v3673
        %v3794 = vpack.c.b16 %v3678, %v3674
        %v3795 = vpack.c.b16 %v3679, %v3675
        %v3796 = vpack.c.b16 %v3684, %v3680
        %v3797 = vpack.c.b16 %v3685, %v3681
        %v3798 = vpack.c.b16 %v3686, %v3682
        %v3799 = vpack.c.b16 %v3687, %v3683
        %v3800 = vpack.c.b16 %v3692, %v3688
        %v3801 = vpack.c.b16 %v3693, %v3689
        %v3802 = vpack.c.b16 %v3694, %v3690
        %v3803 = vpack.c.b16 %v3695, %v3691
        %v3804 = vpack.c.b16 %v3700, %v3696
        %v3805 = vpack.c.b16 %v3701, %v3697
        %v3806 = vpack.c.b16 %v3702, %v3698
        %v3807 = vpack.c.b16 %v3703, %v3699
        %v3808 = vpack.c.b16 %v3708, %v3704
        %v3809 = vpack.c.b16 %v3709, %v3705
        %v3810 = vpack.c.b16 %v3710, %v3706
        %v3811 = vpack.c.b16 %v3711, %v3707
        %v3812 = vpack.c.b16 %v3716, %v3712
        %v3813 = vpack.c.b16 %v3717, %v3713
        %v3814 = vpack.c.b16 %v3718, %v3714
        %v3815 = vpack.c.b16 %v3719, %v3715
        %v3816 = vpack.c.b16 %v3724, %v3720
        %v3817 = vpack.c.b16 %v3725, %v3721
        %v3818 = vpack.c.b16 %v3726, %v3722
        %v3819 = vpack.c.b16 %v3727, %v3723
        %v3820 = vpack.c.b16 %v3732, %v3728
        %v3821 = vpack.c.b16 %v3733, %v3729
        %v3822 = vpack.c.b16 %v3734, %v3730
        %v3823 = vpack.c.b16 %v3735, %v3731
        %v3824 = vpack.c.b16 %v3740, %v3736
        %v3825 = vpack.c.b16 %v3741, %v3737
        %v3826 = vpack.c.b16 %v3742, %v3738
        %v3827 = vpack.c.b16 %v3743, %v3739
        %v3828 = vpack.c.b16 %v3748, %v3744
        %v3829 = vpack.c.b16 %v3749, %v3745
        %v3830 = vpack.c.b16 %v3750, %v3746
        %v3831 = vpack.c.b16 %v3751, %v3747
        %v3832 = vpack.c.b16 %v3756, %v3752
        %v3833 = vpack.c.b16 %v3757, %v3753
        %v3834 = vpack.c.b16 %v3758, %v3754
        %v3835 = vpack.c.b16 %v3759, %v3755
        %v3836 = vpack.c.b16 %v3764, %v3760
        %v3837 = vpack.c.b16 %v3765, %v3761
        %v3838 = vpack.c.b16 %v3766, %v3762
        %v3839 = vpack.c.b16 %v3767, %v3763
        %v3840 = vpack.c.b16 %v3772, %v3768
        %v3841 = vpack.c.b16 %v3773, %v3769
        %v3842 = vpack.c.b16 %v3774, %v3770
        %v3843 = vpack.c.b16 %v3775, %v3771
        %v3844 = vpack.c.b16 %v3780, %v3776
        %v3845 = vpack.c.b16 %v3781, %v3777
        %v3846 = vpack.c.b16 %v3782, %v3778
        %v3847 = vpack.c.b16 %v3783, %v3779
        %3912 = vmatprep.subr.bf16.mxu0 %v3785
        %3913 = vmatpush1.bf16.msra.mxu0 %v3784
        %3914 = vmatprep.subr.bf16.mxu0 %v3789
        %3915 = vmatpush1.bf16.msra.mxu0 %v3788
        %3916 = vmatprep.subr.bf16.mxu0 %v3793
        %3917 = vmatpush1.bf16.msra.mxu0 %v3792
        %3918 = vmatprep.subr.bf16.mxu0 %v3797
        %3919 = vmatpush1.bf16.msra.mxu0 %v3796
        %3920 = vmatprep.subr.bf16.mxu0 %v3801
        %3921 = vmatpush1.bf16.msra.mxu0 %v3800
        %3922 = vmatprep.subr.bf16.mxu0 %v3805
        %3923 = vmatpush1.bf16.msra.mxu0 %v3804
        %3924 = vmatprep.subr.bf16.mxu0 %v3809
        %3925 = vmatpush1.bf16.msra.mxu0 %v3808
        %3926 = vmatprep.subr.bf16.mxu0 %v3813
        %3927 = vmatpush1.bf16.msra.mxu0 %v3812
        %3928 = vmatprep.subr.bf16.mxu0 %v3817
        %3929 = vmatpush1.bf16.msra.mxu0 %v3816
        %3930 = vmatprep.subr.bf16.mxu0 %v3821
        %3931 = vmatpush1.bf16.msra.mxu0 %v3820
        %3932 = vmatprep.subr.bf16.mxu0 %v3825
        %3933 = vmatpush1.bf16.msra.mxu0 %v3824
        %3934 = vmatprep.subr.bf16.mxu0 %v3829
        %3935 = vmatpush1.bf16.msra.mxu0 %v3828
        %3936 = vmatprep.subr.bf16.mxu0 %v3833
        %3937 = vmatpush1.bf16.msra.mxu0 %v3832
        %3938 = vmatprep.subr.bf16.mxu0 %v3837
        %3939 = vmatpush1.bf16.msra.mxu0 %v3836
        %3940 = vmatprep.subr.bf16.mxu0 %v3841
        %3941 = vmatpush1.bf16.msra.mxu0 %v3840
        %3942 = vmatprep.subr.bf16.mxu0 %v3845
        %3943 = vmatpush1.bf16.msra.mxu0 %v3844
        %3944 = vmatprep.mubr.bf16.mxu0 %v3006
        %3945 = vmatmul.mubr.bf16.gmra.mrb[0].mxu0 %v3005
        %v3946 = vpop.f32.mrb[0].mxu0
        %v3947 = vadd.f32 %v3529, %v3946
        %v3948 = vpop.f32.mrb[0].mxu0
        %v3949 = vadd.f32 %v3531, %v3948
        %v3950 = vpop.f32.mrb[0].mxu0
        %v3951 = vpop.f32.mrb[0].mxu0
        %3952 = vmatprep.mubr.bf16.mxu0 %v3008
        %3953 = vmatmul.mubr.bf16.gmra.mrb[0].mxu0 %v3007
        %v3954 = vpop.f32.mrb[0].mxu0
        %v3955 = vadd.f32 %v3537, %v3954
        %v3956 = vpop.f32.mrb[0].mxu0
        %v3957 = vadd.f32 %v3539, %v3956
        %v3958 = vpop.f32.mrb[0].mxu0
        %v3959 = vpop.f32.mrb[0].mxu0
        %3960 = vdwg.mxu0
        %3961 = vmatprep.subr.bf16.mxu0 %v3787
        %3962 = vmatpush1.bf16.msra.mxu0 %v3786
        %3963 = vmatprep.subr.bf16.mxu0 %v3791
        %3964 = vmatpush1.bf16.msra.mxu0 %v3790
        %3965 = vmatprep.subr.bf16.mxu0 %v3795
        %3966 = vmatpush1.bf16.msra.mxu0 %v3794
        %3967 = vmatprep.subr.bf16.mxu0 %v3799
        %3968 = vmatpush1.bf16.msra.mxu0 %v3798
        %3969 = vmatprep.subr.bf16.mxu0 %v3803
        %3970 = vmatpush1.bf16.msra.mxu0 %v3802
        %3971 = vmatprep.subr.bf16.mxu0 %v3807
        %3972 = vmatpush1.bf16.msra.mxu0 %v3806
        %3973 = vmatprep.subr.bf16.mxu0 %v3811
        %3974 = vmatpush1.bf16.msra.mxu0 %v3810
        %3975 = vmatprep.subr.bf16.mxu0 %v3815
        %3976 = vmatpush1.bf16.msra.mxu0 %v3814
        %3977 = vmatprep.subr.bf16.mxu0 %v3819
        %3978 = vmatpush1.bf16.msra.mxu0 %v3818
        %3979 = vmatprep.subr.bf16.mxu0 %v3823
        %3980 = vmatpush1.bf16.msra.mxu0 %v3822
        %3981 = vmatprep.subr.bf16.mxu0 %v3827
        %3982 = vmatpush1.bf16.msra.mxu0 %v3826
        %3983 = vmatprep.subr.bf16.mxu0 %v3831
        %3984 = vmatpush1.bf16.msra.mxu0 %v3830
        %3985 = vmatprep.subr.bf16.mxu0 %v3835
        %3986 = vmatpush1.bf16.msra.mxu0 %v3834
        %3987 = vmatprep.subr.bf16.mxu0 %v3839
        %3988 = vmatpush1.bf16.msra.mxu0 %v3838
        %3989 = vmatprep.subr.bf16.mxu0 %v3843
        %3990 = vmatpush1.bf16.msra.mxu0 %v3842
        %3991 = vmatprep.subr.bf16.mxu0 %v3847
        %3992 = vmatpush1.bf16.msra.mxu0 %v3846
        %3993 = vmatprep.mubr.bf16.mxu0 %v3006
        %3994 = vmatmul.mubr.bf16.gmra.mrb[0].mxu0 %v3005
        %v3995 = vpop.f32.mrb[0].mxu0
        %v3996 = vadd.f32 %v3578, %v3995
        %v3997 = vpop.f32.mrb[0].mxu0
        %v3998 = vadd.f32 %v3580, %v3997
        %v3999 = vpop.f32.mrb[0].mxu0
        %v4000 = vpop.f32.mrb[0].mxu0
        %4001 = vmatprep.mubr.bf16.mxu0 %v3008
        %4002 = vmatmul.mubr.bf16.gmra.mrb[0].mxu0 %v3007
        %v4003 = vpop.f32.mrb[0].mxu0
        %v4004 = vadd.f32 %v3586, %v4003
        %v4005 = vpop.f32.mrb[0].mxu0
        %v4006 = vadd.f32 %v3588, %v4005
        %v4007 = vpop.f32.mrb[0].mxu0
        %v4008 = vpop.f32.mrb[0].mxu0
        %4009 = vdwg.mxu0
        %s4010 = scalar_lea.vmem [#allocation13], 1024
        %v4011 = vld [vmem:[%s4010] sm:$0xff]
        %v4012 = vld [vmem:[%s4010 + $0x8] sm:$0xff]
        %v4013 = vld [vmem:[%s4010 + $0x10] sm:$0xff]
        %v4014 = vld [vmem:[%s4010 + $0x18] sm:$0xff]
        %v4015 = vld [vmem:[%s4010 + $0x20] sm:$0xff]
        %v4016 = vld [vmem:[%s4010 + $0x28] sm:$0xff]
        %v4017 = vld [vmem:[%s4010 + $0x30] sm:$0xff]
        %v4018 = vld [vmem:[%s4010 + $0x38] sm:$0xff]
        %v4019 = vld [vmem:[%s4010 + $0x40] sm:$0xff]
        %v4020 = vld [vmem:[%s4010 + $0x48] sm:$0xff]
        %v4021 = vld [vmem:[%s4010 + $0x50] sm:$0xff]
        %v4022 = vld [vmem:[%s4010 + $0x58] sm:$0xff]
        %v4023 = vld [vmem:[%s4010 + $0x60] sm:$0xff]
        %v4024 = vld [vmem:[%s4010 + $0x68] sm:$0xff]
        %v4025 = vld [vmem:[%s4010 + $0x70] sm:$0xff]
        %v4026 = vld [vmem:[%s4010 + $0x78] sm:$0xff]
        %v4027 = vld [vmem:[%s4010 + $0x80] sm:$0xff]
        %v4028 = vld [vmem:[%s4010 + $0x88] sm:$0xff]
        %v4029 = vld [vmem:[%s4010 + $0x90] sm:$0xff]
        %v4030 = vld [vmem:[%s4010 + $0x98] sm:$0xff]
        %v4031 = vld [vmem:[%s4010 + $0xa0] sm:$0xff]
        %v4032 = vld [vmem:[%s4010 + $0xa8] sm:$0xff]
        %v4033 = vld [vmem:[%s4010 + $0xb0] sm:$0xff]
        %v4034 = vld [vmem:[%s4010 + $0xb8] sm:$0xff]
        %v4035 = vld [vmem:[%s4010 + $0xc0] sm:$0xff]
        %v4036 = vld [vmem:[%s4010 + $0xc8] sm:$0xff]
        %v4037 = vld [vmem:[%s4010 + $0xd0] sm:$0xff]
        %v4038 = vld [vmem:[%s4010 + $0xd8] sm:$0xff]
        %v4039 = vld [vmem:[%s4010 + $0xe0] sm:$0xff]
        %v4040 = vld [vmem:[%s4010 + $0xe8] sm:$0xff]
        %v4041 = vld [vmem:[%s4010 + $0xf0] sm:$0xff]
        %v4042 = vld [vmem:[%s4010 + $0xf8] sm:$0xff]
        %v4043 = vld [vmem:[%s4010 + $0x100] sm:$0xff]
        %v4044 = vld [vmem:[%s4010 + $0x108] sm:$0xff]
        %v4045 = vld [vmem:[%s4010 + $0x110] sm:$0xff]
        %v4046 = vld [vmem:[%s4010 + $0x118] sm:$0xff]
        %v4047 = vld [vmem:[%s4010 + $0x120] sm:$0xff]
        %v4048 = vld [vmem:[%s4010 + $0x128] sm:$0xff]
        %v4049 = vld [vmem:[%s4010 + $0x130] sm:$0xff]
        %v4050 = vld [vmem:[%s4010 + $0x138] sm:$0xff]
        %v4051 = vld [vmem:[%s4010 + $0x140] sm:$0xff]
        %v4052 = vld [vmem:[%s4010 + $0x148] sm:$0xff]
        %v4053 = vld [vmem:[%s4010 + $0x150] sm:$0xff]
        %v4054 = vld [vmem:[%s4010 + $0x158] sm:$0xff]
        %v4055 = vld [vmem:[%s4010 + $0x160] sm:$0xff]
        %v4056 = vld [vmem:[%s4010 + $0x168] sm:$0xff]
        %v4057 = vld [vmem:[%s4010 + $0x170] sm:$0xff]
        %v4058 = vld [vmem:[%s4010 + $0x178] sm:$0xff]
        %v4059 = vld [vmem:[%s4010 + $0x180] sm:$0xff]
        %v4060 = vld [vmem:[%s4010 + $0x188] sm:$0xff]
        %v4061 = vld [vmem:[%s4010 + $0x190] sm:$0xff]
        %v4062 = vld [vmem:[%s4010 + $0x198] sm:$0xff]
        %v4063 = vld [vmem:[%s4010 + $0x1a0] sm:$0xff]
        %v4064 = vld [vmem:[%s4010 + $0x1a8] sm:$0xff]
        %v4065 = vld [vmem:[%s4010 + $0x1b0] sm:$0xff]
        %v4066 = vld [vmem:[%s4010 + $0x1b8] sm:$0xff]
        %v4067 = vld [vmem:[%s4010 + $0x1c0] sm:$0xff]
        %v4068 = vld [vmem:[%s4010 + $0x1c8] sm:$0xff]
        %v4069 = vld [vmem:[%s4010 + $0x1d0] sm:$0xff]
        %v4070 = vld [vmem:[%s4010 + $0x1d8] sm:$0xff]
        %v4071 = vld [vmem:[%s4010 + $0x1e0] sm:$0xff]
        %v4072 = vld [vmem:[%s4010 + $0x1e8] sm:$0xff]
        %v4073 = vld [vmem:[%s4010 + $0x1f0] sm:$0xff]
        %v4074 = vld [vmem:[%s4010 + $0x1f8] sm:$0xff]
        %v4079 = vrot.slane %v3005, 1
        %v4080 = vrot.slane %v3007, 1
        %v4081 = vsel %vm884, %v4079, %v4080
        %v4082 = vrot.slane %v3006, 1
        %v4083 = vrot.slane %v3008, 1
        %v4084 = vsel %vm884, %v4082, %v4083
        %v4085 = vsel %vm884, %v4080, %v894
        %v4086 = vsel %vm884, %v4083, %v894
        %v4155 = vunpack.c.l.b16 %v4011
        %v4156 = vunpack.c.h.b16 %v4011
        %v4157 = vunpack.c.l.b16 %v4012
        %v4158 = vunpack.c.h.b16 %v4012
        %v4159 = vunpack.c.l.b16 %v4013
        %v4160 = vunpack.c.h.b16 %v4013
        %v4161 = vunpack.c.l.b16 %v4014
        %v4162 = vunpack.c.h.b16 %v4014
        %v4163 = vunpack.c.l.b16 %v4015
        %v4164 = vunpack.c.h.b16 %v4015
        %v4165 = vunpack.c.l.b16 %v4016
        %v4166 = vunpack.c.h.b16 %v4016
        %v4167 = vunpack.c.l.b16 %v4017
        %v4168 = vunpack.c.h.b16 %v4017
        %v4169 = vunpack.c.l.b16 %v4018
        %v4170 = vunpack.c.h.b16 %v4018
        %v4171 = vunpack.c.l.b16 %v4019
        %v4172 = vunpack.c.h.b16 %v4019
        %v4173 = vunpack.c.l.b16 %v4020
        %v4174 = vunpack.c.h.b16 %v4020
        %v4175 = vunpack.c.l.b16 %v4021
        %v4176 = vunpack.c.h.b16 %v4021
        %v4177 = vunpack.c.l.b16 %v4022
        %v4178 = vunpack.c.h.b16 %v4022
        %v4179 = vunpack.c.l.b16 %v4023
        %v4180 = vunpack.c.h.b16 %v4023
        %v4181 = vunpack.c.l.b16 %v4024
        %v4182 = vunpack.c.h.b16 %v4024
        %v4183 = vunpack.c.l.b16 %v4025
        %v4184 = vunpack.c.h.b16 %v4025
        %v4185 = vunpack.c.l.b16 %v4026
        %v4186 = vunpack.c.h.b16 %v4026
        %v4187 = vunpack.c.l.b16 %v4027
        %v4188 = vunpack.c.h.b16 %v4027
        %v4189 = vunpack.c.l.b16 %v4028
        %v4190 = vunpack.c.h.b16 %v4028
        %v4191 = vunpack.c.l.b16 %v4029
        %v4192 = vunpack.c.h.b16 %v4029
        %v4193 = vunpack.c.l.b16 %v4030
        %v4194 = vunpack.c.h.b16 %v4030
        %v4195 = vunpack.c.l.b16 %v4031
        %v4196 = vunpack.c.h.b16 %v4031
        %v4197 = vunpack.c.l.b16 %v4032
        %v4198 = vunpack.c.h.b16 %v4032
        %v4199 = vunpack.c.l.b16 %v4033
        %v4200 = vunpack.c.h.b16 %v4033
        %v4201 = vunpack.c.l.b16 %v4034
        %v4202 = vunpack.c.h.b16 %v4034
        %v4203 = vunpack.c.l.b16 %v4035
        %v4204 = vunpack.c.h.b16 %v4035
        %v4205 = vunpack.c.l.b16 %v4036
        %v4206 = vunpack.c.h.b16 %v4036
        %v4207 = vunpack.c.l.b16 %v4037
        %v4208 = vunpack.c.h.b16 %v4037
        %v4209 = vunpack.c.l.b16 %v4038
        %v4210 = vunpack.c.h.b16 %v4038
        %v4211 = vunpack.c.l.b16 %v4039
        %v4212 = vunpack.c.h.b16 %v4039
        %v4213 = vunpack.c.l.b16 %v4040
        %v4214 = vunpack.c.h.b16 %v4040
        %v4215 = vunpack.c.l.b16 %v4041
        %v4216 = vunpack.c.h.b16 %v4041
        %v4217 = vunpack.c.l.b16 %v4042
        %v4218 = vunpack.c.h.b16 %v4042
        %v4219 = vunpack.c.l.b16 %v4043
        %v4220 = vunpack.c.h.b16 %v4043
        %v4221 = vunpack.c.l.b16 %v4044
        %v4222 = vunpack.c.h.b16 %v4044
        %v4223 = vunpack.c.l.b16 %v4045
        %v4224 = vunpack.c.h.b16 %v4045
        %v4225 = vunpack.c.l.b16 %v4046
        %v4226 = vunpack.c.h.b16 %v4046
        %v4227 = vunpack.c.l.b16 %v4047
        %v4228 = vunpack.c.h.b16 %v4047
        %v4229 = vunpack.c.l.b16 %v4048
        %v4230 = vunpack.c.h.b16 %v4048
        %v4231 = vunpack.c.l.b16 %v4049
        %v4232 = vunpack.c.h.b16 %v4049
        %v4233 = vunpack.c.l.b16 %v4050
        %v4234 = vunpack.c.h.b16 %v4050
        %v4235 = vunpack.c.l.b16 %v4051
        %v4236 = vunpack.c.h.b16 %v4051
        %v4237 = vunpack.c.l.b16 %v4052
        %v4238 = vunpack.c.h.b16 %v4052
        %v4239 = vunpack.c.l.b16 %v4053
        %v4240 = vunpack.c.h.b16 %v4053
        %v4241 = vunpack.c.l.b16 %v4054
        %v4242 = vunpack.c.h.b16 %v4054
        %v4243 = vunpack.c.l.b16 %v4055
        %v4244 = vunpack.c.h.b16 %v4055
        %v4245 = vunpack.c.l.b16 %v4056
        %v4246 = vunpack.c.h.b16 %v4056
        %v4247 = vunpack.c.l.b16 %v4057
        %v4248 = vunpack.c.h.b16 %v4057
        %v4249 = vunpack.c.l.b16 %v4058
        %v4250 = vunpack.c.h.b16 %v4058
        %v4251 = vunpack.c.l.b16 %v4059
        %v4252 = vunpack.c.h.b16 %v4059
        %v4253 = vunpack.c.l.b16 %v4060
        %v4254 = vunpack.c.h.b16 %v4060
        %v4255 = vunpack.c.l.b16 %v4061
        %v4256 = vunpack.c.h.b16 %v4061
        %v4257 = vunpack.c.l.b16 %v4062
        %v4258 = vunpack.c.h.b16 %v4062
        %v4259 = vunpack.c.l.b16 %v4063
        %v4260 = vunpack.c.h.b16 %v4063
        %v4261 = vunpack.c.l.b16 %v4064
        %v4262 = vunpack.c.h.b16 %v4064
        %v4263 = vunpack.c.l.b16 %v4065
        %v4264 = vunpack.c.h.b16 %v4065
        %v4265 = vunpack.c.l.b16 %v4066
        %v4266 = vunpack.c.h.b16 %v4066
        %v4267 = vunpack.c.l.b16 %v4067
        %v4268 = vunpack.c.h.b16 %v4067
        %v4269 = vunpack.c.l.b16 %v4068
        %v4270 = vunpack.c.h.b16 %v4068
        %v4271 = vunpack.c.l.b16 %v4069
        %v4272 = vunpack.c.h.b16 %v4069
        %v4273 = vunpack.c.l.b16 %v4070
        %v4274 = vunpack.c.h.b16 %v4070
        %v4275 = vunpack.c.l.b16 %v4071
        %v4276 = vunpack.c.h.b16 %v4071
        %v4277 = vunpack.c.l.b16 %v4072
        %v4278 = vunpack.c.h.b16 %v4072
        %v4279 = vunpack.c.l.b16 %v4073
        %v4280 = vunpack.c.h.b16 %v4073
        %v4281 = vunpack.c.l.b16 %v4074
        %v4282 = vunpack.c.h.b16 %v4074
        %v4283 = vpack.c.b16 %v4159, %v4155
        %v4284 = vpack.c.b16 %v4160, %v4156
        %v4285 = vpack.c.b16 %v4161, %v4157
        %v4286 = vpack.c.b16 %v4162, %v4158
        %v4287 = vpack.c.b16 %v4167, %v4163
        %v4288 = vpack.c.b16 %v4168, %v4164
        %v4289 = vpack.c.b16 %v4169, %v4165
        %v4290 = vpack.c.b16 %v4170, %v4166
        %v4291 = vpack.c.b16 %v4175, %v4171
        %v4292 = vpack.c.b16 %v4176, %v4172
        %v4293 = vpack.c.b16 %v4177, %v4173
        %v4294 = vpack.c.b16 %v4178, %v4174
        %v4295 = vpack.c.b16 %v4183, %v4179
        %v4296 = vpack.c.b16 %v4184, %v4180
        %v4297 = vpack.c.b16 %v4185, %v4181
        %v4298 = vpack.c.b16 %v4186, %v4182
        %v4299 = vpack.c.b16 %v4191, %v4187
        %v4300 = vpack.c.b16 %v4192, %v4188
        %v4301 = vpack.c.b16 %v4193, %v4189
        %v4302 = vpack.c.b16 %v4194, %v4190
        %v4303 = vpack.c.b16 %v4199, %v4195
        %v4304 = vpack.c.b16 %v4200, %v4196
        %v4305 = vpack.c.b16 %v4201, %v4197
        %v4306 = vpack.c.b16 %v4202, %v4198
        %v4307 = vpack.c.b16 %v4207, %v4203
        %v4308 = vpack.c.b16 %v4208, %v4204
        %v4309 = vpack.c.b16 %v4209, %v4205
        %v4310 = vpack.c.b16 %v4210, %v4206
        %v4311 = vpack.c.b16 %v4215, %v4211
        %v4312 = vpack.c.b16 %v4216, %v4212
        %v4313 = vpack.c.b16 %v4217, %v4213
        %v4314 = vpack.c.b16 %v4218, %v4214
        %v4315 = vpack.c.b16 %v4223, %v4219
        %v4316 = vpack.c.b16 %v4224, %v4220
        %v4317 = vpack.c.b16 %v4225, %v4221
        %v4318 = vpack.c.b16 %v4226, %v4222
        %v4319 = vpack.c.b16 %v4231, %v4227
        %v4320 = vpack.c.b16 %v4232, %v4228
        %v4321 = vpack.c.b16 %v4233, %v4229
        %v4322 = vpack.c.b16 %v4234, %v4230
        %v4323 = vpack.c.b16 %v4239, %v4235
        %v4324 = vpack.c.b16 %v4240, %v4236
        %v4325 = vpack.c.b16 %v4241, %v4237
        %v4326 = vpack.c.b16 %v4242, %v4238
        %v4327 = vpack.c.b16 %v4247, %v4243
        %v4328 = vpack.c.b16 %v4248, %v4244
        %v4329 = vpack.c.b16 %v4249, %v4245
        %v4330 = vpack.c.b16 %v4250, %v4246
        %v4331 = vpack.c.b16 %v4255, %v4251
        %v4332 = vpack.c.b16 %v4256, %v4252
        %v4333 = vpack.c.b16 %v4257, %v4253
        %v4334 = vpack.c.b16 %v4258, %v4254
        %v4335 = vpack.c.b16 %v4263, %v4259
        %v4336 = vpack.c.b16 %v4264, %v4260
        %v4337 = vpack.c.b16 %v4265, %v4261
        %v4338 = vpack.c.b16 %v4266, %v4262
        %v4339 = vpack.c.b16 %v4271, %v4267
        %v4340 = vpack.c.b16 %v4272, %v4268
        %v4341 = vpack.c.b16 %v4273, %v4269
        %v4342 = vpack.c.b16 %v4274, %v4270
        %v4343 = vpack.c.b16 %v4279, %v4275
        %v4344 = vpack.c.b16 %v4280, %v4276
        %v4345 = vpack.c.b16 %v4281, %v4277
        %v4346 = vpack.c.b16 %v4282, %v4278
        %4411 = vmatprep.subr.bf16.mxu0 %v4284
        %4412 = vmatpush1.bf16.msra.mxu0 %v4283
        %4413 = vmatprep.subr.bf16.mxu0 %v4288
        %4414 = vmatpush1.bf16.msra.mxu0 %v4287
        %4415 = vmatprep.subr.bf16.mxu0 %v4292
        %4416 = vmatpush1.bf16.msra.mxu0 %v4291
        %4417 = vmatprep.subr.bf16.mxu0 %v4296
        %4418 = vmatpush1.bf16.msra.mxu0 %v4295
        %4419 = vmatprep.subr.bf16.mxu0 %v4300
        %4420 = vmatpush1.bf16.msra.mxu0 %v4299
        %4421 = vmatprep.subr.bf16.mxu0 %v4304
        %4422 = vmatpush1.bf16.msra.mxu0 %v4303
        %4423 = vmatprep.subr.bf16.mxu0 %v4308
        %4424 = vmatpush1.bf16.msra.mxu0 %v4307
        %4425 = vmatprep.subr.bf16.mxu0 %v4312
        %4426 = vmatpush1.bf16.msra.mxu0 %v4311
        %4427 = vmatprep.subr.bf16.mxu0 %v4316
        %4428 = vmatpush1.bf16.msra.mxu0 %v4315
        %4429 = vmatprep.subr.bf16.mxu0 %v4320
        %4430 = vmatpush1.bf16.msra.mxu0 %v4319
        %4431 = vmatprep.subr.bf16.mxu0 %v4324
        %4432 = vmatpush1.bf16.msra.mxu0 %v4323
        %4433 = vmatprep.subr.bf16.mxu0 %v4328
        %4434 = vmatpush1.bf16.msra.mxu0 %v4327
        %4435 = vmatprep.subr.bf16.mxu0 %v4332
        %4436 = vmatpush1.bf16.msra.mxu0 %v4331
        %4437 = vmatprep.subr.bf16.mxu0 %v4336
        %4438 = vmatpush1.bf16.msra.mxu0 %v4335
        %4439 = vmatprep.subr.bf16.mxu0 %v4340
        %4440 = vmatpush1.bf16.msra.mxu0 %v4339
        %4441 = vmatprep.subr.bf16.mxu0 %v4344
        %4442 = vmatpush1.bf16.msra.mxu0 %v4343
        %4443 = vmatprep.mubr.bf16.mxu0 %v4084
        %4444 = vmatmul.mubr.bf16.gmra.mrb[0].mxu0 %v4081
        %v4445 = vpop.f32.mrb[0].mxu0
        %v4446 = vadd.f32 0.0, %v4445
        %v4447 = vpop.f32.mrb[0].mxu0
        %v4448 = vadd.f32 0.0, %v4447
        %v4449 = vpop.f32.mrb[0].mxu0
        %v4450 = vpop.f32.mrb[0].mxu0
        %4451 = vmatprep.mubr.bf16.mxu0 %v4086
        %4452 = vmatmul.mubr.bf16.gmra.mrb[0].mxu0 %v4085
        %v4453 = vpop.f32.mrb[0].mxu0
        %v4454 = vadd.f32 0.0, %v4453
        %v4455 = vpop.f32.mrb[0].mxu0
        %v4456 = vadd.f32 0.0, %v4455
        %v4457 = vpop.f32.mrb[0].mxu0
        %v4458 = vpop.f32.mrb[0].mxu0
        %4459 = vdwg.mxu0
        %4460 = vmatprep.subr.bf16.mxu0 %v4286
        %4461 = vmatpush1.bf16.msra.mxu0 %v4285
        %4462 = vmatprep.subr.bf16.mxu0 %v4290
        %4463 = vmatpush1.bf16.msra.mxu0 %v4289
        %4464 = vmatprep.subr.bf16.mxu0 %v4294
        %4465 = vmatpush1.bf16.msra.mxu0 %v4293
        %4466 = vmatprep.subr.bf16.mxu0 %v4298
        %4467 = vmatpush1.bf16.msra.mxu0 %v4297
        %4468 = vmatprep.subr.bf16.mxu0 %v4302
        %4469 = vmatpush1.bf16.msra.mxu0 %v4301
        %4470 = vmatprep.subr.bf16.mxu0 %v4306
        %4471 = vmatpush1.bf16.msra.mxu0 %v4305
        %4472 = vmatprep.subr.bf16.mxu0 %v4310
        %4473 = vmatpush1.bf16.msra.mxu0 %v4309
        %4474 = vmatprep.subr.bf16.mxu0 %v4314
        %4475 = vmatpush1.bf16.msra.mxu0 %v4313
        %4476 = vmatprep.subr.bf16.mxu0 %v4318
        %4477 = vmatpush1.bf16.msra.mxu0 %v4317
        %4478 = vmatprep.subr.bf16.mxu0 %v4322
        %4479 = vmatpush1.bf16.msra.mxu0 %v4321
        %4480 = vmatprep.subr.bf16.mxu0 %v4326
        %4481 = vmatpush1.bf16.msra.mxu0 %v4325
        %4482 = vmatprep.subr.bf16.mxu0 %v4330
        %4483 = vmatpush1.bf16.msra.mxu0 %v4329
        %4484 = vmatprep.subr.bf16.mxu0 %v4334
        %4485 = vmatpush1.bf16.msra.mxu0 %v4333
        %4486 = vmatprep.subr.bf16.mxu0 %v4338
        %4487 = vmatpush1.bf16.msra.mxu0 %v4337
        %4488 = vmatprep.subr.bf16.mxu0 %v4342
        %4489 = vmatpush1.bf16.msra.mxu0 %v4341
        %4490 = vmatprep.subr.bf16.mxu0 %v4346
        %4491 = vmatpush1.bf16.msra.mxu0 %v4345
        %4492 = vmatprep.mubr.bf16.mxu0 %v4084
        %4493 = vmatmul.mubr.bf16.gmra.mrb[0].mxu0 %v4081
        %v4494 = vpop.f32.mrb[0].mxu0
        %v4495 = vadd.f32 0.0, %v4494
        %v4496 = vpop.f32.mrb[0].mxu0
        %v4497 = vadd.f32 0.0, %v4496
        %v4498 = vpop.f32.mrb[0].mxu0
        %v4499 = vpop.f32.mrb[0].mxu0
        %4500 = vmatprep.mubr.bf16.mxu0 %v4086
        %4501 = vmatmul.mubr.bf16.gmra.mrb[0].mxu0 %v4085
        %v4502 = vpop.f32.mrb[0].mxu0
        %v4503 = vadd.f32 0.0, %v4502
        %v4504 = vpop.f32.mrb[0].mxu0
        %v4505 = vadd.f32 0.0, %v4504
        %v4506 = vpop.f32.mrb[0].mxu0
        %v4507 = vpop.f32.mrb[0].mxu0
        %4508 = vdwg.mxu0
        %v4509 = vadd.f32 %v3947, %v4446
        %v4510 = vadd.f32 %v3949, %v4448
        %v4511 = vadd.f32 %v3996, %v4495
        %v4512 = vadd.f32 %v3998, %v4497
        %v4513 = vadd.f32 %v3955, %v4454
        %v4514 = vadd.f32 %v3957, %v4456
        %v4515 = vadd.f32 %v4004, %v4503
        %v4516 = vadd.f32 %v4006, %v4505
        %s4517 = scalar_lea.vmem [#allocation13], 1536
        %v4518 = vld [vmem:[%s4517] sm:$0xff]
        %v4519 = vld [vmem:[%s4517 + $0x8] sm:$0xff]
        %v4520 = vld [vmem:[%s4517 + $0x10] sm:$0xff]
        %v4521 = vld [vmem:[%s4517 + $0x18] sm:$0xff]
        %v4522 = vld [vmem:[%s4517 + $0x20] sm:$0xff]
        %v4523 = vld [vmem:[%s4517 + $0x28] sm:$0xff]
        %v4524 = vld [vmem:[%s4517 + $0x30] sm:$0xff]
        %v4525 = vld [vmem:[%s4517 + $0x38] sm:$0xff]
        %v4526 = vld [vmem:[%s4517 + $0x40] sm:$0xff]
        %v4527 = vld [vmem:[%s4517 + $0x48] sm:$0xff]
        %v4528 = vld [vmem:[%s4517 + $0x50] sm:$0xff]
        %v4529 = vld [vmem:[%s4517 + $0x58] sm:$0xff]
        %v4530 = vld [vmem:[%s4517 + $0x60] sm:$0xff]
        %v4531 = vld [vmem:[%s4517 + $0x68] sm:$0xff]
        %v4532 = vld [vmem:[%s4517 + $0x70] sm:$0xff]
        %v4533 = vld [vmem:[%s4517 + $0x78] sm:$0xff]
        %v4534 = vld [vmem:[%s4517 + $0x80] sm:$0xff]
        %v4535 = vld [vmem:[%s4517 + $0x88] sm:$0xff]
        %v4536 = vld [vmem:[%s4517 + $0x90] sm:$0xff]
        %v4537 = vld [vmem:[%s4517 + $0x98] sm:$0xff]
        %v4538 = vld [vmem:[%s4517 + $0xa0] sm:$0xff]
        %v4539 = vld [vmem:[%s4517 + $0xa8] sm:$0xff]
        %v4540 = vld [vmem:[%s4517 + $0xb0] sm:$0xff]
        %v4541 = vld [vmem:[%s4517 + $0xb8] sm:$0xff]
        %v4542 = vld [vmem:[%s4517 + $0xc0] sm:$0xff]
        %v4543 = vld [vmem:[%s4517 + $0xc8] sm:$0xff]
        %v4544 = vld [vmem:[%s4517 + $0xd0] sm:$0xff]
        %v4545 = vld [vmem:[%s4517 + $0xd8] sm:$0xff]
        %v4546 = vld [vmem:[%s4517 + $0xe0] sm:$0xff]
        %v4547 = vld [vmem:[%s4517 + $0xe8] sm:$0xff]
        %v4548 = vld [vmem:[%s4517 + $0xf0] sm:$0xff]
        %v4549 = vld [vmem:[%s4517 + $0xf8] sm:$0xff]
        %v4550 = vld [vmem:[%s4517 + $0x100] sm:$0xff]
        %v4551 = vld [vmem:[%s4517 + $0x108] sm:$0xff]
        %v4552 = vld [vmem:[%s4517 + $0x110] sm:$0xff]
        %v4553 = vld [vmem:[%s4517 + $0x118] sm:$0xff]
        %v4554 = vld [vmem:[%s4517 + $0x120] sm:$0xff]
        %v4555 = vld [vmem:[%s4517 + $0x128] sm:$0xff]
        %v4556 = vld [vmem:[%s4517 + $0x130] sm:$0xff]
        %v4557 = vld [vmem:[%s4517 + $0x138] sm:$0xff]
        %v4558 = vld [vmem:[%s4517 + $0x140] sm:$0xff]
        %v4559 = vld [vmem:[%s4517 + $0x148] sm:$0xff]
        %v4560 = vld [vmem:[%s4517 + $0x150] sm:$0xff]
        %v4561 = vld [vmem:[%s4517 + $0x158] sm:$0xff]
        %v4562 = vld [vmem:[%s4517 + $0x160] sm:$0xff]
        %v4563 = vld [vmem:[%s4517 + $0x168] sm:$0xff]
        %v4564 = vld [vmem:[%s4517 + $0x170] sm:$0xff]
        %v4565 = vld [vmem:[%s4517 + $0x178] sm:$0xff]
        %v4566 = vld [vmem:[%s4517 + $0x180] sm:$0xff]
        %v4567 = vld [vmem:[%s4517 + $0x188] sm:$0xff]
        %v4568 = vld [vmem:[%s4517 + $0x190] sm:$0xff]
        %v4569 = vld [vmem:[%s4517 + $0x198] sm:$0xff]
        %v4570 = vld [vmem:[%s4517 + $0x1a0] sm:$0xff]
        %v4571 = vld [vmem:[%s4517 + $0x1a8] sm:$0xff]
        %v4572 = vld [vmem:[%s4517 + $0x1b0] sm:$0xff]
        %v4573 = vld [vmem:[%s4517 + $0x1b8] sm:$0xff]
        %v4574 = vld [vmem:[%s4517 + $0x1c0] sm:$0xff]
        %v4575 = vld [vmem:[%s4517 + $0x1c8] sm:$0xff]
        %v4576 = vld [vmem:[%s4517 + $0x1d0] sm:$0xff]
        %v4577 = vld [vmem:[%s4517 + $0x1d8] sm:$0xff]
        %v4578 = vld [vmem:[%s4517 + $0x1e0] sm:$0xff]
        %v4579 = vld [vmem:[%s4517 + $0x1e8] sm:$0xff]
        %v4580 = vld [vmem:[%s4517 + $0x1f0] sm:$0xff]
        %v4581 = vld [vmem:[%s4517 + $0x1f8] sm:$0xff]
        %v4582 = vrot.slane %v3139, 1
        %v4583 = vrot.slane %v3141, 2
        %v4584 = vor.u32 %v4582, %v4583
        %v4585 = vrot.slane %v3162, 1
        %v4586 = vrot.slane %v3146, 2
        %v4587 = vor.u32 %v4585, %v4586
        %v4588 = vsel %vm1049, %v4584, %v4587
        %v4589 = vrot.slane %v3151, 1
        %v4590 = vrot.slane %v3153, 2
        %v4591 = vor.u32 %v4589, %v4590
        %v4592 = vrot.slane %v3166, 1
        %v4593 = vrot.slane %v3158, 2
        %v4594 = vor.u32 %v4592, %v4593
        %v4595 = vsel %vm1049, %v4591, %v4594
        %v4596 = vsel %vm1049, %v4587, %v1073
        %v4597 = vsel %vm1049, %v4594, %v1073
        %v4666 = vunpack.c.l.b16 %v4518
        %v4667 = vunpack.c.h.b16 %v4518
        %v4668 = vunpack.c.l.b16 %v4519
        %v4669 = vunpack.c.h.b16 %v4519
        %v4670 = vunpack.c.l.b16 %v4520
        %v4671 = vunpack.c.h.b16 %v4520
        %v4672 = vunpack.c.l.b16 %v4521
        %v4673 = vunpack.c.h.b16 %v4521
        %v4674 = vunpack.c.l.b16 %v4522
        %v4675 = vunpack.c.h.b16 %v4522
        %v4676 = vunpack.c.l.b16 %v4523
        %v4677 = vunpack.c.h.b16 %v4523
        %v4678 = vunpack.c.l.b16 %v4524
        %v4679 = vunpack.c.h.b16 %v4524
        %v4680 = vunpack.c.l.b16 %v4525
        %v4681 = vunpack.c.h.b16 %v4525
        %v4682 = vunpack.c.l.b16 %v4526
        %v4683 = vunpack.c.h.b16 %v4526
        %v4684 = vunpack.c.l.b16 %v4527
        %v4685 = vunpack.c.h.b16 %v4527
        %v4686 = vunpack.c.l.b16 %v4528
        %v4687 = vunpack.c.h.b16 %v4528
        %v4688 = vunpack.c.l.b16 %v4529
        %v4689 = vunpack.c.h.b16 %v4529
        %v4690 = vunpack.c.l.b16 %v4530
        %v4691 = vunpack.c.h.b16 %v4530
        %v4692 = vunpack.c.l.b16 %v4531
        %v4693 = vunpack.c.h.b16 %v4531
        %v4694 = vunpack.c.l.b16 %v4532
        %v4695 = vunpack.c.h.b16 %v4532
        %v4696 = vunpack.c.l.b16 %v4533
        %v4697 = vunpack.c.h.b16 %v4533
        %v4698 = vunpack.c.l.b16 %v4534
        %v4699 = vunpack.c.h.b16 %v4534
        %v4700 = vunpack.c.l.b16 %v4535
        %v4701 = vunpack.c.h.b16 %v4535
        %v4702 = vunpack.c.l.b16 %v4536
        %v4703 = vunpack.c.h.b16 %v4536
        %v4704 = vunpack.c.l.b16 %v4537
        %v4705 = vunpack.c.h.b16 %v4537
        %v4706 = vunpack.c.l.b16 %v4538
        %v4707 = vunpack.c.h.b16 %v4538
        %v4708 = vunpack.c.l.b16 %v4539
        %v4709 = vunpack.c.h.b16 %v4539
        %v4710 = vunpack.c.l.b16 %v4540
        %v4711 = vunpack.c.h.b16 %v4540
        %v4712 = vunpack.c.l.b16 %v4541
        %v4713 = vunpack.c.h.b16 %v4541
        %v4714 = vunpack.c.l.b16 %v4542
        %v4715 = vunpack.c.h.b16 %v4542
        %v4716 = vunpack.c.l.b16 %v4543
        %v4717 = vunpack.c.h.b16 %v4543
        %v4718 = vunpack.c.l.b16 %v4544
        %v4719 = vunpack.c.h.b16 %v4544
        %v4720 = vunpack.c.l.b16 %v4545
        %v4721 = vunpack.c.h.b16 %v4545
        %v4722 = vunpack.c.l.b16 %v4546
        %v4723 = vunpack.c.h.b16 %v4546
        %v4724 = vunpack.c.l.b16 %v4547
        %v4725 = vunpack.c.h.b16 %v4547
        %v4726 = vunpack.c.l.b16 %v4548
        %v4727 = vunpack.c.h.b16 %v4548
        %v4728 = vunpack.c.l.b16 %v4549
        %v4729 = vunpack.c.h.b16 %v4549
        %v4730 = vunpack.c.l.b16 %v4550
        %v4731 = vunpack.c.h.b16 %v4550
        %v4732 = vunpack.c.l.b16 %v4551
        %v4733 = vunpack.c.h.b16 %v4551
        %v4734 = vunpack.c.l.b16 %v4552
        %v4735 = vunpack.c.h.b16 %v4552
        %v4736 = vunpack.c.l.b16 %v4553
        %v4737 = vunpack.c.h.b16 %v4553
        %v4738 = vunpack.c.l.b16 %v4554
        %v4739 = vunpack.c.h.b16 %v4554
        %v4740 = vunpack.c.l.b16 %v4555
        %v4741 = vunpack.c.h.b16 %v4555
        %v4742 = vunpack.c.l.b16 %v4556
        %v4743 = vunpack.c.h.b16 %v4556
        %v4744 = vunpack.c.l.b16 %v4557
        %v4745 = vunpack.c.h.b16 %v4557
        %v4746 = vunpack.c.l.b16 %v4558
        %v4747 = vunpack.c.h.b16 %v4558
        %v4748 = vunpack.c.l.b16 %v4559
        %v4749 = vunpack.c.h.b16 %v4559
        %v4750 = vunpack.c.l.b16 %v4560
        %v4751 = vunpack.c.h.b16 %v4560
        %v4752 = vunpack.c.l.b16 %v4561
        %v4753 = vunpack.c.h.b16 %v4561
        %v4754 = vunpack.c.l.b16 %v4562
        %v4755 = vunpack.c.h.b16 %v4562
        %v4756 = vunpack.c.l.b16 %v4563
        %v4757 = vunpack.c.h.b16 %v4563
        %v4758 = vunpack.c.l.b16 %v4564
        %v4759 = vunpack.c.h.b16 %v4564
        %v4760 = vunpack.c.l.b16 %v4565
        %v4761 = vunpack.c.h.b16 %v4565
        %v4762 = vunpack.c.l.b16 %v4566
        %v4763 = vunpack.c.h.b16 %v4566
        %v4764 = vunpack.c.l.b16 %v4567
        %v4765 = vunpack.c.h.b16 %v4567
        %v4766 = vunpack.c.l.b16 %v4568
        %v4767 = vunpack.c.h.b16 %v4568
        %v4768 = vunpack.c.l.b16 %v4569
        %v4769 = vunpack.c.h.b16 %v4569
        %v4770 = vunpack.c.l.b16 %v4570
        %v4771 = vunpack.c.h.b16 %v4570
        %v4772 = vunpack.c.l.b16 %v4571
        %v4773 = vunpack.c.h.b16 %v4571
        %v4774 = vunpack.c.l.b16 %v4572
        %v4775 = vunpack.c.h.b16 %v4572
        %v4776 = vunpack.c.l.b16 %v4573
        %v4777 = vunpack.c.h.b16 %v4573
        %v4778 = vunpack.c.l.b16 %v4574
        %v4779 = vunpack.c.h.b16 %v4574
        %v4780 = vunpack.c.l.b16 %v4575
        %v4781 = vunpack.c.h.b16 %v4575
        %v4782 = vunpack.c.l.b16 %v4576
        %v4783 = vunpack.c.h.b16 %v4576
        %v4784 = vunpack.c.l.b16 %v4577
        %v4785 = vunpack.c.h.b16 %v4577
        %v4786 = vunpack.c.l.b16 %v4578
        %v4787 = vunpack.c.h.b16 %v4578
        %v4788 = vunpack.c.l.b16 %v4579
        %v4789 = vunpack.c.h.b16 %v4579
        %v4790 = vunpack.c.l.b16 %v4580
        %v4791 = vunpack.c.h.b16 %v4580
        %v4792 = vunpack.c.l.b16 %v4581
        %v4793 = vunpack.c.h.b16 %v4581
        %v4794 = vpack.c.b16 %v4670, %v4666
        %v4795 = vpack.c.b16 %v4671, %v4667
        %v4796 = vpack.c.b16 %v4672, %v4668
        %v4797 = vpack.c.b16 %v4673, %v4669
        %v4798 = vpack.c.b16 %v4678, %v4674
        %v4799 = vpack.c.b16 %v4679, %v4675
        %v4800 = vpack.c.b16 %v4680, %v4676
        %v4801 = vpack.c.b16 %v4681, %v4677
        %v4802 = vpack.c.b16 %v4686, %v4682
        %v4803 = vpack.c.b16 %v4687, %v4683
        %v4804 = vpack.c.b16 %v4688, %v4684
        %v4805 = vpack.c.b16 %v4689, %v4685
        %v4806 = vpack.c.b16 %v4694, %v4690
        %v4807 = vpack.c.b16 %v4695, %v4691
        %v4808 = vpack.c.b16 %v4696, %v4692
        %v4809 = vpack.c.b16 %v4697, %v4693
        %v4810 = vpack.c.b16 %v4702, %v4698
        %v4811 = vpack.c.b16 %v4703, %v4699
        %v4812 = vpack.c.b16 %v4704, %v4700
        %v4813 = vpack.c.b16 %v4705, %v4701
        %v4814 = vpack.c.b16 %v4710, %v4706
        %v4815 = vpack.c.b16 %v4711, %v4707
        %v4816 = vpack.c.b16 %v4712, %v4708
        %v4817 = vpack.c.b16 %v4713, %v4709
        %v4818 = vpack.c.b16 %v4718, %v4714
        %v4819 = vpack.c.b16 %v4719, %v4715
        %v4820 = vpack.c.b16 %v4720, %v4716
        %v4821 = vpack.c.b16 %v4721, %v4717
        %v4822 = vpack.c.b16 %v4726, %v4722
        %v4823 = vpack.c.b16 %v4727, %v4723
        %v4824 = vpack.c.b16 %v4728, %v4724
        %v4825 = vpack.c.b16 %v4729, %v4725
        %v4826 = vpack.c.b16 %v4734, %v4730
        %v4827 = vpack.c.b16 %v4735, %v4731
        %v4828 = vpack.c.b16 %v4736, %v4732
        %v4829 = vpack.c.b16 %v4737, %v4733
        %v4830 = vpack.c.b16 %v4742, %v4738
        %v4831 = vpack.c.b16 %v4743, %v4739
        %v4832 = vpack.c.b16 %v4744, %v4740
        %v4833 = vpack.c.b16 %v4745, %v4741
        %v4834 = vpack.c.b16 %v4750, %v4746
        %v4835 = vpack.c.b16 %v4751, %v4747
        %v4836 = vpack.c.b16 %v4752, %v4748
        %v4837 = vpack.c.b16 %v4753, %v4749
        %v4838 = vpack.c.b16 %v4758, %v4754
        %v4839 = vpack.c.b16 %v4759, %v4755
        %v4840 = vpack.c.b16 %v4760, %v4756
        %v4841 = vpack.c.b16 %v4761, %v4757
        %v4842 = vpack.c.b16 %v4766, %v4762
        %v4843 = vpack.c.b16 %v4767, %v4763
        %v4844 = vpack.c.b16 %v4768, %v4764
        %v4845 = vpack.c.b16 %v4769, %v4765
        %v4846 = vpack.c.b16 %v4774, %v4770
        %v4847 = vpack.c.b16 %v4775, %v4771
        %v4848 = vpack.c.b16 %v4776, %v4772
        %v4849 = vpack.c.b16 %v4777, %v4773
        %v4850 = vpack.c.b16 %v4782, %v4778
        %v4851 = vpack.c.b16 %v4783, %v4779
        %v4852 = vpack.c.b16 %v4784, %v4780
        %v4853 = vpack.c.b16 %v4785, %v4781
        %v4854 = vpack.c.b16 %v4790, %v4786
        %v4855 = vpack.c.b16 %v4791, %v4787
        %v4856 = vpack.c.b16 %v4792, %v4788
        %v4857 = vpack.c.b16 %v4793, %v4789
        %4922 = vmatprep.subr.bf16.mxu0 %v4795
        %4923 = vmatpush1.bf16.msra.mxu0 %v4794
        %4924 = vmatprep.subr.bf16.mxu0 %v4799
        %4925 = vmatpush1.bf16.msra.mxu0 %v4798
        %4926 = vmatprep.subr.bf16.mxu0 %v4803
        %4927 = vmatpush1.bf16.msra.mxu0 %v4802
        %4928 = vmatprep.subr.bf16.mxu0 %v4807
        %4929 = vmatpush1.bf16.msra.mxu0 %v4806
        %4930 = vmatprep.subr.bf16.mxu0 %v4811
        %4931 = vmatpush1.bf16.msra.mxu0 %v4810
        %4932 = vmatprep.subr.bf16.mxu0 %v4815
        %4933 = vmatpush1.bf16.msra.mxu0 %v4814
        %4934 = vmatprep.subr.bf16.mxu0 %v4819
        %4935 = vmatpush1.bf16.msra.mxu0 %v4818
        %4936 = vmatprep.subr.bf16.mxu0 %v4823
        %4937 = vmatpush1.bf16.msra.mxu0 %v4822
        %4938 = vmatprep.subr.bf16.mxu0 %v4827
        %4939 = vmatpush1.bf16.msra.mxu0 %v4826
        %4940 = vmatprep.subr.bf16.mxu0 %v4831
        %4941 = vmatpush1.bf16.msra.mxu0 %v4830
        %4942 = vmatprep.subr.bf16.mxu0 %v4835
        %4943 = vmatpush1.bf16.msra.mxu0 %v4834
        %4944 = vmatprep.subr.bf16.mxu0 %v4839
        %4945 = vmatpush1.bf16.msra.mxu0 %v4838
        %4946 = vmatprep.subr.bf16.mxu0 %v4843
        %4947 = vmatpush1.bf16.msra.mxu0 %v4842
        %4948 = vmatprep.subr.bf16.mxu0 %v4847
        %4949 = vmatpush1.bf16.msra.mxu0 %v4846
        %4950 = vmatprep.subr.bf16.mxu0 %v4851
        %4951 = vmatpush1.bf16.msra.mxu0 %v4850
        %4952 = vmatprep.subr.bf16.mxu0 %v4855
        %4953 = vmatpush1.bf16.msra.mxu0 %v4854
        %4954 = vmatprep.mubr.bf16.mxu0 %v4595
        %4955 = vmatmul.mubr.bf16.gmra.mrb[0].mxu0 %v4588
        %v4956 = vpop.f32.mrb[0].mxu0
        %v4957 = vadd.f32 0.0, %v4956
        %v4958 = vpop.f32.mrb[0].mxu0
        %v4959 = vadd.f32 0.0, %v4958
        %v4960 = vpop.f32.mrb[0].mxu0
        %v4961 = vpop.f32.mrb[0].mxu0
        %4962 = vmatprep.mubr.bf16.mxu0 %v4597
        %4963 = vmatmul.mubr.bf16.gmra.mrb[0].mxu0 %v4596
        %v4964 = vpop.f32.mrb[0].mxu0
        %v4965 = vadd.f32 0.0, %v4964
        %v4966 = vpop.f32.mrb[0].mxu0
        %v4967 = vadd.f32 0.0, %v4966
        %v4968 = vpop.f32.mrb[0].mxu0
        %v4969 = vpop.f32.mrb[0].mxu0
        %4970 = vdwg.mxu0
        %4971 = vmatprep.subr.bf16.mxu0 %v4797
        %4972 = vmatpush1.bf16.msra.mxu0 %v4796
        %4973 = vmatprep.subr.bf16.mxu0 %v4801
        %4974 = vmatpush1.bf16.msra.mxu0 %v4800
        %4975 = vmatprep.subr.bf16.mxu0 %v4805
        %4976 = vmatpush1.bf16.msra.mxu0 %v4804
        %4977 = vmatprep.subr.bf16.mxu0 %v4809
        %4978 = vmatpush1.bf16.msra.mxu0 %v4808
        %4979 = vmatprep.subr.bf16.mxu0 %v4813
        %4980 = vmatpush1.bf16.msra.mxu0 %v4812
        %4981 = vmatprep.subr.bf16.mxu0 %v4817
        %4982 = vmatpush1.bf16.msra.mxu0 %v4816
        %4983 = vmatprep.subr.bf16.mxu0 %v4821
        %4984 = vmatpush1.bf16.msra.mxu0 %v4820
        %4985 = vmatprep.subr.bf16.mxu0 %v4825
        %4986 = vmatpush1.bf16.msra.mxu0 %v4824
        %4987 = vmatprep.subr.bf16.mxu0 %v4829
        %4988 = vmatpush1.bf16.msra.mxu0 %v4828
        %4989 = vmatprep.subr.bf16.mxu0 %v4833
        %4990 = vmatpush1.bf16.msra.mxu0 %v4832
        %4991 = vmatprep.subr.bf16.mxu0 %v4837
        %4992 = vmatpush1.bf16.msra.mxu0 %v4836
        %4993 = vmatprep.subr.bf16.mxu0 %v4841
        %4994 = vmatpush1.bf16.msra.mxu0 %v4840
        %4995 = vmatprep.subr.bf16.mxu0 %v4845
        %4996 = vmatpush1.bf16.msra.mxu0 %v4844
        %4997 = vmatprep.subr.bf16.mxu0 %v4849
        %4998 = vmatpush1.bf16.msra.mxu0 %v4848
        %4999 = vmatprep.subr.bf16.mxu0 %v4853
        %5000 = vmatpush1.bf16.msra.mxu0 %v4852
        %5001 = vmatprep.subr.bf16.mxu0 %v4857
        %5002 = vmatpush1.bf16.msra.mxu0 %v4856
        %5003 = vmatprep.mubr.bf16.mxu0 %v4595
        %5004 = vmatmul.mubr.bf16.gmra.mrb[0].mxu0 %v4588
        %v5005 = vpop.f32.mrb[0].mxu0
        %v5006 = vadd.f32 0.0, %v5005
        %v5007 = vpop.f32.mrb[0].mxu0
        %v5008 = vadd.f32 0.0, %v5007
        %v5009 = vpop.f32.mrb[0].mxu0
        %v5010 = vpop.f32.mrb[0].mxu0
        %5011 = vmatprep.mubr.bf16.mxu0 %v4597
        %5012 = vmatmul.mubr.bf16.gmra.mrb[0].mxu0 %v4596
        %v5013 = vpop.f32.mrb[0].mxu0
        %v5014 = vadd.f32 0.0, %v5013
        %v5015 = vpop.f32.mrb[0].mxu0
        %v5016 = vadd.f32 0.0, %v5015
        %v5017 = vpop.f32.mrb[0].mxu0
        %v5018 = vpop.f32.mrb[0].mxu0
        %5019 = vdwg.mxu0
        %v5020 = vadd.f32 %v4509, %v4957
        %v5021 = vadd.f32 %v4510, %v4959
        %v5022 = vadd.f32 %v4511, %v5006
        %v5023 = vadd.f32 %v4512, %v5008
        %v5024 = vadd.f32 %v4513, %v4965
        %v5025 = vadd.f32 %v4514, %v4967
        %v5026 = vadd.f32 %v4515, %v5014
        %v5027 = vadd.f32 %v4516, %v5016
        %v5028 = vld [vmem:[%s8] sm:$0xf]
        %v5030 = vlaneseq
        %v5031 = vshrl.u32 %v5030, 7
        %v5032 = vsub.s32 0, %v5031
        %v5033 = vrot.slane %v5028, %v5032
        %v5034 = vlaneseq
        %v5035 = vshrl.u32 %v5034, 7
        %v5036 = vsub.s32 1, %v5035
        %v5037 = vrot.slane %v5028, %v5036
        %v5038 = vlaneseq
        %v5039 = vshrl.u32 %v5038, 7
        %v5040 = vsub.s32 2, %v5039
        %v5041 = vrot.slane %v5028, %v5040
        %v5042 = vlaneseq
        %v5043 = vshrl.u32 %v5042, 7
        %v5044 = vsub.s32 3, %v5043
        %v5045 = vrot.slane %v5028, %v5044
        %v5050 = vadd.f32 %v5020, %v5033
        %v5051 = vadd.f32 %v5021, %v5037
        %v5052 = vadd.f32 %v5022, %v5041
        %v5053 = vadd.f32 %v5023, %v5045
        %v5054 = vadd.f32 %v5024, %v5033
        %v5055 = vadd.f32 %v5025, %v5037
        %v5056 = vadd.f32 %v5026, %v5041
        %v5057 = vadd.f32 %v5027, %v5045
        %vm5058 = vcmask 1045504
        %v5059 = vsel %vm5058, %v5050, 0.0
        %v5060 = vrot.slane %v5059, 4
        %v5061 = vadd.f32 %v5059, %v5060
        %v5062 = vrot.slane %v5061, 2
        %v5063 = vadd.f32 %v5061, %v5062
        %v5064 = vrot.slane %v5063, 1
        %v5065 = vadd.f32 %v5063, %v5064
        %v5066 = vsel %vm5058, %v5051, 0.0
        %v5067 = vrot.slane %v5066, 4
        %v5068 = vadd.f32 %v5066, %v5067
        %v5069 = vrot.slane %v5068, 2
        %v5070 = vadd.f32 %v5068, %v5069
        %v5071 = vrot.slane %v5070, 1
        %v5072 = vadd.f32 %v5070, %v5071
        %v5073 = vsel %vm5058, %v5052, 0.0
        %v5074 = vrot.slane %v5073, 4
        %v5075 = vadd.f32 %v5073, %v5074
        %v5076 = vrot.slane %v5075, 2
        %v5077 = vadd.f32 %v5075, %v5076
        %v5078 = vrot.slane %v5077, 1
        %v5079 = vadd.f32 %v5077, %v5078
        %v5080 = vsel %vm5058, %v5053, 0.0
        %v5081 = vrot.slane %v5080, 4
        %v5082 = vadd.f32 %v5080, %v5081
        %v5083 = vrot.slane %v5082, 2
        %v5084 = vadd.f32 %v5082, %v5083
        %v5085 = vrot.slane %v5084, 1
        %v5086 = vadd.f32 %v5084, %v5085
        %v5087 = vsel %vm5058, %v5054, 0.0
        %v5088 = vrot.slane %v5087, 4
        %v5089 = vadd.f32 %v5087, %v5088
        %v5090 = vrot.slane %v5089, 2
        %v5091 = vadd.f32 %v5089, %v5090
        %v5092 = vrot.slane %v5091, 1
        %v5093 = vadd.f32 %v5091, %v5092
        %v5094 = vsel %vm5058, %v5055, 0.0
        %v5095 = vrot.slane %v5094, 4
        %v5096 = vadd.f32 %v5094, %v5095
        %v5097 = vrot.slane %v5096, 2
        %v5098 = vadd.f32 %v5096, %v5097
        %v5099 = vrot.slane %v5098, 1
        %v5100 = vadd.f32 %v5098, %v5099
        %v5101 = vsel %vm5058, %v5056, 0.0
        %v5102 = vrot.slane %v5101, 4
        %v5103 = vadd.f32 %v5101, %v5102
        %v5104 = vrot.slane %v5103, 2
        %v5105 = vadd.f32 %v5103, %v5104
        %v5106 = vrot.slane %v5105, 1
        %v5107 = vadd.f32 %v5105, %v5106
        %v5108 = vsel %vm5058, %v5057, 0.0
        %v5109 = vrot.slane %v5108, 4
        %v5110 = vadd.f32 %v5108, %v5109
        %v5111 = vrot.slane %v5110, 2
        %v5112 = vadd.f32 %v5110, %v5111
        %v5113 = vrot.slane %v5112, 1
        %v5114 = vadd.f32 %v5112, %v5113
        %v5115 = vrcp.pop 6.0
        %v5116 = vmul.f32 %v5065, %v5115
        %v5117 = vmul.f32 %v5072, %v5115
        %v5118 = vmul.f32 %v5079, %v5115
        %v5119 = vmul.f32 %v5086, %v5115
        %v5120 = vmul.f32 %v5093, %v5115
        %v5121 = vmul.f32 %v5100, %v5115
        %v5122 = vmul.f32 %v5107, %v5115
        %v5123 = vmul.f32 %v5114, %v5115
        %v5124 = vsub.f32 %v5050, %v5116
        %v5125 = vsub.f32 %v5051, %v5117
        %v5126 = vsub.f32 %v5052, %v5118
        %v5127 = vsub.f32 %v5053, %v5119
        %v5128 = vsub.f32 %v5054, %v5120
        %v5129 = vsub.f32 %v5055, %v5121
        %v5130 = vsub.f32 %v5056, %v5122
        %v5131 = vsub.f32 %v5057, %v5123
        %v5132 = vmul.f32 %v5124, %v5124
        %v5133 = vmul.f32 %v5125, %v5125
        %v5134 = vmul.f32 %v5126, %v5126
        %v5135 = vmul.f32 %v5127, %v5127
        %v5136 = vmul.f32 %v5128, %v5128
        %v5137 = vmul.f32 %v5129, %v5129
        %v5138 = vmul.f32 %v5130, %v5130
        %v5139 = vmul.f32 %v5131, %v5131
        %v5140 = vsel %vm5058, %v5132, 0.0
        %v5141 = vrot.slane %v5140, 4
        %v5142 = vadd.f32 %v5140, %v5141
        %v5143 = vrot.slane %v5142, 2
        %v5144 = vadd.f32 %v5142, %v5143
        %v5145 = vrot.slane %v5144, 1
        %v5146 = vadd.f32 %v5144, %v5145
        %v5147 = vsel %vm5058, %v5133, 0.0
        %v5148 = vrot.slane %v5147, 4
        %v5149 = vadd.f32 %v5147, %v5148
        %v5150 = vrot.slane %v5149, 2
        %v5151 = vadd.f32 %v5149, %v5150
        %v5152 = vrot.slane %v5151, 1
        %v5153 = vadd.f32 %v5151, %v5152
        %v5154 = vsel %vm5058, %v5134, 0.0
        %v5155 = vrot.slane %v5154, 4
        %v5156 = vadd.f32 %v5154, %v5155
        %v5157 = vrot.slane %v5156, 2
        %v5158 = vadd.f32 %v5156, %v5157
        %v5159 = vrot.slane %v5158, 1
        %v5160 = vadd.f32 %v5158, %v5159
        %v5161 = vsel %vm5058, %v5135, 0.0
        %v5162 = vrot.slane %v5161, 4
        %v5163 = vadd.f32 %v5161, %v5162
        %v5164 = vrot.slane %v5163, 2
        %v5165 = vadd.f32 %v5163, %v5164
        %v5166 = vrot.slane %v5165, 1
        %v5167 = vadd.f32 %v5165, %v5166
        %v5168 = vsel %vm5058, %v5136, 0.0
        %v5169 = vrot.slane %v5168, 4
        %v5170 = vadd.f32 %v5168, %v5169
        %v5171 = vrot.slane %v5170, 2
        %v5172 = vadd.f32 %v5170, %v5171
        %v5173 = vrot.slane %v5172, 1
        %v5174 = vadd.f32 %v5172, %v5173
        %v5175 = vsel %vm5058, %v5137, 0.0
        %v5176 = vrot.slane %v5175, 4
        %v5177 = vadd.f32 %v5175, %v5176
        %v5178 = vrot.slane %v5177, 2
        %v5179 = vadd.f32 %v5177, %v5178
        %v5180 = vrot.slane %v5179, 1
        %v5181 = vadd.f32 %v5179, %v5180
        %v5182 = vsel %vm5058, %v5138, 0.0
        %v5183 = vrot.slane %v5182, 4
        %v5184 = vadd.f32 %v5182, %v5183
        %v5185 = vrot.slane %v5184, 2
        %v5186 = vadd.f32 %v5184, %v5185
        %v5187 = vrot.slane %v5186, 1
        %v5188 = vadd.f32 %v5186, %v5187
        %v5189 = vsel %vm5058, %v5139, 0.0
        %v5190 = vrot.slane %v5189, 4
        %v5191 = vadd.f32 %v5189, %v5190
        %v5192 = vrot.slane %v5191, 2
        %v5193 = vadd.f32 %v5191, %v5192
        %v5194 = vrot.slane %v5193, 1
        %v5195 = vadd.f32 %v5193, %v5194
        %v5196 = vmul.f32 %v5146, %v5115
        %v5197 = vmul.f32 %v5153, %v5115
        %v5198 = vmul.f32 %v5160, %v5115
        %v5199 = vmul.f32 %v5167, %v5115
        %v5200 = vmul.f32 %v5174, %v5115
        %v5201 = vmul.f32 %v5181, %v5115
        %v5202 = vmul.f32 %v5188, %v5115
        %v5203 = vmul.f32 %v5195, %v5115
        %v5204 = vadd.f32 %v5196, 1e-05
        %v5205 = vadd.f32 %v5197, 1e-05
        %v5206 = vadd.f32 %v5198, 1e-05
        %v5207 = vadd.f32 %v5199, 1e-05
        %v5208 = vadd.f32 %v5200, 1e-05
        %v5209 = vadd.f32 %v5201, 1e-05
        %v5210 = vadd.f32 %v5202, 1e-05
        %v5211 = vadd.f32 %v5203, 1e-05
        %v5212 = vrsqrt.pop %v5204
        %v5213 = vrsqrt.pop %v5205
        %v5214 = vrsqrt.pop %v5206
        %v5215 = vrsqrt.pop %v5207
        %v5216 = vrsqrt.pop %v5208
        %v5217 = vrsqrt.pop %v5209
        %v5218 = vrsqrt.pop %v5210
        %v5219 = vrsqrt.pop %v5211
        %v5220 = vmul.f32 %v5124, %v5212
        %v5221 = vmul.f32 %v5125, %v5213
        %v5222 = vmul.f32 %v5126, %v5214
        %v5223 = vmul.f32 %v5127, %v5215
        %v5224 = vmul.f32 %v5128, %v5216
        %v5225 = vmul.f32 %v5129, %v5217
        %v5226 = vmul.f32 %v5130, %v5218
        %v5227 = vmul.f32 %v5131, %v5219
        %vm5228 = vcmp.gt.f32.partialorder %v5220, 0.0
        %vm5229 = vcmp.gt.f32.partialorder %v5221, 0.0
        %vm5230 = vcmp.gt.f32.partialorder %v5222, 0.0
        %vm5231 = vcmp.gt.f32.partialorder %v5223, 0.0
        %vm5232 = vcmp.gt.f32.partialorder %v5224, 0.0
        %vm5233 = vcmp.gt.f32.partialorder %v5225, 0.0
        %vm5234 = vcmp.gt.f32.partialorder %v5226, 0.0
        %vm5235 = vcmp.gt.f32.partialorder %v5227, 0.0
        %v5236 = vmul.f32 %v5220, 0.2
        %v5237 = vmul.f32 %v5221, 0.2
        %v5238 = vmul.f32 %v5222, 0.2
        %v5239 = vmul.f32 %v5223, 0.2
        %v5240 = vmul.f32 %v5224, 0.2
        %v5241 = vmul.f32 %v5225, 0.2
        %v5242 = vmul.f32 %v5226, 0.2
        %v5243 = vmul.f32 %v5227, 0.2
        %v5244 = vsel %vm5228, %v5220, %v5236
        %v5245 = vsel %vm5229, %v5221, %v5237
        %v5246 = vsel %vm5230, %v5222, %v5238
        %v5247 = vsel %vm5231, %v5223, %v5239
        %v5248 = vsel %vm5232, %v5224, %v5240
        %v5249 = vsel %vm5233, %v5225, %v5241
        %v5250 = vsel %vm5234, %v5226, %v5242
        %v5251 = vsel %vm5235, %v5227, %v5243
        %v5260 = vrot.slane %v5244, 6
        %v5261 = vrot.slane %v5245, 6
        %v5262 = vrot.slane %v5246, 6
        %v5263 = vrot.slane %v5247, 6
        %v5264 = vrot.slane %v5248, 6
        %v5265 = vrot.slane %v5249, 6
        %v5266 = vrot.slane %v5250, 6
        %v5267 = vrot.slane %v5251, 6
        %5276 = vst [vmem:[#allocation5] sm:$0xfc] %v5260
        %5277 = vst [vmem:[#allocation5 + $0x8] sm:$0xfc] %v5261
        %5278 = vst [vmem:[#allocation5 + $0x10] sm:$0xfc] %v5262
        %5279 = vst [vmem:[#allocation5 + $0x18] sm:$0xfc] %v5263
        %5280 = vst [vmem:[#allocation5 + $0x40] sm:$0xfc] %v5264
        %5281 = vst [vmem:[#allocation5 + $0x48] sm:$0xfc] %v5265
        %5282 = vst [vmem:[#allocation5 + $0x50] sm:$0xfc] %v5266
        %5283 = vst [vmem:[#allocation5 + $0x58] sm:$0xfc] %v5267
        %v5284 = vld [vmem:[#allocation5] sm:$0xff]
        %v5285 = vld [vmem:[#allocation5 + $0x8] sm:$0xff]
        %v5286 = vld [vmem:[#allocation5 + $0x10] sm:$0xff]
        %v5287 = vld [vmem:[#allocation5 + $0x18] sm:$0xff]
        %v5288 = vld [vmem:[#allocation5 + $0x20] sm:$0xff]
        %v5289 = vld [vmem:[#allocation5 + $0x28] sm:$0xff]
        %v5290 = vld [vmem:[#allocation5 + $0x30] sm:$0xff]
        %v5291 = vld [vmem:[#allocation5 + $0x38] sm:$0xff]
        %v5292 = vld [vmem:[#allocation5 + $0x40] sm:$0xff]
        %v5293 = vld [vmem:[#allocation5 + $0x48] sm:$0xff]
        %v5294 = vld [vmem:[#allocation5 + $0x50] sm:$0xff]
        %v5295 = vld [vmem:[#allocation5 + $0x58] sm:$0xff]
        %v5296 = vld [vmem:[#allocation5 + $0x60] sm:$0xff]
        %v5297 = vld [vmem:[#allocation5 + $0x68] sm:$0xff]
        %v5298 = vld [vmem:[#allocation5 + $0x70] sm:$0xff]
        %v5299 = vld [vmem:[#allocation5 + $0x78] sm:$0xff]
        %v5300 = vpack.c.bf16 %v5288, %v5284
        %v5301 = vpack.c.bf16 %v5289, %v5285
        %v5302 = vpack.c.bf16 %v5290, %v5286
        %v5303 = vpack.c.bf16 %v5291, %v5287
        %v5304 = vpack.c.bf16 %v5296, %v5292
        %v5305 = vpack.c.bf16 %v5297, %v5293
        %v5306 = vpack.c.bf16 %v5298, %v5294
        %v5307 = vpack.c.bf16 %v5299, %v5295
        %v5308 = vld [vmem:[#allocation14] sm:$0xf]
        %v5309 = vld [vmem:[#allocation14 + $0x4] sm:$0xf]
        %v5310 = vld [vmem:[#allocation14 + $0x8] sm:$0xf]
        %v5311 = vld [vmem:[#allocation14 + $0xc] sm:$0xf]
        %v5312 = vld [vmem:[#allocation14 + $0x10] sm:$0xf]
        %v5313 = vld [vmem:[#allocation14 + $0x14] sm:$0xf]
        %v5314 = vld [vmem:[#allocation14 + $0x18] sm:$0xf]
        %v5315 = vld [vmem:[#allocation14 + $0x1c] sm:$0xf]
        %v5316 = vld [vmem:[#allocation14 + $0x20] sm:$0xf]
        %v5317 = vld [vmem:[#allocation14 + $0x24] sm:$0xf]
        %v5318 = vld [vmem:[#allocation14 + $0x28] sm:$0xf]
        %v5319 = vld [vmem:[#allocation14 + $0x2c] sm:$0xf]
        %v5320 = vld [vmem:[#allocation14 + $0x30] sm:$0xf]
        %v5321 = vld [vmem:[#allocation14 + $0x34] sm:$0xf]
        %v5322 = vld [vmem:[#allocation14 + $0x38] sm:$0xf]
        %v5323 = vld [vmem:[#allocation14 + $0x3c] sm:$0xf]
        %v5324 = vld [vmem:[#allocation14 + $0x40] sm:$0xf]
        %v5325 = vld [vmem:[#allocation14 + $0x44] sm:$0xf]
        %v5326 = vld [vmem:[#allocation14 + $0x48] sm:$0xf]
        %v5327 = vld [vmem:[#allocation14 + $0x4c] sm:$0xf]
        %v5328 = vld [vmem:[#allocation14 + $0x50] sm:$0xf]
        %v5329 = vld [vmem:[#allocation14 + $0x54] sm:$0xf]
        %v5330 = vld [vmem:[#allocation14 + $0x58] sm:$0xf]
        %v5331 = vld [vmem:[#allocation14 + $0x5c] sm:$0xf]
        %v5332 = vld [vmem:[#allocation14 + $0x60] sm:$0xf]
        %v5333 = vld [vmem:[#allocation14 + $0x64] sm:$0xf]
        %v5334 = vld [vmem:[#allocation14 + $0x68] sm:$0xf]
        %v5335 = vld [vmem:[#allocation14 + $0x6c] sm:$0xf]
        %v5336 = vld [vmem:[#allocation14 + $0x70] sm:$0xf]
        %v5337 = vld [vmem:[#allocation14 + $0x74] sm:$0xf]
        %v5338 = vld [vmem:[#allocation14 + $0x78] sm:$0xf]
        %v5339 = vld [vmem:[#allocation14 + $0x7c] sm:$0xf]
        %v5340 = vld [vmem:[#allocation14 + $0x80] sm:$0xf]
        %v5341 = vld [vmem:[#allocation14 + $0x84] sm:$0xf]
        %v5342 = vld [vmem:[#allocation14 + $0x88] sm:$0xf]
        %v5343 = vld [vmem:[#allocation14 + $0x8c] sm:$0xf]
        %v5344 = vld [vmem:[#allocation14 + $0x90] sm:$0xf]
        %v5345 = vld [vmem:[#allocation14 + $0x94] sm:$0xf]
        %v5346 = vld [vmem:[#allocation14 + $0x98] sm:$0xf]
        %v5347 = vld [vmem:[#allocation14 + $0x9c] sm:$0xf]
        %v5348 = vld [vmem:[#allocation14 + $0xa0] sm:$0xf]
        %v5349 = vld [vmem:[#allocation14 + $0xa4] sm:$0xf]
        %v5350 = vld [vmem:[#allocation14 + $0xa8] sm:$0xf]
        %v5351 = vld [vmem:[#allocation14 + $0xac] sm:$0xf]
        %v5352 = vld [vmem:[#allocation14 + $0xb0] sm:$0xf]
        %v5353 = vld [vmem:[#allocation14 + $0xb4] sm:$0xf]
        %v5354 = vld [vmem:[#allocation14 + $0xb8] sm:$0xf]
        %v5355 = vld [vmem:[#allocation14 + $0xbc] sm:$0xf]
        %v5356 = vld [vmem:[#allocation14 + $0xc0] sm:$0xf]
        %v5357 = vld [vmem:[#allocation14 + $0xc4] sm:$0xf]
        %v5358 = vld [vmem:[#allocation14 + $0xc8] sm:$0xf]
        %v5359 = vld [vmem:[#allocation14 + $0xcc] sm:$0xf]
        %v5360 = vld [vmem:[#allocation14 + $0xd0] sm:$0xf]
        %v5361 = vld [vmem:[#allocation14 + $0xd4] sm:$0xf]
        %v5362 = vld [vmem:[#allocation14 + $0xd8] sm:$0xf]
        %v5363 = vld [vmem:[#allocation14 + $0xdc] sm:$0xf]
        %v5364 = vld [vmem:[#allocation14 + $0xe0] sm:$0xf]
        %v5365 = vld [vmem:[#allocation14 + $0xe4] sm:$0xf]
        %v5366 = vld [vmem:[#allocation14 + $0xe8] sm:$0xf]
        %v5367 = vld [vmem:[#allocation14 + $0xec] sm:$0xf]
        %v5368 = vld [vmem:[#allocation14 + $0xf0] sm:$0xf]
        %v5369 = vld [vmem:[#allocation14 + $0xf4] sm:$0xf]
        %v5370 = vld [vmem:[#allocation14 + $0xf8] sm:$0xf]
        %v5371 = vld [vmem:[#allocation14 + $0xfc] sm:$0xf]
        %s5372 = scalar_lea.vmem [#allocation14], 256
        %v5373 = vld [vmem:[%s5372] sm:$0xf]
        %v5374 = vld [vmem:[%s5372 + $0x4] sm:$0xf]
        %v5375 = vld [vmem:[%s5372 + $0x8] sm:$0xf]
        %v5376 = vld [vmem:[%s5372 + $0xc] sm:$0xf]
        %v5377 = vld [vmem:[%s5372 + $0x10] sm:$0xf]
        %v5378 = vld [vmem:[%s5372 + $0x14] sm:$0xf]
        %v5379 = vld [vmem:[%s5372 + $0x18] sm:$0xf]
        %v5380 = vld [vmem:[%s5372 + $0x1c] sm:$0xf]
        %v5381 = vld [vmem:[%s5372 + $0x20] sm:$0xf]
        %v5382 = vld [vmem:[%s5372 + $0x24] sm:$0xf]
        %v5383 = vld [vmem:[%s5372 + $0x28] sm:$0xf]
        %v5384 = vld [vmem:[%s5372 + $0x2c] sm:$0xf]
        %v5385 = vld [vmem:[%s5372 + $0x30] sm:$0xf]
        %v5386 = vld [vmem:[%s5372 + $0x34] sm:$0xf]
        %v5387 = vld [vmem:[%s5372 + $0x38] sm:$0xf]
        %v5388 = vld [vmem:[%s5372 + $0x3c] sm:$0xf]
        %v5389 = vld [vmem:[%s5372 + $0x40] sm:$0xf]
        %v5390 = vld [vmem:[%s5372 + $0x44] sm:$0xf]
        %v5391 = vld [vmem:[%s5372 + $0x48] sm:$0xf]
        %v5392 = vld [vmem:[%s5372 + $0x4c] sm:$0xf]
        %v5393 = vld [vmem:[%s5372 + $0x50] sm:$0xf]
        %v5394 = vld [vmem:[%s5372 + $0x54] sm:$0xf]
        %v5395 = vld [vmem:[%s5372 + $0x58] sm:$0xf]
        %v5396 = vld [vmem:[%s5372 + $0x5c] sm:$0xf]
        %v5397 = vld [vmem:[%s5372 + $0x60] sm:$0xf]
        %v5398 = vld [vmem:[%s5372 + $0x64] sm:$0xf]
        %v5399 = vld [vmem:[%s5372 + $0x68] sm:$0xf]
        %v5400 = vld [vmem:[%s5372 + $0x6c] sm:$0xf]
        %v5401 = vld [vmem:[%s5372 + $0x70] sm:$0xf]
        %v5402 = vld [vmem:[%s5372 + $0x74] sm:$0xf]
        %v5403 = vld [vmem:[%s5372 + $0x78] sm:$0xf]
        %v5404 = vld [vmem:[%s5372 + $0x7c] sm:$0xf]
        %v5405 = vld [vmem:[%s5372 + $0x80] sm:$0xf]
        %v5406 = vld [vmem:[%s5372 + $0x84] sm:$0xf]
        %v5407 = vld [vmem:[%s5372 + $0x88] sm:$0xf]
        %v5408 = vld [vmem:[%s5372 + $0x8c] sm:$0xf]
        %v5409 = vld [vmem:[%s5372 + $0x90] sm:$0xf]
        %v5410 = vld [vmem:[%s5372 + $0x94] sm:$0xf]
        %v5411 = vld [vmem:[%s5372 + $0x98] sm:$0xf]
        %v5412 = vld [vmem:[%s5372 + $0x9c] sm:$0xf]
        %v5413 = vld [vmem:[%s5372 + $0xa0] sm:$0xf]
        %v5414 = vld [vmem:[%s5372 + $0xa4] sm:$0xf]
        %v5415 = vld [vmem:[%s5372 + $0xa8] sm:$0xf]
        %v5416 = vld [vmem:[%s5372 + $0xac] sm:$0xf]
        %v5417 = vld [vmem:[%s5372 + $0xb0] sm:$0xf]
        %v5418 = vld [vmem:[%s5372 + $0xb4] sm:$0xf]
        %v5419 = vld [vmem:[%s5372 + $0xb8] sm:$0xf]
        %v5420 = vld [vmem:[%s5372 + $0xbc] sm:$0xf]
        %v5421 = vld [vmem:[%s5372 + $0xc0] sm:$0xf]
        %v5422 = vld [vmem:[%s5372 + $0xc4] sm:$0xf]
        %v5423 = vld [vmem:[%s5372 + $0xc8] sm:$0xf]
        %v5424 = vld [vmem:[%s5372 + $0xcc] sm:$0xf]
        %v5425 = vld [vmem:[%s5372 + $0xd0] sm:$0xf]
        %v5426 = vld [vmem:[%s5372 + $0xd4] sm:$0xf]
        %v5427 = vld [vmem:[%s5372 + $0xd8] sm:$0xf]
        %v5428 = vld [vmem:[%s5372 + $0xdc] sm:$0xf]
        %v5429 = vld [vmem:[%s5372 + $0xe0] sm:$0xf]
        %v5430 = vld [vmem:[%s5372 + $0xe4] sm:$0xf]
        %v5431 = vld [vmem:[%s5372 + $0xe8] sm:$0xf]
        %v5432 = vld [vmem:[%s5372 + $0xec] sm:$0xf]
        %v5433 = vld [vmem:[%s5372 + $0xf0] sm:$0xf]
        %v5434 = vld [vmem:[%s5372 + $0xf4] sm:$0xf]
        %v5435 = vld [vmem:[%s5372 + $0xf8] sm:$0xf]
        %v5436 = vld [vmem:[%s5372 + $0xfc] sm:$0xf]
        %v5438 = vshrl.u32 %v5300, 16
        %v5440 = vshll.u32 %v5300, 16
        %v5442 = vrot.slane %v5440, 1
        %v5443 = vor.u32 %v5438, %v5442
        %v5445 = vshll.u32 %v5304, 16
        %v5447 = vrot.slane %v5445, 1
        %v5448 = vsel %vm569, %v5443, %v5447
        %v5450 = vshrl.u32 %v5301, 16
        %v5452 = vshll.u32 %v5301, 16
        %v5454 = vrot.slane %v5452, 1
        %v5455 = vor.u32 %v5450, %v5454
        %v5457 = vshll.u32 %v5305, 16
        %v5459 = vrot.slane %v5457, 1
        %v5460 = vsel %vm569, %v5455, %v5459
        %v5462 = vshrl.u32 %v5302, 16
        %v5464 = vshll.u32 %v5302, 16
        %v5466 = vrot.slane %v5464, 1
        %v5467 = vor.u32 %v5462, %v5466
        %v5469 = vshll.u32 %v5306, 16
        %v5471 = vrot.slane %v5469, 1
        %v5472 = vsel %vm569, %v5467, %v5471
        %v5474 = vshrl.u32 %v5303, 16
        %v5476 = vshll.u32 %v5303, 16
        %v5478 = vrot.slane %v5476, 1
        %v5479 = vor.u32 %v5474, %v5478
        %v5481 = vshll.u32 %v5307, 16
        %v5483 = vrot.slane %v5481, 1
        %v5484 = vsel %vm569, %v5479, %v5483
        %v5485 = vshrl.u32 %v5304, 16
        %v5487 = vor.u32 %v5485, %v5447
        %v5488 = vsel %vm569, %v5487, %v612
        %v5489 = vshrl.u32 %v5305, 16
        %v5491 = vor.u32 %v5489, %v5459
        %v5492 = vsel %vm569, %v5491, %v612
        %v5493 = vshrl.u32 %v5306, 16
        %v5495 = vor.u32 %v5493, %v5471
        %v5496 = vsel %vm569, %v5495, %v612
        %v5497 = vshrl.u32 %v5307, 16
        %v5499 = vor.u32 %v5497, %v5483
        %v5500 = vsel %vm569, %v5499, %v612
        %v5573 = vunpack.c.l.b16 %v5373
        %v5574 = vunpack.c.l.b16 %v5374
        %v5575 = vunpack.c.l.b16 %v5375
        %v5576 = vunpack.c.l.b16 %v5376
        %v5577 = vunpack.c.l.b16 %v5377
        %v5578 = vunpack.c.l.b16 %v5378
        %v5579 = vunpack.c.l.b16 %v5379
        %v5580 = vunpack.c.l.b16 %v5380
        %v5581 = vunpack.c.l.b16 %v5381
        %v5582 = vunpack.c.l.b16 %v5382
        %v5583 = vunpack.c.l.b16 %v5383
        %v5584 = vunpack.c.l.b16 %v5384
        %v5585 = vunpack.c.l.b16 %v5385
        %v5586 = vunpack.c.l.b16 %v5386
        %v5587 = vunpack.c.l.b16 %v5387
        %v5588 = vunpack.c.l.b16 %v5388
        %v5589 = vunpack.c.l.b16 %v5389
        %v5590 = vunpack.c.l.b16 %v5390
        %v5591 = vunpack.c.l.b16 %v5391
        %v5592 = vunpack.c.l.b16 %v5392
        %v5593 = vunpack.c.l.b16 %v5393
        %v5594 = vunpack.c.l.b16 %v5394
        %v5595 = vunpack.c.l.b16 %v5395
        %v5596 = vunpack.c.l.b16 %v5396
        %v5597 = vunpack.c.l.b16 %v5397
        %v5598 = vunpack.c.l.b16 %v5398
        %v5599 = vunpack.c.l.b16 %v5399
        %v5600 = vunpack.c.l.b16 %v5400
        %v5601 = vunpack.c.l.b16 %v5401
        %v5602 = vunpack.c.l.b16 %v5402
        %v5603 = vunpack.c.l.b16 %v5403
        %v5604 = vunpack.c.l.b16 %v5404
        %v5605 = vunpack.c.l.b16 %v5405
        %v5606 = vunpack.c.l.b16 %v5406
        %v5607 = vunpack.c.l.b16 %v5407
        %v5608 = vunpack.c.l.b16 %v5408
        %v5609 = vunpack.c.l.b16 %v5409
        %v5610 = vunpack.c.l.b16 %v5410
        %v5611 = vunpack.c.l.b16 %v5411
        %v5612 = vunpack.c.l.b16 %v5412
        %v5613 = vunpack.c.l.b16 %v5413
        %v5614 = vunpack.c.l.b16 %v5414
        %v5615 = vunpack.c.l.b16 %v5415
        %v5616 = vunpack.c.l.b16 %v5416
        %v5617 = vunpack.c.l.b16 %v5417
        %v5618 = vunpack.c.l.b16 %v5418
        %v5619 = vunpack.c.l.b16 %v5419
        %v5620 = vunpack.c.l.b16 %v5420
        %v5621 = vunpack.c.l.b16 %v5421
        %v5622 = vunpack.c.l.b16 %v5422
        %v5623 = vunpack.c.l.b16 %v5423
        %v5624 = vunpack.c.l.b16 %v5424
        %v5625 = vunpack.c.l.b16 %v5425
        %v5626 = vunpack.c.l.b16 %v5426
        %v5627 = vunpack.c.l.b16 %v5427
        %v5628 = vunpack.c.l.b16 %v5428
        %v5629 = vunpack.c.l.b16 %v5429
        %v5630 = vunpack.c.l.b16 %v5430
        %v5631 = vunpack.c.l.b16 %v5431
        %v5632 = vunpack.c.l.b16 %v5432
        %v5633 = vunpack.c.l.b16 %v5433
        %v5634 = vunpack.c.l.b16 %v5434
        %v5635 = vunpack.c.l.b16 %v5435
        %v5636 = vunpack.c.l.b16 %v5436
        %v5637 = vpack.c.b16 %v5574, %v5573
        %v5638 = vpack.c.b16 %v5576, %v5575
        %v5639 = vpack.c.b16 %v5578, %v5577
        %v5640 = vpack.c.b16 %v5580, %v5579
        %v5641 = vpack.c.b16 %v5582, %v5581
        %v5642 = vpack.c.b16 %v5584, %v5583
        %v5643 = vpack.c.b16 %v5586, %v5585
        %v5644 = vpack.c.b16 %v5588, %v5587
        %v5645 = vpack.c.b16 %v5590, %v5589
        %v5646 = vpack.c.b16 %v5592, %v5591
        %v5647 = vpack.c.b16 %v5594, %v5593
        %v5648 = vpack.c.b16 %v5596, %v5595
        %v5649 = vpack.c.b16 %v5598, %v5597
        %v5650 = vpack.c.b16 %v5600, %v5599
        %v5651 = vpack.c.b16 %v5602, %v5601
        %v5652 = vpack.c.b16 %v5604, %v5603
        %v5653 = vpack.c.b16 %v5606, %v5605
        %v5654 = vpack.c.b16 %v5608, %v5607
        %v5655 = vpack.c.b16 %v5610, %v5609
        %v5656 = vpack.c.b16 %v5612, %v5611
        %v5657 = vpack.c.b16 %v5614, %v5613
        %v5658 = vpack.c.b16 %v5616, %v5615
        %v5659 = vpack.c.b16 %v5618, %v5617
        %v5660 = vpack.c.b16 %v5620, %v5619
        %v5661 = vpack.c.b16 %v5622, %v5621
        %v5662 = vpack.c.b16 %v5624, %v5623
        %v5663 = vpack.c.b16 %v5626, %v5625
        %v5664 = vpack.c.b16 %v5628, %v5627
        %v5665 = vpack.c.b16 %v5630, %v5629
        %v5666 = vpack.c.b16 %v5632, %v5631
        %v5667 = vpack.c.b16 %v5634, %v5633
        %v5668 = vpack.c.b16 %v5636, %v5635
        %5701 = vmatprep.subr.bf16.mxu0 0
        %5702 = vmatpush1.bf16.msra.mxu0 %v5637
        %5703 = vmatprep.subr.bf16.mxu0 0
        %5704 = vmatpush1.bf16.msra.mxu0 %v5638
        %5705 = vmatprep.subr.bf16.mxu0 0
        %5706 = vmatpush1.bf16.msra.mxu0 %v5639
        %5707 = vmatprep.subr.bf16.mxu0 0
        %5708 = vmatpush1.bf16.msra.mxu0 %v5640
        %5709 = vmatprep.subr.bf16.mxu0 0
        %5710 = vmatpush1.bf16.msra.mxu0 %v5641
        %5711 = vmatprep.subr.bf16.mxu0 0
        %5712 = vmatpush1.bf16.msra.mxu0 %v5642
        %5713 = vmatprep.subr.bf16.mxu0 0
        %5714 = vmatpush1.bf16.msra.mxu0 %v5643
        %5715 = vmatprep.subr.bf16.mxu0 0
        %5716 = vmatpush1.bf16.msra.mxu0 %v5644
        %5717 = vmatprep.subr.bf16.mxu0 0
        %5718 = vmatpush1.bf16.msra.mxu0 %v5645
        %5719 = vmatprep.subr.bf16.mxu0 0
        %5720 = vmatpush1.bf16.msra.mxu0 %v5646
        %5721 = vmatprep.subr.bf16.mxu0 0
        %5722 = vmatpush1.bf16.msra.mxu0 %v5647
        %5723 = vmatprep.subr.bf16.mxu0 0
        %5724 = vmatpush1.bf16.msra.mxu0 %v5648
        %5725 = vmatprep.subr.bf16.mxu0 0
        %5726 = vmatpush1.bf16.msra.mxu0 %v5649
        %5727 = vmatprep.subr.bf16.mxu0 0
        %5728 = vmatpush1.bf16.msra.mxu0 %v5650
        %5729 = vmatprep.subr.bf16.mxu0 0
        %5730 = vmatpush1.bf16.msra.mxu0 %v5651
        %5731 = vmatprep.subr.bf16.mxu0 0
        %5732 = vmatpush1.bf16.msra.mxu0 %v5652
        %5733 = vmatprep.mubr.bf16.mxu0 %v5460
        %5734 = vmatmul.mubr.bf16.gmra.mrb[0].mxu0 %v5448
        %v5735 = vpop.f32.mrb[0].mxu0
        %v5736 = vadd.f32 0.0, %v5735
        %v5737 = vpop.f32.mrb[0].mxu0
        %v5738 = vpop.f32.mrb[0].mxu0
        %v5739 = vpop.f32.mrb[0].mxu0
        %5740 = vmatprep.mubr.bf16.mxu0 %v5492
        %5741 = vmatmul.mubr.bf16.gmra.mrb[0].mxu0 %v5488
        %v5742 = vpop.f32.mrb[0].mxu0
        %v5743 = vadd.f32 0.0, %v5742
        %v5744 = vpop.f32.mrb[0].mxu0
        %v5745 = vpop.f32.mrb[0].mxu0
        %v5746 = vpop.f32.mrb[0].mxu0
        %5747 = vdwg.mxu0
        %5748 = vmatprep.subr.bf16.mxu0 0
        %5749 = vmatpush1.bf16.msra.mxu0 %v5653
        %5750 = vmatprep.subr.bf16.mxu0 0
        %5751 = vmatpush1.bf16.msra.mxu0 %v5654
        %5752 = vmatprep.subr.bf16.mxu0 0
        %5753 = vmatpush1.bf16.msra.mxu0 %v5655
        %5754 = vmatprep.subr.bf16.mxu0 0
        %5755 = vmatpush1.bf16.msra.mxu0 %v5656
        %5756 = vmatprep.subr.bf16.mxu0 0
        %5757 = vmatpush1.bf16.msra.mxu0 %v5657
        %5758 = vmatprep.subr.bf16.mxu0 0
        %5759 = vmatpush1.bf16.msra.mxu0 %v5658
        %5760 = vmatprep.subr.bf16.mxu0 0
        %5761 = vmatpush1.bf16.msra.mxu0 %v5659
        %5762 = vmatprep.subr.bf16.mxu0 0
        %5763 = vmatpush1.bf16.msra.mxu0 %v5660
        %5764 = vmatprep.subr.bf16.mxu0 0
        %5765 = vmatpush1.bf16.msra.mxu0 %v5661
        %5766 = vmatprep.subr.bf16.mxu0 0
        %5767 = vmatpush1.bf16.msra.mxu0 %v5662
        %5768 = vmatprep.subr.bf16.mxu0 0
        %5769 = vmatpush1.bf16.msra.mxu0 %v5663
        %5770 = vmatprep.subr.bf16.mxu0 0
        %5771 = vmatpush1.bf16.msra.mxu0 %v5664
        %5772 = vmatprep.subr.bf16.mxu0 0
        %5773 = vmatpush1.bf16.msra.mxu0 %v5665
        %5774 = vmatprep.subr.bf16.mxu0 0
        %5775 = vmatpush1.bf16.msra.mxu0 %v5666
        %5776 = vmatprep.subr.bf16.mxu0 0
        %5777 = vmatpush1.bf16.msra.mxu0 %v5667
        %5778 = vmatprep.subr.bf16.mxu0 0
        %5779 = vmatpush1.bf16.msra.mxu0 %v5668
        %5780 = vmatprep.mubr.bf16.mxu0 %v5484
        %5781 = vmatmul.mubr.bf16.gmra.mrb[0].mxu0 %v5472
        %v5782 = vpop.f32.mrb[0].mxu0
        %v5783 = vadd.f32 %v5736, %v5782
        %v5784 = vpop.f32.mrb[0].mxu0
        %v5785 = vpop.f32.mrb[0].mxu0
        %v5786 = vpop.f32.mrb[0].mxu0
        %5787 = vmatprep.mubr.bf16.mxu0 %v5500
        %5788 = vmatmul.mubr.bf16.gmra.mrb[0].mxu0 %v5496
        %v5789 = vpop.f32.mrb[0].mxu0
        %v5790 = vadd.f32 %v5743, %v5789
        %v5791 = vpop.f32.mrb[0].mxu0
        %v5792 = vpop.f32.mrb[0].mxu0
        %v5793 = vpop.f32.mrb[0].mxu0
        %5794 = vdwg.mxu0
        %v5859 = vunpack.c.l.b16 %v5308
        %v5860 = vunpack.c.l.b16 %v5309
        %v5861 = vunpack.c.l.b16 %v5310
        %v5862 = vunpack.c.l.b16 %v5311
        %v5863 = vunpack.c.l.b16 %v5312
        %v5864 = vunpack.c.l.b16 %v5313
        %v5865 = vunpack.c.l.b16 %v5314
        %v5866 = vunpack.c.l.b16 %v5315
        %v5867 = vunpack.c.l.b16 %v5316
        %v5868 = vunpack.c.l.b16 %v5317
        %v5869 = vunpack.c.l.b16 %v5318
        %v5870 = vunpack.c.l.b16 %v5319
        %v5871 = vunpack.c.l.b16 %v5320
        %v5872 = vunpack.c.l.b16 %v5321
        %v5873 = vunpack.c.l.b16 %v5322
        %v5874 = vunpack.c.l.b16 %v5323
        %v5875 = vunpack.c.l.b16 %v5324
        %v5876 = vunpack.c.l.b16 %v5325
        %v5877 = vunpack.c.l.b16 %v5326
        %v5878 = vunpack.c.l.b16 %v5327
        %v5879 = vunpack.c.l.b16 %v5328
        %v5880 = vunpack.c.l.b16 %v5329
        %v5881 = vunpack.c.l.b16 %v5330
        %v5882 = vunpack.c.l.b16 %v5331
        %v5883 = vunpack.c.l.b16 %v5332
        %v5884 = vunpack.c.l.b16 %v5333
        %v5885 = vunpack.c.l.b16 %v5334
        %v5886 = vunpack.c.l.b16 %v5335
        %v5887 = vunpack.c.l.b16 %v5336
        %v5888 = vunpack.c.l.b16 %v5337
        %v5889 = vunpack.c.l.b16 %v5338
        %v5890 = vunpack.c.l.b16 %v5339
        %v5891 = vunpack.c.l.b16 %v5340
        %v5892 = vunpack.c.l.b16 %v5341
        %v5893 = vunpack.c.l.b16 %v5342
        %v5894 = vunpack.c.l.b16 %v5343
        %v5895 = vunpack.c.l.b16 %v5344
        %v5896 = vunpack.c.l.b16 %v5345
        %v5897 = vunpack.c.l.b16 %v5346
        %v5898 = vunpack.c.l.b16 %v5347
        %v5899 = vunpack.c.l.b16 %v5348
        %v5900 = vunpack.c.l.b16 %v5349
        %v5901 = vunpack.c.l.b16 %v5350
        %v5902 = vunpack.c.l.b16 %v5351
        %v5903 = vunpack.c.l.b16 %v5352
        %v5904 = vunpack.c.l.b16 %v5353
        %v5905 = vunpack.c.l.b16 %v5354
        %v5906 = vunpack.c.l.b16 %v5355
        %v5907 = vunpack.c.l.b16 %v5356
        %v5908 = vunpack.c.l.b16 %v5357
        %v5909 = vunpack.c.l.b16 %v5358
        %v5910 = vunpack.c.l.b16 %v5359
        %v5911 = vunpack.c.l.b16 %v5360
        %v5912 = vunpack.c.l.b16 %v5361
        %v5913 = vunpack.c.l.b16 %v5362
        %v5914 = vunpack.c.l.b16 %v5363
        %v5915 = vunpack.c.l.b16 %v5364
        %v5916 = vunpack.c.l.b16 %v5365
        %v5917 = vunpack.c.l.b16 %v5366
        %v5918 = vunpack.c.l.b16 %v5367
        %v5919 = vunpack.c.l.b16 %v5368
        %v5920 = vunpack.c.l.b16 %v5369
        %v5921 = vunpack.c.l.b16 %v5370
        %v5922 = vunpack.c.l.b16 %v5371
        %v5923 = vpack.c.b16 %v5860, %v5859
        %v5924 = vpack.c.b16 %v5862, %v5861
        %v5925 = vpack.c.b16 %v5864, %v5863
        %v5926 = vpack.c.b16 %v5866, %v5865
        %v5927 = vpack.c.b16 %v5868, %v5867
        %v5928 = vpack.c.b16 %v5870, %v5869
        %v5929 = vpack.c.b16 %v5872, %v5871
        %v5930 = vpack.c.b16 %v5874, %v5873
        %v5931 = vpack.c.b16 %v5876, %v5875
        %v5932 = vpack.c.b16 %v5878, %v5877
        %v5933 = vpack.c.b16 %v5880, %v5879
        %v5934 = vpack.c.b16 %v5882, %v5881
        %v5935 = vpack.c.b16 %v5884, %v5883
        %v5936 = vpack.c.b16 %v5886, %v5885
        %v5937 = vpack.c.b16 %v5888, %v5887
        %v5938 = vpack.c.b16 %v5890, %v5889
        %v5939 = vpack.c.b16 %v5892, %v5891
        %v5940 = vpack.c.b16 %v5894, %v5893
        %v5941 = vpack.c.b16 %v5896, %v5895
        %v5942 = vpack.c.b16 %v5898, %v5897
        %v5943 = vpack.c.b16 %v5900, %v5899
        %v5944 = vpack.c.b16 %v5902, %v5901
        %v5945 = vpack.c.b16 %v5904, %v5903
        %v5946 = vpack.c.b16 %v5906, %v5905
        %v5947 = vpack.c.b16 %v5908, %v5907
        %v5948 = vpack.c.b16 %v5910, %v5909
        %v5949 = vpack.c.b16 %v5912, %v5911
        %v5950 = vpack.c.b16 %v5914, %v5913
        %v5951 = vpack.c.b16 %v5916, %v5915
        %v5952 = vpack.c.b16 %v5918, %v5917
        %v5953 = vpack.c.b16 %v5920, %v5919
        %v5954 = vpack.c.b16 %v5922, %v5921
        %5987 = vmatprep.subr.bf16.mxu0 0
        %5988 = vmatpush1.bf16.msra.mxu0 %v5923
        %5989 = vmatprep.subr.bf16.mxu0 0
        %5990 = vmatpush1.bf16.msra.mxu0 %v5924
        %5991 = vmatprep.subr.bf16.mxu0 0
        %5992 = vmatpush1.bf16.msra.mxu0 %v5925
        %5993 = vmatprep.subr.bf16.mxu0 0
        %5994 = vmatpush1.bf16.msra.mxu0 %v5926
        %5995 = vmatprep.subr.bf16.mxu0 0
        %5996 = vmatpush1.bf16.msra.mxu0 %v5927
        %5997 = vmatprep.subr.bf16.mxu0 0
        %5998 = vmatpush1.bf16.msra.mxu0 %v5928
        %5999 = vmatprep.subr.bf16.mxu0 0
        %6000 = vmatpush1.bf16.msra.mxu0 %v5929
        %6001 = vmatprep.subr.bf16.mxu0 0
        %6002 = vmatpush1.bf16.msra.mxu0 %v5930
        %6003 = vmatprep.subr.bf16.mxu0 0
        %6004 = vmatpush1.bf16.msra.mxu0 %v5931
        %6005 = vmatprep.subr.bf16.mxu0 0
        %6006 = vmatpush1.bf16.msra.mxu0 %v5932
        %6007 = vmatprep.subr.bf16.mxu0 0
        %6008 = vmatpush1.bf16.msra.mxu0 %v5933
        %6009 = vmatprep.subr.bf16.mxu0 0
        %6010 = vmatpush1.bf16.msra.mxu0 %v5934
        %6011 = vmatprep.subr.bf16.mxu0 0
        %6012 = vmatpush1.bf16.msra.mxu0 %v5935
        %6013 = vmatprep.subr.bf16.mxu0 0
        %6014 = vmatpush1.bf16.msra.mxu0 %v5936
        %6015 = vmatprep.subr.bf16.mxu0 0
        %6016 = vmatpush1.bf16.msra.mxu0 %v5937
        %6017 = vmatprep.subr.bf16.mxu0 0
        %6018 = vmatpush1.bf16.msra.mxu0 %v5938
        %6019 = vmatprep.mubr.bf16.mxu0 %v5301
        %6020 = vmatmul.mubr.bf16.gmra.mrb[0].mxu0 %v5300
        %v6021 = vpop.f32.mrb[0].mxu0
        %v6022 = vadd.f32 %v5783, %v6021
        %v6023 = vpop.f32.mrb[0].mxu0
        %v6024 = vpop.f32.mrb[0].mxu0
        %v6025 = vpop.f32.mrb[0].mxu0
        %6026 = vmatprep.mubr.bf16.mxu0 %v5305
        %6027 = vmatmul.mubr.bf16.gmra.mrb[0].mxu0 %v5304
        %v6028 = vpop.f32.mrb[0].mxu0
        %v6029 = vadd.f32 %v5790, %v6028
        %v6030 = vpop.f32.mrb[0].mxu0
        %v6031 = vpop.f32.mrb[0].mxu0
        %v6032 = vpop.f32.mrb[0].mxu0
        %6033 = vdwg.mxu0
        %6034 = vmatprep.subr.bf16.mxu0 0
        %6035 = vmatpush1.bf16.msra.mxu0 %v5939
        %6036 = vmatprep.subr.bf16.mxu0 0
        %6037 = vmatpush1.bf16.msra.mxu0 %v5940
        %6038 = vmatprep.subr.bf16.mxu0 0
        %6039 = vmatpush1.bf16.msra.mxu0 %v5941
        %6040 = vmatprep.subr.bf16.mxu0 0
        %6041 = vmatpush1.bf16.msra.mxu0 %v5942
        %6042 = vmatprep.subr.bf16.mxu0 0
        %6043 = vmatpush1.bf16.msra.mxu0 %v5943
        %6044 = vmatprep.subr.bf16.mxu0 0
        %6045 = vmatpush1.bf16.msra.mxu0 %v5944
        %6046 = vmatprep.subr.bf16.mxu0 0
        %6047 = vmatpush1.bf16.msra.mxu0 %v5945
        %6048 = vmatprep.subr.bf16.mxu0 0
        %6049 = vmatpush1.bf16.msra.mxu0 %v5946
        %6050 = vmatprep.subr.bf16.mxu0 0
        %6051 = vmatpush1.bf16.msra.mxu0 %v5947
        %6052 = vmatprep.subr.bf16.mxu0 0
        %6053 = vmatpush1.bf16.msra.mxu0 %v5948
        %6054 = vmatprep.subr.bf16.mxu0 0
        %6055 = vmatpush1.bf16.msra.mxu0 %v5949
        %6056 = vmatprep.subr.bf16.mxu0 0
        %6057 = vmatpush1.bf16.msra.mxu0 %v5950
        %6058 = vmatprep.subr.bf16.mxu0 0
        %6059 = vmatpush1.bf16.msra.mxu0 %v5951
        %6060 = vmatprep.subr.bf16.mxu0 0
        %6061 = vmatpush1.bf16.msra.mxu0 %v5952
        %6062 = vmatprep.subr.bf16.mxu0 0
        %6063 = vmatpush1.bf16.msra.mxu0 %v5953
        %6064 = vmatprep.subr.bf16.mxu0 0
        %6065 = vmatpush1.bf16.msra.mxu0 %v5954
        %6066 = vmatprep.mubr.bf16.mxu0 %v5303
        %6067 = vmatmul.mubr.bf16.gmra.mrb[0].mxu0 %v5302
        %v6068 = vpop.f32.mrb[0].mxu0
        %v6069 = vadd.f32 %v6022, %v6068
        %v6070 = vpop.f32.mrb[0].mxu0
        %v6071 = vpop.f32.mrb[0].mxu0
        %v6072 = vpop.f32.mrb[0].mxu0
        %6073 = vmatprep.mubr.bf16.mxu0 %v5307
        %6074 = vmatmul.mubr.bf16.gmra.mrb[0].mxu0 %v5306
        %v6075 = vpop.f32.mrb[0].mxu0
        %v6076 = vadd.f32 %v6029, %v6075
        %v6077 = vpop.f32.mrb[0].mxu0
        %v6078 = vpop.f32.mrb[0].mxu0
        %v6079 = vpop.f32.mrb[0].mxu0
        %6080 = vdwg.mxu0
        %s6081 = scalar_lea.vmem [#allocation14], 512
        %v6082 = vld [vmem:[%s6081] sm:$0xf]
        %v6083 = vld [vmem:[%s6081 + $0x4] sm:$0xf]
        %v6084 = vld [vmem:[%s6081 + $0x8] sm:$0xf]
        %v6085 = vld [vmem:[%s6081 + $0xc] sm:$0xf]
        %v6086 = vld [vmem:[%s6081 + $0x10] sm:$0xf]
        %v6087 = vld [vmem:[%s6081 + $0x14] sm:$0xf]
        %v6088 = vld [vmem:[%s6081 + $0x18] sm:$0xf]
        %v6089 = vld [vmem:[%s6081 + $0x1c] sm:$0xf]
        %v6090 = vld [vmem:[%s6081 + $0x20] sm:$0xf]
        %v6091 = vld [vmem:[%s6081 + $0x24] sm:$0xf]
        %v6092 = vld [vmem:[%s6081 + $0x28] sm:$0xf]
        %v6093 = vld [vmem:[%s6081 + $0x2c] sm:$0xf]
        %v6094 = vld [vmem:[%s6081 + $0x30] sm:$0xf]
        %v6095 = vld [vmem:[%s6081 + $0x34] sm:$0xf]
        %v6096 = vld [vmem:[%s6081 + $0x38] sm:$0xf]
        %v6097 = vld [vmem:[%s6081 + $0x3c] sm:$0xf]
        %v6098 = vld [vmem:[%s6081 + $0x40] sm:$0xf]
        %v6099 = vld [vmem:[%s6081 + $0x44] sm:$0xf]
        %v6100 = vld [vmem:[%s6081 + $0x48] sm:$0xf]
        %v6101 = vld [vmem:[%s6081 + $0x4c] sm:$0xf]
        %v6102 = vld [vmem:[%s6081 + $0x50] sm:$0xf]
        %v6103 = vld [vmem:[%s6081 + $0x54] sm:$0xf]
        %v6104 = vld [vmem:[%s6081 + $0x58] sm:$0xf]
        %v6105 = vld [vmem:[%s6081 + $0x5c] sm:$0xf]
        %v6106 = vld [vmem:[%s6081 + $0x60] sm:$0xf]
        %v6107 = vld [vmem:[%s6081 + $0x64] sm:$0xf]
        %v6108 = vld [vmem:[%s6081 + $0x68] sm:$0xf]
        %v6109 = vld [vmem:[%s6081 + $0x6c] sm:$0xf]
        %v6110 = vld [vmem:[%s6081 + $0x70] sm:$0xf]
        %v6111 = vld [vmem:[%s6081 + $0x74] sm:$0xf]
        %v6112 = vld [vmem:[%s6081 + $0x78] sm:$0xf]
        %v6113 = vld [vmem:[%s6081 + $0x7c] sm:$0xf]
        %v6114 = vld [vmem:[%s6081 + $0x80] sm:$0xf]
        %v6115 = vld [vmem:[%s6081 + $0x84] sm:$0xf]
        %v6116 = vld [vmem:[%s6081 + $0x88] sm:$0xf]
        %v6117 = vld [vmem:[%s6081 + $0x8c] sm:$0xf]
        %v6118 = vld [vmem:[%s6081 + $0x90] sm:$0xf]
        %v6119 = vld [vmem:[%s6081 + $0x94] sm:$0xf]
        %v6120 = vld [vmem:[%s6081 + $0x98] sm:$0xf]
        %v6121 = vld [vmem:[%s6081 + $0x9c] sm:$0xf]
        %v6122 = vld [vmem:[%s6081 + $0xa0] sm:$0xf]
        %v6123 = vld [vmem:[%s6081 + $0xa4] sm:$0xf]
        %v6124 = vld [vmem:[%s6081 + $0xa8] sm:$0xf]
        %v6125 = vld [vmem:[%s6081 + $0xac] sm:$0xf]
        %v6126 = vld [vmem:[%s6081 + $0xb0] sm:$0xf]
        %v6127 = vld [vmem:[%s6081 + $0xb4] sm:$0xf]
        %v6128 = vld [vmem:[%s6081 + $0xb8] sm:$0xf]
        %v6129 = vld [vmem:[%s6081 + $0xbc] sm:$0xf]
        %v6130 = vld [vmem:[%s6081 + $0xc0] sm:$0xf]
        %v6131 = vld [vmem:[%s6081 + $0xc4] sm:$0xf]
        %v6132 = vld [vmem:[%s6081 + $0xc8] sm:$0xf]
        %v6133 = vld [vmem:[%s6081 + $0xcc] sm:$0xf]
        %v6134 = vld [vmem:[%s6081 + $0xd0] sm:$0xf]
        %v6135 = vld [vmem:[%s6081 + $0xd4] sm:$0xf]
        %v6136 = vld [vmem:[%s6081 + $0xd8] sm:$0xf]
        %v6137 = vld [vmem:[%s6081 + $0xdc] sm:$0xf]
        %v6138 = vld [vmem:[%s6081 + $0xe0] sm:$0xf]
        %v6139 = vld [vmem:[%s6081 + $0xe4] sm:$0xf]
        %v6140 = vld [vmem:[%s6081 + $0xe8] sm:$0xf]
        %v6141 = vld [vmem:[%s6081 + $0xec] sm:$0xf]
        %v6142 = vld [vmem:[%s6081 + $0xf0] sm:$0xf]
        %v6143 = vld [vmem:[%s6081 + $0xf4] sm:$0xf]
        %v6144 = vld [vmem:[%s6081 + $0xf8] sm:$0xf]
        %v6145 = vld [vmem:[%s6081 + $0xfc] sm:$0xf]
        %v6154 = vrot.slane %v5300, 1
        %v6155 = vrot.slane %v5304, 1
        %v6156 = vsel %vm884, %v6154, %v6155
        %v6157 = vrot.slane %v5301, 1
        %v6158 = vrot.slane %v5305, 1
        %v6159 = vsel %vm884, %v6157, %v6158
        %v6160 = vrot.slane %v5302, 1
        %v6161 = vrot.slane %v5306, 1
        %v6162 = vsel %vm884, %v6160, %v6161
        %v6163 = vrot.slane %v5303, 1
        %v6164 = vrot.slane %v5307, 1
        %v6165 = vsel %vm884, %v6163, %v6164
        %v6166 = vsel %vm884, %v6155, %v894
        %v6167 = vsel %vm884, %v6158, %v894
        %v6168 = vsel %vm884, %v6161, %v894
        %v6169 = vsel %vm884, %v6164, %v894
        %v6242 = vunpack.c.l.b16 %v6082
        %v6243 = vunpack.c.l.b16 %v6083
        %v6244 = vunpack.c.l.b16 %v6084
        %v6245 = vunpack.c.l.b16 %v6085
        %v6246 = vunpack.c.l.b16 %v6086
        %v6247 = vunpack.c.l.b16 %v6087
        %v6248 = vunpack.c.l.b16 %v6088
        %v6249 = vunpack.c.l.b16 %v6089
        %v6250 = vunpack.c.l.b16 %v6090
        %v6251 = vunpack.c.l.b16 %v6091
        %v6252 = vunpack.c.l.b16 %v6092
        %v6253 = vunpack.c.l.b16 %v6093
        %v6254 = vunpack.c.l.b16 %v6094
        %v6255 = vunpack.c.l.b16 %v6095
        %v6256 = vunpack.c.l.b16 %v6096
        %v6257 = vunpack.c.l.b16 %v6097
        %v6258 = vunpack.c.l.b16 %v6098
        %v6259 = vunpack.c.l.b16 %v6099
        %v6260 = vunpack.c.l.b16 %v6100
        %v6261 = vunpack.c.l.b16 %v6101
        %v6262 = vunpack.c.l.b16 %v6102
        %v6263 = vunpack.c.l.b16 %v6103
        %v6264 = vunpack.c.l.b16 %v6104
        %v6265 = vunpack.c.l.b16 %v6105
        %v6266 = vunpack.c.l.b16 %v6106
        %v6267 = vunpack.c.l.b16 %v6107
        %v6268 = vunpack.c.l.b16 %v6108
        %v6269 = vunpack.c.l.b16 %v6109
        %v6270 = vunpack.c.l.b16 %v6110
        %v6271 = vunpack.c.l.b16 %v6111
        %v6272 = vunpack.c.l.b16 %v6112
        %v6273 = vunpack.c.l.b16 %v6113
        %v6274 = vunpack.c.l.b16 %v6114
        %v6275 = vunpack.c.l.b16 %v6115
        %v6276 = vunpack.c.l.b16 %v6116
        %v6277 = vunpack.c.l.b16 %v6117
        %v6278 = vunpack.c.l.b16 %v6118
        %v6279 = vunpack.c.l.b16 %v6119
        %v6280 = vunpack.c.l.b16 %v6120
        %v6281 = vunpack.c.l.b16 %v6121
        %v6282 = vunpack.c.l.b16 %v6122
        %v6283 = vunpack.c.l.b16 %v6123
        %v6284 = vunpack.c.l.b16 %v6124
        %v6285 = vunpack.c.l.b16 %v6125
        %v6286 = vunpack.c.l.b16 %v6126
        %v6287 = vunpack.c.l.b16 %v6127
        %v6288 = vunpack.c.l.b16 %v6128
        %v6289 = vunpack.c.l.b16 %v6129
        %v6290 = vunpack.c.l.b16 %v6130
        %v6291 = vunpack.c.l.b16 %v6131
        %v6292 = vunpack.c.l.b16 %v6132
        %v6293 = vunpack.c.l.b16 %v6133
        %v6294 = vunpack.c.l.b16 %v6134
        %v6295 = vunpack.c.l.b16 %v6135
        %v6296 = vunpack.c.l.b16 %v6136
        %v6297 = vunpack.c.l.b16 %v6137
        %v6298 = vunpack.c.l.b16 %v6138
        %v6299 = vunpack.c.l.b16 %v6139
        %v6300 = vunpack.c.l.b16 %v6140
        %v6301 = vunpack.c.l.b16 %v6141
        %v6302 = vunpack.c.l.b16 %v6142
        %v6303 = vunpack.c.l.b16 %v6143
        %v6304 = vunpack.c.l.b16 %v6144
        %v6305 = vunpack.c.l.b16 %v6145
        %v6306 = vpack.c.b16 %v6243, %v6242
        %v6307 = vpack.c.b16 %v6245, %v6244
        %v6308 = vpack.c.b16 %v6247, %v6246
        %v6309 = vpack.c.b16 %v6249, %v6248
        %v6310 = vpack.c.b16 %v6251, %v6250
        %v6311 = vpack.c.b16 %v6253, %v6252
        %v6312 = vpack.c.b16 %v6255, %v6254
        %v6313 = vpack.c.b16 %v6257, %v6256
        %v6314 = vpack.c.b16 %v6259, %v6258
        %v6315 = vpack.c.b16 %v6261, %v6260
        %v6316 = vpack.c.b16 %v6263, %v6262
        %v6317 = vpack.c.b16 %v6265, %v6264
        %v6318 = vpack.c.b16 %v6267, %v6266
        %v6319 = vpack.c.b16 %v6269, %v6268
        %v6320 = vpack.c.b16 %v6271, %v6270
        %v6321 = vpack.c.b16 %v6273, %v6272
        %v6322 = vpack.c.b16 %v6275, %v6274
        %v6323 = vpack.c.b16 %v6277, %v6276
        %v6324 = vpack.c.b16 %v6279, %v6278
        %v6325 = vpack.c.b16 %v6281, %v6280
        %v6326 = vpack.c.b16 %v6283, %v6282
        %v6327 = vpack.c.b16 %v6285, %v6284
        %v6328 = vpack.c.b16 %v6287, %v6286
        %v6329 = vpack.c.b16 %v6289, %v6288
        %v6330 = vpack.c.b16 %v6291, %v6290
        %v6331 = vpack.c.b16 %v6293, %v6292
        %v6332 = vpack.c.b16 %v6295, %v6294
        %v6333 = vpack.c.b16 %v6297, %v6296
        %v6334 = vpack.c.b16 %v6299, %v6298
        %v6335 = vpack.c.b16 %v6301, %v6300
        %v6336 = vpack.c.b16 %v6303, %v6302
        %v6337 = vpack.c.b16 %v6305, %v6304
        %6370 = vmatprep.subr.bf16.mxu0 0
        %6371 = vmatpush1.bf16.msra.mxu0 %v6306
        %6372 = vmatprep.subr.bf16.mxu0 0
        %6373 = vmatpush1.bf16.msra.mxu0 %v6307
        %6374 = vmatprep.subr.bf16.mxu0 0
        %6375 = vmatpush1.bf16.msra.mxu0 %v6308
        %6376 = vmatprep.subr.bf16.mxu0 0
        %6377 = vmatpush1.bf16.msra.mxu0 %v6309
        %6378 = vmatprep.subr.bf16.mxu0 0
        %6379 = vmatpush1.bf16.msra.mxu0 %v6310
        %6380 = vmatprep.subr.bf16.mxu0 0
        %6381 = vmatpush1.bf16.msra.mxu0 %v6311
        %6382 = vmatprep.subr.bf16.mxu0 0
        %6383 = vmatpush1.bf16.msra.mxu0 %v6312
        %6384 = vmatprep.subr.bf16.mxu0 0
        %6385 = vmatpush1.bf16.msra.mxu0 %v6313
        %6386 = vmatprep.subr.bf16.mxu0 0
        %6387 = vmatpush1.bf16.msra.mxu0 %v6314
        %6388 = vmatprep.subr.bf16.mxu0 0
        %6389 = vmatpush1.bf16.msra.mxu0 %v6315
        %6390 = vmatprep.subr.bf16.mxu0 0
        %6391 = vmatpush1.bf16.msra.mxu0 %v6316
        %6392 = vmatprep.subr.bf16.mxu0 0
        %6393 = vmatpush1.bf16.msra.mxu0 %v6317
        %6394 = vmatprep.subr.bf16.mxu0 0
        %6395 = vmatpush1.bf16.msra.mxu0 %v6318
        %6396 = vmatprep.subr.bf16.mxu0 0
        %6397 = vmatpush1.bf16.msra.mxu0 %v6319
        %6398 = vmatprep.subr.bf16.mxu0 0
        %6399 = vmatpush1.bf16.msra.mxu0 %v6320
        %6400 = vmatprep.subr.bf16.mxu0 0
        %6401 = vmatpush1.bf16.msra.mxu0 %v6321
        %6402 = vmatprep.mubr.bf16.mxu0 %v6159
        %6403 = vmatmul.mubr.bf16.gmra.mrb[0].mxu0 %v6156
        %v6404 = vpop.f32.mrb[0].mxu0
        %v6405 = vadd.f32 0.0, %v6404
        %v6406 = vpop.f32.mrb[0].mxu0
        %v6407 = vpop.f32.mrb[0].mxu0
        %v6408 = vpop.f32.mrb[0].mxu0
        %6409 = vmatprep.mubr.bf16.mxu0 %v6167
        %6410 = vmatmul.mubr.bf16.gmra.mrb[0].mxu0 %v6166
        %v6411 = vpop.f32.mrb[0].mxu0
        %v6412 = vadd.f32 0.0, %v6411
        %v6413 = vpop.f32.mrb[0].mxu0
        %v6414 = vpop.f32.mrb[0].mxu0
        %v6415 = vpop.f32.mrb[0].mxu0
        %6416 = vdwg.mxu0
        %6417 = vmatprep.subr.bf16.mxu0 0
        %6418 = vmatpush1.bf16.msra.mxu0 %v6322
        %6419 = vmatprep.subr.bf16.mxu0 0
        %6420 = vmatpush1.bf16.msra.mxu0 %v6323
        %6421 = vmatprep.subr.bf16.mxu0 0
        %6422 = vmatpush1.bf16.msra.mxu0 %v6324
        %6423 = vmatprep.subr.bf16.mxu0 0
        %6424 = vmatpush1.bf16.msra.mxu0 %v6325
        %6425 = vmatprep.subr.bf16.mxu0 0
        %6426 = vmatpush1.bf16.msra.mxu0 %v6326
        %6427 = vmatprep.subr.bf16.mxu0 0
        %6428 = vmatpush1.bf16.msra.mxu0 %v6327
        %6429 = vmatprep.subr.bf16.mxu0 0
        %6430 = vmatpush1.bf16.msra.mxu0 %v6328
        %6431 = vmatprep.subr.bf16.mxu0 0
        %6432 = vmatpush1.bf16.msra.mxu0 %v6329
        %6433 = vmatprep.subr.bf16.mxu0 0
        %6434 = vmatpush1.bf16.msra.mxu0 %v6330
        %6435 = vmatprep.subr.bf16.mxu0 0
        %6436 = vmatpush1.bf16.msra.mxu0 %v6331
        %6437 = vmatprep.subr.bf16.mxu0 0
        %6438 = vmatpush1.bf16.msra.mxu0 %v6332
        %6439 = vmatprep.subr.bf16.mxu0 0
        %6440 = vmatpush1.bf16.msra.mxu0 %v6333
        %6441 = vmatprep.subr.bf16.mxu0 0
        %6442 = vmatpush1.bf16.msra.mxu0 %v6334
        %6443 = vmatprep.subr.bf16.mxu0 0
        %6444 = vmatpush1.bf16.msra.mxu0 %v6335
        %6445 = vmatprep.subr.bf16.mxu0 0
        %6446 = vmatpush1.bf16.msra.mxu0 %v6336
        %6447 = vmatprep.subr.bf16.mxu0 0
        %6448 = vmatpush1.bf16.msra.mxu0 %v6337
        %6449 = vmatprep.mubr.bf16.mxu0 %v6165
        %6450 = vmatmul.mubr.bf16.gmra.mrb[0].mxu0 %v6162
        %v6451 = vpop.f32.mrb[0].mxu0
        %v6452 = vadd.f32 %v6405, %v6451
        %v6453 = vpop.f32.mrb[0].mxu0
        %v6454 = vpop.f32.mrb[0].mxu0
        %v6455 = vpop.f32.mrb[0].mxu0
        %6456 = vmatprep.mubr.bf16.mxu0 %v6169
        %6457 = vmatmul.mubr.bf16.gmra.mrb[0].mxu0 %v6168
        %v6458 = vpop.f32.mrb[0].mxu0
        %v6459 = vadd.f32 %v6412, %v6458
        %v6460 = vpop.f32.mrb[0].mxu0
        %v6461 = vpop.f32.mrb[0].mxu0
        %v6462 = vpop.f32.mrb[0].mxu0
        %6463 = vdwg.mxu0
        %v6464 = vadd.f32 %v6069, %v6452
        %v6465 = vadd.f32 %v6076, %v6459
        %s6466 = scalar_lea.vmem [#allocation14], 768
        %v6467 = vld [vmem:[%s6466] sm:$0xf]
        %v6468 = vld [vmem:[%s6466 + $0x4] sm:$0xf]
        %v6469 = vld [vmem:[%s6466 + $0x8] sm:$0xf]
        %v6470 = vld [vmem:[%s6466 + $0xc] sm:$0xf]
        %v6471 = vld [vmem:[%s6466 + $0x10] sm:$0xf]
        %v6472 = vld [vmem:[%s6466 + $0x14] sm:$0xf]
        %v6473 = vld [vmem:[%s6466 + $0x18] sm:$0xf]
        %v6474 = vld [vmem:[%s6466 + $0x1c] sm:$0xf]
        %v6475 = vld [vmem:[%s6466 + $0x20] sm:$0xf]
        %v6476 = vld [vmem:[%s6466 + $0x24] sm:$0xf]
        %v6477 = vld [vmem:[%s6466 + $0x28] sm:$0xf]
        %v6478 = vld [vmem:[%s6466 + $0x2c] sm:$0xf]
        %v6479 = vld [vmem:[%s6466 + $0x30] sm:$0xf]
        %v6480 = vld [vmem:[%s6466 + $0x34] sm:$0xf]
        %v6481 = vld [vmem:[%s6466 + $0x38] sm:$0xf]
        %v6482 = vld [vmem:[%s6466 + $0x3c] sm:$0xf]
        %v6483 = vld [vmem:[%s6466 + $0x40] sm:$0xf]
        %v6484 = vld [vmem:[%s6466 + $0x44] sm:$0xf]
        %v6485 = vld [vmem:[%s6466 + $0x48] sm:$0xf]
        %v6486 = vld [vmem:[%s6466 + $0x4c] sm:$0xf]
        %v6487 = vld [vmem:[%s6466 + $0x50] sm:$0xf]
        %v6488 = vld [vmem:[%s6466 + $0x54] sm:$0xf]
        %v6489 = vld [vmem:[%s6466 + $0x58] sm:$0xf]
        %v6490 = vld [vmem:[%s6466 + $0x5c] sm:$0xf]
        %v6491 = vld [vmem:[%s6466 + $0x60] sm:$0xf]
        %v6492 = vld [vmem:[%s6466 + $0x64] sm:$0xf]
        %v6493 = vld [vmem:[%s6466 + $0x68] sm:$0xf]
        %v6494 = vld [vmem:[%s6466 + $0x6c] sm:$0xf]
        %v6495 = vld [vmem:[%s6466 + $0x70] sm:$0xf]
        %v6496 = vld [vmem:[%s6466 + $0x74] sm:$0xf]
        %v6497 = vld [vmem:[%s6466 + $0x78] sm:$0xf]
        %v6498 = vld [vmem:[%s6466 + $0x7c] sm:$0xf]
        %v6499 = vld [vmem:[%s6466 + $0x80] sm:$0xf]
        %v6500 = vld [vmem:[%s6466 + $0x84] sm:$0xf]
        %v6501 = vld [vmem:[%s6466 + $0x88] sm:$0xf]
        %v6502 = vld [vmem:[%s6466 + $0x8c] sm:$0xf]
        %v6503 = vld [vmem:[%s6466 + $0x90] sm:$0xf]
        %v6504 = vld [vmem:[%s6466 + $0x94] sm:$0xf]
        %v6505 = vld [vmem:[%s6466 + $0x98] sm:$0xf]
        %v6506 = vld [vmem:[%s6466 + $0x9c] sm:$0xf]
        %v6507 = vld [vmem:[%s6466 + $0xa0] sm:$0xf]
        %v6508 = vld [vmem:[%s6466 + $0xa4] sm:$0xf]
        %v6509 = vld [vmem:[%s6466 + $0xa8] sm:$0xf]
        %v6510 = vld [vmem:[%s6466 + $0xac] sm:$0xf]
        %v6511 = vld [vmem:[%s6466 + $0xb0] sm:$0xf]
        %v6512 = vld [vmem:[%s6466 + $0xb4] sm:$0xf]
        %v6513 = vld [vmem:[%s6466 + $0xb8] sm:$0xf]
        %v6514 = vld [vmem:[%s6466 + $0xbc] sm:$0xf]
        %v6515 = vld [vmem:[%s6466 + $0xc0] sm:$0xf]
        %v6516 = vld [vmem:[%s6466 + $0xc4] sm:$0xf]
        %v6517 = vld [vmem:[%s6466 + $0xc8] sm:$0xf]
        %v6518 = vld [vmem:[%s6466 + $0xcc] sm:$0xf]
        %v6519 = vld [vmem:[%s6466 + $0xd0] sm:$0xf]
        %v6520 = vld [vmem:[%s6466 + $0xd4] sm:$0xf]
        %v6521 = vld [vmem:[%s6466 + $0xd8] sm:$0xf]
        %v6522 = vld [vmem:[%s6466 + $0xdc] sm:$0xf]
        %v6523 = vld [vmem:[%s6466 + $0xe0] sm:$0xf]
        %v6524 = vld [vmem:[%s6466 + $0xe4] sm:$0xf]
        %v6525 = vld [vmem:[%s6466 + $0xe8] sm:$0xf]
        %v6526 = vld [vmem:[%s6466 + $0xec] sm:$0xf]
        %v6527 = vld [vmem:[%s6466 + $0xf0] sm:$0xf]
        %v6528 = vld [vmem:[%s6466 + $0xf4] sm:$0xf]
        %v6529 = vld [vmem:[%s6466 + $0xf8] sm:$0xf]
        %v6530 = vld [vmem:[%s6466 + $0xfc] sm:$0xf]
        %v6531 = vrot.slane %v5438, 1
        %v6532 = vrot.slane %v5440, 2
        %v6533 = vor.u32 %v6531, %v6532
        %v6534 = vrot.slane %v5485, 1
        %v6535 = vrot.slane %v5445, 2
        %v6536 = vor.u32 %v6534, %v6535
        %v6537 = vsel %vm1049, %v6533, %v6536
        %v6538 = vrot.slane %v5450, 1
        %v6539 = vrot.slane %v5452, 2
        %v6540 = vor.u32 %v6538, %v6539
        %v6541 = vrot.slane %v5489, 1
        %v6542 = vrot.slane %v5457, 2
        %v6543 = vor.u32 %v6541, %v6542
        %v6544 = vsel %vm1049, %v6540, %v6543
        %v6545 = vrot.slane %v5462, 1
        %v6546 = vrot.slane %v5464, 2
        %v6547 = vor.u32 %v6545, %v6546
        %v6548 = vrot.slane %v5493, 1
        %v6549 = vrot.slane %v5469, 2
        %v6550 = vor.u32 %v6548, %v6549
        %v6551 = vsel %vm1049, %v6547, %v6550
        %v6552 = vrot.slane %v5474, 1
        %v6553 = vrot.slane %v5476, 2
        %v6554 = vor.u32 %v6552, %v6553
        %v6555 = vrot.slane %v5497, 1
        %v6556 = vrot.slane %v5481, 2
        %v6557 = vor.u32 %v6555, %v6556
        %v6558 = vsel %vm1049, %v6554, %v6557
        %v6559 = vsel %vm1049, %v6536, %v1073
        %v6560 = vsel %vm1049, %v6543, %v1073
        %v6561 = vsel %vm1049, %v6550, %v1073
        %v6562 = vsel %vm1049, %v6557, %v1073
        %v6635 = vunpack.c.l.b16 %v6467
        %v6636 = vunpack.c.l.b16 %v6468
        %v6637 = vunpack.c.l.b16 %v6469
        %v6638 = vunpack.c.l.b16 %v6470
        %v6639 = vunpack.c.l.b16 %v6471
        %v6640 = vunpack.c.l.b16 %v6472
        %v6641 = vunpack.c.l.b16 %v6473
        %v6642 = vunpack.c.l.b16 %v6474
        %v6643 = vunpack.c.l.b16 %v6475
        %v6644 = vunpack.c.l.b16 %v6476
        %v6645 = vunpack.c.l.b16 %v6477
        %v6646 = vunpack.c.l.b16 %v6478
        %v6647 = vunpack.c.l.b16 %v6479
        %v6648 = vunpack.c.l.b16 %v6480
        %v6649 = vunpack.c.l.b16 %v6481
        %v6650 = vunpack.c.l.b16 %v6482
        %v6651 = vunpack.c.l.b16 %v6483
        %v6652 = vunpack.c.l.b16 %v6484
        %v6653 = vunpack.c.l.b16 %v6485
        %v6654 = vunpack.c.l.b16 %v6486
        %v6655 = vunpack.c.l.b16 %v6487
        %v6656 = vunpack.c.l.b16 %v6488
        %v6657 = vunpack.c.l.b16 %v6489
        %v6658 = vunpack.c.l.b16 %v6490
        %v6659 = vunpack.c.l.b16 %v6491
        %v6660 = vunpack.c.l.b16 %v6492
        %v6661 = vunpack.c.l.b16 %v6493
        %v6662 = vunpack.c.l.b16 %v6494
        %v6663 = vunpack.c.l.b16 %v6495
        %v6664 = vunpack.c.l.b16 %v6496
        %v6665 = vunpack.c.l.b16 %v6497
        %v6666 = vunpack.c.l.b16 %v6498
        %v6667 = vunpack.c.l.b16 %v6499
        %v6668 = vunpack.c.l.b16 %v6500
        %v6669 = vunpack.c.l.b16 %v6501
        %v6670 = vunpack.c.l.b16 %v6502
        %v6671 = vunpack.c.l.b16 %v6503
        %v6672 = vunpack.c.l.b16 %v6504
        %v6673 = vunpack.c.l.b16 %v6505
        %v6674 = vunpack.c.l.b16 %v6506
        %v6675 = vunpack.c.l.b16 %v6507
        %v6676 = vunpack.c.l.b16 %v6508
        %v6677 = vunpack.c.l.b16 %v6509
        %v6678 = vunpack.c.l.b16 %v6510
        %v6679 = vunpack.c.l.b16 %v6511
        %v6680 = vunpack.c.l.b16 %v6512
        %v6681 = vunpack.c.l.b16 %v6513
        %v6682 = vunpack.c.l.b16 %v6514
        %v6683 = vunpack.c.l.b16 %v6515
        %v6684 = vunpack.c.l.b16 %v6516
        %v6685 = vunpack.c.l.b16 %v6517
        %v6686 = vunpack.c.l.b16 %v6518
        %v6687 = vunpack.c.l.b16 %v6519
        %v6688 = vunpack.c.l.b16 %v6520
        %v6689 = vunpack.c.l.b16 %v6521
        %v6690 = vunpack.c.l.b16 %v6522
        %v6691 = vunpack.c.l.b16 %v6523
        %v6692 = vunpack.c.l.b16 %v6524
        %v6693 = vunpack.c.l.b16 %v6525
        %v6694 = vunpack.c.l.b16 %v6526
        %v6695 = vunpack.c.l.b16 %v6527
        %v6696 = vunpack.c.l.b16 %v6528
        %v6697 = vunpack.c.l.b16 %v6529
        %v6698 = vunpack.c.l.b16 %v6530
        %v6699 = vpack.c.b16 %v6636, %v6635
        %v6700 = vpack.c.b16 %v6638, %v6637
        %v6701 = vpack.c.b16 %v6640, %v6639
        %v6702 = vpack.c.b16 %v6642, %v6641
        %v6703 = vpack.c.b16 %v6644, %v6643
        %v6704 = vpack.c.b16 %v6646, %v6645
        %v6705 = vpack.c.b16 %v6648, %v6647
        %v6706 = vpack.c.b16 %v6650, %v6649
        %v6707 = vpack.c.b16 %v6652, %v6651
        %v6708 = vpack.c.b16 %v6654, %v6653
        %v6709 = vpack.c.b16 %v6656, %v6655
        %v6710 = vpack.c.b16 %v6658, %v6657
        %v6711 = vpack.c.b16 %v6660, %v6659
        %v6712 = vpack.c.b16 %v6662, %v6661
        %v6713 = vpack.c.b16 %v6664, %v6663
        %v6714 = vpack.c.b16 %v6666, %v6665
        %v6715 = vpack.c.b16 %v6668, %v6667
        %v6716 = vpack.c.b16 %v6670, %v6669
        %v6717 = vpack.c.b16 %v6672, %v6671
        %v6718 = vpack.c.b16 %v6674, %v6673
        %v6719 = vpack.c.b16 %v6676, %v6675
        %v6720 = vpack.c.b16 %v6678, %v6677
        %v6721 = vpack.c.b16 %v6680, %v6679
        %v6722 = vpack.c.b16 %v6682, %v6681
        %v6723 = vpack.c.b16 %v6684, %v6683
        %v6724 = vpack.c.b16 %v6686, %v6685
        %v6725 = vpack.c.b16 %v6688, %v6687
        %v6726 = vpack.c.b16 %v6690, %v6689
        %v6727 = vpack.c.b16 %v6692, %v6691
        %v6728 = vpack.c.b16 %v6694, %v6693
        %v6729 = vpack.c.b16 %v6696, %v6695
        %v6730 = vpack.c.b16 %v6698, %v6697
        %6763 = vmatprep.subr.bf16.mxu0 0
        %6764 = vmatpush1.bf16.msra.mxu0 %v6699
        %6765 = vmatprep.subr.bf16.mxu0 0
        %6766 = vmatpush1.bf16.msra.mxu0 %v6700
        %6767 = vmatprep.subr.bf16.mxu0 0
        %6768 = vmatpush1.bf16.msra.mxu0 %v6701
        %6769 = vmatprep.subr.bf16.mxu0 0
        %6770 = vmatpush1.bf16.msra.mxu0 %v6702
        %6771 = vmatprep.subr.bf16.mxu0 0
        %6772 = vmatpush1.bf16.msra.mxu0 %v6703
        %6773 = vmatprep.subr.bf16.mxu0 0
        %6774 = vmatpush1.bf16.msra.mxu0 %v6704
        %6775 = vmatprep.subr.bf16.mxu0 0
        %6776 = vmatpush1.bf16.msra.mxu0 %v6705
        %6777 = vmatprep.subr.bf16.mxu0 0
        %6778 = vmatpush1.bf16.msra.mxu0 %v6706
        %6779 = vmatprep.subr.bf16.mxu0 0
        %6780 = vmatpush1.bf16.msra.mxu0 %v6707
        %6781 = vmatprep.subr.bf16.mxu0 0
        %6782 = vmatpush1.bf16.msra.mxu0 %v6708
        %6783 = vmatprep.subr.bf16.mxu0 0
        %6784 = vmatpush1.bf16.msra.mxu0 %v6709
        %6785 = vmatprep.subr.bf16.mxu0 0
        %6786 = vmatpush1.bf16.msra.mxu0 %v6710
        %6787 = vmatprep.subr.bf16.mxu0 0
        %6788 = vmatpush1.bf16.msra.mxu0 %v6711
        %6789 = vmatprep.subr.bf16.mxu0 0
        %6790 = vmatpush1.bf16.msra.mxu0 %v6712
        %6791 = vmatprep.subr.bf16.mxu0 0
        %6792 = vmatpush1.bf16.msra.mxu0 %v6713
        %6793 = vmatprep.subr.bf16.mxu0 0
        %6794 = vmatpush1.bf16.msra.mxu0 %v6714
        %6795 = vmatprep.mubr.bf16.mxu0 %v6544
        %6796 = vmatmul.mubr.bf16.gmra.mrb[0].mxu0 %v6537
        %v6797 = vpop.f32.mrb[0].mxu0
        %v6798 = vadd.f32 0.0, %v6797
        %v6799 = vpop.f32.mrb[0].mxu0
        %v6800 = vpop.f32.mrb[0].mxu0
        %v6801 = vpop.f32.mrb[0].mxu0
        %6802 = vmatprep.mubr.bf16.mxu0 %v6560
        %6803 = vmatmul.mubr.bf16.gmra.mrb[0].mxu0 %v6559
        %v6804 = vpop.f32.mrb[0].mxu0
        %v6805 = vadd.f32 0.0, %v6804
        %v6806 = vpop.f32.mrb[0].mxu0
        %v6807 = vpop.f32.mrb[0].mxu0
        %v6808 = vpop.f32.mrb[0].mxu0
        %6809 = vdwg.mxu0
        %6810 = vmatprep.subr.bf16.mxu0 0
        %6811 = vmatpush1.bf16.msra.mxu0 %v6715
        %6812 = vmatprep.subr.bf16.mxu0 0
        %6813 = vmatpush1.bf16.msra.mxu0 %v6716
        %6814 = vmatprep.subr.bf16.mxu0 0
        %6815 = vmatpush1.bf16.msra.mxu0 %v6717
        %6816 = vmatprep.subr.bf16.mxu0 0
        %6817 = vmatpush1.bf16.msra.mxu0 %v6718
        %6818 = vmatprep.subr.bf16.mxu0 0
        %6819 = vmatpush1.bf16.msra.mxu0 %v6719
        %6820 = vmatprep.subr.bf16.mxu0 0
        %6821 = vmatpush1.bf16.msra.mxu0 %v6720
        %6822 = vmatprep.subr.bf16.mxu0 0
        %6823 = vmatpush1.bf16.msra.mxu0 %v6721
        %6824 = vmatprep.subr.bf16.mxu0 0
        %6825 = vmatpush1.bf16.msra.mxu0 %v6722
        %6826 = vmatprep.subr.bf16.mxu0 0
        %6827 = vmatpush1.bf16.msra.mxu0 %v6723
        %6828 = vmatprep.subr.bf16.mxu0 0
        %6829 = vmatpush1.bf16.msra.mxu0 %v6724
        %6830 = vmatprep.subr.bf16.mxu0 0
        %6831 = vmatpush1.bf16.msra.mxu0 %v6725
        %6832 = vmatprep.subr.bf16.mxu0 0
        %6833 = vmatpush1.bf16.msra.mxu0 %v6726
        %6834 = vmatprep.subr.bf16.mxu0 0
        %6835 = vmatpush1.bf16.msra.mxu0 %v6727
        %6836 = vmatprep.subr.bf16.mxu0 0
        %6837 = vmatpush1.bf16.msra.mxu0 %v6728
        %6838 = vmatprep.subr.bf16.mxu0 0
        %6839 = vmatpush1.bf16.msra.mxu0 %v6729
        %6840 = vmatprep.subr.bf16.mxu0 0
        %6841 = vmatpush1.bf16.msra.mxu0 %v6730
        %6842 = vmatprep.mubr.bf16.mxu0 %v6558
        %6843 = vmatmul.mubr.bf16.gmra.mrb[0].mxu0 %v6551
        %v6844 = vpop.f32.mrb[0].mxu0
        %v6845 = vadd.f32 %v6798, %v6844
        %v6846 = vpop.f32.mrb[0].mxu0
        %v6847 = vpop.f32.mrb[0].mxu0
        %v6848 = vpop.f32.mrb[0].mxu0
        %6849 = vmatprep.mubr.bf16.mxu0 %v6562
        %6850 = vmatmul.mubr.bf16.gmra.mrb[0].mxu0 %v6561
        %v6851 = vpop.f32.mrb[0].mxu0
        %v6852 = vadd.f32 %v6805, %v6851
        %v6853 = vpop.f32.mrb[0].mxu0
        %v6854 = vpop.f32.mrb[0].mxu0
        %v6855 = vpop.f32.mrb[0].mxu0
        %6856 = vdwg.mxu0
        %v6857 = vadd.f32 %v6464, %v6845
        %v6858 = vadd.f32 %v6465, %v6852
        %v6859 = vld [vmem:[%s10] sm:$0x1]
        %v6861 = vlaneseq
        %v6862 = vshrl.u32 %v6861, 7
        %v6863 = vsub.s32 0, %v6862
        %v6864 = vrot.slane %v6859, %v6863
        %v6866 = vadd.f32 %v6857, %v6864
        %v6867 = vadd.f32 %v6858, %v6864
        %vm6868 = vcmask 6144
        %6869 = vst.msk [vmem:[%s481] sm:$0x7f] %vm6868, %v6866
        %6870 = vst.msk [vmem:[%s481 + $0x8] sm:$0x7f] %vm6868, %v6867
        %s6871 = smul.u32 2, %s28
        %p6872 = scmp.lt.s32.totalorder %s6871, 3
        %s6873 = scalar_select %p6872, %s6871, 3
        %s6874 = smul.addr %s6873, 8
        %s6875 = scalar_lea.vmem %s11, %s6874
        // Predicated region
        $region89: #{tpu_custom_call.1} parent=63 // pred_check
          %p6876 = pneg %p282
        $region90: #{tpu_custom_call.1} parent=63 // pred_check_branch
          %6878 = sbr.rel (%p6876) target = $region92
        $region91: #{tpu_custom_call.1} parent=63 // pred_region
          %s6879 = smul.u32 2, %s28
        $region92: #{tpu_custom_call.1} parent=63 // pred_fallthru
          _
      $region64: #{tpu_custom_call.1} parent=5 // pred_fallthru
        _
      %p6880 = scmp.le.s32.totalorder 2, %s23
      // Predicated region
      $region93: #{tpu_custom_call.1} parent=5 // pred_check
        %p6881 = pneg %p6880
      $region94: #{tpu_custom_call.1} parent=5 // pred_check_branch
        %6883 = sbr.rel (%p6881) target = $region96
      $region95: #{tpu_custom_call.1} parent=5 // pred_region
        %s6884 = ssub.s32 %s23, 2
        // Predicated region
        $region97: #{tpu_custom_call.1} parent=95 // pred_check
          %p6885 = pneg %p288
        $region98: #{tpu_custom_call.1} parent=95 // pred_check_branch
          %6887 = sbr.rel (%p6885) target = $region100
        $region99: #{tpu_custom_call.1} parent=95 // pred_region
          %s6888 = smul.u32 2, %s29
          %p6889 = scmp.lt.s32.totalorder %s6888, 3
          %s6890 = scalar_select %p6889, %s6888, 3
          %s6891 = smul.addr %s6890, 8
          %s6892 = scalar_lea.vmem %s11, %s6891
        $region100: #{tpu_custom_call.1} parent=95 // pred_fallthru
          _
      $region96: #{tpu_custom_call.1} parent=5 // pred_fallthru
        _
    $region6: #{tpu_custom_call.1} parent=1 // loop_footer
      %s27 = sadd.s32 1, %s23
    $region7: #{tpu_custom_call.1} parent=1 // loop_footer_branch
      %22 = sbr.rel target = $region3
    $region8: #{tpu_custom_call.1} parent=1 // loop_exit
      _
    %6893 = vsyncpa [#allocation7], 1
    %s6894 = scalar_lea.sflag [#allocation7], 1
    %6895 = vsyncpa %s6894, 1
    %6896 = vsyncpa [#allocation9], 1
    %6897 = vsyncpa [#allocation12], 1
    %6898 = vsyncpa [#allocation15], 1

</llo_original>
